<compile_context>
chip_gen: v6e
topology: v6e:2x2x1
jax: 0.10.0
libtpu: 0.0.40
codegen_flags: <defaults>
</compile_context>

<pallas_src>
import functools

import numpy as np
import jax
import jax.numpy as jnp
from jax.experimental import pallas as pl
from jax.experimental.pallas import tpu as pltpu

STATE_SIZE = 16
OUT_C = STATE_SIZE - 4          # 12
C_PAD = 128                     # lane-dense channel padding
KSIZE = 3
STRIDE = 2
N_LAYERS = 3
RELUS = (True, True, False)


def _round_up(v, m):
    return ((v + m - 1) // m) * m


def _conv_out(size):
    return (size - KSIZE) // STRIDE + 1


# ----------------------------- fused Pallas kernel --------------------------


def _encoder_fused_kernel(x_ref, w_ref, b_ref, g1_ref, g2_ref, g3_ref, o_ref,
                          *, mo_last):
    """One batch element: 3 convs (9-tap gather matmuls) + bias/ReLU + max.

    x_ref : (1, H*W, 128)     input, channels zero-padded to 128 lanes
    w_ref : (3, 9, 128, 128)  per-layer, per-tap weights (zero-padded)
    b_ref : (3, 1, 128)       per-layer bias (zero-padded)
    g*_ref: (9, Mo_pad, Mi)   constant 0/1 gather (im2col row-selection) mats
    o_ref : (1, 8, 128)       spatial max, broadcast over 8 sublanes
    """
    act = x_ref[0]                                   # (H*W, 128), stays in VMEM
    g_refs = (g1_ref, g2_ref, g3_ref)
    for layer in range(N_LAYERS):
        g_ref = g_refs[layer]
        mo_pad = g_ref.shape[1]
        acc = jnp.zeros((mo_pad, C_PAD), jnp.float32)
        for t in range(KSIZE * KSIZE):
            # Gather the stride-2 shifted rows for tap t (MXU), apply W_t (MXU).
            patches = jnp.dot(g_ref[t], act,
                              preferred_element_type=jnp.float32)
            acc = acc + jnp.dot(patches, w_ref[layer, t],
                                preferred_element_type=jnp.float32)
        acc = acc + b_ref[layer]                     # padded bias entries are 0
        if RELUS[layer]:
            acc = jnp.maximum(acc, 0.0)
        act = acc                                    # next layer's input

    # torch.max over dim 3 then dim 2  ==  max over flattened spatial rows.
    # Padded rows (>= mo_last) hold ReLU(bias)/bias junk -> mask to -inf.
    rows = jax.lax.broadcasted_iota(jnp.int32, (act.shape[0], 1), 0)
    masked = jnp.where(rows < mo_last, act, -jnp.inf)
    mx = jnp.max(masked, axis=0, keepdims=True)      # (1, 128)
    o_ref[...] = jnp.broadcast_to(mx[None, :, :], o_ref.shape)


# ------------------------- one-time packing (host side) ---------------------


def _gather_matrix(h_in, w_in, rows_in):
    """0/1 matrices selecting input rows for each of the 9 conv taps."""
    ho, wo = _conv_out(h_in), _conv_out(w_in)
    mo = ho * wo
    mo_pad = max(_round_up(mo, 8), 8)
    g = np.zeros((KSIZE * KSIZE, mo_pad, rows_in), np.float32)
    for dy in range(KSIZE):
        for dx in range(KSIZE):
            t = dy * KSIZE + dx
            for oy in range(ho):
                for ox in range(wo):
                    src = (STRIDE * oy + dy) * w_in + (STRIDE * ox + dx)
                    g[t, oy * wo + ox, src] = 1.0
    return g, ho, wo, mo, mo_pad


def pack_encoder(params, h, w):
    """Hoisted, one-time packing of conv weights + gather matrices.

    params: list of (w: (3,3,Cin,Cout) HWIO, b: (Cout,)).  A PyTorch OIHW
    weight maps here via transpose(2, 3, 1, 0).
    """
    w_all = np.zeros((N_LAYERS, KSIZE * KSIZE, C_PAD, C_PAD), np.float32)
    b_all = np.zeros((N_LAYERS, 1, C_PAD), np.float32)
    for l, (wl, bl) in enumerate(params):
        wl = np.asarray(wl)
        bl = np.asarray(bl)
        cin, cout = wl.shape[2], wl.shape[3]
        w_all[l, :, :cin, :cout] = wl.reshape(KSIZE * KSIZE, cin, cout)
        b_all[l, 0, :cout] = bl

    gs = []
    hh, ww, rows = h, w, h * w
    for _ in range(N_LAYERS):
        g, ho, wo, _mo, mo_pad = _gather_matrix(hh, ww, rows)
        gs.append(jnp.asarray(g))
        hh, ww, rows = ho, wo, mo_pad

    return dict(w_all=jnp.asarray(w_all), b_all=jnp.asarray(b_all),
                g1=gs[0], g2=gs[1], g3=gs[2])


# ------------------------------- forward ------------------------------------


def encoder_net_forward(x_nchw, packed):
    """Matches EncoderNet.forward for NCHW input; returns (N, STATE_SIZE - 4)."""
    n, c, h, w = x_nchw.shape
    assert c <= C_PAD and (h * w) % 8 == 0

    # Static geometry -> number of real rows of the final feature map.
    hh, ww = h, w
    for _ in range(N_LAYERS):
        hh, ww = _conv_out(hh), _conv_out(ww)
    mo_last = hh * ww

    # One-time layout glue: NCHW -> (N, H*W, C) with channels padded to 128.
    x = jnp.transpose(x_nchw.astype(jnp.float32), (0, 2, 3, 1))
    x_p = jnp.pad(x.reshape(n, h * w, c), ((0, 0), (0, 0), (0, C_PAD - c)))

    w_all, b_all = packed["w_all"], packed["b_all"]
    g1, g2, g3 = packed["g1"], packed["g2"], packed["g3"]

    # Advisory cost hint for XLA scheduling around the single custom call.
    flops = 0
    for g in (g1, g2, g3):
        taps, mo_pad, k_rows = g.shape
        flops += taps * 2 * (mo_pad * k_rows * C_PAD + mo_pad * C_PAD * C_PAD)
    flops *= n
    bytes_accessed = sum(int(a.size) * a.dtype.itemsize
                         for a in (x_p, w_all, b_all, g1, g2, g3))
    bytes_accessed += n * 8 * C_PAD * 4

    out = pl.pallas_call(
        functools.partial(_encoder_fused_kernel, mo_last=mo_last),
        out_shape=jax.ShapeDtypeStruct((n, 8, C_PAD), jnp.float32),
        grid=(n,),
        in_specs=[
            pl.BlockSpec((1, h * w, C_PAD), lambda i: (i, 0, 0)),
            pl.BlockSpec(w_all.shape, lambda i: (0, 0, 0, 0)),
            pl.BlockSpec(b_all.shape, lambda i: (0, 0, 0)),
            pl.BlockSpec(g1.shape, lambda i: (0, 0, 0)),
            pl.BlockSpec(g2.shape, lambda i: (0, 0, 0)),
            pl.BlockSpec(g3.shape, lambda i: (0, 0, 0)),
        ],
        out_specs=pl.BlockSpec((1, 8, C_PAD), lambda i: (i, 0, 0)),
        compiler_params=pltpu.CompilerParams(
            dimension_semantics=("parallel",),        # v7x: shard batch on 2 TCs
            vmem_limit_bytes=32 * 1024 * 1024),        # safe on v5e/v6e/v7x
        cost_estimate=pl.CostEstimate(
            flops=flops, transcendentals=0, bytes_accessed=bytes_accessed),
    )(x_p, w_all, b_all, g1, g2, g3)

    # Slice real channels out in the wrapper (kernel output is lane-dense).
    return out[:, 0, :OUT_C]


# ---------------------------- params & reference ----------------------------


def init_params(key):
    # Conv weights stored in HWIO (kh, kw, Cin, Cout); deterministic synthetic
    # init mirroring nn.Conv2d's uniform(-1/sqrt(fan_in), 1/sqrt(fan_in)).
    dims = [(4, 16), (16, 32), (32, STATE_SIZE - 4)]
    params = []
    for cin, cout in dims:
        key, kw_, kb_ = jax.random.split(key, 3)
        bound = 1.0 / ((cin * 9) ** 0.5)
        w = jax.random.uniform(kw_, (3, 3, cin, cout), jnp.float32, -bound, bound)
        b = jax.random.uniform(kb_, (cout,), jnp.float32, -bound, bound)
        params.append((w, b))
    return params


def _reference_forward(x_nchw, params):
    """Pure-JAX reference (lax conv) for numerical validation."""
    x = jnp.transpose(x_nchw.astype(jnp.float32), (0, 2, 3, 1))
    for (w, b), relu in zip(params, RELUS):
        x = jax.lax.conv_general_dilated(
            x, w, window_strides=(STRIDE, STRIDE), padding="VALID",
            dimension_numbers=("NHWC", "HWIO", "NHWC")) + b
        if relu:
            x = jnp.maximum(x, 0.0)
    return jnp.max(x, axis=(1, 2))


if __name__ == "__main__":
    key = jax.random.PRNGKey(0)
    kx, kp = jax.random.split(key)
    # PyTorch-style NCHW input: batch=2, channels=4, spatial=16x16
    x = jax.random.normal(kx, (2, 4, 16, 16), dtype=jnp.float32)
    params = init_params(kp)

    packed = pack_encoder(params, h=16, w=16)     # hoisted, one-time packing
    forward = jax.jit(encoder_net_forward)

    out = jax.block_until_ready(forward(x, packed))
    assert out.shape == (2, OUT_C), out.shape

    ref = jax.block_until_ready(_reference_forward(x, params))
    assert jnp.allclose(out, ref, atol=2e-4, rtol=2e-4), (out, ref)

    print("KERNEL_OK")
</pallas_src>

<mosaic_0001>
module attributes {stable_mosaic.version = 11 : i64} {
  func.func @_encoder_fused_kernel(%arg0: i32, %arg1: memref<1x256x128xf32, #tpu.memory_space<vmem>>, %arg2: memref<3x9x128x128xf32, #tpu.memory_space<vmem>>, %arg3: memref<3x1x128xf32, #tpu.memory_space<vmem>>, %arg4: memref<9x56x256xf32, #tpu.memory_space<vmem>>, %arg5: memref<9x16x56xf32, #tpu.memory_space<vmem>>, %arg6: memref<9x8x16xf32, #tpu.memory_space<vmem>>, %arg7: memref<1x8x128xf32, #tpu.memory_space<vmem>>) attributes {dimension_semantics = [#tpu.dimension_semantics<parallel>], iteration_bounds = array<i64: 2>, scalar_prefetch = 0 : i64, scratch_operands = 0 : i64, tpu.core_type = #tpu.core_type<tc>, window_params = [{transform_indices = @transform_0, window_bounds = array<i64: 1, 256, 128>}, {pipeline_mode = #tpu.pipeline_mode<synchronous>, transform_indices = @transform_1, window_bounds = array<i64: 3, 9, 128, 128>}, {pipeline_mode = #tpu.pipeline_mode<synchronous>, transform_indices = @transform_2, window_bounds = array<i64: 3, 1, 128>}, {pipeline_mode = #tpu.pipeline_mode<synchronous>, transform_indices = @transform_3, window_bounds = array<i64: 9, 56, 256>}, {pipeline_mode = #tpu.pipeline_mode<synchronous>, transform_indices = @transform_4, window_bounds = array<i64: 9, 16, 56>}, {pipeline_mode = #tpu.pipeline_mode<synchronous>, transform_indices = @transform_5, window_bounds = array<i64: 9, 8, 16>}, {transform_indices = @transform_6, window_bounds = array<i64: 1, 8, 128>}]} {
    %c0 = arith.constant 0 : index
    %c0_0 = arith.constant 0 : index
    %c0_1 = arith.constant 0 : index
    %0 = vector.load %arg1[%c0, %c0_0, %c0_1] : memref<1x256x128xf32, #tpu.memory_space<vmem>>, vector<1x256x128xf32>
    %1 = vector.shape_cast %0 : vector<1x256x128xf32> to vector<256x128xf32>
    %cst = arith.constant 0.000000e+00 : f32
    %2 = vector.broadcast %cst : f32 to vector<56x128xf32>
    %c0_2 = arith.constant 0 : index
    %c0_3 = arith.constant 0 : index
    %c0_4 = arith.constant 0 : index
    %3 = vector.load %arg4[%c0_2, %c0_3, %c0_4] : memref<9x56x256xf32, #tpu.memory_space<vmem>>, vector<1x56x256xf32>
    %4 = vector.shape_cast %3 : vector<1x56x256xf32> to vector<56x256xf32>
    %cst_5 = arith.constant dense<0.000000e+00> : vector<56x128xf32>
    %5 = tpu.matmul %4, %1, %cst_5 {dimension_numbers = #tpu.dot_dimension_numbers<[1], [0], [0], [1], [0, 0, 1, 1], [], []>} : vector<56x256xf32>, vector<256x128xf32>, vector<56x128xf32> -> vector<56x128xf32>
    %c0_6 = arith.constant 0 : index
    %c0_7 = arith.constant 0 : index
    %c0_8 = arith.constant 0 : index
    %c0_9 = arith.constant 0 : index
    %6 = vector.load %arg2[%c0_6, %c0_7, %c0_8, %c0_9] : memref<3x9x128x128xf32, #tpu.memory_space<vmem>>, vector<1x1x128x128xf32>
    %7 = vector.shape_cast %6 : vector<1x1x128x128xf32> to vector<128x128xf32>
    %cst_10 = arith.constant dense<0.000000e+00> : vector<56x128xf32>
    %8 = tpu.matmul %5, %7, %cst_10 {dimension_numbers = #tpu.dot_dimension_numbers<[1], [0], [0], [1], [0, 0, 1, 1], [], []>} : vector<56x128xf32>, vector<128x128xf32>, vector<56x128xf32> -> vector<56x128xf32>
    %9 = arith.addf %2, %8 : vector<56x128xf32>
    %c1 = arith.constant 1 : index
    %c0_11 = arith.constant 0 : index
    %c0_12 = arith.constant 0 : index
    %10 = vector.load %arg4[%c1, %c0_11, %c0_12] : memref<9x56x256xf32, #tpu.memory_space<vmem>>, vector<1x56x256xf32>
    %11 = vector.shape_cast %10 : vector<1x56x256xf32> to vector<56x256xf32>
    %cst_13 = arith.constant dense<0.000000e+00> : vector<56x128xf32>
    %12 = tpu.matmul %11, %1, %cst_13 {dimension_numbers = #tpu.dot_dimension_numbers<[1], [0], [0], [1], [0, 0, 1, 1], [], []>} : vector<56x256xf32>, vector<256x128xf32>, vector<56x128xf32> -> vector<56x128xf32>
    %c0_14 = arith.constant 0 : index
    %c1_15 = arith.constant 1 : index
    %c0_16 = arith.constant 0 : index
    %c0_17 = arith.constant 0 : index
    %13 = vector.load %arg2[%c0_14, %c1_15, %c0_16, %c0_17] : memref<3x9x128x128xf32, #tpu.memory_space<vmem>>, vector<1x1x128x128xf32>
    %14 = vector.shape_cast %13 : vector<1x1x128x128xf32> to vector<128x128xf32>
    %cst_18 = arith.constant dense<0.000000e+00> : vector<56x128xf32>
    %15 = tpu.matmul %12, %14, %cst_18 {dimension_numbers = #tpu.dot_dimension_numbers<[1], [0], [0], [1], [0, 0, 1, 1], [], []>} : vector<56x128xf32>, vector<128x128xf32>, vector<56x128xf32> -> vector<56x128xf32>
    %16 = arith.addf %9, %15 : vector<56x128xf32>
    %c2 = arith.constant 2 : index
    %c0_19 = arith.constant 0 : index
    %c0_20 = arith.constant 0 : index
    %17 = vector.load %arg4[%c2, %c0_19, %c0_20] : memref<9x56x256xf32, #tpu.memory_space<vmem>>, vector<1x56x256xf32>
    %18 = vector.shape_cast %17 : vector<1x56x256xf32> to vector<56x256xf32>
    %cst_21 = arith.constant dense<0.000000e+00> : vector<56x128xf32>
    %19 = tpu.matmul %18, %1, %cst_21 {dimension_numbers = #tpu.dot_dimension_numbers<[1], [0], [0], [1], [0, 0, 1, 1], [], []>} : vector<56x256xf32>, vector<256x128xf32>, vector<56x128xf32> -> vector<56x128xf32>
    %c0_22 = arith.constant 0 : index
    %c2_23 = arith.constant 2 : index
    %c0_24 = arith.constant 0 : index
    %c0_25 = arith.constant 0 : index
    %20 = vector.load %arg2[%c0_22, %c2_23, %c0_24, %c0_25] : memref<3x9x128x128xf32, #tpu.memory_space<vmem>>, vector<1x1x128x128xf32>
    %21 = vector.shape_cast %20 : vector<1x1x128x128xf32> to vector<128x128xf32>
    %cst_26 = arith.constant dense<0.000000e+00> : vector<56x128xf32>
    %22 = tpu.matmul %19, %21, %cst_26 {dimension_numbers = #tpu.dot_dimension_numbers<[1], [0], [0], [1], [0, 0, 1, 1], [], []>} : vector<56x128xf32>, vector<128x128xf32>, vector<56x128xf32> -> vector<56x128xf32>
    %23 = arith.addf %16, %22 : vector<56x128xf32>
    %c3 = arith.constant 3 : index
    %c0_27 = arith.constant 0 : index
    %c0_28 = arith.constant 0 : index
    %24 = vector.load %arg4[%c3, %c0_27, %c0_28] : memref<9x56x256xf32, #tpu.memory_space<vmem>>, vector<1x56x256xf32>
    %25 = vector.shape_cast %24 : vector<1x56x256xf32> to vector<56x256xf32>
    %cst_29 = arith.constant dense<0.000000e+00> : vector<56x128xf32>
    %26 = tpu.matmul %25, %1, %cst_29 {dimension_numbers = #tpu.dot_dimension_numbers<[1], [0], [0], [1], [0, 0, 1, 1], [], []>} : vector<56x256xf32>, vector<256x128xf32>, vector<56x128xf32> -> vector<56x128xf32>
    %c0_30 = arith.constant 0 : index
    %c3_31 = arith.constant 3 : index
    %c0_32 = arith.constant 0 : index
    %c0_33 = arith.constant 0 : index
    %27 = vector.load %arg2[%c0_30, %c3_31, %c0_32, %c0_33] : memref<3x9x128x128xf32, #tpu.memory_space<vmem>>, vector<1x1x128x128xf32>
    %28 = vector.shape_cast %27 : vector<1x1x128x128xf32> to vector<128x128xf32>
    %cst_34 = arith.constant dense<0.000000e+00> : vector<56x128xf32>
    %29 = tpu.matmul %26, %28, %cst_34 {dimension_numbers = #tpu.dot_dimension_numbers<[1], [0], [0], [1], [0, 0, 1, 1], [], []>} : vector<56x128xf32>, vector<128x128xf32>, vector<56x128xf32> -> vector<56x128xf32>
    %30 = arith.addf %23, %29 : vector<56x128xf32>
    %c4 = arith.constant 4 : index
    %c0_35 = arith.constant 0 : index
    %c0_36 = arith.constant 0 : index
    %31 = vector.load %arg4[%c4, %c0_35, %c0_36] : memref<9x56x256xf32, #tpu.memory_space<vmem>>, vector<1x56x256xf32>
    %32 = vector.shape_cast %31 : vector<1x56x256xf32> to vector<56x256xf32>
    %cst_37 = arith.constant dense<0.000000e+00> : vector<56x128xf32>
    %33 = tpu.matmul %32, %1, %cst_37 {dimension_numbers = #tpu.dot_dimension_numbers<[1], [0], [0], [1], [0, 0, 1, 1], [], []>} : vector<56x256xf32>, vector<256x128xf32>, vector<56x128xf32> -> vector<56x128xf32>
    %c0_38 = arith.constant 0 : index
    %c4_39 = arith.constant 4 : index
    %c0_40 = arith.constant 0 : index
    %c0_41 = arith.constant 0 : index
    %34 = vector.load %arg2[%c0_38, %c4_39, %c0_40, %c0_41] : memref<3x9x128x128xf32, #tpu.memory_space<vmem>>, vector<1x1x128x128xf32>
    %35 = vector.shape_cast %34 : vector<1x1x128x128xf32> to vector<128x128xf32>
    %cst_42 = arith.constant dense<0.000000e+00> : vector<56x128xf32>
    %36 = tpu.matmul %33, %35, %cst_42 {dimension_numbers = #tpu.dot_dimension_numbers<[1], [0], [0], [1], [0, 0, 1, 1], [], []>} : vector<56x128xf32>, vector<128x128xf32>, vector<56x128xf32> -> vector<56x128xf32>
    %37 = arith.addf %30, %36 : vector<56x128xf32>
    %c5 = arith.constant 5 : index
    %c0_43 = arith.constant 0 : index
    %c0_44 = arith.constant 0 : index
    %38 = vector.load %arg4[%c5, %c0_43, %c0_44] : memref<9x56x256xf32, #tpu.memory_space<vmem>>, vector<1x56x256xf32>
    %39 = vector.shape_cast %38 : vector<1x56x256xf32> to vector<56x256xf32>
    %cst_45 = arith.constant dense<0.000000e+00> : vector<56x128xf32>
    %40 = tpu.matmul %39, %1, %cst_45 {dimension_numbers = #tpu.dot_dimension_numbers<[1], [0], [0], [1], [0, 0, 1, 1], [], []>} : vector<56x256xf32>, vector<256x128xf32>, vector<56x128xf32> -> vector<56x128xf32>
    %c0_46 = arith.constant 0 : index
    %c5_47 = arith.constant 5 : index
    %c0_48 = arith.constant 0 : index
    %c0_49 = arith.constant 0 : index
    %41 = vector.load %arg2[%c0_46, %c5_47, %c0_48, %c0_49] : memref<3x9x128x128xf32, #tpu.memory_space<vmem>>, vector<1x1x128x128xf32>
    %42 = vector.shape_cast %41 : vector<1x1x128x128xf32> to vector<128x128xf32>
    %cst_50 = arith.constant dense<0.000000e+00> : vector<56x128xf32>
    %43 = tpu.matmul %40, %42, %cst_50 {dimension_numbers = #tpu.dot_dimension_numbers<[1], [0], [0], [1], [0, 0, 1, 1], [], []>} : vector<56x128xf32>, vector<128x128xf32>, vector<56x128xf32> -> vector<56x128xf32>
    %44 = arith.addf %37, %43 : vector<56x128xf32>
    %c6 = arith.constant 6 : index
    %c0_51 = arith.constant 0 : index
    %c0_52 = arith.constant 0 : index
    %45 = vector.load %arg4[%c6, %c0_51, %c0_52] : memref<9x56x256xf32, #tpu.memory_space<vmem>>, vector<1x56x256xf32>
    %46 = vector.shape_cast %45 : vector<1x56x256xf32> to vector<56x256xf32>
    %cst_53 = arith.constant dense<0.000000e+00> : vector<56x128xf32>
    %47 = tpu.matmul %46, %1, %cst_53 {dimension_numbers = #tpu.dot_dimension_numbers<[1], [0], [0], [1], [0, 0, 1, 1], [], []>} : vector<56x256xf32>, vector<256x128xf32>, vector<56x128xf32> -> vector<56x128xf32>
    %c0_54 = arith.constant 0 : index
    %c6_55 = arith.constant 6 : index
    %c0_56 = arith.constant 0 : index
    %c0_57 = arith.constant 0 : index
    %48 = vector.load %arg2[%c0_54, %c6_55, %c0_56, %c0_57] : memref<3x9x128x128xf32, #tpu.memory_space<vmem>>, vector<1x1x128x128xf32>
    %49 = vector.shape_cast %48 : vector<1x1x128x128xf32> to vector<128x128xf32>
    %cst_58 = arith.constant dense<0.000000e+00> : vector<56x128xf32>
    %50 = tpu.matmul %47, %49, %cst_58 {dimension_numbers = #tpu.dot_dimension_numbers<[1], [0], [0], [1], [0, 0, 1, 1], [], []>} : vector<56x128xf32>, vector<128x128xf32>, vector<56x128xf32> -> vector<56x128xf32>
    %51 = arith.addf %44, %50 : vector<56x128xf32>
    %c7 = arith.constant 7 : index
    %c0_59 = arith.constant 0 : index
    %c0_60 = arith.constant 0 : index
    %52 = vector.load %arg4[%c7, %c0_59, %c0_60] : memref<9x56x256xf32, #tpu.memory_space<vmem>>, vector<1x56x256xf32>
    %53 = vector.shape_cast %52 : vector<1x56x256xf32> to vector<56x256xf32>
    %cst_61 = arith.constant dense<0.000000e+00> : vector<56x128xf32>
    %54 = tpu.matmul %53, %1, %cst_61 {dimension_numbers = #tpu.dot_dimension_numbers<[1], [0], [0], [1], [0, 0, 1, 1], [], []>} : vector<56x256xf32>, vector<256x128xf32>, vector<56x128xf32> -> vector<56x128xf32>
    %c0_62 = arith.constant 0 : index
    %c7_63 = arith.constant 7 : index
    %c0_64 = arith.constant 0 : index
    %c0_65 = arith.constant 0 : index
    %55 = vector.load %arg2[%c0_62, %c7_63, %c0_64, %c0_65] : memref<3x9x128x128xf32, #tpu.memory_space<vmem>>, vector<1x1x128x128xf32>
    %56 = vector.shape_cast %55 : vector<1x1x128x128xf32> to vector<128x128xf32>
    %cst_66 = arith.constant dense<0.000000e+00> : vector<56x128xf32>
    %57 = tpu.matmul %54, %56, %cst_66 {dimension_numbers = #tpu.dot_dimension_numbers<[1], [0], [0], [1], [0, 0, 1, 1], [], []>} : vector<56x128xf32>, vector<128x128xf32>, vector<56x128xf32> -> vector<56x128xf32>
    %58 = arith.addf %51, %57 : vector<56x128xf32>
    %c8 = arith.constant 8 : index
    %c0_67 = arith.constant 0 : index
    %c0_68 = arith.constant 0 : index
    %59 = vector.load %arg4[%c8, %c0_67, %c0_68] : memref<9x56x256xf32, #tpu.memory_space<vmem>>, vector<1x56x256xf32>
    %60 = vector.shape_cast %59 : vector<1x56x256xf32> to vector<56x256xf32>
    %cst_69 = arith.constant dense<0.000000e+00> : vector<56x128xf32>
    %61 = tpu.matmul %60, %1, %cst_69 {dimension_numbers = #tpu.dot_dimension_numbers<[1], [0], [0], [1], [0, 0, 1, 1], [], []>} : vector<56x256xf32>, vector<256x128xf32>, vector<56x128xf32> -> vector<56x128xf32>
    %c0_70 = arith.constant 0 : index
    %c8_71 = arith.constant 8 : index
    %c0_72 = arith.constant 0 : index
    %c0_73 = arith.constant 0 : index
    %62 = vector.load %arg2[%c0_70, %c8_71, %c0_72, %c0_73] : memref<3x9x128x128xf32, #tpu.memory_space<vmem>>, vector<1x1x128x128xf32>
    %63 = vector.shape_cast %62 : vector<1x1x128x128xf32> to vector<128x128xf32>
    %cst_74 = arith.constant dense<0.000000e+00> : vector<56x128xf32>
    %64 = tpu.matmul %61, %63, %cst_74 {dimension_numbers = #tpu.dot_dimension_numbers<[1], [0], [0], [1], [0, 0, 1, 1], [], []>} : vector<56x128xf32>, vector<128x128xf32>, vector<56x128xf32> -> vector<56x128xf32>
    %65 = arith.addf %58, %64 : vector<56x128xf32>
    %c0_75 = arith.constant 0 : index
    %c0_76 = arith.constant 0 : index
    %c0_77 = arith.constant 0 : index
    %66 = vector.load %arg3[%c0_75, %c0_76, %c0_77] : memref<3x1x128xf32, #tpu.memory_space<vmem>>, vector<1x1x128xf32>
    %67 = vector.shape_cast %66 : vector<1x1x128xf32> to vector<1x128xf32>
    %68 = vector.broadcast %67 : vector<1x128xf32> to vector<56x128xf32>
    %69 = arith.addf %65, %68 : vector<56x128xf32>
    %cst_78 = arith.constant 0.000000e+00 : f32
    %70 = vector.broadcast %cst_78 : f32 to vector<56x128xf32>
    %71 = arith.maximumf %69, %70 : vector<56x128xf32>
    %cst_79 = arith.constant 0.000000e+00 : f32
    %72 = vector.broadcast %cst_79 : f32 to vector<16x128xf32>
    %c0_80 = arith.constant 0 : index
    %c0_81 = arith.constant 0 : index
    %c0_82 = arith.constant 0 : index
    %73 = vector.load %arg5[%c0_80, %c0_81, %c0_82] : memref<9x16x56xf32, #tpu.memory_space<vmem>>, vector<1x16x56xf32>
    %74 = vector.shape_cast %73 : vector<1x16x56xf32> to vector<16x56xf32>
    %cst_83 = arith.constant dense<0.000000e+00> : vector<16x128xf32>
    %75 = tpu.matmul %74, %71, %cst_83 {dimension_numbers = #tpu.dot_dimension_numbers<[1], [0], [0], [1], [0, 0, 1, 1], [], []>} : vector<16x56xf32>, vector<56x128xf32>, vector<16x128xf32> -> vector<16x128xf32>
    %c1_84 = arith.constant 1 : index
    %c0_85 = arith.constant 0 : index
    %c0_86 = arith.constant 0 : index
    %c0_87 = arith.constant 0 : index
    %76 = vector.load %arg2[%c1_84, %c0_85, %c0_86, %c0_87] : memref<3x9x128x128xf32, #tpu.memory_space<vmem>>, vector<1x1x128x128xf32>
    %77 = vector.shape_cast %76 : vector<1x1x128x128xf32> to vector<128x128xf32>
    %cst_88 = arith.constant dense<0.000000e+00> : vector<16x128xf32>
    %78 = tpu.matmul %75, %77, %cst_88 {dimension_numbers = #tpu.dot_dimension_numbers<[1], [0], [0], [1], [0, 0, 1, 1], [], []>} : vector<16x128xf32>, vector<128x128xf32>, vector<16x128xf32> -> vector<16x128xf32>
    %79 = arith.addf %72, %78 : vector<16x128xf32>
    %c1_89 = arith.constant 1 : index
    %c0_90 = arith.constant 0 : index
    %c0_91 = arith.constant 0 : index
    %80 = vector.load %arg5[%c1_89, %c0_90, %c0_91] : memref<9x16x56xf32, #tpu.memory_space<vmem>>, vector<1x16x56xf32>
    %81 = vector.shape_cast %80 : vector<1x16x56xf32> to vector<16x56xf32>
    %cst_92 = arith.constant dense<0.000000e+00> : vector<16x128xf32>
    %82 = tpu.matmul %81, %71, %cst_92 {dimension_numbers = #tpu.dot_dimension_numbers<[1], [0], [0], [1], [0, 0, 1, 1], [], []>} : vector<16x56xf32>, vector<56x128xf32>, vector<16x128xf32> -> vector<16x128xf32>
    %c1_93 = arith.constant 1 : index
    %c1_94 = arith.constant 1 : index
    %c0_95 = arith.constant 0 : index
    %c0_96 = arith.constant 0 : index
    %83 = vector.load %arg2[%c1_93, %c1_94, %c0_95, %c0_96] : memref<3x9x128x128xf32, #tpu.memory_space<vmem>>, vector<1x1x128x128xf32>
    %84 = vector.shape_cast %83 : vector<1x1x128x128xf32> to vector<128x128xf32>
    %cst_97 = arith.constant dense<0.000000e+00> : vector<16x128xf32>
    %85 = tpu.matmul %82, %84, %cst_97 {dimension_numbers = #tpu.dot_dimension_numbers<[1], [0], [0], [1], [0, 0, 1, 1], [], []>} : vector<16x128xf32>, vector<128x128xf32>, vector<16x128xf32> -> vector<16x128xf32>
    %86 = arith.addf %79, %85 : vector<16x128xf32>
    %c2_98 = arith.constant 2 : index
    %c0_99 = arith.constant 0 : index
    %c0_100 = arith.constant 0 : index
    %87 = vector.load %arg5[%c2_98, %c0_99, %c0_100] : memref<9x16x56xf32, #tpu.memory_space<vmem>>, vector<1x16x56xf32>
    %88 = vector.shape_cast %87 : vector<1x16x56xf32> to vector<16x56xf32>
    %cst_101 = arith.constant dense<0.000000e+00> : vector<16x128xf32>
    %89 = tpu.matmul %88, %71, %cst_101 {dimension_numbers = #tpu.dot_dimension_numbers<[1], [0], [0], [1], [0, 0, 1, 1], [], []>} : vector<16x56xf32>, vector<56x128xf32>, vector<16x128xf32> -> vector<16x128xf32>
    %c1_102 = arith.constant 1 : index
    %c2_103 = arith.constant 2 : index
    %c0_104 = arith.constant 0 : index
    %c0_105 = arith.constant 0 : index
    %90 = vector.load %arg2[%c1_102, %c2_103, %c0_104, %c0_105] : memref<3x9x128x128xf32, #tpu.memory_space<vmem>>, vector<1x1x128x128xf32>
    %91 = vector.shape_cast %90 : vector<1x1x128x128xf32> to vector<128x128xf32>
    %cst_106 = arith.constant dense<0.000000e+00> : vector<16x128xf32>
    %92 = tpu.matmul %89, %91, %cst_106 {dimension_numbers = #tpu.dot_dimension_numbers<[1], [0], [0], [1], [0, 0, 1, 1], [], []>} : vector<16x128xf32>, vector<128x128xf32>, vector<16x128xf32> -> vector<16x128xf32>
    %93 = arith.addf %86, %92 : vector<16x128xf32>
    %c3_107 = arith.constant 3 : index
    %c0_108 = arith.constant 0 : index
    %c0_109 = arith.constant 0 : index
    %94 = vector.load %arg5[%c3_107, %c0_108, %c0_109] : memref<9x16x56xf32, #tpu.memory_space<vmem>>, vector<1x16x56xf32>
    %95 = vector.shape_cast %94 : vector<1x16x56xf32> to vector<16x56xf32>
    %cst_110 = arith.constant dense<0.000000e+00> : vector<16x128xf32>
    %96 = tpu.matmul %95, %71, %cst_110 {dimension_numbers = #tpu.dot_dimension_numbers<[1], [0], [0], [1], [0, 0, 1, 1], [], []>} : vector<16x56xf32>, vector<56x128xf32>, vector<16x128xf32> -> vector<16x128xf32>
    %c1_111 = arith.constant 1 : index
    %c3_112 = arith.constant 3 : index
    %c0_113 = arith.constant 0 : index
    %c0_114 = arith.constant 0 : index
    %97 = vector.load %arg2[%c1_111, %c3_112, %c0_113, %c0_114] : memref<3x9x128x128xf32, #tpu.memory_space<vmem>>, vector<1x1x128x128xf32>
    %98 = vector.shape_cast %97 : vector<1x1x128x128xf32> to vector<128x128xf32>
    %cst_115 = arith.constant dense<0.000000e+00> : vector<16x128xf32>
    %99 = tpu.matmul %96, %98, %cst_115 {dimension_numbers = #tpu.dot_dimension_numbers<[1], [0], [0], [1], [0, 0, 1, 1], [], []>} : vector<16x128xf32>, vector<128x128xf32>, vector<16x128xf32> -> vector<16x128xf32>
    %100 = arith.addf %93, %99 : vector<16x128xf32>
    %c4_116 = arith.constant 4 : index
    %c0_117 = arith.constant 0 : index
    %c0_118 = arith.constant 0 : index
    %101 = vector.load %arg5[%c4_116, %c0_117, %c0_118] : memref<9x16x56xf32, #tpu.memory_space<vmem>>, vector<1x16x56xf32>
    %102 = vector.shape_cast %101 : vector<1x16x56xf32> to vector<16x56xf32>
    %cst_119 = arith.constant dense<0.000000e+00> : vector<16x128xf32>
    %103 = tpu.matmul %102, %71, %cst_119 {dimension_numbers = #tpu.dot_dimension_numbers<[1], [0], [0], [1], [0, 0, 1, 1], [], []>} : vector<16x56xf32>, vector<56x128xf32>, vector<16x128xf32> -> vector<16x128xf32>
    %c1_120 = arith.constant 1 : index
    %c4_121 = arith.constant 4 : index
    %c0_122 = arith.constant 0 : index
    %c0_123 = arith.constant 0 : index
    %104 = vector.load %arg2[%c1_120, %c4_121, %c0_122, %c0_123] : memref<3x9x128x128xf32, #tpu.memory_space<vmem>>, vector<1x1x128x128xf32>
    %105 = vector.shape_cast %104 : vector<1x1x128x128xf32> to vector<128x128xf32>
    %cst_124 = arith.constant dense<0.000000e+00> : vector<16x128xf32>
    %106 = tpu.matmul %103, %105, %cst_124 {dimension_numbers = #tpu.dot_dimension_numbers<[1], [0], [0], [1], [0, 0, 1, 1], [], []>} : vector<16x128xf32>, vector<128x128xf32>, vector<16x128xf32> -> vector<16x128xf32>
    %107 = arith.addf %100, %106 : vector<16x128xf32>
    %c5_125 = arith.constant 5 : index
    %c0_126 = arith.constant 0 : index
    %c0_127 = arith.constant 0 : index
    %108 = vector.load %arg5[%c5_125, %c0_126, %c0_127] : memref<9x16x56xf32, #tpu.memory_space<vmem>>, vector<1x16x56xf32>
    %109 = vector.shape_cast %108 : vector<1x16x56xf32> to vector<16x56xf32>
    %cst_128 = arith.constant dense<0.000000e+00> : vector<16x128xf32>
    %110 = tpu.matmul %109, %71, %cst_128 {dimension_numbers = #tpu.dot_dimension_numbers<[1], [0], [0], [1], [0, 0, 1, 1], [], []>} : vector<16x56xf32>, vector<56x128xf32>, vector<16x128xf32> -> vector<16x128xf32>
    %c1_129 = arith.constant 1 : index
    %c5_130 = arith.constant 5 : index
    %c0_131 = arith.constant 0 : index
    %c0_132 = arith.constant 0 : index
    %111 = vector.load %arg2[%c1_129, %c5_130, %c0_131, %c0_132] : memref<3x9x128x128xf32, #tpu.memory_space<vmem>>, vector<1x1x128x128xf32>
    %112 = vector.shape_cast %111 : vector<1x1x128x128xf32> to vector<128x128xf32>
    %cst_133 = arith.constant dense<0.000000e+00> : vector<16x128xf32>
    %113 = tpu.matmul %110, %112, %cst_133 {dimension_numbers = #tpu.dot_dimension_numbers<[1], [0], [0], [1], [0, 0, 1, 1], [], []>} : vector<16x128xf32>, vector<128x128xf32>, vector<16x128xf32> -> vector<16x128xf32>
    %114 = arith.addf %107, %113 : vector<16x128xf32>
    %c6_134 = arith.constant 6 : index
    %c0_135 = arith.constant 0 : index
    %c0_136 = arith.constant 0 : index
    %115 = vector.load %arg5[%c6_134, %c0_135, %c0_136] : memref<9x16x56xf32, #tpu.memory_space<vmem>>, vector<1x16x56xf32>
    %116 = vector.shape_cast %115 : vector<1x16x56xf32> to vector<16x56xf32>
    %cst_137 = arith.constant dense<0.000000e+00> : vector<16x128xf32>
    %117 = tpu.matmul %116, %71, %cst_137 {dimension_numbers = #tpu.dot_dimension_numbers<[1], [0], [0], [1], [0, 0, 1, 1], [], []>} : vector<16x56xf32>, vector<56x128xf32>, vector<16x128xf32> -> vector<16x128xf32>
    %c1_138 = arith.constant 1 : index
    %c6_139 = arith.constant 6 : index
    %c0_140 = arith.constant 0 : index
    %c0_141 = arith.constant 0 : index
    %118 = vector.load %arg2[%c1_138, %c6_139, %c0_140, %c0_141] : memref<3x9x128x128xf32, #tpu.memory_space<vmem>>, vector<1x1x128x128xf32>
    %119 = vector.shape_cast %118 : vector<1x1x128x128xf32> to vector<128x128xf32>
    %cst_142 = arith.constant dense<0.000000e+00> : vector<16x128xf32>
    %120 = tpu.matmul %117, %119, %cst_142 {dimension_numbers = #tpu.dot_dimension_numbers<[1], [0], [0], [1], [0, 0, 1, 1], [], []>} : vector<16x128xf32>, vector<128x128xf32>, vector<16x128xf32> -> vector<16x128xf32>
    %121 = arith.addf %114, %120 : vector<16x128xf32>
    %c7_143 = arith.constant 7 : index
    %c0_144 = arith.constant 0 : index
    %c0_145 = arith.constant 0 : index
    %122 = vector.load %arg5[%c7_143, %c0_144, %c0_145] : memref<9x16x56xf32, #tpu.memory_space<vmem>>, vector<1x16x56xf32>
    %123 = vector.shape_cast %122 : vector<1x16x56xf32> to vector<16x56xf32>
    %cst_146 = arith.constant dense<0.000000e+00> : vector<16x128xf32>
    %124 = tpu.matmul %123, %71, %cst_146 {dimension_numbers = #tpu.dot_dimension_numbers<[1], [0], [0], [1], [0, 0, 1, 1], [], []>} : vector<16x56xf32>, vector<56x128xf32>, vector<16x128xf32> -> vector<16x128xf32>
    %c1_147 = arith.constant 1 : index
    %c7_148 = arith.constant 7 : index
    %c0_149 = arith.constant 0 : index
    %c0_150 = arith.constant 0 : index
    %125 = vector.load %arg2[%c1_147, %c7_148, %c0_149, %c0_150] : memref<3x9x128x128xf32, #tpu.memory_space<vmem>>, vector<1x1x128x128xf32>
    %126 = vector.shape_cast %125 : vector<1x1x128x128xf32> to vector<128x128xf32>
    %cst_151 = arith.constant dense<0.000000e+00> : vector<16x128xf32>
    %127 = tpu.matmul %124, %126, %cst_151 {dimension_numbers = #tpu.dot_dimension_numbers<[1], [0], [0], [1], [0, 0, 1, 1], [], []>} : vector<16x128xf32>, vector<128x128xf32>, vector<16x128xf32> -> vector<16x128xf32>
    %128 = arith.addf %121, %127 : vector<16x128xf32>
    %c8_152 = arith.constant 8 : index
    %c0_153 = arith.constant 0 : index
    %c0_154 = arith.constant 0 : index
    %129 = vector.load %arg5[%c8_152, %c0_153, %c0_154] : memref<9x16x56xf32, #tpu.memory_space<vmem>>, vector<1x16x56xf32>
    %130 = vector.shape_cast %129 : vector<1x16x56xf32> to vector<16x56xf32>
    %cst_155 = arith.constant dense<0.000000e+00> : vector<16x128xf32>
    %131 = tpu.matmul %130, %71, %cst_155 {dimension_numbers = #tpu.dot_dimension_numbers<[1], [0], [0], [1], [0, 0, 1, 1], [], []>} : vector<16x56xf32>, vector<56x128xf32>, vector<16x128xf32> -> vector<16x128xf32>
    %c1_156 = arith.constant 1 : index
    %c8_157 = arith.constant 8 : index
    %c0_158 = arith.constant 0 : index
    %c0_159 = arith.constant 0 : index
    %132 = vector.load %arg2[%c1_156, %c8_157, %c0_158, %c0_159] : memref<3x9x128x128xf32, #tpu.memory_space<vmem>>, vector<1x1x128x128xf32>
    %133 = vector.shape_cast %132 : vector<1x1x128x128xf32> to vector<128x128xf32>
    %cst_160 = arith.constant dense<0.000000e+00> : vector<16x128xf32>
    %134 = tpu.matmul %131, %133, %cst_160 {dimension_numbers = #tpu.dot_dimension_numbers<[1], [0], [0], [1], [0, 0, 1, 1], [], []>} : vector<16x128xf32>, vector<128x128xf32>, vector<16x128xf32> -> vector<16x128xf32>
    %135 = arith.addf %128, %134 : vector<16x128xf32>
    %c1_161 = arith.constant 1 : index
    %c0_162 = arith.constant 0 : index
    %c0_163 = arith.constant 0 : index
    %136 = vector.load %arg3[%c1_161, %c0_162, %c0_163] : memref<3x1x128xf32, #tpu.memory_space<vmem>>, vector<1x1x128xf32>
    %137 = vector.shape_cast %136 : vector<1x1x128xf32> to vector<1x128xf32>
    %138 = vector.broadcast %137 : vector<1x128xf32> to vector<16x128xf32>
    %139 = arith.addf %135, %138 : vector<16x128xf32>
    %cst_164 = arith.constant 0.000000e+00 : f32
    %140 = vector.broadcast %cst_164 : f32 to vector<16x128xf32>
    %141 = arith.maximumf %139, %140 : vector<16x128xf32>
    %cst_165 = arith.constant 0.000000e+00 : f32
    %142 = vector.broadcast %cst_165 : f32 to vector<8x128xf32>
    %c0_166 = arith.constant 0 : index
    %c0_167 = arith.constant 0 : index
    %c0_168 = arith.constant 0 : index
    %143 = vector.load %arg6[%c0_166, %c0_167, %c0_168] : memref<9x8x16xf32, #tpu.memory_space<vmem>>, vector<1x8x16xf32>
    %144 = vector.shape_cast %143 : vector<1x8x16xf32> to vector<8x16xf32>
    %cst_169 = arith.constant dense<0.000000e+00> : vector<8x128xf32>
    %145 = tpu.matmul %144, %141, %cst_169 {dimension_numbers = #tpu.dot_dimension_numbers<[1], [0], [0], [1], [0, 0, 1, 1], [], []>} : vector<8x16xf32>, vector<16x128xf32>, vector<8x128xf32> -> vector<8x128xf32>
    %c2_170 = arith.constant 2 : index
    %c0_171 = arith.constant 0 : index
    %c0_172 = arith.constant 0 : index
    %c0_173 = arith.constant 0 : index
    %146 = vector.load %arg2[%c2_170, %c0_171, %c0_172, %c0_173] : memref<3x9x128x128xf32, #tpu.memory_space<vmem>>, vector<1x1x128x128xf32>
    %147 = vector.shape_cast %146 : vector<1x1x128x128xf32> to vector<128x128xf32>
    %cst_174 = arith.constant dense<0.000000e+00> : vector<8x128xf32>
    %148 = tpu.matmul %145, %147, %cst_174 {dimension_numbers = #tpu.dot_dimension_numbers<[1], [0], [0], [1], [0, 0, 1, 1], [], []>} : vector<8x128xf32>, vector<128x128xf32>, vector<8x128xf32> -> vector<8x128xf32>
    %149 = arith.addf %142, %148 : vector<8x128xf32>
    %c1_175 = arith.constant 1 : index
    %c0_176 = arith.constant 0 : index
    %c0_177 = arith.constant 0 : index
    %150 = vector.load %arg6[%c1_175, %c0_176, %c0_177] : memref<9x8x16xf32, #tpu.memory_space<vmem>>, vector<1x8x16xf32>
    %151 = vector.shape_cast %150 : vector<1x8x16xf32> to vector<8x16xf32>
    %cst_178 = arith.constant dense<0.000000e+00> : vector<8x128xf32>
    %152 = tpu.matmul %151, %141, %cst_178 {dimension_numbers = #tpu.dot_dimension_numbers<[1], [0], [0], [1], [0, 0, 1, 1], [], []>} : vector<8x16xf32>, vector<16x128xf32>, vector<8x128xf32> -> vector<8x128xf32>
    %c2_179 = arith.constant 2 : index
    %c1_180 = arith.constant 1 : index
    %c0_181 = arith.constant 0 : index
    %c0_182 = arith.constant 0 : index
    %153 = vector.load %arg2[%c2_179, %c1_180, %c0_181, %c0_182] : memref<3x9x128x128xf32, #tpu.memory_space<vmem>>, vector<1x1x128x128xf32>
    %154 = vector.shape_cast %153 : vector<1x1x128x128xf32> to vector<128x128xf32>
    %cst_183 = arith.constant dense<0.000000e+00> : vector<8x128xf32>
    %155 = tpu.matmul %152, %154, %cst_183 {dimension_numbers = #tpu.dot_dimension_numbers<[1], [0], [0], [1], [0, 0, 1, 1], [], []>} : vector<8x128xf32>, vector<128x128xf32>, vector<8x128xf32> -> vector<8x128xf32>
    %156 = arith.addf %149, %155 : vector<8x128xf32>
    %c2_184 = arith.constant 2 : index
    %c0_185 = arith.constant 0 : index
    %c0_186 = arith.constant 0 : index
    %157 = vector.load %arg6[%c2_184, %c0_185, %c0_186] : memref<9x8x16xf32, #tpu.memory_space<vmem>>, vector<1x8x16xf32>
    %158 = vector.shape_cast %157 : vector<1x8x16xf32> to vector<8x16xf32>
    %cst_187 = arith.constant dense<0.000000e+00> : vector<8x128xf32>
    %159 = tpu.matmul %158, %141, %cst_187 {dimension_numbers = #tpu.dot_dimension_numbers<[1], [0], [0], [1], [0, 0, 1, 1], [], []>} : vector<8x16xf32>, vector<16x128xf32>, vector<8x128xf32> -> vector<8x128xf32>
    %c2_188 = arith.constant 2 : index
    %c2_189 = arith.constant 2 : index
    %c0_190 = arith.constant 0 : index
    %c0_191 = arith.constant 0 : index
    %160 = vector.load %arg2[%c2_188, %c2_189, %c0_190, %c0_191] : memref<3x9x128x128xf32, #tpu.memory_space<vmem>>, vector<1x1x128x128xf32>
    %161 = vector.shape_cast %160 : vector<1x1x128x128xf32> to vector<128x128xf32>
    %cst_192 = arith.constant dense<0.000000e+00> : vector<8x128xf32>
    %162 = tpu.matmul %159, %161, %cst_192 {dimension_numbers = #tpu.dot_dimension_numbers<[1], [0], [0], [1], [0, 0, 1, 1], [], []>} : vector<8x128xf32>, vector<128x128xf32>, vector<8x128xf32> -> vector<8x128xf32>
    %163 = arith.addf %156, %162 : vector<8x128xf32>
    %c3_193 = arith.constant 3 : index
    %c0_194 = arith.constant 0 : index
    %c0_195 = arith.constant 0 : index
    %164 = vector.load %arg6[%c3_193, %c0_194, %c0_195] : memref<9x8x16xf32, #tpu.memory_space<vmem>>, vector<1x8x16xf32>
    %165 = vector.shape_cast %164 : vector<1x8x16xf32> to vector<8x16xf32>
    %cst_196 = arith.constant dense<0.000000e+00> : vector<8x128xf32>
    %166 = tpu.matmul %165, %141, %cst_196 {dimension_numbers = #tpu.dot_dimension_numbers<[1], [0], [0], [1], [0, 0, 1, 1], [], []>} : vector<8x16xf32>, vector<16x128xf32>, vector<8x128xf32> -> vector<8x128xf32>
    %c2_197 = arith.constant 2 : index
    %c3_198 = arith.constant 3 : index
    %c0_199 = arith.constant 0 : index
    %c0_200 = arith.constant 0 : index
    %167 = vector.load %arg2[%c2_197, %c3_198, %c0_199, %c0_200] : memref<3x9x128x128xf32, #tpu.memory_space<vmem>>, vector<1x1x128x128xf32>
    %168 = vector.shape_cast %167 : vector<1x1x128x128xf32> to vector<128x128xf32>
    %cst_201 = arith.constant dense<0.000000e+00> : vector<8x128xf32>
    %169 = tpu.matmul %166, %168, %cst_201 {dimension_numbers = #tpu.dot_dimension_numbers<[1], [0], [0], [1], [0, 0, 1, 1], [], []>} : vector<8x128xf32>, vector<128x128xf32>, vector<8x128xf32> -> vector<8x128xf32>
    %170 = arith.addf %163, %169 : vector<8x128xf32>
    %c4_202 = arith.constant 4 : index
    %c0_203 = arith.constant 0 : index
    %c0_204 = arith.constant 0 : index
    %171 = vector.load %arg6[%c4_202, %c0_203, %c0_204] : memref<9x8x16xf32, #tpu.memory_space<vmem>>, vector<1x8x16xf32>
    %172 = vector.shape_cast %171 : vector<1x8x16xf32> to vector<8x16xf32>
    %cst_205 = arith.constant dense<0.000000e+00> : vector<8x128xf32>
    %173 = tpu.matmul %172, %141, %cst_205 {dimension_numbers = #tpu.dot_dimension_numbers<[1], [0], [0], [1], [0, 0, 1, 1], [], []>} : vector<8x16xf32>, vector<16x128xf32>, vector<8x128xf32> -> vector<8x128xf32>
    %c2_206 = arith.constant 2 : index
    %c4_207 = arith.constant 4 : index
    %c0_208 = arith.constant 0 : index
    %c0_209 = arith.constant 0 : index
    %174 = vector.load %arg2[%c2_206, %c4_207, %c0_208, %c0_209] : memref<3x9x128x128xf32, #tpu.memory_space<vmem>>, vector<1x1x128x128xf32>
    %175 = vector.shape_cast %174 : vector<1x1x128x128xf32> to vector<128x128xf32>
    %cst_210 = arith.constant dense<0.000000e+00> : vector<8x128xf32>
    %176 = tpu.matmul %173, %175, %cst_210 {dimension_numbers = #tpu.dot_dimension_numbers<[1], [0], [0], [1], [0, 0, 1, 1], [], []>} : vector<8x128xf32>, vector<128x128xf32>, vector<8x128xf32> -> vector<8x128xf32>
    %177 = arith.addf %170, %176 : vector<8x128xf32>
    %c5_211 = arith.constant 5 : index
    %c0_212 = arith.constant 0 : index
    %c0_213 = arith.constant 0 : index
    %178 = vector.load %arg6[%c5_211, %c0_212, %c0_213] : memref<9x8x16xf32, #tpu.memory_space<vmem>>, vector<1x8x16xf32>
    %179 = vector.shape_cast %178 : vector<1x8x16xf32> to vector<8x16xf32>
    %cst_214 = arith.constant dense<0.000000e+00> : vector<8x128xf32>
    %180 = tpu.matmul %179, %141, %cst_214 {dimension_numbers = #tpu.dot_dimension_numbers<[1], [0], [0], [1], [0, 0, 1, 1], [], []>} : vector<8x16xf32>, vector<16x128xf32>, vector<8x128xf32> -> vector<8x128xf32>
    %c2_215 = arith.constant 2 : index
    %c5_216 = arith.constant 5 : index
    %c0_217 = arith.constant 0 : index
    %c0_218 = arith.constant 0 : index
    %181 = vector.load %arg2[%c2_215, %c5_216, %c0_217, %c0_218] : memref<3x9x128x128xf32, #tpu.memory_space<vmem>>, vector<1x1x128x128xf32>
    %182 = vector.shape_cast %181 : vector<1x1x128x128xf32> to vector<128x128xf32>
    %cst_219 = arith.constant dense<0.000000e+00> : vector<8x128xf32>
    %183 = tpu.matmul %180, %182, %cst_219 {dimension_numbers = #tpu.dot_dimension_numbers<[1], [0], [0], [1], [0, 0, 1, 1], [], []>} : vector<8x128xf32>, vector<128x128xf32>, vector<8x128xf32> -> vector<8x128xf32>
    %184 = arith.addf %177, %183 : vector<8x128xf32>
    %c6_220 = arith.constant 6 : index
    %c0_221 = arith.constant 0 : index
    %c0_222 = arith.constant 0 : index
    %185 = vector.load %arg6[%c6_220, %c0_221, %c0_222] : memref<9x8x16xf32, #tpu.memory_space<vmem>>, vector<1x8x16xf32>
    %186 = vector.shape_cast %185 : vector<1x8x16xf32> to vector<8x16xf32>
    %cst_223 = arith.constant dense<0.000000e+00> : vector<8x128xf32>
    %187 = tpu.matmul %186, %141, %cst_223 {dimension_numbers = #tpu.dot_dimension_numbers<[1], [0], [0], [1], [0, 0, 1, 1], [], []>} : vector<8x16xf32>, vector<16x128xf32>, vector<8x128xf32> -> vector<8x128xf32>
    %c2_224 = arith.constant 2 : index
    %c6_225 = arith.constant 6 : index
    %c0_226 = arith.constant 0 : index
    %c0_227 = arith.constant 0 : index
    %188 = vector.load %arg2[%c2_224, %c6_225, %c0_226, %c0_227] : memref<3x9x128x128xf32, #tpu.memory_space<vmem>>, vector<1x1x128x128xf32>
    %189 = vector.shape_cast %188 : vector<1x1x128x128xf32> to vector<128x128xf32>
    %cst_228 = arith.constant dense<0.000000e+00> : vector<8x128xf32>
    %190 = tpu.matmul %187, %189, %cst_228 {dimension_numbers = #tpu.dot_dimension_numbers<[1], [0], [0], [1], [0, 0, 1, 1], [], []>} : vector<8x128xf32>, vector<128x128xf32>, vector<8x128xf32> -> vector<8x128xf32>
    %191 = arith.addf %184, %190 : vector<8x128xf32>
    %c7_229 = arith.constant 7 : index
    %c0_230 = arith.constant 0 : index
    %c0_231 = arith.constant 0 : index
    %192 = vector.load %arg6[%c7_229, %c0_230, %c0_231] : memref<9x8x16xf32, #tpu.memory_space<vmem>>, vector<1x8x16xf32>
    %193 = vector.shape_cast %192 : vector<1x8x16xf32> to vector<8x16xf32>
    %cst_232 = arith.constant dense<0.000000e+00> : vector<8x128xf32>
    %194 = tpu.matmul %193, %141, %cst_232 {dimension_numbers = #tpu.dot_dimension_numbers<[1], [0], [0], [1], [0, 0, 1, 1], [], []>} : vector<8x16xf32>, vector<16x128xf32>, vector<8x128xf32> -> vector<8x128xf32>
    %c2_233 = arith.constant 2 : index
    %c7_234 = arith.constant 7 : index
    %c0_235 = arith.constant 0 : index
    %c0_236 = arith.constant 0 : index
    %195 = vector.load %arg2[%c2_233, %c7_234, %c0_235, %c0_236] : memref<3x9x128x128xf32, #tpu.memory_space<vmem>>, vector<1x1x128x128xf32>
    %196 = vector.shape_cast %195 : vector<1x1x128x128xf32> to vector<128x128xf32>
    %cst_237 = arith.constant dense<0.000000e+00> : vector<8x128xf32>
    %197 = tpu.matmul %194, %196, %cst_237 {dimension_numbers = #tpu.dot_dimension_numbers<[1], [0], [0], [1], [0, 0, 1, 1], [], []>} : vector<8x128xf32>, vector<128x128xf32>, vector<8x128xf32> -> vector<8x128xf32>
    %198 = arith.addf %191, %197 : vector<8x128xf32>
    %c8_238 = arith.constant 8 : index
    %c0_239 = arith.constant 0 : index
    %c0_240 = arith.constant 0 : index
    %199 = vector.load %arg6[%c8_238, %c0_239, %c0_240] : memref<9x8x16xf32, #tpu.memory_space<vmem>>, vector<1x8x16xf32>
    %200 = vector.shape_cast %199 : vector<1x8x16xf32> to vector<8x16xf32>
    %cst_241 = arith.constant dense<0.000000e+00> : vector<8x128xf32>
    %201 = tpu.matmul %200, %141, %cst_241 {dimension_numbers = #tpu.dot_dimension_numbers<[1], [0], [0], [1], [0, 0, 1, 1], [], []>} : vector<8x16xf32>, vector<16x128xf32>, vector<8x128xf32> -> vector<8x128xf32>
    %c2_242 = arith.constant 2 : index
    %c8_243 = arith.constant 8 : index
    %c0_244 = arith.constant 0 : index
    %c0_245 = arith.constant 0 : index
    %202 = vector.load %arg2[%c2_242, %c8_243, %c0_244, %c0_245] : memref<3x9x128x128xf32, #tpu.memory_space<vmem>>, vector<1x1x128x128xf32>
    %203 = vector.shape_cast %202 : vector<1x1x128x128xf32> to vector<128x128xf32>
    %cst_246 = arith.constant dense<0.000000e+00> : vector<8x128xf32>
    %204 = tpu.matmul %201, %203, %cst_246 {dimension_numbers = #tpu.dot_dimension_numbers<[1], [0], [0], [1], [0, 0, 1, 1], [], []>} : vector<8x128xf32>, vector<128x128xf32>, vector<8x128xf32> -> vector<8x128xf32>
    %205 = arith.addf %198, %204 : vector<8x128xf32>
    %c2_247 = arith.constant 2 : index
    %c0_248 = arith.constant 0 : index
    %c0_249 = arith.constant 0 : index
    %206 = vector.load %arg3[%c2_247, %c0_248, %c0_249] : memref<3x1x128xf32, #tpu.memory_space<vmem>>, vector<1x1x128xf32>
    %207 = vector.shape_cast %206 : vector<1x1x128xf32> to vector<1x128xf32>
    %208 = vector.broadcast %207 : vector<1x128xf32> to vector<8x128xf32>
    %209 = arith.addf %205, %208 : vector<8x128xf32>
    %210 = tpu.iota {dimensions = array<i32: 0>} : vector<8x1xi32>
    %c1_i32 = arith.constant 1 : i32
    %211 = vector.broadcast %c1_i32 : i32 to vector<8x1xi32>
    %212 = arith.cmpi slt, %210, %211 : vector<8x1xi32>
    %cst_250 = arith.constant 0xFF800000 : f32
    %213 = vector.shape_cast %212 : vector<8x1xi1> to vector<8x1xi1>
    %214 = vector.broadcast %213 : vector<8x1xi1> to vector<8x128xi1>
    %215 = vector.broadcast %cst_250 : f32 to vector<8x128xf32>
    %216 = arith.select %214, %209, %215 : vector<8x128xi1>, vector<8x128xf32>
    %cst_251 = arith.constant dense<0xFF800000> : vector<128xf32>
    %217 = vector.multi_reduction <maximumf>, %216, %cst_251 [0] : vector<8x128xf32> to vector<128xf32>
    %218 = vector.shape_cast %217 : vector<128xf32> to vector<1x128xf32>
    %219 = vector.shape_cast %218 : vector<1x128xf32> to vector<1x1x128xf32>
    %220 = vector.shape_cast %219 : vector<1x1x128xf32> to vector<1x1x128xf32>
    %221 = vector.broadcast %220 : vector<1x1x128xf32> to vector<1x8x128xf32>
    %c0_252 = arith.constant 0 : index
    %c0_253 = arith.constant 0 : index
    %c0_254 = arith.constant 0 : index
    %222 = vector.load %arg7[%c0_252, %c0_253, %c0_254] : memref<1x8x128xf32, #tpu.memory_space<vmem>>, vector<1x8x128xf32>
    tpu.vector_store %arg7[%c0_252, %c0_253, %c0_254], %221 {strides = array<i32>} : memref<1x8x128xf32, #tpu.memory_space<vmem>>, vector<1x8x128xf32>,
    return
  }
  func.func @transform_0(%arg0: i32) -> (i32, i32, i32) {
    %c0_i32 = arith.constant 0 : i32
    %c0_i32_0 = arith.constant 0 : i32
    %c0_i32_1 = arith.constant 0 : i32
    return %arg0, %c0_i32, %c0_i32_0 : i32, i32, i32
  }
  func.func @transform_1(%arg0: i32) -> (i32, i32, i32, i32) {
    %c0_i32 = arith.constant 0 : i32
    %c0_i32_0 = arith.constant 0 : i32
    %c0_i32_1 = arith.constant 0 : i32
    %c0_i32_2 = arith.constant 0 : i32
    %c0_i32_3 = arith.constant 0 : i32
    return %c0_i32, %c0_i32_0, %c0_i32_1, %c0_i32_2 : i32, i32, i32, i32
  }
  func.func @transform_2(%arg0: i32) -> (i32, i32, i32) {
    %c0_i32 = arith.constant 0 : i32
    %c0_i32_0 = arith.constant 0 : i32
    %c0_i32_1 = arith.constant 0 : i32
    %c0_i32_2 = arith.constant 0 : i32
    return %c0_i32, %c0_i32_0, %c0_i32_1 : i32, i32, i32
  }
  func.func @transform_3(%arg0: i32) -> (i32, i32, i32) {
    %c0_i32 = arith.constant 0 : i32
    %c0_i32_0 = arith.constant 0 : i32
    %c0_i32_1 = arith.constant 0 : i32
    %c0_i32_2 = arith.constant 0 : i32
    return %c0_i32, %c0_i32_0, %c0_i32_1 : i32, i32, i32
  }
  func.func @transform_4(%arg0: i32) -> (i32, i32, i32) {
    %c0_i32 = arith.constant 0 : i32
    %c0_i32_0 = arith.constant 0 : i32
    %c0_i32_1 = arith.constant 0 : i32
    %c0_i32_2 = arith.constant 0 : i32
    return %c0_i32, %c0_i32_0, %c0_i32_1 : i32, i32, i32
  }
  func.func @transform_5(%arg0: i32) -> (i32, i32, i32) {
    %c0_i32 = arith.constant 0 : i32
    %c0_i32_0 = arith.constant 0 : i32
    %c0_i32_1 = arith.constant 0 : i32
    %c0_i32_2 = arith.constant 0 : i32
    return %c0_i32, %c0_i32_0, %c0_i32_1 : i32, i32, i32
  }
  func.func @transform_6(%arg0: i32) -> (i32, i32, i32) {
    %c0_i32 = arith.constant 0 : i32
    %c0_i32_0 = arith.constant 0 : i32
    %c0_i32_1 = arith.constant 0 : i32
    return %arg0, %c0_i32, %c0_i32_0 : i32, i32, i32
  }
}

</mosaic_0001>

<llo_original>
// kernel: encoder_net_forward.1
$region0: #{encoder_net_forward.1}
  #allocation0 [shape = 'u32[]', space=smem, size = 0x4, offset = 0x4, fixed_abs, tag = 'smem constant byte address 0x4 - core index']
  #allocation1 [shape = 'u32[144,128]{1,0:T(1,128)}', space=vmem, size = 0x12000, scoped, tag = 'internal scratch']
  %s0 = inlined_call_operand.vmem [shape: f32[2,256,128], index: 0, kind: input, shape index: {}]
  %s1 = inlined_call_operand.hbm [shape: f32[3,9,128,128], index: 1, kind: input, shape index: {}]
  %s2 = inlined_call_operand.hbm [shape: f32[3,1,128], index: 2, kind: input, shape index: {}]
  %s3 = inlined_call_operand.hbm [shape: f32[9,56,256], index: 3, kind: input, shape index: {}]
  %s4 = inlined_call_operand.hbm [shape: f32[9,16,56], index: 4, kind: input, shape index: {}]
  %s5 = inlined_call_operand.hbm [shape: f32[9,8,16], index: 5, kind: input, shape index: {}]
  %s6 = inlined_call_operand.vmem [shape: f32[2,8,128], index: 6, kind: output, shape index: {}]
  %s7 = sld [smem:[#allocation0]]
  $region77: #{encoder_net_forward.1} parent=0
    _
  %s9 = ssub.s32 1, %s7
  %s10 = scalar_select 0, %s9, %s7
  $region1: #{encoder_net_forward.1} parent=0
    #allocation2 [shape = 'u8[1769472]{0}', space=vmem, size = 0x1b0000, scoped, tag = 'input window, operand 1, single buffered']
    #allocation3 [shape = 's32[2]{0}', space=sflag, size = 0x8, scoped, tag = 'scoped memory for encoder_net_forward.1']
    #allocation4 [shape = 'u8[1536]{0}', space=vmem, size = 0x800, scoped, tag = 'input window, operand 2, single buffered']
    #allocation5 [shape = 's32[1]{0}', space=sflag, size = 0x4, scoped, tag = 'scoped memory for encoder_net_forward.1']
    #allocation6 [shape = 'u8[516096]{0}', space=vmem, size = 0x7e000, scoped, tag = 'input window, operand 3, single buffered']
    #allocation7 [shape = 'u8[73728]{0}', space=vmem, size = 0x12000, scoped, tag = 'input window, operand 4, single buffered']
    #allocation8 [shape = 's32[1]{0}', space=sflag, size = 0x4, scoped, tag = 'scoped memory for encoder_net_forward.1']
    #allocation9 [shape = 'u8[36864]{0}', space=vmem, size = 0x9000, scoped, tag = 'input window, operand 5, single buffered']
    %11 = vsyncpa [#allocation3], 0
    %12 = vsyncpa [#allocation5], 0
    %13 = vsyncpa [#allocation8], 0
    loop: start=0, step=1, limit=4
    $region2: #{encoder_net_forward.1} parent=1 // loop_pre_header
      _
    $region3: #{encoder_net_forward.1} parent=1 // loop_header
      %s15 = sphi 0, %s19
      %p16 = scmp.ge.s32.totalorder %s15, 4
      %s25 = sphi 0, %s27
      %s28 = sphi 0, %s25
      %s29 = sphi 0, %s28
      %s45 = sphi 0, %s29
      %s49 = sphi 0, %s49
      %s51 = sphi 0, %s49
      %s52 = sphi 0, %s51
      %s66 = sphi 0, %s52
      %s70 = sphi 0, %s70
      %s72 = sphi 0, %s70
      %s73 = sphi 0, %s72
      %s87 = sphi 0, %s73
      %s91 = sphi 0, %s91
      %s93 = sphi 0, %s91
      %s94 = sphi 0, %s93
      %s108 = sphi 0, %s94
      %s112 = sphi 0, %s112
      %s114 = sphi 0, %s112
      %s115 = sphi 0, %s114
      %s129 = sphi 0, %s115
      %s133 = sphi 0, %s133
      %s135 = sphi 0, %s133
      %s136 = sphi 0, %s135
      %s150 = sphi 0, %s136
      %s156 = sphi 0, %s158
      %s159 = sphi 0, %s156
      %s160 = sphi 0, %s159
      %s176 = sphi 0, %s160
    $region4: #{encoder_net_forward.1} parent=1 // loop_header_branch
      %18 = sbr.rel (%p16) target = $region8
    $region5: #{encoder_net_forward.1} parent=1 // loop_body
      %s20 = ssub.s32 %s15, 1
      %s21 = ssub.s32 %s15, 2
      %s22 = sadd.s32 %s15, 1
      %s23 = ssub.s32 %s15, %s22
      %p24 = scmp.eq.s32.totalorder %s23, 0
      %s26 = sadd.s32 %s25, 1
      %s27 = scalar_select %p24, %s25, %s26
      %p30 = pneg %p24
      %p31 = scmp.eq.s32.totalorder %s15, 1
      %p32 = por %p30, %p31
      %p33 = scmp.ne.s32.totalorder %s25, %s28
      %p34 = scmp.eq.s32.totalorder %s15, 0
      %p35 = por %p33, %p34
      %p36 = scmp.ne.s32.totalorder %s25, %s28
      %p37 = scmp.eq.s32.totalorder %s20, 1
      %p38 = por %p36, %p37
      %p39 = scmp.ne.s32.totalorder %s28, %s29
      %p40 = scmp.eq.s32.totalorder %s20, 0
      %p41 = por %p39, %p40
      %p42 = scmp.ne.s32.totalorder %s28, %s29
      %p43 = scmp.eq.s32.totalorder %s21, 1
      %p44 = por %p42, %p43
      %p46 = scmp.ne.s32.totalorder %s29, %s45
      %p47 = scmp.eq.s32.totalorder %s21, 0
      %p48 = por %p46, %p47
      %s50 = sadd.s32 %s49, 1
      %p53 = scmp.eq.s32.totalorder %s15, 1
      %p54 = scmp.ne.s32.totalorder %s49, %s51
      %p55 = scmp.eq.s32.totalorder %s15, 0
      %p56 = por %p54, %p55
      %p57 = scmp.ne.s32.totalorder %s49, %s51
      %p58 = scmp.eq.s32.totalorder %s20, 1
      %p59 = por %p57, %p58
      %p60 = scmp.ne.s32.totalorder %s51, %s52
      %p61 = scmp.eq.s32.totalorder %s20, 0
      %p62 = por %p60, %p61
      %p63 = scmp.ne.s32.totalorder %s51, %s52
      %p64 = scmp.eq.s32.totalorder %s21, 1
      %p65 = por %p63, %p64
      %p67 = scmp.ne.s32.totalorder %s52, %s66
      %p68 = scmp.eq.s32.totalorder %s21, 0
      %p69 = por %p67, %p68
      %s71 = sadd.s32 %s70, 1
      %p74 = scmp.eq.s32.totalorder %s15, 1
      %p75 = scmp.ne.s32.totalorder %s70, %s72
      %p76 = scmp.eq.s32.totalorder %s15, 0
      %p77 = por %p75, %p76
      %p78 = scmp.ne.s32.totalorder %s70, %s72
      %p79 = scmp.eq.s32.totalorder %s20, 1
      %p80 = por %p78, %p79
      %p81 = scmp.ne.s32.totalorder %s72, %s73
      %p82 = scmp.eq.s32.totalorder %s20, 0
      %p83 = por %p81, %p82
      %p84 = scmp.ne.s32.totalorder %s72, %s73
      %p85 = scmp.eq.s32.totalorder %s21, 1
      %p86 = por %p84, %p85
      %p88 = scmp.ne.s32.totalorder %s73, %s87
      %p89 = scmp.eq.s32.totalorder %s21, 0
      %p90 = por %p88, %p89
      %s92 = sadd.s32 %s91, 1
      %p95 = scmp.eq.s32.totalorder %s15, 1
      %p96 = scmp.ne.s32.totalorder %s91, %s93
      %p97 = scmp.eq.s32.totalorder %s15, 0
      %p98 = por %p96, %p97
      %p99 = scmp.ne.s32.totalorder %s91, %s93
      %p100 = scmp.eq.s32.totalorder %s20, 1
      %p101 = por %p99, %p100
      %p102 = scmp.ne.s32.totalorder %s93, %s94
      %p103 = scmp.eq.s32.totalorder %s20, 0
      %p104 = por %p102, %p103
      %p105 = scmp.ne.s32.totalorder %s93, %s94
      %p106 = scmp.eq.s32.totalorder %s21, 1
      %p107 = por %p105, %p106
      %p109 = scmp.ne.s32.totalorder %s94, %s108
      %p110 = scmp.eq.s32.totalorder %s21, 0
      %p111 = por %p109, %p110
      %s113 = sadd.s32 %s112, 1
      %p116 = scmp.eq.s32.totalorder %s15, 1
      %p117 = scmp.ne.s32.totalorder %s112, %s114
      %p118 = scmp.eq.s32.totalorder %s15, 0
      %p119 = por %p117, %p118
      %p120 = scmp.ne.s32.totalorder %s112, %s114
      %p121 = scmp.eq.s32.totalorder %s20, 1
      %p122 = por %p120, %p121
      %p123 = scmp.ne.s32.totalorder %s114, %s115
      %p124 = scmp.eq.s32.totalorder %s20, 0
      %p125 = por %p123, %p124
      %p126 = scmp.ne.s32.totalorder %s114, %s115
      %p127 = scmp.eq.s32.totalorder %s21, 1
      %p128 = por %p126, %p127
      %p130 = scmp.ne.s32.totalorder %s115, %s129
      %p131 = scmp.eq.s32.totalorder %s21, 0
      %p132 = por %p130, %p131
      %s134 = sadd.s32 %s133, 1
      %p137 = scmp.eq.s32.totalorder %s15, 1
      %p138 = scmp.ne.s32.totalorder %s133, %s135
      %p139 = scmp.eq.s32.totalorder %s15, 0
      %p140 = por %p138, %p139
      %p141 = scmp.ne.s32.totalorder %s133, %s135
      %p142 = scmp.eq.s32.totalorder %s20, 1
      %p143 = por %p141, %p142
      %p144 = scmp.ne.s32.totalorder %s135, %s136
      %p145 = scmp.eq.s32.totalorder %s20, 0
      %p146 = por %p144, %p145
      %p147 = scmp.ne.s32.totalorder %s135, %s136
      %p148 = scmp.eq.s32.totalorder %s21, 1
      %p149 = por %p147, %p148
      %p151 = scmp.ne.s32.totalorder %s136, %s150
      %p152 = scmp.eq.s32.totalorder %s21, 0
      %p153 = por %p151, %p152
      %s154 = ssub.s32 %s15, %s22
      %p155 = scmp.eq.s32.totalorder %s154, 0
      %s157 = sadd.s32 %s156, 1
      %s158 = scalar_select %p155, %s156, %s157
      %p161 = pneg %p155
      %p162 = scmp.eq.s32.totalorder %s15, 1
      %p163 = por %p161, %p162
      %p164 = scmp.ne.s32.totalorder %s156, %s159
      %p165 = scmp.eq.s32.totalorder %s15, 0
      %p166 = por %p164, %p165
      %p167 = scmp.ne.s32.totalorder %s156, %s159
      %p168 = scmp.eq.s32.totalorder %s20, 1
      %p169 = por %p167, %p168
      %p170 = scmp.ne.s32.totalorder %s159, %s160
      %p171 = scmp.eq.s32.totalorder %s20, 0
      %p172 = por %p170, %p171
      %p173 = scmp.ne.s32.totalorder %s159, %s160
      %p174 = scmp.eq.s32.totalorder %s21, 1
      %p175 = por %p173, %p174
      %p177 = scmp.ne.s32.totalorder %s160, %s176
      %p178 = scmp.eq.s32.totalorder %s21, 0
      %p179 = por %p177, %p178
      %p180 = scmp.le.s32.totalorder 1, %s15
      %p181 = scmp.lt.s32.totalorder %s15, 3
      %p182 = pnand %p180, %p181
      %p183 = pneg %p182
      // Predicated region
      $region9: #{encoder_net_forward.1} parent=5 // pred_check
        _
      $region10: #{encoder_net_forward.1} parent=5 // pred_check_branch
        %185 = sbr.rel (%p182) target = $region12
      $region11: #{encoder_net_forward.1} parent=5 // pred_region
        %s186 = ssub.s32 %s15, 1
        // Predicated region
        $region13: #{encoder_net_forward.1} parent=11 // pred_check
          %p187 = pneg %p62
        $region14: #{encoder_net_forward.1} parent=11 // pred_check_branch
          %189 = sbr.rel (%p187) target = $region16
        $region15: #{encoder_net_forward.1} parent=11 // pred_region
          %s191 = ssub.s32 55296, 55296
          %192 = vsyncadd [#allocation3], %s191
          %s193 = sshll.u32 [#allocation2], 4
          %s194 = int_to_ptr.vmem [resolvable:$true] %s193
          %199 = dma.hbm_to_vmem [thread:$0]  %s1, 55296, %s194, [#allocation3], 128, 128, 8
        $region16: #{encoder_net_forward.1} parent=11 // pred_fallthru
          _
        // Predicated region
        $region17: #{encoder_net_forward.1} parent=11 // pred_check
          %p200 = pneg %p83
        $region18: #{encoder_net_forward.1} parent=11 // pred_check_branch
          %202 = sbr.rel (%p200) target = $region20
        $region19: #{encoder_net_forward.1} parent=11 // pred_region
          %s204 = ssub.s32 48, 48
          %205 = vsyncadd [#allocation5], %s204
          %s206 = sshll.u32 [#allocation4], 4
          %s207 = int_to_ptr.vmem [resolvable:$true] %s206
          %212 = dma.hbm_to_vmem [thread:$0]  %s2, 48, %s207, [#allocation5], 16, 16, 1
        $region20: #{encoder_net_forward.1} parent=11 // pred_fallthru
          _
        // Predicated region
        $region21: #{encoder_net_forward.1} parent=11 // pred_check
          %p213 = pneg %p104
        $region22: #{encoder_net_forward.1} parent=11 // pred_check_branch
          %215 = sbr.rel (%p213) target = $region24
        $region23: #{encoder_net_forward.1} parent=11 // pred_region
          %s217 = ssub.s32 16128, 16128
          %218 = vsyncadd [#allocation5], %s217
          %s219 = sshll.u32 [#allocation6], 4
          %s220 = int_to_ptr.vmem [resolvable:$true] %s219
          %225 = dma.hbm_to_vmem [thread:$0]  %s3, 16128, %s220, [#allocation5], 256, 256, 16
        $region24: #{encoder_net_forward.1} parent=11 // pred_fallthru
          _
        // Predicated region
        $region25: #{encoder_net_forward.1} parent=11 // pred_check
          %p226 = pneg %p125
        $region26: #{encoder_net_forward.1} parent=11 // pred_check_branch
          %228 = sbr.rel (%p226) target = $region28
        $region27: #{encoder_net_forward.1} parent=11 // pred_region
          %s230 = ssub.s32 2304, 2304
          %231 = vsyncadd [#allocation8], %s230
          %s232 = sshll.u32 [#allocation7], 4
          %s233 = int_to_ptr.vmem [resolvable:$true] %s232
          %238 = dma.hbm_to_vmem [thread:$0]  %s4, 2304, %s233, [#allocation8], 128, 128, 8
        $region28: #{encoder_net_forward.1} parent=11 // pred_fallthru
          _
        // Predicated region
        $region29: #{encoder_net_forward.1} parent=11 // pred_check
          %p239 = pneg %p146
        $region30: #{encoder_net_forward.1} parent=11 // pred_check_branch
          %241 = sbr.rel (%p239) target = $region32
        $region31: #{encoder_net_forward.1} parent=11 // pred_region
          %s243 = ssub.s32 1152, 1152
          %244 = vsyncadd [#allocation8], %s243
          %s245 = sshll.u32 [#allocation9], 4
          %s246 = int_to_ptr.vmem [resolvable:$true] %s245
          %251 = dma.hbm_to_vmem [thread:$0]  %s5, 1152, %s246, [#allocation8], 128, 128, 8
        $region32: #{encoder_net_forward.1} parent=11 // pred_fallthru
          _
      $region12: #{encoder_net_forward.1} parent=5 // pred_fallthru
        _
      %p252 = scmp.lt.s32.totalorder %s15, 2
      // Predicated region
      $region33: #{encoder_net_forward.1} parent=5 // pred_check
        %p253 = pneg %p252
      $region34: #{encoder_net_forward.1} parent=5 // pred_check_branch
        %255 = sbr.rel (%p253) target = $region36
      $region35: #{encoder_net_forward.1} parent=5 // pred_region
        // Predicated region
        $region37: #{encoder_net_forward.1} parent=35 // pred_check
          %p256 = pneg %p35
        $region38: #{encoder_net_forward.1} parent=35 // pred_check_branch
          %258 = sbr.rel (%p256) target = $region40
        $region39: #{encoder_net_forward.1} parent=35 // pred_region
          %p259 = scmp.lt.s32.totalorder %s15, 1
          %s260 = scalar_select %p259, %s15, 1
          %s261 = smul.addr %s260, 32
          %s262 = smul.addr %s261, 8
          %s263 = scalar_lea.vmem %s0, %s262
        $region40: #{encoder_net_forward.1} parent=35 // pred_fallthru
          _
      $region36: #{encoder_net_forward.1} parent=5 // pred_fallthru
        _
      %p264 = scmp.le.s32.totalorder 1, %s15
      %p265 = scmp.lt.s32.totalorder %s15, 3
      %p266 = pnand %p264, %p265
      %p267 = pneg %p266
      // Predicated region
      $region41: #{encoder_net_forward.1} parent=5 // pred_check
        _
      $region42: #{encoder_net_forward.1} parent=5 // pred_check_branch
        %269 = sbr.rel (%p266) target = $region44
      $region43: #{encoder_net_forward.1} parent=5 // pred_region
        %s270 = ssub.s32 %s15, 1
        // Predicated region
        $region45: #{encoder_net_forward.1} parent=43 // pred_check
          %p271 = pneg %p62
        $region46: #{encoder_net_forward.1} parent=43 // pred_check_branch
          %273 = sbr.rel (%p271) target = $region48
        $region47: #{encoder_net_forward.1} parent=43 // pred_region
          %274 = dma.done [#allocation3], 55296
        $region48: #{encoder_net_forward.1} parent=43 // pred_fallthru
          _
        // Predicated region
        $region49: #{encoder_net_forward.1} parent=43 // pred_check
          %p275 = pneg %p83
        $region50: #{encoder_net_forward.1} parent=43 // pred_check_branch
          %277 = sbr.rel (%p275) target = $region52
        $region51: #{encoder_net_forward.1} parent=43 // pred_region
          %278 = dma.done [#allocation5], 48
        $region52: #{encoder_net_forward.1} parent=43 // pred_fallthru
          _
        // Predicated region
        $region53: #{encoder_net_forward.1} parent=43 // pred_check
          %p279 = pneg %p104
        $region54: #{encoder_net_forward.1} parent=43 // pred_check_branch
          %281 = sbr.rel (%p279) target = $region56
        $region55: #{encoder_net_forward.1} parent=43 // pred_region
          %282 = dma.done [#allocation5], 16128
        $region56: #{encoder_net_forward.1} parent=43 // pred_fallthru
          _
        // Predicated region
        $region57: #{encoder_net_forward.1} parent=43 // pred_check
          %p283 = pneg %p125
        $region58: #{encoder_net_forward.1} parent=43 // pred_check_branch
          %285 = sbr.rel (%p283) target = $region60
        $region59: #{encoder_net_forward.1} parent=43 // pred_region
          %286 = dma.done [#allocation8], 2304
        $region60: #{encoder_net_forward.1} parent=43 // pred_fallthru
          _
        // Predicated region
        $region61: #{encoder_net_forward.1} parent=43 // pred_check
          %p287 = pneg %p146
        $region62: #{encoder_net_forward.1} parent=43 // pred_check_branch
          %289 = sbr.rel (%p287) target = $region64
        $region63: #{encoder_net_forward.1} parent=43 // pred_region
          %290 = dma.done [#allocation8], 1152
        $region64: #{encoder_net_forward.1} parent=43 // pred_fallthru
          _
        %p291 = scmp.lt.s32.totalorder %s20, 1
        %s292 = scalar_select %p291, %s20, 1
        %s293 = smul.addr %s292, 32
        %s294 = smul.addr %s293, 8
        %s295 = scalar_lea.vmem %s0, %s294
        %p296 = pneg %p41
        %p297 = pneg %p38
        %p298 = pneg %p62
        %p299 = pneg %p59
        %p300 = pneg %p83
        %p301 = pneg %p80
        %p302 = pneg %p104
        %p303 = pneg %p101
        %p304 = pneg %p125
        %p305 = pneg %p122
        %p306 = pneg %p146
        %p307 = pneg %p143
        %p308 = pneg %p172
        %p309 = pneg %p169
        %p310 = scmp.lt.s32.totalorder %s20, 1
        %s311 = scalar_select %p310, %s20, 1
        %s312 = smul.addr %s311, 8
        %s313 = scalar_lea.vmem %s6, %s312
        %p314 = scmp.lt.s32.totalorder %s20, 1
        %s315 = scalar_select %p314, %s20, 1
        %s316 = smul.addr %s315, 32
        %s317 = smul.addr %s316, 8
        %s318 = scalar_lea.vmem %s0, %s317
        %p319 = scmp.lt.s32.totalorder %s20, 1
        %s320 = scalar_select %p319, %s20, 1
        %s321 = smul.addr %s320, 8
        %s322 = scalar_lea.vmem %s6, %s321
        %v323 = vld [vmem:[%s318] sm:$0xff]
        %v324 = vld [vmem:[%s318 + $0x8] sm:$0xff]
        %v325 = vld [vmem:[%s318 + $0x10] sm:$0xff]
        %v326 = vld [vmem:[%s318 + $0x18] sm:$0xff]
        %v327 = vld [vmem:[%s318 + $0x20] sm:$0xff]
        %v328 = vld [vmem:[%s318 + $0x28] sm:$0xff]
        %v329 = vld [vmem:[%s318 + $0x30] sm:$0xff]
        %v330 = vld [vmem:[%s318 + $0x38] sm:$0xff]
        %v331 = vld [vmem:[%s318 + $0x40] sm:$0xff]
        %v332 = vld [vmem:[%s318 + $0x48] sm:$0xff]
        %v333 = vld [vmem:[%s318 + $0x50] sm:$0xff]
        %v334 = vld [vmem:[%s318 + $0x58] sm:$0xff]
        %v335 = vld [vmem:[%s318 + $0x60] sm:$0xff]
        %v336 = vld [vmem:[%s318 + $0x68] sm:$0xff]
        %v337 = vld [vmem:[%s318 + $0x70] sm:$0xff]
        %v338 = vld [vmem:[%s318 + $0x78] sm:$0xff]
        %v339 = vld [vmem:[%s318 + $0x80] sm:$0xff]
        %v340 = vld [vmem:[%s318 + $0x88] sm:$0xff]
        %v341 = vld [vmem:[%s318 + $0x90] sm:$0xff]
        %v342 = vld [vmem:[%s318 + $0x98] sm:$0xff]
        %v343 = vld [vmem:[%s318 + $0xa0] sm:$0xff]
        %v344 = vld [vmem:[%s318 + $0xa8] sm:$0xff]
        %v345 = vld [vmem:[%s318 + $0xb0] sm:$0xff]
        %v346 = vld [vmem:[%s318 + $0xb8] sm:$0xff]
        %v347 = vld [vmem:[%s318 + $0xc0] sm:$0xff]
        %v348 = vld [vmem:[%s318 + $0xc8] sm:$0xff]
        %v349 = vld [vmem:[%s318 + $0xd0] sm:$0xff]
        %v350 = vld [vmem:[%s318 + $0xd8] sm:$0xff]
        %v351 = vld [vmem:[%s318 + $0xe0] sm:$0xff]
        %v352 = vld [vmem:[%s318 + $0xe8] sm:$0xff]
        %v353 = vld [vmem:[%s318 + $0xf0] sm:$0xff]
        %v354 = vld [vmem:[%s318 + $0xf8] sm:$0xff]
        %v355 = vld [vmem:[#allocation6] sm:$0xff]
        %v356 = vld [vmem:[#allocation6 + $0x8] sm:$0xff]
        %v357 = vld [vmem:[#allocation6 + $0x10] sm:$0xff]
        %v358 = vld [vmem:[#allocation6 + $0x18] sm:$0xff]
        %v359 = vld [vmem:[#allocation6 + $0x20] sm:$0xff]
        %v360 = vld [vmem:[#allocation6 + $0x28] sm:$0xff]
        %v361 = vld [vmem:[#allocation6 + $0x30] sm:$0xff]
        %v362 = vld [vmem:[#allocation6 + $0x38] sm:$0xff]
        %v363 = vld [vmem:[#allocation6 + $0x40] sm:$0xff]
        %v364 = vld [vmem:[#allocation6 + $0x48] sm:$0xff]
        %v365 = vld [vmem:[#allocation6 + $0x50] sm:$0xff]
        %v366 = vld [vmem:[#allocation6 + $0x58] sm:$0xff]
        %v367 = vld [vmem:[#allocation6 + $0x60] sm:$0xff]
        %v368 = vld [vmem:[#allocation6 + $0x68] sm:$0xff]
        %369 = vmatprep.subr.mxu0 0.0
        %370 = vmatpush1.msra.mxu0 %v338
        %371 = vmatprep.subr.mxu0 0.0
        %372 = vmatpush1.msra.mxu0 %v337
        %373 = vmatprep.subr.mxu0 0.0
        %374 = vmatpush1.msra.mxu0 %v336
        %375 = vmatprep.subr.mxu0 0.0
        %376 = vmatpush1.msra.mxu0 %v335
        %377 = vmatprep.subr.mxu0 0.0
        %378 = vmatpush1.msra.mxu0 %v334
        %379 = vmatprep.subr.mxu0 0.0
        %380 = vmatpush1.msra.mxu0 %v333
        %381 = vmatprep.subr.mxu0 0.0
        %382 = vmatpush1.msra.mxu0 %v332
        %383 = vmatprep.subr.mxu0 0.0
        %384 = vmatpush1.msra.mxu0 %v331
        %385 = vmatprep.subr.mxu0 0.0
        %386 = vmatpush1.msra.mxu0 %v330
        %387 = vmatprep.subr.mxu0 0.0
        %388 = vmatpush1.msra.mxu0 %v329
        %389 = vmatprep.subr.mxu0 0.0
        %390 = vmatpush1.msra.mxu0 %v328
        %391 = vmatprep.subr.mxu0 0.0
        %392 = vmatpush1.msra.mxu0 %v327
        %393 = vmatprep.subr.mxu0 0.0
        %394 = vmatpush1.msra.mxu0 %v326
        %395 = vmatprep.subr.mxu0 0.0
        %396 = vmatpush1.msra.mxu0 %v325
        %397 = vmatprep.subr.mxu0 0.0
        %398 = vmatpush1.msra.mxu0 %v324
        %399 = vmatprep.subr.mxu0 0.0
        %400 = vmatpush1.msra.mxu0 %v323
        %401 = vmatprep.subr.mxu0 0.0
        %402 = vmatpush2.msra.mxu0 %v354
        %403 = vmatprep.subr.mxu0 0.0
        %404 = vmatpush2.msra.mxu0 %v353
        %405 = vmatprep.subr.mxu0 0.0
        %406 = vmatpush2.msra.mxu0 %v352
        %407 = vmatprep.subr.mxu0 0.0
        %408 = vmatpush2.msra.mxu0 %v351
        %409 = vmatprep.subr.mxu0 0.0
        %410 = vmatpush2.msra.mxu0 %v350
        %411 = vmatprep.subr.mxu0 0.0
        %412 = vmatpush2.msra.mxu0 %v349
        %413 = vmatprep.subr.mxu0 0.0
        %414 = vmatpush2.msra.mxu0 %v348
        %415 = vmatprep.subr.mxu0 0.0
        %416 = vmatpush2.msra.mxu0 %v347
        %417 = vmatprep.subr.mxu0 0.0
        %418 = vmatpush2.msra.mxu0 %v346
        %419 = vmatprep.subr.mxu0 0.0
        %420 = vmatpush2.msra.mxu0 %v345
        %421 = vmatprep.subr.mxu0 0.0
        %422 = vmatpush2.msra.mxu0 %v344
        %423 = vmatprep.subr.mxu0 0.0
        %424 = vmatpush2.msra.mxu0 %v343
        %425 = vmatprep.subr.mxu0 0.0
        %426 = vmatpush2.msra.mxu0 %v342
        %427 = vmatprep.subr.mxu0 0.0
        %428 = vmatpush2.msra.mxu0 %v341
        %429 = vmatprep.subr.mxu0 0.0
        %430 = vmatpush2.msra.mxu0 %v340
        %431 = vmatprep.subr.mxu0 0.0
        %432 = vmatpush2.msra.mxu0 %v339
        %433 = vmatprep.mubr.f32.mxu0 %v356
        %434 = vmatmul.mubr.f32.gmra.mxu0 %v355
        %v435 = vpop.f32.mrf.mxu0
        %v436 = vadd.f32 0.0, %v435
        %v437 = vpop.f32.mrf.mxu0
        %438 = vmatprep.mubr.f32.mxu0 %v358
        %439 = vmatmul.mubr.f32.gmra.mxu0 %v357
        %v440 = vpop.f32.mrf.mxu0
        %v441 = vadd.f32 0.0, %v440
        %v442 = vpop.f32.mrf.mxu0
        %443 = vmatprep.mubr.f32.mxu0 %v360
        %444 = vmatmul.mubr.f32.gmra.mxu0 %v359
        %v445 = vpop.f32.mrf.mxu0
        %v446 = vadd.f32 0.0, %v445
        %v447 = vpop.f32.mrf.mxu0
        %448 = vmatprep.mubr.f32.mxu0 %v362
        %449 = vmatmul.mubr.f32.gmra.mxu0 %v361
        %v450 = vpop.f32.mrf.mxu0
        %v451 = vadd.f32 0.0, %v450
        %v452 = vpop.f32.mrf.mxu0
        %453 = vmatprep.mubr.f32.mxu0 %v364
        %454 = vmatmul.mubr.f32.gmra.mxu0 %v363
        %v455 = vpop.f32.mrf.mxu0
        %v456 = vadd.f32 0.0, %v455
        %v457 = vpop.f32.mrf.mxu0
        %458 = vmatprep.mubr.f32.mxu0 %v366
        %459 = vmatmul.mubr.f32.gmra.mxu0 %v365
        %v460 = vpop.f32.mrf.mxu0
        %v461 = vadd.f32 0.0, %v460
        %v462 = vpop.f32.mrf.mxu0
        %463 = vmatprep.mubr.f32.mxu0 %v368
        %464 = vmatmul.mubr.f32.gmra.mxu0 %v367
        %v465 = vpop.f32.mrf.mxu0
        %v466 = vadd.f32 0.0, %v465
        %v467 = vpop.f32.mrf.mxu0
        %468 = vdwg.mxu0
        %v469 = vld [vmem:[#allocation2] sm:$0xff]
        %v470 = vld [vmem:[#allocation2 + $0x8] sm:$0xff]
        %v471 = vld [vmem:[#allocation2 + $0x10] sm:$0xff]
        %v472 = vld [vmem:[#allocation2 + $0x18] sm:$0xff]
        %v473 = vld [vmem:[#allocation2 + $0x20] sm:$0xff]
        %v474 = vld [vmem:[#allocation2 + $0x28] sm:$0xff]
        %v475 = vld [vmem:[#allocation2 + $0x30] sm:$0xff]
        %v476 = vld [vmem:[#allocation2 + $0x38] sm:$0xff]
        %v477 = vld [vmem:[#allocation2 + $0x40] sm:$0xff]
        %v478 = vld [vmem:[#allocation2 + $0x48] sm:$0xff]
        %v479 = vld [vmem:[#allocation2 + $0x50] sm:$0xff]
        %v480 = vld [vmem:[#allocation2 + $0x58] sm:$0xff]
        %v481 = vld [vmem:[#allocation2 + $0x60] sm:$0xff]
        %v482 = vld [vmem:[#allocation2 + $0x68] sm:$0xff]
        %v483 = vld [vmem:[#allocation2 + $0x70] sm:$0xff]
        %v484 = vld [vmem:[#allocation2 + $0x78] sm:$0xff]
        %s485 = scalar_lea.vmem [#allocation6], 112
        %v486 = vld [vmem:[%s485] sm:$0xff]
        %v487 = vld [vmem:[%s485 + $0x8] sm:$0xff]
        %v488 = vld [vmem:[%s485 + $0x10] sm:$0xff]
        %v489 = vld [vmem:[%s485 + $0x18] sm:$0xff]
        %v490 = vld [vmem:[%s485 + $0x20] sm:$0xff]
        %v491 = vld [vmem:[%s485 + $0x28] sm:$0xff]
        %v492 = vld [vmem:[%s485 + $0x30] sm:$0xff]
        %v493 = vld [vmem:[%s485 + $0x38] sm:$0xff]
        %v494 = vld [vmem:[%s485 + $0x40] sm:$0xff]
        %v495 = vld [vmem:[%s485 + $0x48] sm:$0xff]
        %v496 = vld [vmem:[%s485 + $0x50] sm:$0xff]
        %v497 = vld [vmem:[%s485 + $0x58] sm:$0xff]
        %v498 = vld [vmem:[%s485 + $0x60] sm:$0xff]
        %v499 = vld [vmem:[%s485 + $0x68] sm:$0xff]
        %500 = vmatprep.subr.mxu0 0.0
        %501 = vmatpush1.msra.mxu0 %v338
        %502 = vmatprep.subr.mxu0 0.0
        %503 = vmatpush1.msra.mxu0 %v337
        %504 = vmatprep.subr.mxu0 0.0
        %505 = vmatpush1.msra.mxu0 %v336
        %506 = vmatprep.subr.mxu0 0.0
        %507 = vmatpush1.msra.mxu0 %v335
        %508 = vmatprep.subr.mxu0 0.0
        %509 = vmatpush1.msra.mxu0 %v334
        %510 = vmatprep.subr.mxu0 0.0
        %511 = vmatpush1.msra.mxu0 %v333
        %512 = vmatprep.subr.mxu0 0.0
        %513 = vmatpush1.msra.mxu0 %v332
        %514 = vmatprep.subr.mxu0 0.0
        %515 = vmatpush1.msra.mxu0 %v331
        %516 = vmatprep.subr.mxu0 0.0
        %517 = vmatpush1.msra.mxu0 %v330
        %518 = vmatprep.subr.mxu0 0.0
        %519 = vmatpush1.msra.mxu0 %v329
        %520 = vmatprep.subr.mxu0 0.0
        %521 = vmatpush1.msra.mxu0 %v328
        %522 = vmatprep.subr.mxu0 0.0
        %523 = vmatpush1.msra.mxu0 %v327
        %524 = vmatprep.subr.mxu0 0.0
        %525 = vmatpush1.msra.mxu0 %v326
        %526 = vmatprep.subr.mxu0 0.0
        %527 = vmatpush1.msra.mxu0 %v325
        %528 = vmatprep.subr.mxu0 0.0
        %529 = vmatpush1.msra.mxu0 %v324
        %530 = vmatprep.subr.mxu0 0.0
        %531 = vmatpush1.msra.mxu0 %v323
        %532 = vmatprep.subr.mxu0 0.0
        %533 = vmatpush2.msra.mxu0 %v354
        %534 = vmatprep.subr.mxu0 0.0
        %535 = vmatpush2.msra.mxu0 %v353
        %536 = vmatprep.subr.mxu0 0.0
        %537 = vmatpush2.msra.mxu0 %v352
        %538 = vmatprep.subr.mxu0 0.0
        %539 = vmatpush2.msra.mxu0 %v351
        %540 = vmatprep.subr.mxu0 0.0
        %541 = vmatpush2.msra.mxu0 %v350
        %542 = vmatprep.subr.mxu0 0.0
        %543 = vmatpush2.msra.mxu0 %v349
        %544 = vmatprep.subr.mxu0 0.0
        %545 = vmatpush2.msra.mxu0 %v348
        %546 = vmatprep.subr.mxu0 0.0
        %547 = vmatpush2.msra.mxu0 %v347
        %548 = vmatprep.subr.mxu0 0.0
        %549 = vmatpush2.msra.mxu0 %v346
        %550 = vmatprep.subr.mxu0 0.0
        %551 = vmatpush2.msra.mxu0 %v345
        %552 = vmatprep.subr.mxu0 0.0
        %553 = vmatpush2.msra.mxu0 %v344
        %554 = vmatprep.subr.mxu0 0.0
        %555 = vmatpush2.msra.mxu0 %v343
        %556 = vmatprep.subr.mxu0 0.0
        %557 = vmatpush2.msra.mxu0 %v342
        %558 = vmatprep.subr.mxu0 0.0
        %559 = vmatpush2.msra.mxu0 %v341
        %560 = vmatprep.subr.mxu0 0.0
        %561 = vmatpush2.msra.mxu0 %v340
        %562 = vmatprep.subr.mxu0 0.0
        %563 = vmatpush2.msra.mxu0 %v339
        %564 = vmatprep.mubr.f32.mxu0 %v487
        %565 = vmatmul.mubr.f32.gmra.mxu0 %v486
        %v566 = vpop.f32.mrf.mxu0
        %v567 = vadd.f32 0.0, %v566
        %v568 = vpop.f32.mrf.mxu0
        %569 = vmatprep.mubr.f32.mxu0 %v489
        %570 = vmatmul.mubr.f32.gmra.mxu0 %v488
        %v571 = vpop.f32.mrf.mxu0
        %v572 = vadd.f32 0.0, %v571
        %v573 = vpop.f32.mrf.mxu0
        %574 = vmatprep.mubr.f32.mxu0 %v491
        %575 = vmatmul.mubr.f32.gmra.mxu0 %v490
        %v576 = vpop.f32.mrf.mxu0
        %v577 = vadd.f32 0.0, %v576
        %v578 = vpop.f32.mrf.mxu0
        %579 = vmatprep.mubr.f32.mxu0 %v493
        %580 = vmatmul.mubr.f32.gmra.mxu0 %v492
        %v581 = vpop.f32.mrf.mxu0
        %v582 = vadd.f32 0.0, %v581
        %v583 = vpop.f32.mrf.mxu0
        %584 = vmatprep.mubr.f32.mxu0 %v495
        %585 = vmatmul.mubr.f32.gmra.mxu0 %v494
        %v586 = vpop.f32.mrf.mxu0
        %v587 = vadd.f32 0.0, %v586
        %v588 = vpop.f32.mrf.mxu0
        %589 = vmatprep.mubr.f32.mxu0 %v497
        %590 = vmatmul.mubr.f32.gmra.mxu0 %v496
        %v591 = vpop.f32.mrf.mxu0
        %v592 = vadd.f32 0.0, %v591
        %v593 = vpop.f32.mrf.mxu0
        %594 = vmatprep.mubr.f32.mxu0 %v499
        %595 = vmatmul.mubr.f32.gmra.mxu0 %v498
        %v596 = vpop.f32.mrf.mxu0
        %v597 = vadd.f32 0.0, %v596
        %v598 = vpop.f32.mrf.mxu0
        %599 = vdwg.mxu0
        %s600 = scalar_lea.vmem [#allocation2], 128
        %v601 = vld [vmem:[%s600] sm:$0xff]
        %v602 = vld [vmem:[%s600 + $0x8] sm:$0xff]
        %v603 = vld [vmem:[%s600 + $0x10] sm:$0xff]
        %v604 = vld [vmem:[%s600 + $0x18] sm:$0xff]
        %v605 = vld [vmem:[%s600 + $0x20] sm:$0xff]
        %v606 = vld [vmem:[%s600 + $0x28] sm:$0xff]
        %v607 = vld [vmem:[%s600 + $0x30] sm:$0xff]
        %v608 = vld [vmem:[%s600 + $0x38] sm:$0xff]
        %v609 = vld [vmem:[%s600 + $0x40] sm:$0xff]
        %v610 = vld [vmem:[%s600 + $0x48] sm:$0xff]
        %v611 = vld [vmem:[%s600 + $0x50] sm:$0xff]
        %v612 = vld [vmem:[%s600 + $0x58] sm:$0xff]
        %v613 = vld [vmem:[%s600 + $0x60] sm:$0xff]
        %v614 = vld [vmem:[%s600 + $0x68] sm:$0xff]
        %v615 = vld [vmem:[%s600 + $0x70] sm:$0xff]
        %v616 = vld [vmem:[%s600 + $0x78] sm:$0xff]
        %617 = vmatprep.subr.mxu0 0.0
        %618 = vmatpush1.msra.mxu0 %v616
        %619 = vmatprep.subr.mxu0 0.0
        %620 = vmatpush1.msra.mxu0 %v615
        %621 = vmatprep.subr.mxu0 0.0
        %622 = vmatpush1.msra.mxu0 %v614
        %623 = vmatprep.subr.mxu0 0.0
        %624 = vmatpush1.msra.mxu0 %v613
        %625 = vmatprep.subr.mxu0 0.0
        %626 = vmatpush1.msra.mxu0 %v612
        %627 = vmatprep.subr.mxu0 0.0
        %628 = vmatpush1.msra.mxu0 %v611
        %629 = vmatprep.subr.mxu0 0.0
        %630 = vmatpush1.msra.mxu0 %v610
        %631 = vmatprep.subr.mxu0 0.0
        %632 = vmatpush1.msra.mxu0 %v609
        %633 = vmatprep.subr.mxu0 0.0
        %634 = vmatpush1.msra.mxu0 %v608
        %635 = vmatprep.subr.mxu0 0.0
        %636 = vmatpush1.msra.mxu0 %v607
        %637 = vmatprep.subr.mxu0 0.0
        %638 = vmatpush1.msra.mxu0 %v606
        %639 = vmatprep.subr.mxu0 0.0
        %640 = vmatpush1.msra.mxu0 %v605
        %641 = vmatprep.subr.mxu0 0.0
        %642 = vmatpush1.msra.mxu0 %v604
        %643 = vmatprep.subr.mxu0 0.0
        %644 = vmatpush1.msra.mxu0 %v603
        %645 = vmatprep.subr.mxu0 0.0
        %646 = vmatpush1.msra.mxu0 %v602
        %647 = vmatprep.subr.mxu0 0.0
        %648 = vmatpush1.msra.mxu0 %v601
        %649 = vmatprep.subr.mxu0 0.0
        %650 = vmatpush2.msra.mxu0 0.0
        %651 = vmatprep.subr.mxu0 0.0
        %652 = vmatpush2.msra.mxu0 0.0
        %653 = vmatprep.subr.mxu0 0.0
        %654 = vmatpush2.msra.mxu0 0.0
        %655 = vmatprep.subr.mxu0 0.0
        %656 = vmatpush2.msra.mxu0 0.0
        %657 = vmatprep.subr.mxu0 0.0
        %658 = vmatpush2.msra.mxu0 0.0
        %659 = vmatprep.subr.mxu0 0.0
        %660 = vmatpush2.msra.mxu0 0.0
        %661 = vmatprep.subr.mxu0 0.0
        %662 = vmatpush2.msra.mxu0 0.0
        %663 = vmatprep.subr.mxu0 0.0
        %664 = vmatpush2.msra.mxu0 0.0
        %665 = vmatprep.subr.mxu0 0.0
        %666 = vmatpush2.msra.mxu0 0.0
        %667 = vmatprep.subr.mxu0 0.0
        %668 = vmatpush2.msra.mxu0 0.0
        %669 = vmatprep.subr.mxu0 0.0
        %670 = vmatpush2.msra.mxu0 0.0
        %671 = vmatprep.subr.mxu0 0.0
        %672 = vmatpush2.msra.mxu0 0.0
        %673 = vmatprep.subr.mxu0 0.0
        %674 = vmatpush2.msra.mxu0 0.0
        %675 = vmatprep.subr.mxu0 0.0
        %676 = vmatpush2.msra.mxu0 0.0
        %677 = vmatprep.subr.mxu0 0.0
        %678 = vmatpush2.msra.mxu0 0.0
        %679 = vmatprep.subr.mxu0 0.0
        %680 = vmatpush2.msra.mxu0 0.0
        %681 = vmatprep.mubr.f32.mxu0 0.0
        %682 = vmatmul.mubr.f32.gmra.mxu0 %v567
        %v683 = vpop.f32.mrf.mxu0
        %v684 = vadd.f32 0.0, %v683
        %v685 = vpop.f32.mrf.mxu0
        %686 = vmatprep.mubr.f32.mxu0 0.0
        %687 = vmatmul.mubr.f32.gmra.mxu0 %v572
        %v688 = vpop.f32.mrf.mxu0
        %v689 = vadd.f32 0.0, %v688
        %v690 = vpop.f32.mrf.mxu0
        %691 = vmatprep.mubr.f32.mxu0 0.0
        %692 = vmatmul.mubr.f32.gmra.mxu0 %v577
        %v693 = vpop.f32.mrf.mxu0
        %v694 = vadd.f32 0.0, %v693
        %v695 = vpop.f32.mrf.mxu0
        %696 = vmatprep.mubr.f32.mxu0 0.0
        %697 = vmatmul.mubr.f32.gmra.mxu0 %v582
        %v698 = vpop.f32.mrf.mxu0
        %v699 = vadd.f32 0.0, %v698
        %v700 = vpop.f32.mrf.mxu0
        %701 = vmatprep.mubr.f32.mxu0 0.0
        %702 = vmatmul.mubr.f32.gmra.mxu0 %v587
        %v703 = vpop.f32.mrf.mxu0
        %v704 = vadd.f32 0.0, %v703
        %v705 = vpop.f32.mrf.mxu0
        %706 = vmatprep.mubr.f32.mxu0 0.0
        %707 = vmatmul.mubr.f32.gmra.mxu0 %v592
        %v708 = vpop.f32.mrf.mxu0
        %v709 = vadd.f32 0.0, %v708
        %v710 = vpop.f32.mrf.mxu0
        %711 = vmatprep.mubr.f32.mxu0 0.0
        %712 = vmatmul.mubr.f32.gmra.mxu0 %v597
        %v713 = vpop.f32.mrf.mxu0
        %v714 = vadd.f32 0.0, %v713
        %v715 = vpop.f32.mrf.mxu0
        %716 = vdwg.mxu0
        %717 = vmatprep.subr.mxu0 0.0
        %718 = vmatpush1.msra.mxu0 %v484
        %719 = vmatprep.subr.mxu0 0.0
        %720 = vmatpush1.msra.mxu0 %v483
        %721 = vmatprep.subr.mxu0 0.0
        %722 = vmatpush1.msra.mxu0 %v482
        %723 = vmatprep.subr.mxu0 0.0
        %724 = vmatpush1.msra.mxu0 %v481
        %725 = vmatprep.subr.mxu0 0.0
        %726 = vmatpush1.msra.mxu0 %v480
        %727 = vmatprep.subr.mxu0 0.0
        %728 = vmatpush1.msra.mxu0 %v479
        %729 = vmatprep.subr.mxu0 0.0
        %730 = vmatpush1.msra.mxu0 %v478
        %731 = vmatprep.subr.mxu0 0.0
        %732 = vmatpush1.msra.mxu0 %v477
        %733 = vmatprep.subr.mxu0 0.0
        %734 = vmatpush1.msra.mxu0 %v476
        %735 = vmatprep.subr.mxu0 0.0
        %736 = vmatpush1.msra.mxu0 %v475
        %737 = vmatprep.subr.mxu0 0.0
        %738 = vmatpush1.msra.mxu0 %v474
        %739 = vmatprep.subr.mxu0 0.0
        %740 = vmatpush1.msra.mxu0 %v473
        %741 = vmatprep.subr.mxu0 0.0
        %742 = vmatpush1.msra.mxu0 %v472
        %743 = vmatprep.subr.mxu0 0.0
        %744 = vmatpush1.msra.mxu0 %v471
        %745 = vmatprep.subr.mxu0 0.0
        %746 = vmatpush1.msra.mxu0 %v470
        %747 = vmatprep.subr.mxu0 0.0
        %748 = vmatpush1.msra.mxu0 %v469
        %749 = vmatprep.subr.mxu0 0.0
        %750 = vmatpush2.msra.mxu0 0.0
        %751 = vmatprep.subr.mxu0 0.0
        %752 = vmatpush2.msra.mxu0 0.0
        %753 = vmatprep.subr.mxu0 0.0
        %754 = vmatpush2.msra.mxu0 0.0
        %755 = vmatprep.subr.mxu0 0.0
        %756 = vmatpush2.msra.mxu0 0.0
        %757 = vmatprep.subr.mxu0 0.0
        %758 = vmatpush2.msra.mxu0 0.0
        %759 = vmatprep.subr.mxu0 0.0
        %760 = vmatpush2.msra.mxu0 0.0
        %761 = vmatprep.subr.mxu0 0.0
        %762 = vmatpush2.msra.mxu0 0.0
        %763 = vmatprep.subr.mxu0 0.0
        %764 = vmatpush2.msra.mxu0 0.0
        %765 = vmatprep.subr.mxu0 0.0
        %766 = vmatpush2.msra.mxu0 0.0
        %767 = vmatprep.subr.mxu0 0.0
        %768 = vmatpush2.msra.mxu0 0.0
        %769 = vmatprep.subr.mxu0 0.0
        %770 = vmatpush2.msra.mxu0 0.0
        %771 = vmatprep.subr.mxu0 0.0
        %772 = vmatpush2.msra.mxu0 0.0
        %773 = vmatprep.subr.mxu0 0.0
        %774 = vmatpush2.msra.mxu0 0.0
        %775 = vmatprep.subr.mxu0 0.0
        %776 = vmatpush2.msra.mxu0 0.0
        %777 = vmatprep.subr.mxu0 0.0
        %778 = vmatpush2.msra.mxu0 0.0
        %779 = vmatprep.subr.mxu0 0.0
        %780 = vmatpush2.msra.mxu0 0.0
        %781 = vmatprep.mubr.f32.mxu0 0.0
        %782 = vmatmul.mubr.f32.gmra.mxu0 %v436
        %v783 = vpop.f32.mrf.mxu0
        %v784 = vadd.f32 %v684, %v783
        %v785 = vpop.f32.mrf.mxu0
        %786 = vmatprep.mubr.f32.mxu0 0.0
        %787 = vmatmul.mubr.f32.gmra.mxu0 %v441
        %v788 = vpop.f32.mrf.mxu0
        %v789 = vadd.f32 %v689, %v788
        %v790 = vpop.f32.mrf.mxu0
        %791 = vmatprep.mubr.f32.mxu0 0.0
        %792 = vmatmul.mubr.f32.gmra.mxu0 %v446
        %v793 = vpop.f32.mrf.mxu0
        %v794 = vadd.f32 %v694, %v793
        %v795 = vpop.f32.mrf.mxu0
        %796 = vmatprep.mubr.f32.mxu0 0.0
        %797 = vmatmul.mubr.f32.gmra.mxu0 %v451
        %v798 = vpop.f32.mrf.mxu0
        %v799 = vadd.f32 %v699, %v798
        %v800 = vpop.f32.mrf.mxu0
        %801 = vmatprep.mubr.f32.mxu0 0.0
        %802 = vmatmul.mubr.f32.gmra.mxu0 %v456
        %v803 = vpop.f32.mrf.mxu0
        %v804 = vadd.f32 %v704, %v803
        %v805 = vpop.f32.mrf.mxu0
        %806 = vmatprep.mubr.f32.mxu0 0.0
        %807 = vmatmul.mubr.f32.gmra.mxu0 %v461
        %v808 = vpop.f32.mrf.mxu0
        %v809 = vadd.f32 %v709, %v808
        %v810 = vpop.f32.mrf.mxu0
        %811 = vmatprep.mubr.f32.mxu0 0.0
        %812 = vmatmul.mubr.f32.gmra.mxu0 %v466
        %v813 = vpop.f32.mrf.mxu0
        %v814 = vadd.f32 %v714, %v813
        %v815 = vpop.f32.mrf.mxu0
        %816 = vdwg.mxu0
        %s817 = scalar_lea.vmem [#allocation6], 224
        %v818 = vld [vmem:[%s817] sm:$0xff]
        %v819 = vld [vmem:[%s817 + $0x8] sm:$0xff]
        %v820 = vld [vmem:[%s817 + $0x10] sm:$0xff]
        %v821 = vld [vmem:[%s817 + $0x18] sm:$0xff]
        %v822 = vld [vmem:[%s817 + $0x20] sm:$0xff]
        %v823 = vld [vmem:[%s817 + $0x28] sm:$0xff]
        %v824 = vld [vmem:[%s817 + $0x30] sm:$0xff]
        %v825 = vld [vmem:[%s817 + $0x38] sm:$0xff]
        %v826 = vld [vmem:[%s817 + $0x40] sm:$0xff]
        %v827 = vld [vmem:[%s817 + $0x48] sm:$0xff]
        %v828 = vld [vmem:[%s817 + $0x50] sm:$0xff]
        %v829 = vld [vmem:[%s817 + $0x58] sm:$0xff]
        %v830 = vld [vmem:[%s817 + $0x60] sm:$0xff]
        %v831 = vld [vmem:[%s817 + $0x68] sm:$0xff]
        %832 = vmatprep.subr.mxu0 0.0
        %833 = vmatpush1.msra.mxu0 %v338
        %834 = vmatprep.subr.mxu0 0.0
        %835 = vmatpush1.msra.mxu0 %v337
        %836 = vmatprep.subr.mxu0 0.0
        %837 = vmatpush1.msra.mxu0 %v336
        %838 = vmatprep.subr.mxu0 0.0
        %839 = vmatpush1.msra.mxu0 %v335
        %840 = vmatprep.subr.mxu0 0.0
        %841 = vmatpush1.msra.mxu0 %v334
        %842 = vmatprep.subr.mxu0 0.0
        %843 = vmatpush1.msra.mxu0 %v333
        %844 = vmatprep.subr.mxu0 0.0
        %845 = vmatpush1.msra.mxu0 %v332
        %846 = vmatprep.subr.mxu0 0.0
        %847 = vmatpush1.msra.mxu0 %v331
        %848 = vmatprep.subr.mxu0 0.0
        %849 = vmatpush1.msra.mxu0 %v330
        %850 = vmatprep.subr.mxu0 0.0
        %851 = vmatpush1.msra.mxu0 %v329
        %852 = vmatprep.subr.mxu0 0.0
        %853 = vmatpush1.msra.mxu0 %v328
        %854 = vmatprep.subr.mxu0 0.0
        %855 = vmatpush1.msra.mxu0 %v327
        %856 = vmatprep.subr.mxu0 0.0
        %857 = vmatpush1.msra.mxu0 %v326
        %858 = vmatprep.subr.mxu0 0.0
        %859 = vmatpush1.msra.mxu0 %v325
        %860 = vmatprep.subr.mxu0 0.0
        %861 = vmatpush1.msra.mxu0 %v324
        %862 = vmatprep.subr.mxu0 0.0
        %863 = vmatpush1.msra.mxu0 %v323
        %864 = vmatprep.subr.mxu0 0.0
        %865 = vmatpush2.msra.mxu0 %v354
        %866 = vmatprep.subr.mxu0 0.0
        %867 = vmatpush2.msra.mxu0 %v353
        %868 = vmatprep.subr.mxu0 0.0
        %869 = vmatpush2.msra.mxu0 %v352
        %870 = vmatprep.subr.mxu0 0.0
        %871 = vmatpush2.msra.mxu0 %v351
        %872 = vmatprep.subr.mxu0 0.0
        %873 = vmatpush2.msra.mxu0 %v350
        %874 = vmatprep.subr.mxu0 0.0
        %875 = vmatpush2.msra.mxu0 %v349
        %876 = vmatprep.subr.mxu0 0.0
        %877 = vmatpush2.msra.mxu0 %v348
        %878 = vmatprep.subr.mxu0 0.0
        %879 = vmatpush2.msra.mxu0 %v347
        %880 = vmatprep.subr.mxu0 0.0
        %881 = vmatpush2.msra.mxu0 %v346
        %882 = vmatprep.subr.mxu0 0.0
        %883 = vmatpush2.msra.mxu0 %v345
        %884 = vmatprep.subr.mxu0 0.0
        %885 = vmatpush2.msra.mxu0 %v344
        %886 = vmatprep.subr.mxu0 0.0
        %887 = vmatpush2.msra.mxu0 %v343
        %888 = vmatprep.subr.mxu0 0.0
        %889 = vmatpush2.msra.mxu0 %v342
        %890 = vmatprep.subr.mxu0 0.0
        %891 = vmatpush2.msra.mxu0 %v341
        %892 = vmatprep.subr.mxu0 0.0
        %893 = vmatpush2.msra.mxu0 %v340
        %894 = vmatprep.subr.mxu0 0.0
        %895 = vmatpush2.msra.mxu0 %v339
        %896 = vmatprep.mubr.f32.mxu0 %v819
        %897 = vmatmul.mubr.f32.gmra.mxu0 %v818
        %v898 = vpop.f32.mrf.mxu0
        %v899 = vadd.f32 0.0, %v898
        %v900 = vpop.f32.mrf.mxu0
        %901 = vmatprep.mubr.f32.mxu0 %v821
        %902 = vmatmul.mubr.f32.gmra.mxu0 %v820
        %v903 = vpop.f32.mrf.mxu0
        %v904 = vadd.f32 0.0, %v903
        %v905 = vpop.f32.mrf.mxu0
        %906 = vmatprep.mubr.f32.mxu0 %v823
        %907 = vmatmul.mubr.f32.gmra.mxu0 %v822
        %v908 = vpop.f32.mrf.mxu0
        %v909 = vadd.f32 0.0, %v908
        %v910 = vpop.f32.mrf.mxu0
        %911 = vmatprep.mubr.f32.mxu0 %v825
        %912 = vmatmul.mubr.f32.gmra.mxu0 %v824
        %v913 = vpop.f32.mrf.mxu0
        %v914 = vadd.f32 0.0, %v913
        %v915 = vpop.f32.mrf.mxu0
        %916 = vmatprep.mubr.f32.mxu0 %v827
        %917 = vmatmul.mubr.f32.gmra.mxu0 %v826
        %v918 = vpop.f32.mrf.mxu0
        %v919 = vadd.f32 0.0, %v918
        %v920 = vpop.f32.mrf.mxu0
        %921 = vmatprep.mubr.f32.mxu0 %v829
        %922 = vmatmul.mubr.f32.gmra.mxu0 %v828
        %v923 = vpop.f32.mrf.mxu0
        %v924 = vadd.f32 0.0, %v923
        %v925 = vpop.f32.mrf.mxu0
        %926 = vmatprep.mubr.f32.mxu0 %v831
        %927 = vmatmul.mubr.f32.gmra.mxu0 %v830
        %v928 = vpop.f32.mrf.mxu0
        %v929 = vadd.f32 0.0, %v928
        %v930 = vpop.f32.mrf.mxu0
        %931 = vdwg.mxu0
        %s932 = scalar_lea.vmem [#allocation2], 256
        %v933 = vld [vmem:[%s932] sm:$0xff]
        %v934 = vld [vmem:[%s932 + $0x8] sm:$0xff]
        %v935 = vld [vmem:[%s932 + $0x10] sm:$0xff]
        %v936 = vld [vmem:[%s932 + $0x18] sm:$0xff]
        %v937 = vld [vmem:[%s932 + $0x20] sm:$0xff]
        %v938 = vld [vmem:[%s932 + $0x28] sm:$0xff]
        %v939 = vld [vmem:[%s932 + $0x30] sm:$0xff]
        %v940 = vld [vmem:[%s932 + $0x38] sm:$0xff]
        %v941 = vld [vmem:[%s932 + $0x40] sm:$0xff]
        %v942 = vld [vmem:[%s932 + $0x48] sm:$0xff]
        %v943 = vld [vmem:[%s932 + $0x50] sm:$0xff]
        %v944 = vld [vmem:[%s932 + $0x58] sm:$0xff]
        %v945 = vld [vmem:[%s932 + $0x60] sm:$0xff]
        %v946 = vld [vmem:[%s932 + $0x68] sm:$0xff]
        %v947 = vld [vmem:[%s932 + $0x70] sm:$0xff]
        %v948 = vld [vmem:[%s932 + $0x78] sm:$0xff]
        %949 = vmatprep.subr.mxu0 0.0
        %950 = vmatpush1.msra.mxu0 %v948
        %951 = vmatprep.subr.mxu0 0.0
        %952 = vmatpush1.msra.mxu0 %v947
        %953 = vmatprep.subr.mxu0 0.0
        %954 = vmatpush1.msra.mxu0 %v946
        %955 = vmatprep.subr.mxu0 0.0
        %956 = vmatpush1.msra.mxu0 %v945
        %957 = vmatprep.subr.mxu0 0.0
        %958 = vmatpush1.msra.mxu0 %v944
        %959 = vmatprep.subr.mxu0 0.0
        %960 = vmatpush1.msra.mxu0 %v943
        %961 = vmatprep.subr.mxu0 0.0
        %962 = vmatpush1.msra.mxu0 %v942
        %963 = vmatprep.subr.mxu0 0.0
        %964 = vmatpush1.msra.mxu0 %v941
        %965 = vmatprep.subr.mxu0 0.0
        %966 = vmatpush1.msra.mxu0 %v940
        %967 = vmatprep.subr.mxu0 0.0
        %968 = vmatpush1.msra.mxu0 %v939
        %969 = vmatprep.subr.mxu0 0.0
        %970 = vmatpush1.msra.mxu0 %v938
        %971 = vmatprep.subr.mxu0 0.0
        %972 = vmatpush1.msra.mxu0 %v937
        %973 = vmatprep.subr.mxu0 0.0
        %974 = vmatpush1.msra.mxu0 %v936
        %975 = vmatprep.subr.mxu0 0.0
        %976 = vmatpush1.msra.mxu0 %v935
        %977 = vmatprep.subr.mxu0 0.0
        %978 = vmatpush1.msra.mxu0 %v934
        %979 = vmatprep.subr.mxu0 0.0
        %980 = vmatpush1.msra.mxu0 %v933
        %981 = vmatprep.subr.mxu0 0.0
        %982 = vmatpush2.msra.mxu0 0.0
        %983 = vmatprep.subr.mxu0 0.0
        %984 = vmatpush2.msra.mxu0 0.0
        %985 = vmatprep.subr.mxu0 0.0
        %986 = vmatpush2.msra.mxu0 0.0
        %987 = vmatprep.subr.mxu0 0.0
        %988 = vmatpush2.msra.mxu0 0.0
        %989 = vmatprep.subr.mxu0 0.0
        %990 = vmatpush2.msra.mxu0 0.0
        %991 = vmatprep.subr.mxu0 0.0
        %992 = vmatpush2.msra.mxu0 0.0
        %993 = vmatprep.subr.mxu0 0.0
        %994 = vmatpush2.msra.mxu0 0.0
        %995 = vmatprep.subr.mxu0 0.0
        %996 = vmatpush2.msra.mxu0 0.0
        %997 = vmatprep.subr.mxu0 0.0
        %998 = vmatpush2.msra.mxu0 0.0
        %999 = vmatprep.subr.mxu0 0.0
        %1000 = vmatpush2.msra.mxu0 0.0
        %1001 = vmatprep.subr.mxu0 0.0
        %1002 = vmatpush2.msra.mxu0 0.0
        %1003 = vmatprep.subr.mxu0 0.0
        %1004 = vmatpush2.msra.mxu0 0.0
        %1005 = vmatprep.subr.mxu0 0.0
        %1006 = vmatpush2.msra.mxu0 0.0
        %1007 = vmatprep.subr.mxu0 0.0
        %1008 = vmatpush2.msra.mxu0 0.0
        %1009 = vmatprep.subr.mxu0 0.0
        %1010 = vmatpush2.msra.mxu0 0.0
        %1011 = vmatprep.subr.mxu0 0.0
        %1012 = vmatpush2.msra.mxu0 0.0
        %1013 = vmatprep.mubr.f32.mxu0 0.0
        %1014 = vmatmul.mubr.f32.gmra.mxu0 %v899
        %v1015 = vpop.f32.mrf.mxu0
        %v1016 = vadd.f32 0.0, %v1015
        %v1017 = vpop.f32.mrf.mxu0
        %1018 = vmatprep.mubr.f32.mxu0 0.0
        %1019 = vmatmul.mubr.f32.gmra.mxu0 %v904
        %v1020 = vpop.f32.mrf.mxu0
        %v1021 = vadd.f32 0.0, %v1020
        %v1022 = vpop.f32.mrf.mxu0
        %1023 = vmatprep.mubr.f32.mxu0 0.0
        %1024 = vmatmul.mubr.f32.gmra.mxu0 %v909
        %v1025 = vpop.f32.mrf.mxu0
        %v1026 = vadd.f32 0.0, %v1025
        %v1027 = vpop.f32.mrf.mxu0
        %1028 = vmatprep.mubr.f32.mxu0 0.0
        %1029 = vmatmul.mubr.f32.gmra.mxu0 %v914
        %v1030 = vpop.f32.mrf.mxu0
        %v1031 = vadd.f32 0.0, %v1030
        %v1032 = vpop.f32.mrf.mxu0
        %1033 = vmatprep.mubr.f32.mxu0 0.0
        %1034 = vmatmul.mubr.f32.gmra.mxu0 %v919
        %v1035 = vpop.f32.mrf.mxu0
        %v1036 = vadd.f32 0.0, %v1035
        %v1037 = vpop.f32.mrf.mxu0
        %1038 = vmatprep.mubr.f32.mxu0 0.0
        %1039 = vmatmul.mubr.f32.gmra.mxu0 %v924
        %v1040 = vpop.f32.mrf.mxu0
        %v1041 = vadd.f32 0.0, %v1040
        %v1042 = vpop.f32.mrf.mxu0
        %1043 = vmatprep.mubr.f32.mxu0 0.0
        %1044 = vmatmul.mubr.f32.gmra.mxu0 %v929
        %v1045 = vpop.f32.mrf.mxu0
        %v1046 = vadd.f32 0.0, %v1045
        %v1047 = vpop.f32.mrf.mxu0
        %1048 = vdwg.mxu0
        %v1049 = vadd.f32 %v784, %v1016
        %v1050 = vadd.f32 %v789, %v1021
        %v1051 = vadd.f32 %v794, %v1026
        %v1052 = vadd.f32 %v799, %v1031
        %v1053 = vadd.f32 %v804, %v1036
        %v1054 = vadd.f32 %v809, %v1041
        %v1055 = vadd.f32 %v814, %v1046
        %s1056 = scalar_lea.vmem [#allocation6], 336
        %v1057 = vld [vmem:[%s1056] sm:$0xff]
        %v1058 = vld [vmem:[%s1056 + $0x8] sm:$0xff]
        %v1059 = vld [vmem:[%s1056 + $0x10] sm:$0xff]
        %v1060 = vld [vmem:[%s1056 + $0x18] sm:$0xff]
        %v1061 = vld [vmem:[%s1056 + $0x20] sm:$0xff]
        %v1062 = vld [vmem:[%s1056 + $0x28] sm:$0xff]
        %v1063 = vld [vmem:[%s1056 + $0x30] sm:$0xff]
        %v1064 = vld [vmem:[%s1056 + $0x38] sm:$0xff]
        %v1065 = vld [vmem:[%s1056 + $0x40] sm:$0xff]
        %v1066 = vld [vmem:[%s1056 + $0x48] sm:$0xff]
        %v1067 = vld [vmem:[%s1056 + $0x50] sm:$0xff]
        %v1068 = vld [vmem:[%s1056 + $0x58] sm:$0xff]
        %v1069 = vld [vmem:[%s1056 + $0x60] sm:$0xff]
        %v1070 = vld [vmem:[%s1056 + $0x68] sm:$0xff]
        %1071 = vmatprep.subr.mxu0 0.0
        %1072 = vmatpush1.msra.mxu0 %v338
        %1073 = vmatprep.subr.mxu0 0.0
        %1074 = vmatpush1.msra.mxu0 %v337
        %1075 = vmatprep.subr.mxu0 0.0
        %1076 = vmatpush1.msra.mxu0 %v336
        %1077 = vmatprep.subr.mxu0 0.0
        %1078 = vmatpush1.msra.mxu0 %v335
        %1079 = vmatprep.subr.mxu0 0.0
        %1080 = vmatpush1.msra.mxu0 %v334
        %1081 = vmatprep.subr.mxu0 0.0
        %1082 = vmatpush1.msra.mxu0 %v333
        %1083 = vmatprep.subr.mxu0 0.0
        %1084 = vmatpush1.msra.mxu0 %v332
        %1085 = vmatprep.subr.mxu0 0.0
        %1086 = vmatpush1.msra.mxu0 %v331
        %1087 = vmatprep.subr.mxu0 0.0
        %1088 = vmatpush1.msra.mxu0 %v330
        %1089 = vmatprep.subr.mxu0 0.0
        %1090 = vmatpush1.msra.mxu0 %v329
        %1091 = vmatprep.subr.mxu0 0.0
        %1092 = vmatpush1.msra.mxu0 %v328
        %1093 = vmatprep.subr.mxu0 0.0
        %1094 = vmatpush1.msra.mxu0 %v327
        %1095 = vmatprep.subr.mxu0 0.0
        %1096 = vmatpush1.msra.mxu0 %v326
        %1097 = vmatprep.subr.mxu0 0.0
        %1098 = vmatpush1.msra.mxu0 %v325
        %1099 = vmatprep.subr.mxu0 0.0
        %1100 = vmatpush1.msra.mxu0 %v324
        %1101 = vmatprep.subr.mxu0 0.0
        %1102 = vmatpush1.msra.mxu0 %v323
        %1103 = vmatprep.subr.mxu0 0.0
        %1104 = vmatpush2.msra.mxu0 %v354
        %1105 = vmatprep.subr.mxu0 0.0
        %1106 = vmatpush2.msra.mxu0 %v353
        %1107 = vmatprep.subr.mxu0 0.0
        %1108 = vmatpush2.msra.mxu0 %v352
        %1109 = vmatprep.subr.mxu0 0.0
        %1110 = vmatpush2.msra.mxu0 %v351
        %1111 = vmatprep.subr.mxu0 0.0
        %1112 = vmatpush2.msra.mxu0 %v350
        %1113 = vmatprep.subr.mxu0 0.0
        %1114 = vmatpush2.msra.mxu0 %v349
        %1115 = vmatprep.subr.mxu0 0.0
        %1116 = vmatpush2.msra.mxu0 %v348
        %1117 = vmatprep.subr.mxu0 0.0
        %1118 = vmatpush2.msra.mxu0 %v347
        %1119 = vmatprep.subr.mxu0 0.0
        %1120 = vmatpush2.msra.mxu0 %v346
        %1121 = vmatprep.subr.mxu0 0.0
        %1122 = vmatpush2.msra.mxu0 %v345
        %1123 = vmatprep.subr.mxu0 0.0
        %1124 = vmatpush2.msra.mxu0 %v344
        %1125 = vmatprep.subr.mxu0 0.0
        %1126 = vmatpush2.msra.mxu0 %v343
        %1127 = vmatprep.subr.mxu0 0.0
        %1128 = vmatpush2.msra.mxu0 %v342
        %1129 = vmatprep.subr.mxu0 0.0
        %1130 = vmatpush2.msra.mxu0 %v341
        %1131 = vmatprep.subr.mxu0 0.0
        %1132 = vmatpush2.msra.mxu0 %v340
        %1133 = vmatprep.subr.mxu0 0.0
        %1134 = vmatpush2.msra.mxu0 %v339
        %1135 = vmatprep.mubr.f32.mxu0 %v1058
        %1136 = vmatmul.mubr.f32.gmra.mxu0 %v1057
        %v1137 = vpop.f32.mrf.mxu0
        %v1138 = vadd.f32 0.0, %v1137
        %v1139 = vpop.f32.mrf.mxu0
        %1140 = vmatprep.mubr.f32.mxu0 %v1060
        %1141 = vmatmul.mubr.f32.gmra.mxu0 %v1059
        %v1142 = vpop.f32.mrf.mxu0
        %v1143 = vadd.f32 0.0, %v1142
        %v1144 = vpop.f32.mrf.mxu0
        %1145 = vmatprep.mubr.f32.mxu0 %v1062
        %1146 = vmatmul.mubr.f32.gmra.mxu0 %v1061
        %v1147 = vpop.f32.mrf.mxu0
        %v1148 = vadd.f32 0.0, %v1147
        %v1149 = vpop.f32.mrf.mxu0
        %1150 = vmatprep.mubr.f32.mxu0 %v1064
        %1151 = vmatmul.mubr.f32.gmra.mxu0 %v1063
        %v1152 = vpop.f32.mrf.mxu0
        %v1153 = vadd.f32 0.0, %v1152
        %v1154 = vpop.f32.mrf.mxu0
        %1155 = vmatprep.mubr.f32.mxu0 %v1066
        %1156 = vmatmul.mubr.f32.gmra.mxu0 %v1065
        %v1157 = vpop.f32.mrf.mxu0
        %v1158 = vadd.f32 0.0, %v1157
        %v1159 = vpop.f32.mrf.mxu0
        %1160 = vmatprep.mubr.f32.mxu0 %v1068
        %1161 = vmatmul.mubr.f32.gmra.mxu0 %v1067
        %v1162 = vpop.f32.mrf.mxu0
        %v1163 = vadd.f32 0.0, %v1162
        %v1164 = vpop.f32.mrf.mxu0
        %1165 = vmatprep.mubr.f32.mxu0 %v1070
        %1166 = vmatmul.mubr.f32.gmra.mxu0 %v1069
        %v1167 = vpop.f32.mrf.mxu0
        %v1168 = vadd.f32 0.0, %v1167
        %v1169 = vpop.f32.mrf.mxu0
        %1170 = vdwg.mxu0
        %s1171 = scalar_lea.vmem [#allocation2], 384
        %v1172 = vld [vmem:[%s1171] sm:$0xff]
        %v1173 = vld [vmem:[%s1171 + $0x8] sm:$0xff]
        %v1174 = vld [vmem:[%s1171 + $0x10] sm:$0xff]
        %v1175 = vld [vmem:[%s1171 + $0x18] sm:$0xff]
        %v1176 = vld [vmem:[%s1171 + $0x20] sm:$0xff]
        %v1177 = vld [vmem:[%s1171 + $0x28] sm:$0xff]
        %v1178 = vld [vmem:[%s1171 + $0x30] sm:$0xff]
        %v1179 = vld [vmem:[%s1171 + $0x38] sm:$0xff]
        %v1180 = vld [vmem:[%s1171 + $0x40] sm:$0xff]
        %v1181 = vld [vmem:[%s1171 + $0x48] sm:$0xff]
        %v1182 = vld [vmem:[%s1171 + $0x50] sm:$0xff]
        %v1183 = vld [vmem:[%s1171 + $0x58] sm:$0xff]
        %v1184 = vld [vmem:[%s1171 + $0x60] sm:$0xff]
        %v1185 = vld [vmem:[%s1171 + $0x68] sm:$0xff]
        %v1186 = vld [vmem:[%s1171 + $0x70] sm:$0xff]
        %v1187 = vld [vmem:[%s1171 + $0x78] sm:$0xff]
        %1188 = vmatprep.subr.mxu0 0.0
        %1189 = vmatpush1.msra.mxu0 %v1187
        %1190 = vmatprep.subr.mxu0 0.0
        %1191 = vmatpush1.msra.mxu0 %v1186
        %1192 = vmatprep.subr.mxu0 0.0
        %1193 = vmatpush1.msra.mxu0 %v1185
        %1194 = vmatprep.subr.mxu0 0.0
        %1195 = vmatpush1.msra.mxu0 %v1184
        %1196 = vmatprep.subr.mxu0 0.0
        %1197 = vmatpush1.msra.mxu0 %v1183
        %1198 = vmatprep.subr.mxu0 0.0
        %1199 = vmatpush1.msra.mxu0 %v1182
        %1200 = vmatprep.subr.mxu0 0.0
        %1201 = vmatpush1.msra.mxu0 %v1181
        %1202 = vmatprep.subr.mxu0 0.0
        %1203 = vmatpush1.msra.mxu0 %v1180
        %1204 = vmatprep.subr.mxu0 0.0
        %1205 = vmatpush1.msra.mxu0 %v1179
        %1206 = vmatprep.subr.mxu0 0.0
        %1207 = vmatpush1.msra.mxu0 %v1178
        %1208 = vmatprep.subr.mxu0 0.0
        %1209 = vmatpush1.msra.mxu0 %v1177
        %1210 = vmatprep.subr.mxu0 0.0
        %1211 = vmatpush1.msra.mxu0 %v1176
        %1212 = vmatprep.subr.mxu0 0.0
        %1213 = vmatpush1.msra.mxu0 %v1175
        %1214 = vmatprep.subr.mxu0 0.0
        %1215 = vmatpush1.msra.mxu0 %v1174
        %1216 = vmatprep.subr.mxu0 0.0
        %1217 = vmatpush1.msra.mxu0 %v1173
        %1218 = vmatprep.subr.mxu0 0.0
        %1219 = vmatpush1.msra.mxu0 %v1172
        %1220 = vmatprep.subr.mxu0 0.0
        %1221 = vmatpush2.msra.mxu0 0.0
        %1222 = vmatprep.subr.mxu0 0.0
        %1223 = vmatpush2.msra.mxu0 0.0
        %1224 = vmatprep.subr.mxu0 0.0
        %1225 = vmatpush2.msra.mxu0 0.0
        %1226 = vmatprep.subr.mxu0 0.0
        %1227 = vmatpush2.msra.mxu0 0.0
        %1228 = vmatprep.subr.mxu0 0.0
        %1229 = vmatpush2.msra.mxu0 0.0
        %1230 = vmatprep.subr.mxu0 0.0
        %1231 = vmatpush2.msra.mxu0 0.0
        %1232 = vmatprep.subr.mxu0 0.0
        %1233 = vmatpush2.msra.mxu0 0.0
        %1234 = vmatprep.subr.mxu0 0.0
        %1235 = vmatpush2.msra.mxu0 0.0
        %1236 = vmatprep.subr.mxu0 0.0
        %1237 = vmatpush2.msra.mxu0 0.0
        %1238 = vmatprep.subr.mxu0 0.0
        %1239 = vmatpush2.msra.mxu0 0.0
        %1240 = vmatprep.subr.mxu0 0.0
        %1241 = vmatpush2.msra.mxu0 0.0
        %1242 = vmatprep.subr.mxu0 0.0
        %1243 = vmatpush2.msra.mxu0 0.0
        %1244 = vmatprep.subr.mxu0 0.0
        %1245 = vmatpush2.msra.mxu0 0.0
        %1246 = vmatprep.subr.mxu0 0.0
        %1247 = vmatpush2.msra.mxu0 0.0
        %1248 = vmatprep.subr.mxu0 0.0
        %1249 = vmatpush2.msra.mxu0 0.0
        %1250 = vmatprep.subr.mxu0 0.0
        %1251 = vmatpush2.msra.mxu0 0.0
        %1252 = vmatprep.mubr.f32.mxu0 0.0
        %1253 = vmatmul.mubr.f32.gmra.mxu0 %v1138
        %v1254 = vpop.f32.mrf.mxu0
        %v1255 = vadd.f32 0.0, %v1254
        %v1256 = vpop.f32.mrf.mxu0
        %1257 = vmatprep.mubr.f32.mxu0 0.0
        %1258 = vmatmul.mubr.f32.gmra.mxu0 %v1143
        %v1259 = vpop.f32.mrf.mxu0
        %v1260 = vadd.f32 0.0, %v1259
        %v1261 = vpop.f32.mrf.mxu0
        %1262 = vmatprep.mubr.f32.mxu0 0.0
        %1263 = vmatmul.mubr.f32.gmra.mxu0 %v1148
        %v1264 = vpop.f32.mrf.mxu0
        %v1265 = vadd.f32 0.0, %v1264
        %v1266 = vpop.f32.mrf.mxu0
        %1267 = vmatprep.mubr.f32.mxu0 0.0
        %1268 = vmatmul.mubr.f32.gmra.mxu0 %v1153
        %v1269 = vpop.f32.mrf.mxu0
        %v1270 = vadd.f32 0.0, %v1269
        %v1271 = vpop.f32.mrf.mxu0
        %1272 = vmatprep.mubr.f32.mxu0 0.0
        %1273 = vmatmul.mubr.f32.gmra.mxu0 %v1158
        %v1274 = vpop.f32.mrf.mxu0
        %v1275 = vadd.f32 0.0, %v1274
        %v1276 = vpop.f32.mrf.mxu0
        %1277 = vmatprep.mubr.f32.mxu0 0.0
        %1278 = vmatmul.mubr.f32.gmra.mxu0 %v1163
        %v1279 = vpop.f32.mrf.mxu0
        %v1280 = vadd.f32 0.0, %v1279
        %v1281 = vpop.f32.mrf.mxu0
        %1282 = vmatprep.mubr.f32.mxu0 0.0
        %1283 = vmatmul.mubr.f32.gmra.mxu0 %v1168
        %v1284 = vpop.f32.mrf.mxu0
        %v1285 = vadd.f32 0.0, %v1284
        %v1286 = vpop.f32.mrf.mxu0
        %1287 = vdwg.mxu0
        %v1288 = vadd.f32 %v1049, %v1255
        %v1289 = vadd.f32 %v1050, %v1260
        %v1290 = vadd.f32 %v1051, %v1265
        %v1291 = vadd.f32 %v1052, %v1270
        %v1292 = vadd.f32 %v1053, %v1275
        %v1293 = vadd.f32 %v1054, %v1280
        %v1294 = vadd.f32 %v1055, %v1285
        %s1295 = scalar_lea.vmem [#allocation6], 448
        %v1296 = vld [vmem:[%s1295] sm:$0xff]
        %v1297 = vld [vmem:[%s1295 + $0x8] sm:$0xff]
        %v1298 = vld [vmem:[%s1295 + $0x10] sm:$0xff]
        %v1299 = vld [vmem:[%s1295 + $0x18] sm:$0xff]
        %v1300 = vld [vmem:[%s1295 + $0x20] sm:$0xff]
        %v1301 = vld [vmem:[%s1295 + $0x28] sm:$0xff]
        %v1302 = vld [vmem:[%s1295 + $0x30] sm:$0xff]
        %v1303 = vld [vmem:[%s1295 + $0x38] sm:$0xff]
        %v1304 = vld [vmem:[%s1295 + $0x40] sm:$0xff]
        %v1305 = vld [vmem:[%s1295 + $0x48] sm:$0xff]
        %v1306 = vld [vmem:[%s1295 + $0x50] sm:$0xff]
        %v1307 = vld [vmem:[%s1295 + $0x58] sm:$0xff]
        %v1308 = vld [vmem:[%s1295 + $0x60] sm:$0xff]
        %v1309 = vld [vmem:[%s1295 + $0x68] sm:$0xff]
        %1310 = vmatprep.subr.mxu0 0.0
        %1311 = vmatpush1.msra.mxu0 %v338
        %1312 = vmatprep.subr.mxu0 0.0
        %1313 = vmatpush1.msra.mxu0 %v337
        %1314 = vmatprep.subr.mxu0 0.0
        %1315 = vmatpush1.msra.mxu0 %v336
        %1316 = vmatprep.subr.mxu0 0.0
        %1317 = vmatpush1.msra.mxu0 %v335
        %1318 = vmatprep.subr.mxu0 0.0
        %1319 = vmatpush1.msra.mxu0 %v334
        %1320 = vmatprep.subr.mxu0 0.0
        %1321 = vmatpush1.msra.mxu0 %v333
        %1322 = vmatprep.subr.mxu0 0.0
        %1323 = vmatpush1.msra.mxu0 %v332
        %1324 = vmatprep.subr.mxu0 0.0
        %1325 = vmatpush1.msra.mxu0 %v331
        %1326 = vmatprep.subr.mxu0 0.0
        %1327 = vmatpush1.msra.mxu0 %v330
        %1328 = vmatprep.subr.mxu0 0.0
        %1329 = vmatpush1.msra.mxu0 %v329
        %1330 = vmatprep.subr.mxu0 0.0
        %1331 = vmatpush1.msra.mxu0 %v328
        %1332 = vmatprep.subr.mxu0 0.0
        %1333 = vmatpush1.msra.mxu0 %v327
        %1334 = vmatprep.subr.mxu0 0.0
        %1335 = vmatpush1.msra.mxu0 %v326
        %1336 = vmatprep.subr.mxu0 0.0
        %1337 = vmatpush1.msra.mxu0 %v325
        %1338 = vmatprep.subr.mxu0 0.0
        %1339 = vmatpush1.msra.mxu0 %v324
        %1340 = vmatprep.subr.mxu0 0.0
        %1341 = vmatpush1.msra.mxu0 %v323
        %1342 = vmatprep.subr.mxu0 0.0
        %1343 = vmatpush2.msra.mxu0 %v354
        %1344 = vmatprep.subr.mxu0 0.0
        %1345 = vmatpush2.msra.mxu0 %v353
        %1346 = vmatprep.subr.mxu0 0.0
        %1347 = vmatpush2.msra.mxu0 %v352
        %1348 = vmatprep.subr.mxu0 0.0
        %1349 = vmatpush2.msra.mxu0 %v351
        %1350 = vmatprep.subr.mxu0 0.0
        %1351 = vmatpush2.msra.mxu0 %v350
        %1352 = vmatprep.subr.mxu0 0.0
        %1353 = vmatpush2.msra.mxu0 %v349
        %1354 = vmatprep.subr.mxu0 0.0
        %1355 = vmatpush2.msra.mxu0 %v348
        %1356 = vmatprep.subr.mxu0 0.0
        %1357 = vmatpush2.msra.mxu0 %v347
        %1358 = vmatprep.subr.mxu0 0.0
        %1359 = vmatpush2.msra.mxu0 %v346
        %1360 = vmatprep.subr.mxu0 0.0
        %1361 = vmatpush2.msra.mxu0 %v345
        %1362 = vmatprep.subr.mxu0 0.0
        %1363 = vmatpush2.msra.mxu0 %v344
        %1364 = vmatprep.subr.mxu0 0.0
        %1365 = vmatpush2.msra.mxu0 %v343
        %1366 = vmatprep.subr.mxu0 0.0
        %1367 = vmatpush2.msra.mxu0 %v342
        %1368 = vmatprep.subr.mxu0 0.0
        %1369 = vmatpush2.msra.mxu0 %v341
        %1370 = vmatprep.subr.mxu0 0.0
        %1371 = vmatpush2.msra.mxu0 %v340
        %1372 = vmatprep.subr.mxu0 0.0
        %1373 = vmatpush2.msra.mxu0 %v339
        %1374 = vmatprep.mubr.f32.mxu0 %v1297
        %1375 = vmatmul.mubr.f32.gmra.mxu0 %v1296
        %v1376 = vpop.f32.mrf.mxu0
        %v1377 = vadd.f32 0.0, %v1376
        %v1378 = vpop.f32.mrf.mxu0
        %1379 = vmatprep.mubr.f32.mxu0 %v1299
        %1380 = vmatmul.mubr.f32.gmra.mxu0 %v1298
        %v1381 = vpop.f32.mrf.mxu0
        %v1382 = vadd.f32 0.0, %v1381
        %v1383 = vpop.f32.mrf.mxu0
        %1384 = vmatprep.mubr.f32.mxu0 %v1301
        %1385 = vmatmul.mubr.f32.gmra.mxu0 %v1300
        %v1386 = vpop.f32.mrf.mxu0
        %v1387 = vadd.f32 0.0, %v1386
        %v1388 = vpop.f32.mrf.mxu0
        %1389 = vmatprep.mubr.f32.mxu0 %v1303
        %1390 = vmatmul.mubr.f32.gmra.mxu0 %v1302
        %v1391 = vpop.f32.mrf.mxu0
        %v1392 = vadd.f32 0.0, %v1391
        %v1393 = vpop.f32.mrf.mxu0
        %1394 = vmatprep.mubr.f32.mxu0 %v1305
        %1395 = vmatmul.mubr.f32.gmra.mxu0 %v1304
        %v1396 = vpop.f32.mrf.mxu0
        %v1397 = vadd.f32 0.0, %v1396
        %v1398 = vpop.f32.mrf.mxu0
        %1399 = vmatprep.mubr.f32.mxu0 %v1307
        %1400 = vmatmul.mubr.f32.gmra.mxu0 %v1306
        %v1401 = vpop.f32.mrf.mxu0
        %v1402 = vadd.f32 0.0, %v1401
        %v1403 = vpop.f32.mrf.mxu0
        %1404 = vmatprep.mubr.f32.mxu0 %v1309
        %1405 = vmatmul.mubr.f32.gmra.mxu0 %v1308
        %v1406 = vpop.f32.mrf.mxu0
        %v1407 = vadd.f32 0.0, %v1406
        %v1408 = vpop.f32.mrf.mxu0
        %1409 = vdwg.mxu0
        %s1410 = scalar_lea.vmem [#allocation2], 512
        %v1411 = vld [vmem:[%s1410] sm:$0xff]
        %v1412 = vld [vmem:[%s1410 + $0x8] sm:$0xff]
        %v1413 = vld [vmem:[%s1410 + $0x10] sm:$0xff]
        %v1414 = vld [vmem:[%s1410 + $0x18] sm:$0xff]
        %v1415 = vld [vmem:[%s1410 + $0x20] sm:$0xff]
        %v1416 = vld [vmem:[%s1410 + $0x28] sm:$0xff]
        %v1417 = vld [vmem:[%s1410 + $0x30] sm:$0xff]
        %v1418 = vld [vmem:[%s1410 + $0x38] sm:$0xff]
        %v1419 = vld [vmem:[%s1410 + $0x40] sm:$0xff]
        %v1420 = vld [vmem:[%s1410 + $0x48] sm:$0xff]
        %v1421 = vld [vmem:[%s1410 + $0x50] sm:$0xff]
        %v1422 = vld [vmem:[%s1410 + $0x58] sm:$0xff]
        %v1423 = vld [vmem:[%s1410 + $0x60] sm:$0xff]
        %v1424 = vld [vmem:[%s1410 + $0x68] sm:$0xff]
        %v1425 = vld [vmem:[%s1410 + $0x70] sm:$0xff]
        %v1426 = vld [vmem:[%s1410 + $0x78] sm:$0xff]
        %1427 = vmatprep.subr.mxu0 0.0
        %1428 = vmatpush1.msra.mxu0 %v1426
        %1429 = vmatprep.subr.mxu0 0.0
        %1430 = vmatpush1.msra.mxu0 %v1425
        %1431 = vmatprep.subr.mxu0 0.0
        %1432 = vmatpush1.msra.mxu0 %v1424
        %1433 = vmatprep.subr.mxu0 0.0
        %1434 = vmatpush1.msra.mxu0 %v1423
        %1435 = vmatprep.subr.mxu0 0.0
        %1436 = vmatpush1.msra.mxu0 %v1422
        %1437 = vmatprep.subr.mxu0 0.0
        %1438 = vmatpush1.msra.mxu0 %v1421
        %1439 = vmatprep.subr.mxu0 0.0
        %1440 = vmatpush1.msra.mxu0 %v1420
        %1441 = vmatprep.subr.mxu0 0.0
        %1442 = vmatpush1.msra.mxu0 %v1419
        %1443 = vmatprep.subr.mxu0 0.0
        %1444 = vmatpush1.msra.mxu0 %v1418
        %1445 = vmatprep.subr.mxu0 0.0
        %1446 = vmatpush1.msra.mxu0 %v1417
        %1447 = vmatprep.subr.mxu0 0.0
        %1448 = vmatpush1.msra.mxu0 %v1416
        %1449 = vmatprep.subr.mxu0 0.0
        %1450 = vmatpush1.msra.mxu0 %v1415
        %1451 = vmatprep.subr.mxu0 0.0
        %1452 = vmatpush1.msra.mxu0 %v1414
        %1453 = vmatprep.subr.mxu0 0.0
        %1454 = vmatpush1.msra.mxu0 %v1413
        %1455 = vmatprep.subr.mxu0 0.0
        %1456 = vmatpush1.msra.mxu0 %v1412
        %1457 = vmatprep.subr.mxu0 0.0
        %1458 = vmatpush1.msra.mxu0 %v1411
        %1459 = vmatprep.subr.mxu0 0.0
        %1460 = vmatpush2.msra.mxu0 0.0
        %1461 = vmatprep.subr.mxu0 0.0
        %1462 = vmatpush2.msra.mxu0 0.0
        %1463 = vmatprep.subr.mxu0 0.0
        %1464 = vmatpush2.msra.mxu0 0.0
        %1465 = vmatprep.subr.mxu0 0.0
        %1466 = vmatpush2.msra.mxu0 0.0
        %1467 = vmatprep.subr.mxu0 0.0
        %1468 = vmatpush2.msra.mxu0 0.0
        %1469 = vmatprep.subr.mxu0 0.0
        %1470 = vmatpush2.msra.mxu0 0.0
        %1471 = vmatprep.subr.mxu0 0.0
        %1472 = vmatpush2.msra.mxu0 0.0
        %1473 = vmatprep.subr.mxu0 0.0
        %1474 = vmatpush2.msra.mxu0 0.0
        %1475 = vmatprep.subr.mxu0 0.0
        %1476 = vmatpush2.msra.mxu0 0.0
        %1477 = vmatprep.subr.mxu0 0.0
        %1478 = vmatpush2.msra.mxu0 0.0
        %1479 = vmatprep.subr.mxu0 0.0
        %1480 = vmatpush2.msra.mxu0 0.0
        %1481 = vmatprep.subr.mxu0 0.0
        %1482 = vmatpush2.msra.mxu0 0.0
        %1483 = vmatprep.subr.mxu0 0.0
        %1484 = vmatpush2.msra.mxu0 0.0
        %1485 = vmatprep.subr.mxu0 0.0
        %1486 = vmatpush2.msra.mxu0 0.0
        %1487 = vmatprep.subr.mxu0 0.0
        %1488 = vmatpush2.msra.mxu0 0.0
        %1489 = vmatprep.subr.mxu0 0.0
        %1490 = vmatpush2.msra.mxu0 0.0
        %1491 = vmatprep.mubr.f32.mxu0 0.0
        %1492 = vmatmul.mubr.f32.gmra.mxu0 %v1377
        %v1493 = vpop.f32.mrf.mxu0
        %v1494 = vadd.f32 0.0, %v1493
        %v1495 = vpop.f32.mrf.mxu0
        %1496 = vmatprep.mubr.f32.mxu0 0.0
        %1497 = vmatmul.mubr.f32.gmra.mxu0 %v1382
        %v1498 = vpop.f32.mrf.mxu0
        %v1499 = vadd.f32 0.0, %v1498
        %v1500 = vpop.f32.mrf.mxu0
        %1501 = vmatprep.mubr.f32.mxu0 0.0
        %1502 = vmatmul.mubr.f32.gmra.mxu0 %v1387
        %v1503 = vpop.f32.mrf.mxu0
        %v1504 = vadd.f32 0.0, %v1503
        %v1505 = vpop.f32.mrf.mxu0
        %1506 = vmatprep.mubr.f32.mxu0 0.0
        %1507 = vmatmul.mubr.f32.gmra.mxu0 %v1392
        %v1508 = vpop.f32.mrf.mxu0
        %v1509 = vadd.f32 0.0, %v1508
        %v1510 = vpop.f32.mrf.mxu0
        %1511 = vmatprep.mubr.f32.mxu0 0.0
        %1512 = vmatmul.mubr.f32.gmra.mxu0 %v1397
        %v1513 = vpop.f32.mrf.mxu0
        %v1514 = vadd.f32 0.0, %v1513
        %v1515 = vpop.f32.mrf.mxu0
        %1516 = vmatprep.mubr.f32.mxu0 0.0
        %1517 = vmatmul.mubr.f32.gmra.mxu0 %v1402
        %v1518 = vpop.f32.mrf.mxu0
        %v1519 = vadd.f32 0.0, %v1518
        %v1520 = vpop.f32.mrf.mxu0
        %1521 = vmatprep.mubr.f32.mxu0 0.0
        %1522 = vmatmul.mubr.f32.gmra.mxu0 %v1407
        %v1523 = vpop.f32.mrf.mxu0
        %v1524 = vadd.f32 0.0, %v1523
        %v1525 = vpop.f32.mrf.mxu0
        %1526 = vdwg.mxu0
        %v1527 = vadd.f32 %v1288, %v1494
        %v1528 = vadd.f32 %v1289, %v1499
        %v1529 = vadd.f32 %v1290, %v1504
        %v1530 = vadd.f32 %v1291, %v1509
        %v1531 = vadd.f32 %v1292, %v1514
        %v1532 = vadd.f32 %v1293, %v1519
        %v1533 = vadd.f32 %v1294, %v1524
        %s1534 = scalar_lea.vmem [#allocation6], 560
        %v1535 = vld [vmem:[%s1534] sm:$0xff]
        %v1536 = vld [vmem:[%s1534 + $0x8] sm:$0xff]
        %v1537 = vld [vmem:[%s1534 + $0x10] sm:$0xff]
        %v1538 = vld [vmem:[%s1534 + $0x18] sm:$0xff]
        %v1539 = vld [vmem:[%s1534 + $0x20] sm:$0xff]
        %v1540 = vld [vmem:[%s1534 + $0x28] sm:$0xff]
        %v1541 = vld [vmem:[%s1534 + $0x30] sm:$0xff]
        %v1542 = vld [vmem:[%s1534 + $0x38] sm:$0xff]
        %v1543 = vld [vmem:[%s1534 + $0x40] sm:$0xff]
        %v1544 = vld [vmem:[%s1534 + $0x48] sm:$0xff]
        %v1545 = vld [vmem:[%s1534 + $0x50] sm:$0xff]
        %v1546 = vld [vmem:[%s1534 + $0x58] sm:$0xff]
        %v1547 = vld [vmem:[%s1534 + $0x60] sm:$0xff]
        %v1548 = vld [vmem:[%s1534 + $0x68] sm:$0xff]
        %1549 = vmatprep.subr.mxu0 0.0
        %1550 = vmatpush1.msra.mxu0 %v338
        %1551 = vmatprep.subr.mxu0 0.0
        %1552 = vmatpush1.msra.mxu0 %v337
        %1553 = vmatprep.subr.mxu0 0.0
        %1554 = vmatpush1.msra.mxu0 %v336
        %1555 = vmatprep.subr.mxu0 0.0
        %1556 = vmatpush1.msra.mxu0 %v335
        %1557 = vmatprep.subr.mxu0 0.0
        %1558 = vmatpush1.msra.mxu0 %v334
        %1559 = vmatprep.subr.mxu0 0.0
        %1560 = vmatpush1.msra.mxu0 %v333
        %1561 = vmatprep.subr.mxu0 0.0
        %1562 = vmatpush1.msra.mxu0 %v332
        %1563 = vmatprep.subr.mxu0 0.0
        %1564 = vmatpush1.msra.mxu0 %v331
        %1565 = vmatprep.subr.mxu0 0.0
        %1566 = vmatpush1.msra.mxu0 %v330
        %1567 = vmatprep.subr.mxu0 0.0
        %1568 = vmatpush1.msra.mxu0 %v329
        %1569 = vmatprep.subr.mxu0 0.0
        %1570 = vmatpush1.msra.mxu0 %v328
        %1571 = vmatprep.subr.mxu0 0.0
        %1572 = vmatpush1.msra.mxu0 %v327
        %1573 = vmatprep.subr.mxu0 0.0
        %1574 = vmatpush1.msra.mxu0 %v326
        %1575 = vmatprep.subr.mxu0 0.0
        %1576 = vmatpush1.msra.mxu0 %v325
        %1577 = vmatprep.subr.mxu0 0.0
        %1578 = vmatpush1.msra.mxu0 %v324
        %1579 = vmatprep.subr.mxu0 0.0
        %1580 = vmatpush1.msra.mxu0 %v323
        %1581 = vmatprep.subr.mxu0 0.0
        %1582 = vmatpush2.msra.mxu0 %v354
        %1583 = vmatprep.subr.mxu0 0.0
        %1584 = vmatpush2.msra.mxu0 %v353
        %1585 = vmatprep.subr.mxu0 0.0
        %1586 = vmatpush2.msra.mxu0 %v352
        %1587 = vmatprep.subr.mxu0 0.0
        %1588 = vmatpush2.msra.mxu0 %v351
        %1589 = vmatprep.subr.mxu0 0.0
        %1590 = vmatpush2.msra.mxu0 %v350
        %1591 = vmatprep.subr.mxu0 0.0
        %1592 = vmatpush2.msra.mxu0 %v349
        %1593 = vmatprep.subr.mxu0 0.0
        %1594 = vmatpush2.msra.mxu0 %v348
        %1595 = vmatprep.subr.mxu0 0.0
        %1596 = vmatpush2.msra.mxu0 %v347
        %1597 = vmatprep.subr.mxu0 0.0
        %1598 = vmatpush2.msra.mxu0 %v346
        %1599 = vmatprep.subr.mxu0 0.0
        %1600 = vmatpush2.msra.mxu0 %v345
        %1601 = vmatprep.subr.mxu0 0.0
        %1602 = vmatpush2.msra.mxu0 %v344
        %1603 = vmatprep.subr.mxu0 0.0
        %1604 = vmatpush2.msra.mxu0 %v343
        %1605 = vmatprep.subr.mxu0 0.0
        %1606 = vmatpush2.msra.mxu0 %v342
        %1607 = vmatprep.subr.mxu0 0.0
        %1608 = vmatpush2.msra.mxu0 %v341
        %1609 = vmatprep.subr.mxu0 0.0
        %1610 = vmatpush2.msra.mxu0 %v340
        %1611 = vmatprep.subr.mxu0 0.0
        %1612 = vmatpush2.msra.mxu0 %v339
        %1613 = vmatprep.mubr.f32.mxu0 %v1536
        %1614 = vmatmul.mubr.f32.gmra.mxu0 %v1535
        %v1615 = vpop.f32.mrf.mxu0
        %v1616 = vadd.f32 0.0, %v1615
        %v1617 = vpop.f32.mrf.mxu0
        %1618 = vmatprep.mubr.f32.mxu0 %v1538
        %1619 = vmatmul.mubr.f32.gmra.mxu0 %v1537
        %v1620 = vpop.f32.mrf.mxu0
        %v1621 = vadd.f32 0.0, %v1620
        %v1622 = vpop.f32.mrf.mxu0
        %1623 = vmatprep.mubr.f32.mxu0 %v1540
        %1624 = vmatmul.mubr.f32.gmra.mxu0 %v1539
        %v1625 = vpop.f32.mrf.mxu0
        %v1626 = vadd.f32 0.0, %v1625
        %v1627 = vpop.f32.mrf.mxu0
        %1628 = vmatprep.mubr.f32.mxu0 %v1542
        %1629 = vmatmul.mubr.f32.gmra.mxu0 %v1541
        %v1630 = vpop.f32.mrf.mxu0
        %v1631 = vadd.f32 0.0, %v1630
        %v1632 = vpop.f32.mrf.mxu0
        %1633 = vmatprep.mubr.f32.mxu0 %v1544
        %1634 = vmatmul.mubr.f32.gmra.mxu0 %v1543
        %v1635 = vpop.f32.mrf.mxu0
        %v1636 = vadd.f32 0.0, %v1635
        %v1637 = vpop.f32.mrf.mxu0
        %1638 = vmatprep.mubr.f32.mxu0 %v1546
        %1639 = vmatmul.mubr.f32.gmra.mxu0 %v1545
        %v1640 = vpop.f32.mrf.mxu0
        %v1641 = vadd.f32 0.0, %v1640
        %v1642 = vpop.f32.mrf.mxu0
        %1643 = vmatprep.mubr.f32.mxu0 %v1548
        %1644 = vmatmul.mubr.f32.gmra.mxu0 %v1547
        %v1645 = vpop.f32.mrf.mxu0
        %v1646 = vadd.f32 0.0, %v1645
        %v1647 = vpop.f32.mrf.mxu0
        %1648 = vdwg.mxu0
        %s1649 = scalar_lea.vmem [#allocation2], 640
        %v1650 = vld [vmem:[%s1649] sm:$0xff]
        %v1651 = vld [vmem:[%s1649 + $0x8] sm:$0xff]
        %v1652 = vld [vmem:[%s1649 + $0x10] sm:$0xff]
        %v1653 = vld [vmem:[%s1649 + $0x18] sm:$0xff]
        %v1654 = vld [vmem:[%s1649 + $0x20] sm:$0xff]
        %v1655 = vld [vmem:[%s1649 + $0x28] sm:$0xff]
        %v1656 = vld [vmem:[%s1649 + $0x30] sm:$0xff]
        %v1657 = vld [vmem:[%s1649 + $0x38] sm:$0xff]
        %v1658 = vld [vmem:[%s1649 + $0x40] sm:$0xff]
        %v1659 = vld [vmem:[%s1649 + $0x48] sm:$0xff]
        %v1660 = vld [vmem:[%s1649 + $0x50] sm:$0xff]
        %v1661 = vld [vmem:[%s1649 + $0x58] sm:$0xff]
        %v1662 = vld [vmem:[%s1649 + $0x60] sm:$0xff]
        %v1663 = vld [vmem:[%s1649 + $0x68] sm:$0xff]
        %v1664 = vld [vmem:[%s1649 + $0x70] sm:$0xff]
        %v1665 = vld [vmem:[%s1649 + $0x78] sm:$0xff]
        %1666 = vmatprep.subr.mxu0 0.0
        %1667 = vmatpush1.msra.mxu0 %v1665
        %1668 = vmatprep.subr.mxu0 0.0
        %1669 = vmatpush1.msra.mxu0 %v1664
        %1670 = vmatprep.subr.mxu0 0.0
        %1671 = vmatpush1.msra.mxu0 %v1663
        %1672 = vmatprep.subr.mxu0 0.0
        %1673 = vmatpush1.msra.mxu0 %v1662
        %1674 = vmatprep.subr.mxu0 0.0
        %1675 = vmatpush1.msra.mxu0 %v1661
        %1676 = vmatprep.subr.mxu0 0.0
        %1677 = vmatpush1.msra.mxu0 %v1660
        %1678 = vmatprep.subr.mxu0 0.0
        %1679 = vmatpush1.msra.mxu0 %v1659
        %1680 = vmatprep.subr.mxu0 0.0
        %1681 = vmatpush1.msra.mxu0 %v1658
        %1682 = vmatprep.subr.mxu0 0.0
        %1683 = vmatpush1.msra.mxu0 %v1657
        %1684 = vmatprep.subr.mxu0 0.0
        %1685 = vmatpush1.msra.mxu0 %v1656
        %1686 = vmatprep.subr.mxu0 0.0
        %1687 = vmatpush1.msra.mxu0 %v1655
        %1688 = vmatprep.subr.mxu0 0.0
        %1689 = vmatpush1.msra.mxu0 %v1654
        %1690 = vmatprep.subr.mxu0 0.0
        %1691 = vmatpush1.msra.mxu0 %v1653
        %1692 = vmatprep.subr.mxu0 0.0
        %1693 = vmatpush1.msra.mxu0 %v1652
        %1694 = vmatprep.subr.mxu0 0.0
        %1695 = vmatpush1.msra.mxu0 %v1651
        %1696 = vmatprep.subr.mxu0 0.0
        %1697 = vmatpush1.msra.mxu0 %v1650
        %1698 = vmatprep.subr.mxu0 0.0
        %1699 = vmatpush2.msra.mxu0 0.0
        %1700 = vmatprep.subr.mxu0 0.0
        %1701 = vmatpush2.msra.mxu0 0.0
        %1702 = vmatprep.subr.mxu0 0.0
        %1703 = vmatpush2.msra.mxu0 0.0
        %1704 = vmatprep.subr.mxu0 0.0
        %1705 = vmatpush2.msra.mxu0 0.0
        %1706 = vmatprep.subr.mxu0 0.0
        %1707 = vmatpush2.msra.mxu0 0.0
        %1708 = vmatprep.subr.mxu0 0.0
        %1709 = vmatpush2.msra.mxu0 0.0
        %1710 = vmatprep.subr.mxu0 0.0
        %1711 = vmatpush2.msra.mxu0 0.0
        %1712 = vmatprep.subr.mxu0 0.0
        %1713 = vmatpush2.msra.mxu0 0.0
        %1714 = vmatprep.subr.mxu0 0.0
        %1715 = vmatpush2.msra.mxu0 0.0
        %1716 = vmatprep.subr.mxu0 0.0
        %1717 = vmatpush2.msra.mxu0 0.0
        %1718 = vmatprep.subr.mxu0 0.0
        %1719 = vmatpush2.msra.mxu0 0.0
        %1720 = vmatprep.subr.mxu0 0.0
        %1721 = vmatpush2.msra.mxu0 0.0
        %1722 = vmatprep.subr.mxu0 0.0
        %1723 = vmatpush2.msra.mxu0 0.0
        %1724 = vmatprep.subr.mxu0 0.0
        %1725 = vmatpush2.msra.mxu0 0.0
        %1726 = vmatprep.subr.mxu0 0.0
        %1727 = vmatpush2.msra.mxu0 0.0
        %1728 = vmatprep.subr.mxu0 0.0
        %1729 = vmatpush2.msra.mxu0 0.0
        %1730 = vmatprep.mubr.f32.mxu0 0.0
        %1731 = vmatmul.mubr.f32.gmra.mxu0 %v1616
        %v1732 = vpop.f32.mrf.mxu0
        %v1733 = vadd.f32 0.0, %v1732
        %v1734 = vpop.f32.mrf.mxu0
        %1735 = vmatprep.mubr.f32.mxu0 0.0
        %1736 = vmatmul.mubr.f32.gmra.mxu0 %v1621
        %v1737 = vpop.f32.mrf.mxu0
        %v1738 = vadd.f32 0.0, %v1737
        %v1739 = vpop.f32.mrf.mxu0
        %1740 = vmatprep.mubr.f32.mxu0 0.0
        %1741 = vmatmul.mubr.f32.gmra.mxu0 %v1626
        %v1742 = vpop.f32.mrf.mxu0
        %v1743 = vadd.f32 0.0, %v1742
        %v1744 = vpop.f32.mrf.mxu0
        %1745 = vmatprep.mubr.f32.mxu0 0.0
        %1746 = vmatmul.mubr.f32.gmra.mxu0 %v1631
        %v1747 = vpop.f32.mrf.mxu0
        %v1748 = vadd.f32 0.0, %v1747
        %v1749 = vpop.f32.mrf.mxu0
        %1750 = vmatprep.mubr.f32.mxu0 0.0
        %1751 = vmatmul.mubr.f32.gmra.mxu0 %v1636
        %v1752 = vpop.f32.mrf.mxu0
        %v1753 = vadd.f32 0.0, %v1752
        %v1754 = vpop.f32.mrf.mxu0
        %1755 = vmatprep.mubr.f32.mxu0 0.0
        %1756 = vmatmul.mubr.f32.gmra.mxu0 %v1641
        %v1757 = vpop.f32.mrf.mxu0
        %v1758 = vadd.f32 0.0, %v1757
        %v1759 = vpop.f32.mrf.mxu0
        %1760 = vmatprep.mubr.f32.mxu0 0.0
        %1761 = vmatmul.mubr.f32.gmra.mxu0 %v1646
        %v1762 = vpop.f32.mrf.mxu0
        %v1763 = vadd.f32 0.0, %v1762
        %v1764 = vpop.f32.mrf.mxu0
        %1765 = vdwg.mxu0
        %v1766 = vadd.f32 %v1527, %v1733
        %v1767 = vadd.f32 %v1528, %v1738
        %v1768 = vadd.f32 %v1529, %v1743
        %v1769 = vadd.f32 %v1530, %v1748
        %v1770 = vadd.f32 %v1531, %v1753
        %v1771 = vadd.f32 %v1532, %v1758
        %v1772 = vadd.f32 %v1533, %v1763
        %s1773 = scalar_lea.vmem [#allocation6], 672
        %v1774 = vld [vmem:[%s1773] sm:$0xff]
        %v1775 = vld [vmem:[%s1773 + $0x8] sm:$0xff]
        %v1776 = vld [vmem:[%s1773 + $0x10] sm:$0xff]
        %v1777 = vld [vmem:[%s1773 + $0x18] sm:$0xff]
        %v1778 = vld [vmem:[%s1773 + $0x20] sm:$0xff]
        %v1779 = vld [vmem:[%s1773 + $0x28] sm:$0xff]
        %v1780 = vld [vmem:[%s1773 + $0x30] sm:$0xff]
        %v1781 = vld [vmem:[%s1773 + $0x38] sm:$0xff]
        %v1782 = vld [vmem:[%s1773 + $0x40] sm:$0xff]
        %v1783 = vld [vmem:[%s1773 + $0x48] sm:$0xff]
        %v1784 = vld [vmem:[%s1773 + $0x50] sm:$0xff]
        %v1785 = vld [vmem:[%s1773 + $0x58] sm:$0xff]
        %v1786 = vld [vmem:[%s1773 + $0x60] sm:$0xff]
        %v1787 = vld [vmem:[%s1773 + $0x68] sm:$0xff]
        %1788 = vmatprep.subr.mxu0 0.0
        %1789 = vmatpush1.msra.mxu0 %v338
        %1790 = vmatprep.subr.mxu0 0.0
        %1791 = vmatpush1.msra.mxu0 %v337
        %1792 = vmatprep.subr.mxu0 0.0
        %1793 = vmatpush1.msra.mxu0 %v336
        %1794 = vmatprep.subr.mxu0 0.0
        %1795 = vmatpush1.msra.mxu0 %v335
        %1796 = vmatprep.subr.mxu0 0.0
        %1797 = vmatpush1.msra.mxu0 %v334
        %1798 = vmatprep.subr.mxu0 0.0
        %1799 = vmatpush1.msra.mxu0 %v333
        %1800 = vmatprep.subr.mxu0 0.0
        %1801 = vmatpush1.msra.mxu0 %v332
        %1802 = vmatprep.subr.mxu0 0.0
        %1803 = vmatpush1.msra.mxu0 %v331
        %1804 = vmatprep.subr.mxu0 0.0
        %1805 = vmatpush1.msra.mxu0 %v330
        %1806 = vmatprep.subr.mxu0 0.0
        %1807 = vmatpush1.msra.mxu0 %v329
        %1808 = vmatprep.subr.mxu0 0.0
        %1809 = vmatpush1.msra.mxu0 %v328
        %1810 = vmatprep.subr.mxu0 0.0
        %1811 = vmatpush1.msra.mxu0 %v327
        %1812 = vmatprep.subr.mxu0 0.0
        %1813 = vmatpush1.msra.mxu0 %v326
        %1814 = vmatprep.subr.mxu0 0.0
        %1815 = vmatpush1.msra.mxu0 %v325
        %1816 = vmatprep.subr.mxu0 0.0
        %1817 = vmatpush1.msra.mxu0 %v324
        %1818 = vmatprep.subr.mxu0 0.0
        %1819 = vmatpush1.msra.mxu0 %v323
        %1820 = vmatprep.subr.mxu0 0.0
        %1821 = vmatpush2.msra.mxu0 %v354
        %1822 = vmatprep.subr.mxu0 0.0
        %1823 = vmatpush2.msra.mxu0 %v353
        %1824 = vmatprep.subr.mxu0 0.0
        %1825 = vmatpush2.msra.mxu0 %v352
        %1826 = vmatprep.subr.mxu0 0.0
        %1827 = vmatpush2.msra.mxu0 %v351
        %1828 = vmatprep.subr.mxu0 0.0
        %1829 = vmatpush2.msra.mxu0 %v350
        %1830 = vmatprep.subr.mxu0 0.0
        %1831 = vmatpush2.msra.mxu0 %v349
        %1832 = vmatprep.subr.mxu0 0.0
        %1833 = vmatpush2.msra.mxu0 %v348
        %1834 = vmatprep.subr.mxu0 0.0
        %1835 = vmatpush2.msra.mxu0 %v347
        %1836 = vmatprep.subr.mxu0 0.0
        %1837 = vmatpush2.msra.mxu0 %v346
        %1838 = vmatprep.subr.mxu0 0.0
        %1839 = vmatpush2.msra.mxu0 %v345
        %1840 = vmatprep.subr.mxu0 0.0
        %1841 = vmatpush2.msra.mxu0 %v344
        %1842 = vmatprep.subr.mxu0 0.0
        %1843 = vmatpush2.msra.mxu0 %v343
        %1844 = vmatprep.subr.mxu0 0.0
        %1845 = vmatpush2.msra.mxu0 %v342
        %1846 = vmatprep.subr.mxu0 0.0
        %1847 = vmatpush2.msra.mxu0 %v341
        %1848 = vmatprep.subr.mxu0 0.0
        %1849 = vmatpush2.msra.mxu0 %v340
        %1850 = vmatprep.subr.mxu0 0.0
        %1851 = vmatpush2.msra.mxu0 %v339
        %1852 = vmatprep.mubr.f32.mxu0 %v1775
        %1853 = vmatmul.mubr.f32.gmra.mxu0 %v1774
        %v1854 = vpop.f32.mrf.mxu0
        %v1855 = vadd.f32 0.0, %v1854
        %v1856 = vpop.f32.mrf.mxu0
        %1857 = vmatprep.mubr.f32.mxu0 %v1777
        %1858 = vmatmul.mubr.f32.gmra.mxu0 %v1776
        %v1859 = vpop.f32.mrf.mxu0
        %v1860 = vadd.f32 0.0, %v1859
        %v1861 = vpop.f32.mrf.mxu0
        %1862 = vmatprep.mubr.f32.mxu0 %v1779
        %1863 = vmatmul.mubr.f32.gmra.mxu0 %v1778
        %v1864 = vpop.f32.mrf.mxu0
        %v1865 = vadd.f32 0.0, %v1864
        %v1866 = vpop.f32.mrf.mxu0
        %1867 = vmatprep.mubr.f32.mxu0 %v1781
        %1868 = vmatmul.mubr.f32.gmra.mxu0 %v1780
        %v1869 = vpop.f32.mrf.mxu0
        %v1870 = vadd.f32 0.0, %v1869
        %v1871 = vpop.f32.mrf.mxu0
        %1872 = vmatprep.mubr.f32.mxu0 %v1783
        %1873 = vmatmul.mubr.f32.gmra.mxu0 %v1782
        %v1874 = vpop.f32.mrf.mxu0
        %v1875 = vadd.f32 0.0, %v1874
        %v1876 = vpop.f32.mrf.mxu0
        %1877 = vmatprep.mubr.f32.mxu0 %v1785
        %1878 = vmatmul.mubr.f32.gmra.mxu0 %v1784
        %v1879 = vpop.f32.mrf.mxu0
        %v1880 = vadd.f32 0.0, %v1879
        %v1881 = vpop.f32.mrf.mxu0
        %1882 = vmatprep.mubr.f32.mxu0 %v1787
        %1883 = vmatmul.mubr.f32.gmra.mxu0 %v1786
        %v1884 = vpop.f32.mrf.mxu0
        %v1885 = vadd.f32 0.0, %v1884
        %v1886 = vpop.f32.mrf.mxu0
        %1887 = vdwg.mxu0
        %s1888 = scalar_lea.vmem [#allocation2], 768
        %v1889 = vld [vmem:[%s1888] sm:$0xff]
        %v1890 = vld [vmem:[%s1888 + $0x8] sm:$0xff]
        %v1891 = vld [vmem:[%s1888 + $0x10] sm:$0xff]
        %v1892 = vld [vmem:[%s1888 + $0x18] sm:$0xff]
        %v1893 = vld [vmem:[%s1888 + $0x20] sm:$0xff]
        %v1894 = vld [vmem:[%s1888 + $0x28] sm:$0xff]
        %v1895 = vld [vmem:[%s1888 + $0x30] sm:$0xff]
        %v1896 = vld [vmem:[%s1888 + $0x38] sm:$0xff]
        %v1897 = vld [vmem:[%s1888 + $0x40] sm:$0xff]
        %v1898 = vld [vmem:[%s1888 + $0x48] sm:$0xff]
        %v1899 = vld [vmem:[%s1888 + $0x50] sm:$0xff]
        %v1900 = vld [vmem:[%s1888 + $0x58] sm:$0xff]
        %v1901 = vld [vmem:[%s1888 + $0x60] sm:$0xff]
        %v1902 = vld [vmem:[%s1888 + $0x68] sm:$0xff]
        %v1903 = vld [vmem:[%s1888 + $0x70] sm:$0xff]
        %v1904 = vld [vmem:[%s1888 + $0x78] sm:$0xff]
        %1905 = vmatprep.subr.mxu0 0.0
        %1906 = vmatpush1.msra.mxu0 %v1904
        %1907 = vmatprep.subr.mxu0 0.0
        %1908 = vmatpush1.msra.mxu0 %v1903
        %1909 = vmatprep.subr.mxu0 0.0
        %1910 = vmatpush1.msra.mxu0 %v1902
        %1911 = vmatprep.subr.mxu0 0.0
        %1912 = vmatpush1.msra.mxu0 %v1901
        %1913 = vmatprep.subr.mxu0 0.0
        %1914 = vmatpush1.msra.mxu0 %v1900
        %1915 = vmatprep.subr.mxu0 0.0
        %1916 = vmatpush1.msra.mxu0 %v1899
        %1917 = vmatprep.subr.mxu0 0.0
        %1918 = vmatpush1.msra.mxu0 %v1898
        %1919 = vmatprep.subr.mxu0 0.0
        %1920 = vmatpush1.msra.mxu0 %v1897
        %1921 = vmatprep.subr.mxu0 0.0
        %1922 = vmatpush1.msra.mxu0 %v1896
        %1923 = vmatprep.subr.mxu0 0.0
        %1924 = vmatpush1.msra.mxu0 %v1895
        %1925 = vmatprep.subr.mxu0 0.0
        %1926 = vmatpush1.msra.mxu0 %v1894
        %1927 = vmatprep.subr.mxu0 0.0
        %1928 = vmatpush1.msra.mxu0 %v1893
        %1929 = vmatprep.subr.mxu0 0.0
        %1930 = vmatpush1.msra.mxu0 %v1892
        %1931 = vmatprep.subr.mxu0 0.0
        %1932 = vmatpush1.msra.mxu0 %v1891
        %1933 = vmatprep.subr.mxu0 0.0
        %1934 = vmatpush1.msra.mxu0 %v1890
        %1935 = vmatprep.subr.mxu0 0.0
        %1936 = vmatpush1.msra.mxu0 %v1889
        %1937 = vmatprep.subr.mxu0 0.0
        %1938 = vmatpush2.msra.mxu0 0.0
        %1939 = vmatprep.subr.mxu0 0.0
        %1940 = vmatpush2.msra.mxu0 0.0
        %1941 = vmatprep.subr.mxu0 0.0
        %1942 = vmatpush2.msra.mxu0 0.0
        %1943 = vmatprep.subr.mxu0 0.0
        %1944 = vmatpush2.msra.mxu0 0.0
        %1945 = vmatprep.subr.mxu0 0.0
        %1946 = vmatpush2.msra.mxu0 0.0
        %1947 = vmatprep.subr.mxu0 0.0
        %1948 = vmatpush2.msra.mxu0 0.0
        %1949 = vmatprep.subr.mxu0 0.0
        %1950 = vmatpush2.msra.mxu0 0.0
        %1951 = vmatprep.subr.mxu0 0.0
        %1952 = vmatpush2.msra.mxu0 0.0
        %1953 = vmatprep.subr.mxu0 0.0
        %1954 = vmatpush2.msra.mxu0 0.0
        %1955 = vmatprep.subr.mxu0 0.0
        %1956 = vmatpush2.msra.mxu0 0.0
        %1957 = vmatprep.subr.mxu0 0.0
        %1958 = vmatpush2.msra.mxu0 0.0
        %1959 = vmatprep.subr.mxu0 0.0
        %1960 = vmatpush2.msra.mxu0 0.0
        %1961 = vmatprep.subr.mxu0 0.0
        %1962 = vmatpush2.msra.mxu0 0.0
        %1963 = vmatprep.subr.mxu0 0.0
        %1964 = vmatpush2.msra.mxu0 0.0
        %1965 = vmatprep.subr.mxu0 0.0
        %1966 = vmatpush2.msra.mxu0 0.0
        %1967 = vmatprep.subr.mxu0 0.0
        %1968 = vmatpush2.msra.mxu0 0.0
        %1969 = vmatprep.mubr.f32.mxu0 0.0
        %1970 = vmatmul.mubr.f32.gmra.mxu0 %v1855
        %v1971 = vpop.f32.mrf.mxu0
        %v1972 = vadd.f32 0.0, %v1971
        %v1973 = vpop.f32.mrf.mxu0
        %1974 = vmatprep.mubr.f32.mxu0 0.0
        %1975 = vmatmul.mubr.f32.gmra.mxu0 %v1860
        %v1976 = vpop.f32.mrf.mxu0
        %v1977 = vadd.f32 0.0, %v1976
        %v1978 = vpop.f32.mrf.mxu0
        %1979 = vmatprep.mubr.f32.mxu0 0.0
        %1980 = vmatmul.mubr.f32.gmra.mxu0 %v1865
        %v1981 = vpop.f32.mrf.mxu0
        %v1982 = vadd.f32 0.0, %v1981
        %v1983 = vpop.f32.mrf.mxu0
        %1984 = vmatprep.mubr.f32.mxu0 0.0
        %1985 = vmatmul.mubr.f32.gmra.mxu0 %v1870
        %v1986 = vpop.f32.mrf.mxu0
        %v1987 = vadd.f32 0.0, %v1986
        %v1988 = vpop.f32.mrf.mxu0
        %1989 = vmatprep.mubr.f32.mxu0 0.0
        %1990 = vmatmul.mubr.f32.gmra.mxu0 %v1875
        %v1991 = vpop.f32.mrf.mxu0
        %v1992 = vadd.f32 0.0, %v1991
        %v1993 = vpop.f32.mrf.mxu0
        %1994 = vmatprep.mubr.f32.mxu0 0.0
        %1995 = vmatmul.mubr.f32.gmra.mxu0 %v1880
        %v1996 = vpop.f32.mrf.mxu0
        %v1997 = vadd.f32 0.0, %v1996
        %v1998 = vpop.f32.mrf.mxu0
        %1999 = vmatprep.mubr.f32.mxu0 0.0
        %2000 = vmatmul.mubr.f32.gmra.mxu0 %v1885
        %v2001 = vpop.f32.mrf.mxu0
        %v2002 = vadd.f32 0.0, %v2001
        %v2003 = vpop.f32.mrf.mxu0
        %2004 = vdwg.mxu0
        %v2005 = vadd.f32 %v1766, %v1972
        %v2006 = vadd.f32 %v1767, %v1977
        %v2007 = vadd.f32 %v1768, %v1982
        %v2008 = vadd.f32 %v1769, %v1987
        %v2009 = vadd.f32 %v1770, %v1992
        %v2010 = vadd.f32 %v1771, %v1997
        %v2011 = vadd.f32 %v1772, %v2002
        %s2012 = scalar_lea.vmem [#allocation6], 784
        %v2013 = vld [vmem:[%s2012] sm:$0xff]
        %v2014 = vld [vmem:[%s2012 + $0x8] sm:$0xff]
        %v2015 = vld [vmem:[%s2012 + $0x10] sm:$0xff]
        %v2016 = vld [vmem:[%s2012 + $0x18] sm:$0xff]
        %v2017 = vld [vmem:[%s2012 + $0x20] sm:$0xff]
        %v2018 = vld [vmem:[%s2012 + $0x28] sm:$0xff]
        %v2019 = vld [vmem:[%s2012 + $0x30] sm:$0xff]
        %v2020 = vld [vmem:[%s2012 + $0x38] sm:$0xff]
        %v2021 = vld [vmem:[%s2012 + $0x40] sm:$0xff]
        %v2022 = vld [vmem:[%s2012 + $0x48] sm:$0xff]
        %v2023 = vld [vmem:[%s2012 + $0x50] sm:$0xff]
        %v2024 = vld [vmem:[%s2012 + $0x58] sm:$0xff]
        %v2025 = vld [vmem:[%s2012 + $0x60] sm:$0xff]
        %v2026 = vld [vmem:[%s2012 + $0x68] sm:$0xff]
        %2027 = vmatprep.subr.mxu0 0.0
        %2028 = vmatpush1.msra.mxu0 %v338
        %2029 = vmatprep.subr.mxu0 0.0
        %2030 = vmatpush1.msra.mxu0 %v337
        %2031 = vmatprep.subr.mxu0 0.0
        %2032 = vmatpush1.msra.mxu0 %v336
        %2033 = vmatprep.subr.mxu0 0.0
        %2034 = vmatpush1.msra.mxu0 %v335
        %2035 = vmatprep.subr.mxu0 0.0
        %2036 = vmatpush1.msra.mxu0 %v334
        %2037 = vmatprep.subr.mxu0 0.0
        %2038 = vmatpush1.msra.mxu0 %v333
        %2039 = vmatprep.subr.mxu0 0.0
        %2040 = vmatpush1.msra.mxu0 %v332
        %2041 = vmatprep.subr.mxu0 0.0
        %2042 = vmatpush1.msra.mxu0 %v331
        %2043 = vmatprep.subr.mxu0 0.0
        %2044 = vmatpush1.msra.mxu0 %v330
        %2045 = vmatprep.subr.mxu0 0.0
        %2046 = vmatpush1.msra.mxu0 %v329
        %2047 = vmatprep.subr.mxu0 0.0
        %2048 = vmatpush1.msra.mxu0 %v328
        %2049 = vmatprep.subr.mxu0 0.0
        %2050 = vmatpush1.msra.mxu0 %v327
        %2051 = vmatprep.subr.mxu0 0.0
        %2052 = vmatpush1.msra.mxu0 %v326
        %2053 = vmatprep.subr.mxu0 0.0
        %2054 = vmatpush1.msra.mxu0 %v325
        %2055 = vmatprep.subr.mxu0 0.0
        %2056 = vmatpush1.msra.mxu0 %v324
        %2057 = vmatprep.subr.mxu0 0.0
        %2058 = vmatpush1.msra.mxu0 %v323
        %2059 = vmatprep.subr.mxu0 0.0
        %2060 = vmatpush2.msra.mxu0 %v354
        %2061 = vmatprep.subr.mxu0 0.0
        %2062 = vmatpush2.msra.mxu0 %v353
        %2063 = vmatprep.subr.mxu0 0.0
        %2064 = vmatpush2.msra.mxu0 %v352
        %2065 = vmatprep.subr.mxu0 0.0
        %2066 = vmatpush2.msra.mxu0 %v351
        %2067 = vmatprep.subr.mxu0 0.0
        %2068 = vmatpush2.msra.mxu0 %v350
        %2069 = vmatprep.subr.mxu0 0.0
        %2070 = vmatpush2.msra.mxu0 %v349
        %2071 = vmatprep.subr.mxu0 0.0
        %2072 = vmatpush2.msra.mxu0 %v348
        %2073 = vmatprep.subr.mxu0 0.0
        %2074 = vmatpush2.msra.mxu0 %v347
        %2075 = vmatprep.subr.mxu0 0.0
        %2076 = vmatpush2.msra.mxu0 %v346
        %2077 = vmatprep.subr.mxu0 0.0
        %2078 = vmatpush2.msra.mxu0 %v345
        %2079 = vmatprep.subr.mxu0 0.0
        %2080 = vmatpush2.msra.mxu0 %v344
        %2081 = vmatprep.subr.mxu0 0.0
        %2082 = vmatpush2.msra.mxu0 %v343
        %2083 = vmatprep.subr.mxu0 0.0
        %2084 = vmatpush2.msra.mxu0 %v342
        %2085 = vmatprep.subr.mxu0 0.0
        %2086 = vmatpush2.msra.mxu0 %v341
        %2087 = vmatprep.subr.mxu0 0.0
        %2088 = vmatpush2.msra.mxu0 %v340
        %2089 = vmatprep.subr.mxu0 0.0
        %2090 = vmatpush2.msra.mxu0 %v339
        %2091 = vmatprep.mubr.f32.mxu0 %v2014
        %2092 = vmatmul.mubr.f32.gmra.mxu0 %v2013
        %v2093 = vpop.f32.mrf.mxu0
        %v2094 = vadd.f32 0.0, %v2093
        %v2095 = vpop.f32.mrf.mxu0
        %2096 = vmatprep.mubr.f32.mxu0 %v2016
        %2097 = vmatmul.mubr.f32.gmra.mxu0 %v2015
        %v2098 = vpop.f32.mrf.mxu0
        %v2099 = vadd.f32 0.0, %v2098
        %v2100 = vpop.f32.mrf.mxu0
        %2101 = vmatprep.mubr.f32.mxu0 %v2018
        %2102 = vmatmul.mubr.f32.gmra.mxu0 %v2017
        %v2103 = vpop.f32.mrf.mxu0
        %v2104 = vadd.f32 0.0, %v2103
        %v2105 = vpop.f32.mrf.mxu0
        %2106 = vmatprep.mubr.f32.mxu0 %v2020
        %2107 = vmatmul.mubr.f32.gmra.mxu0 %v2019
        %v2108 = vpop.f32.mrf.mxu0
        %v2109 = vadd.f32 0.0, %v2108
        %v2110 = vpop.f32.mrf.mxu0
        %2111 = vmatprep.mubr.f32.mxu0 %v2022
        %2112 = vmatmul.mubr.f32.gmra.mxu0 %v2021
        %v2113 = vpop.f32.mrf.mxu0
        %v2114 = vadd.f32 0.0, %v2113
        %v2115 = vpop.f32.mrf.mxu0
        %2116 = vmatprep.mubr.f32.mxu0 %v2024
        %2117 = vmatmul.mubr.f32.gmra.mxu0 %v2023
        %v2118 = vpop.f32.mrf.mxu0
        %v2119 = vadd.f32 0.0, %v2118
        %v2120 = vpop.f32.mrf.mxu0
        %2121 = vmatprep.mubr.f32.mxu0 %v2026
        %2122 = vmatmul.mubr.f32.gmra.mxu0 %v2025
        %v2123 = vpop.f32.mrf.mxu0
        %v2124 = vadd.f32 0.0, %v2123
        %v2125 = vpop.f32.mrf.mxu0
        %2126 = vdwg.mxu0
        %s2127 = scalar_lea.vmem [#allocation2], 896
        %v2128 = vld [vmem:[%s2127] sm:$0xff]
        %v2129 = vld [vmem:[%s2127 + $0x8] sm:$0xff]
        %v2130 = vld [vmem:[%s2127 + $0x10] sm:$0xff]
        %v2131 = vld [vmem:[%s2127 + $0x18] sm:$0xff]
        %v2132 = vld [vmem:[%s2127 + $0x20] sm:$0xff]
        %v2133 = vld [vmem:[%s2127 + $0x28] sm:$0xff]
        %v2134 = vld [vmem:[%s2127 + $0x30] sm:$0xff]
        %v2135 = vld [vmem:[%s2127 + $0x38] sm:$0xff]
        %v2136 = vld [vmem:[%s2127 + $0x40] sm:$0xff]
        %v2137 = vld [vmem:[%s2127 + $0x48] sm:$0xff]
        %v2138 = vld [vmem:[%s2127 + $0x50] sm:$0xff]
        %v2139 = vld [vmem:[%s2127 + $0x58] sm:$0xff]
        %v2140 = vld [vmem:[%s2127 + $0x60] sm:$0xff]
        %v2141 = vld [vmem:[%s2127 + $0x68] sm:$0xff]
        %v2142 = vld [vmem:[%s2127 + $0x70] sm:$0xff]
        %v2143 = vld [vmem:[%s2127 + $0x78] sm:$0xff]
        %2144 = vmatprep.subr.mxu0 0.0
        %2145 = vmatpush1.msra.mxu0 %v2143
        %2146 = vmatprep.subr.mxu0 0.0
        %2147 = vmatpush1.msra.mxu0 %v2142
        %2148 = vmatprep.subr.mxu0 0.0
        %2149 = vmatpush1.msra.mxu0 %v2141
        %2150 = vmatprep.subr.mxu0 0.0
        %2151 = vmatpush1.msra.mxu0 %v2140
        %2152 = vmatprep.subr.mxu0 0.0
        %2153 = vmatpush1.msra.mxu0 %v2139
        %2154 = vmatprep.subr.mxu0 0.0
        %2155 = vmatpush1.msra.mxu0 %v2138
        %2156 = vmatprep.subr.mxu0 0.0
        %2157 = vmatpush1.msra.mxu0 %v2137
        %2158 = vmatprep.subr.mxu0 0.0
        %2159 = vmatpush1.msra.mxu0 %v2136
        %2160 = vmatprep.subr.mxu0 0.0
        %2161 = vmatpush1.msra.mxu0 %v2135
        %2162 = vmatprep.subr.mxu0 0.0
        %2163 = vmatpush1.msra.mxu0 %v2134
        %2164 = vmatprep.subr.mxu0 0.0
        %2165 = vmatpush1.msra.mxu0 %v2133
        %2166 = vmatprep.subr.mxu0 0.0
        %2167 = vmatpush1.msra.mxu0 %v2132
        %2168 = vmatprep.subr.mxu0 0.0
        %2169 = vmatpush1.msra.mxu0 %v2131
        %2170 = vmatprep.subr.mxu0 0.0
        %2171 = vmatpush1.msra.mxu0 %v2130
        %2172 = vmatprep.subr.mxu0 0.0
        %2173 = vmatpush1.msra.mxu0 %v2129
        %2174 = vmatprep.subr.mxu0 0.0
        %2175 = vmatpush1.msra.mxu0 %v2128
        %2176 = vmatprep.subr.mxu0 0.0
        %2177 = vmatpush2.msra.mxu0 0.0
        %2178 = vmatprep.subr.mxu0 0.0
        %2179 = vmatpush2.msra.mxu0 0.0
        %2180 = vmatprep.subr.mxu0 0.0
        %2181 = vmatpush2.msra.mxu0 0.0
        %2182 = vmatprep.subr.mxu0 0.0
        %2183 = vmatpush2.msra.mxu0 0.0
        %2184 = vmatprep.subr.mxu0 0.0
        %2185 = vmatpush2.msra.mxu0 0.0
        %2186 = vmatprep.subr.mxu0 0.0
        %2187 = vmatpush2.msra.mxu0 0.0
        %2188 = vmatprep.subr.mxu0 0.0
        %2189 = vmatpush2.msra.mxu0 0.0
        %2190 = vmatprep.subr.mxu0 0.0
        %2191 = vmatpush2.msra.mxu0 0.0
        %2192 = vmatprep.subr.mxu0 0.0
        %2193 = vmatpush2.msra.mxu0 0.0
        %2194 = vmatprep.subr.mxu0 0.0
        %2195 = vmatpush2.msra.mxu0 0.0
        %2196 = vmatprep.subr.mxu0 0.0
        %2197 = vmatpush2.msra.mxu0 0.0
        %2198 = vmatprep.subr.mxu0 0.0
        %2199 = vmatpush2.msra.mxu0 0.0
        %2200 = vmatprep.subr.mxu0 0.0
        %2201 = vmatpush2.msra.mxu0 0.0
        %2202 = vmatprep.subr.mxu0 0.0
        %2203 = vmatpush2.msra.mxu0 0.0
        %2204 = vmatprep.subr.mxu0 0.0
        %2205 = vmatpush2.msra.mxu0 0.0
        %2206 = vmatprep.subr.mxu0 0.0
        %2207 = vmatpush2.msra.mxu0 0.0
        %2208 = vmatprep.mubr.f32.mxu0 0.0
        %2209 = vmatmul.mubr.f32.gmra.mxu0 %v2094
        %v2210 = vpop.f32.mrf.mxu0
        %v2211 = vadd.f32 0.0, %v2210
        %v2212 = vpop.f32.mrf.mxu0
        %2213 = vmatprep.mubr.f32.mxu0 0.0
        %2214 = vmatmul.mubr.f32.gmra.mxu0 %v2099
        %v2215 = vpop.f32.mrf.mxu0
        %v2216 = vadd.f32 0.0, %v2215
        %v2217 = vpop.f32.mrf.mxu0
        %2218 = vmatprep.mubr.f32.mxu0 0.0
        %2219 = vmatmul.mubr.f32.gmra.mxu0 %v2104
        %v2220 = vpop.f32.mrf.mxu0
        %v2221 = vadd.f32 0.0, %v2220
        %v2222 = vpop.f32.mrf.mxu0
        %2223 = vmatprep.mubr.f32.mxu0 0.0
        %2224 = vmatmul.mubr.f32.gmra.mxu0 %v2109
        %v2225 = vpop.f32.mrf.mxu0
        %v2226 = vadd.f32 0.0, %v2225
        %v2227 = vpop.f32.mrf.mxu0
        %2228 = vmatprep.mubr.f32.mxu0 0.0
        %2229 = vmatmul.mubr.f32.gmra.mxu0 %v2114
        %v2230 = vpop.f32.mrf.mxu0
        %v2231 = vadd.f32 0.0, %v2230
        %v2232 = vpop.f32.mrf.mxu0
        %2233 = vmatprep.mubr.f32.mxu0 0.0
        %2234 = vmatmul.mubr.f32.gmra.mxu0 %v2119
        %v2235 = vpop.f32.mrf.mxu0
        %v2236 = vadd.f32 0.0, %v2235
        %v2237 = vpop.f32.mrf.mxu0
        %2238 = vmatprep.mubr.f32.mxu0 0.0
        %2239 = vmatmul.mubr.f32.gmra.mxu0 %v2124
        %v2240 = vpop.f32.mrf.mxu0
        %v2241 = vadd.f32 0.0, %v2240
        %v2242 = vpop.f32.mrf.mxu0
        %2243 = vdwg.mxu0
        %v2244 = vadd.f32 %v2005, %v2211
        %v2245 = vadd.f32 %v2006, %v2216
        %v2246 = vadd.f32 %v2007, %v2221
        %v2247 = vadd.f32 %v2008, %v2226
        %v2248 = vadd.f32 %v2009, %v2231
        %v2249 = vadd.f32 %v2010, %v2236
        %v2250 = vadd.f32 %v2011, %v2241
        %s2251 = scalar_lea.vmem [#allocation6], 896
        %v2252 = vld [vmem:[%s2251] sm:$0xff]
        %v2253 = vld [vmem:[%s2251 + $0x8] sm:$0xff]
        %v2254 = vld [vmem:[%s2251 + $0x10] sm:$0xff]
        %v2255 = vld [vmem:[%s2251 + $0x18] sm:$0xff]
        %v2256 = vld [vmem:[%s2251 + $0x20] sm:$0xff]
        %v2257 = vld [vmem:[%s2251 + $0x28] sm:$0xff]
        %v2258 = vld [vmem:[%s2251 + $0x30] sm:$0xff]
        %v2259 = vld [vmem:[%s2251 + $0x38] sm:$0xff]
        %v2260 = vld [vmem:[%s2251 + $0x40] sm:$0xff]
        %v2261 = vld [vmem:[%s2251 + $0x48] sm:$0xff]
        %v2262 = vld [vmem:[%s2251 + $0x50] sm:$0xff]
        %v2263 = vld [vmem:[%s2251 + $0x58] sm:$0xff]
        %v2264 = vld [vmem:[%s2251 + $0x60] sm:$0xff]
        %v2265 = vld [vmem:[%s2251 + $0x68] sm:$0xff]
        %2266 = vmatprep.subr.mxu0 0.0
        %2267 = vmatpush1.msra.mxu0 %v338
        %2268 = vmatprep.subr.mxu0 0.0
        %2269 = vmatpush1.msra.mxu0 %v337
        %2270 = vmatprep.subr.mxu0 0.0
        %2271 = vmatpush1.msra.mxu0 %v336
        %2272 = vmatprep.subr.mxu0 0.0
        %2273 = vmatpush1.msra.mxu0 %v335
        %2274 = vmatprep.subr.mxu0 0.0
        %2275 = vmatpush1.msra.mxu0 %v334
        %2276 = vmatprep.subr.mxu0 0.0
        %2277 = vmatpush1.msra.mxu0 %v333
        %2278 = vmatprep.subr.mxu0 0.0
        %2279 = vmatpush1.msra.mxu0 %v332
        %2280 = vmatprep.subr.mxu0 0.0
        %2281 = vmatpush1.msra.mxu0 %v331
        %2282 = vmatprep.subr.mxu0 0.0
        %2283 = vmatpush1.msra.mxu0 %v330
        %2284 = vmatprep.subr.mxu0 0.0
        %2285 = vmatpush1.msra.mxu0 %v329
        %2286 = vmatprep.subr.mxu0 0.0
        %2287 = vmatpush1.msra.mxu0 %v328
        %2288 = vmatprep.subr.mxu0 0.0
        %2289 = vmatpush1.msra.mxu0 %v327
        %2290 = vmatprep.subr.mxu0 0.0
        %2291 = vmatpush1.msra.mxu0 %v326
        %2292 = vmatprep.subr.mxu0 0.0
        %2293 = vmatpush1.msra.mxu0 %v325
        %2294 = vmatprep.subr.mxu0 0.0
        %2295 = vmatpush1.msra.mxu0 %v324
        %2296 = vmatprep.subr.mxu0 0.0
        %2297 = vmatpush1.msra.mxu0 %v323
        %2298 = vmatprep.subr.mxu0 0.0
        %2299 = vmatpush2.msra.mxu0 %v354
        %2300 = vmatprep.subr.mxu0 0.0
        %2301 = vmatpush2.msra.mxu0 %v353
        %2302 = vmatprep.subr.mxu0 0.0
        %2303 = vmatpush2.msra.mxu0 %v352
        %2304 = vmatprep.subr.mxu0 0.0
        %2305 = vmatpush2.msra.mxu0 %v351
        %2306 = vmatprep.subr.mxu0 0.0
        %2307 = vmatpush2.msra.mxu0 %v350
        %2308 = vmatprep.subr.mxu0 0.0
        %2309 = vmatpush2.msra.mxu0 %v349
        %2310 = vmatprep.subr.mxu0 0.0
        %2311 = vmatpush2.msra.mxu0 %v348
        %2312 = vmatprep.subr.mxu0 0.0
        %2313 = vmatpush2.msra.mxu0 %v347
        %2314 = vmatprep.subr.mxu0 0.0
        %2315 = vmatpush2.msra.mxu0 %v346
        %2316 = vmatprep.subr.mxu0 0.0
        %2317 = vmatpush2.msra.mxu0 %v345
        %2318 = vmatprep.subr.mxu0 0.0
        %2319 = vmatpush2.msra.mxu0 %v344
        %2320 = vmatprep.subr.mxu0 0.0
        %2321 = vmatpush2.msra.mxu0 %v343
        %2322 = vmatprep.subr.mxu0 0.0
        %2323 = vmatpush2.msra.mxu0 %v342
        %2324 = vmatprep.subr.mxu0 0.0
        %2325 = vmatpush2.msra.mxu0 %v341
        %2326 = vmatprep.subr.mxu0 0.0
        %2327 = vmatpush2.msra.mxu0 %v340
        %2328 = vmatprep.subr.mxu0 0.0
        %2329 = vmatpush2.msra.mxu0 %v339
        %2330 = vmatprep.mubr.f32.mxu0 %v2253
        %2331 = vmatmul.mubr.f32.gmra.mxu0 %v2252
        %v2332 = vpop.f32.mrf.mxu0
        %v2333 = vadd.f32 0.0, %v2332
        %v2334 = vpop.f32.mrf.mxu0
        %2335 = vmatprep.mubr.f32.mxu0 %v2255
        %2336 = vmatmul.mubr.f32.gmra.mxu0 %v2254
        %v2337 = vpop.f32.mrf.mxu0
        %v2338 = vadd.f32 0.0, %v2337
        %v2339 = vpop.f32.mrf.mxu0
        %2340 = vmatprep.mubr.f32.mxu0 %v2257
        %2341 = vmatmul.mubr.f32.gmra.mxu0 %v2256
        %v2342 = vpop.f32.mrf.mxu0
        %v2343 = vadd.f32 0.0, %v2342
        %v2344 = vpop.f32.mrf.mxu0
        %2345 = vmatprep.mubr.f32.mxu0 %v2259
        %2346 = vmatmul.mubr.f32.gmra.mxu0 %v2258
        %v2347 = vpop.f32.mrf.mxu0
        %v2348 = vadd.f32 0.0, %v2347
        %v2349 = vpop.f32.mrf.mxu0
        %2350 = vmatprep.mubr.f32.mxu0 %v2261
        %2351 = vmatmul.mubr.f32.gmra.mxu0 %v2260
        %v2352 = vpop.f32.mrf.mxu0
        %v2353 = vadd.f32 0.0, %v2352
        %v2354 = vpop.f32.mrf.mxu0
        %2355 = vmatprep.mubr.f32.mxu0 %v2263
        %2356 = vmatmul.mubr.f32.gmra.mxu0 %v2262
        %v2357 = vpop.f32.mrf.mxu0
        %v2358 = vadd.f32 0.0, %v2357
        %v2359 = vpop.f32.mrf.mxu0
        %2360 = vmatprep.mubr.f32.mxu0 %v2265
        %2361 = vmatmul.mubr.f32.gmra.mxu0 %v2264
        %v2362 = vpop.f32.mrf.mxu0
        %v2363 = vadd.f32 0.0, %v2362
        %v2364 = vpop.f32.mrf.mxu0
        %2365 = vdwg.mxu0
        %s2366 = scalar_lea.vmem [#allocation2], 1024
        %v2367 = vld [vmem:[%s2366] sm:$0xff]
        %v2368 = vld [vmem:[%s2366 + $0x8] sm:$0xff]
        %v2369 = vld [vmem:[%s2366 + $0x10] sm:$0xff]
        %v2370 = vld [vmem:[%s2366 + $0x18] sm:$0xff]
        %v2371 = vld [vmem:[%s2366 + $0x20] sm:$0xff]
        %v2372 = vld [vmem:[%s2366 + $0x28] sm:$0xff]
        %v2373 = vld [vmem:[%s2366 + $0x30] sm:$0xff]
        %v2374 = vld [vmem:[%s2366 + $0x38] sm:$0xff]
        %v2375 = vld [vmem:[%s2366 + $0x40] sm:$0xff]
        %v2376 = vld [vmem:[%s2366 + $0x48] sm:$0xff]
        %v2377 = vld [vmem:[%s2366 + $0x50] sm:$0xff]
        %v2378 = vld [vmem:[%s2366 + $0x58] sm:$0xff]
        %v2379 = vld [vmem:[%s2366 + $0x60] sm:$0xff]
        %v2380 = vld [vmem:[%s2366 + $0x68] sm:$0xff]
        %v2381 = vld [vmem:[%s2366 + $0x70] sm:$0xff]
        %v2382 = vld [vmem:[%s2366 + $0x78] sm:$0xff]
        %2383 = vmatprep.subr.mxu0 0.0
        %2384 = vmatpush1.msra.mxu0 %v2382
        %2385 = vmatprep.subr.mxu0 0.0
        %2386 = vmatpush1.msra.mxu0 %v2381
        %2387 = vmatprep.subr.mxu0 0.0
        %2388 = vmatpush1.msra.mxu0 %v2380
        %2389 = vmatprep.subr.mxu0 0.0
        %2390 = vmatpush1.msra.mxu0 %v2379
        %2391 = vmatprep.subr.mxu0 0.0
        %2392 = vmatpush1.msra.mxu0 %v2378
        %2393 = vmatprep.subr.mxu0 0.0
        %2394 = vmatpush1.msra.mxu0 %v2377
        %2395 = vmatprep.subr.mxu0 0.0
        %2396 = vmatpush1.msra.mxu0 %v2376
        %2397 = vmatprep.subr.mxu0 0.0
        %2398 = vmatpush1.msra.mxu0 %v2375
        %2399 = vmatprep.subr.mxu0 0.0
        %2400 = vmatpush1.msra.mxu0 %v2374
        %2401 = vmatprep.subr.mxu0 0.0
        %2402 = vmatpush1.msra.mxu0 %v2373
        %2403 = vmatprep.subr.mxu0 0.0
        %2404 = vmatpush1.msra.mxu0 %v2372
        %2405 = vmatprep.subr.mxu0 0.0
        %2406 = vmatpush1.msra.mxu0 %v2371
        %2407 = vmatprep.subr.mxu0 0.0
        %2408 = vmatpush1.msra.mxu0 %v2370
        %2409 = vmatprep.subr.mxu0 0.0
        %2410 = vmatpush1.msra.mxu0 %v2369
        %2411 = vmatprep.subr.mxu0 0.0
        %2412 = vmatpush1.msra.mxu0 %v2368
        %2413 = vmatprep.subr.mxu0 0.0
        %2414 = vmatpush1.msra.mxu0 %v2367
        %2415 = vmatprep.subr.mxu0 0.0
        %2416 = vmatpush2.msra.mxu0 0.0
        %2417 = vmatprep.subr.mxu0 0.0
        %2418 = vmatpush2.msra.mxu0 0.0
        %2419 = vmatprep.subr.mxu0 0.0
        %2420 = vmatpush2.msra.mxu0 0.0
        %2421 = vmatprep.subr.mxu0 0.0
        %2422 = vmatpush2.msra.mxu0 0.0
        %2423 = vmatprep.subr.mxu0 0.0
        %2424 = vmatpush2.msra.mxu0 0.0
        %2425 = vmatprep.subr.mxu0 0.0
        %2426 = vmatpush2.msra.mxu0 0.0
        %2427 = vmatprep.subr.mxu0 0.0
        %2428 = vmatpush2.msra.mxu0 0.0
        %2429 = vmatprep.subr.mxu0 0.0
        %2430 = vmatpush2.msra.mxu0 0.0
        %2431 = vmatprep.subr.mxu0 0.0
        %2432 = vmatpush2.msra.mxu0 0.0
        %2433 = vmatprep.subr.mxu0 0.0
        %2434 = vmatpush2.msra.mxu0 0.0
        %2435 = vmatprep.subr.mxu0 0.0
        %2436 = vmatpush2.msra.mxu0 0.0
        %2437 = vmatprep.subr.mxu0 0.0
        %2438 = vmatpush2.msra.mxu0 0.0
        %2439 = vmatprep.subr.mxu0 0.0
        %2440 = vmatpush2.msra.mxu0 0.0
        %2441 = vmatprep.subr.mxu0 0.0
        %2442 = vmatpush2.msra.mxu0 0.0
        %2443 = vmatprep.subr.mxu0 0.0
        %2444 = vmatpush2.msra.mxu0 0.0
        %2445 = vmatprep.subr.mxu0 0.0
        %2446 = vmatpush2.msra.mxu0 0.0
        %2447 = vmatprep.mubr.f32.mxu0 0.0
        %2448 = vmatmul.mubr.f32.gmra.mxu0 %v2333
        %v2449 = vpop.f32.mrf.mxu0
        %v2450 = vadd.f32 0.0, %v2449
        %v2451 = vpop.f32.mrf.mxu0
        %2452 = vmatprep.mubr.f32.mxu0 0.0
        %2453 = vmatmul.mubr.f32.gmra.mxu0 %v2338
        %v2454 = vpop.f32.mrf.mxu0
        %v2455 = vadd.f32 0.0, %v2454
        %v2456 = vpop.f32.mrf.mxu0
        %2457 = vmatprep.mubr.f32.mxu0 0.0
        %2458 = vmatmul.mubr.f32.gmra.mxu0 %v2343
        %v2459 = vpop.f32.mrf.mxu0
        %v2460 = vadd.f32 0.0, %v2459
        %v2461 = vpop.f32.mrf.mxu0
        %2462 = vmatprep.mubr.f32.mxu0 0.0
        %2463 = vmatmul.mubr.f32.gmra.mxu0 %v2348
        %v2464 = vpop.f32.mrf.mxu0
        %v2465 = vadd.f32 0.0, %v2464
        %v2466 = vpop.f32.mrf.mxu0
        %2467 = vmatprep.mubr.f32.mxu0 0.0
        %2468 = vmatmul.mubr.f32.gmra.mxu0 %v2353
        %v2469 = vpop.f32.mrf.mxu0
        %v2470 = vadd.f32 0.0, %v2469
        %v2471 = vpop.f32.mrf.mxu0
        %2472 = vmatprep.mubr.f32.mxu0 0.0
        %2473 = vmatmul.mubr.f32.gmra.mxu0 %v2358
        %v2474 = vpop.f32.mrf.mxu0
        %v2475 = vadd.f32 0.0, %v2474
        %v2476 = vpop.f32.mrf.mxu0
        %2477 = vmatprep.mubr.f32.mxu0 0.0
        %2478 = vmatmul.mubr.f32.gmra.mxu0 %v2363
        %v2479 = vpop.f32.mrf.mxu0
        %v2480 = vadd.f32 0.0, %v2479
        %v2481 = vpop.f32.mrf.mxu0
        %2482 = vdwg.mxu0
        %v2483 = vadd.f32 %v2244, %v2450
        %v2484 = vadd.f32 %v2245, %v2455
        %v2485 = vadd.f32 %v2246, %v2460
        %v2486 = vadd.f32 %v2247, %v2465
        %v2487 = vadd.f32 %v2248, %v2470
        %v2488 = vadd.f32 %v2249, %v2475
        %v2489 = vadd.f32 %v2250, %v2480
        %v2490 = vld [vmem:[#allocation4] sm:$0x1]
        %v2492 = vlaneseq
        %v2493 = vshrl.u32 %v2492, 7
        %v2494 = vsub.s32 0, %v2493
        %v2495 = vrot.slane %v2490, %v2494
        %v2497 = vadd.f32 %v2483, %v2495
        %v2498 = vadd.f32 %v2484, %v2495
        %v2499 = vadd.f32 %v2485, %v2495
        %v2500 = vadd.f32 %v2486, %v2495
        %v2501 = vadd.f32 %v2487, %v2495
        %v2502 = vadd.f32 %v2488, %v2495
        %v2503 = vadd.f32 %v2489, %v2495
        %v2504 = vmax.f32 %v2497, 0.0
        %v2505 = vmax.f32 %v2498, 0.0
        %v2506 = vmax.f32 %v2499, 0.0
        %v2507 = vmax.f32 %v2500, 0.0
        %v2508 = vmax.f32 %v2501, 0.0
        %v2509 = vmax.f32 %v2502, 0.0
        %v2510 = vmax.f32 %v2503, 0.0
        %v2511 = vld [vmem:[#allocation7] sm:$0xff]
        %v2512 = vld [vmem:[#allocation7 + $0x8] sm:$0xff]
        %vm2513 = vcmask 457728
        %v2515 = vsel %vm2513, %v2511, 0
        %v2518 = vsel %vm2513, %v2512, 0
        %2520 = vmatprep.subr.mxu0 0.0
        %2521 = vmatpush1.msra.mxu0 0.0
        %2522 = vmatprep.subr.mxu0 0.0
        %2523 = vmatpush1.msra.mxu0 0.0
        %2524 = vmatprep.subr.mxu0 0.0
        %2525 = vmatpush1.msra.mxu0 0.0
        %2526 = vmatprep.subr.mxu0 0.0
        %2527 = vmatpush1.msra.mxu0 0.0
        %2528 = vmatprep.subr.mxu0 0.0
        %2529 = vmatpush1.msra.mxu0 0.0
        %2530 = vmatprep.subr.mxu0 0.0
        %2531 = vmatpush1.msra.mxu0 0.0
        %2532 = vmatprep.subr.mxu0 0.0
        %2533 = vmatpush1.msra.mxu0 0.0
        %2534 = vmatprep.subr.mxu0 0.0
        %2535 = vmatpush1.msra.mxu0 0.0
        %2536 = vmatprep.subr.mxu0 0.0
        %2537 = vmatpush1.msra.mxu0 0.0
        %2538 = vmatprep.subr.mxu0 0.0
        %2539 = vmatpush1.msra.mxu0 %v2510
        %2540 = vmatprep.subr.mxu0 0.0
        %2541 = vmatpush1.msra.mxu0 %v2509
        %2542 = vmatprep.subr.mxu0 0.0
        %2543 = vmatpush1.msra.mxu0 %v2508
        %2544 = vmatprep.subr.mxu0 0.0
        %2545 = vmatpush1.msra.mxu0 %v2507
        %2546 = vmatprep.subr.mxu0 0.0
        %2547 = vmatpush1.msra.mxu0 %v2506
        %2548 = vmatprep.subr.mxu0 0.0
        %2549 = vmatpush1.msra.mxu0 %v2505
        %2550 = vmatprep.subr.mxu0 0.0
        %2551 = vmatpush1.msra.mxu0 %v2504
        %2552 = vmatprep.subr.mxu0 0.0
        %2553 = vmatpush2.msra.mxu0 0.0
        %2554 = vmatprep.subr.mxu0 0.0
        %2555 = vmatpush2.msra.mxu0 0.0
        %2556 = vmatprep.subr.mxu0 0.0
        %2557 = vmatpush2.msra.mxu0 0.0
        %2558 = vmatprep.subr.mxu0 0.0
        %2559 = vmatpush2.msra.mxu0 0.0
        %2560 = vmatprep.subr.mxu0 0.0
        %2561 = vmatpush2.msra.mxu0 0.0
        %2562 = vmatprep.subr.mxu0 0.0
        %2563 = vmatpush2.msra.mxu0 0.0
        %2564 = vmatprep.subr.mxu0 0.0
        %2565 = vmatpush2.msra.mxu0 0.0
        %2566 = vmatprep.subr.mxu0 0.0
        %2567 = vmatpush2.msra.mxu0 0.0
        %2568 = vmatprep.subr.mxu0 0.0
        %2569 = vmatpush2.msra.mxu0 0.0
        %2570 = vmatprep.subr.mxu0 0.0
        %2571 = vmatpush2.msra.mxu0 0.0
        %2572 = vmatprep.subr.mxu0 0.0
        %2573 = vmatpush2.msra.mxu0 0.0
        %2574 = vmatprep.subr.mxu0 0.0
        %2575 = vmatpush2.msra.mxu0 0.0
        %2576 = vmatprep.subr.mxu0 0.0
        %2577 = vmatpush2.msra.mxu0 0.0
        %2578 = vmatprep.subr.mxu0 0.0
        %2579 = vmatpush2.msra.mxu0 0.0
        %2580 = vmatprep.subr.mxu0 0.0
        %2581 = vmatpush2.msra.mxu0 0.0
        %2582 = vmatprep.subr.mxu0 0.0
        %2583 = vmatpush2.msra.mxu0 0.0
        %2584 = vmatprep.mubr.f32.mxu0 0.0
        %2585 = vmatmul.mubr.f32.gmra.mxu0 %v2515
        %v2586 = vpop.f32.mrf.mxu0
        %v2587 = vadd.f32 0.0, %v2586
        %v2588 = vpop.f32.mrf.mxu0
        %2589 = vmatprep.mubr.f32.mxu0 0.0
        %2590 = vmatmul.mubr.f32.gmra.mxu0 %v2518
        %v2591 = vpop.f32.mrf.mxu0
        %v2592 = vadd.f32 0.0, %v2591
        %v2593 = vpop.f32.mrf.mxu0
        %2594 = vdwg.mxu0
        %s2595 = scalar_lea.vmem [#allocation2], 1152
        %v2596 = vld [vmem:[%s2595] sm:$0xff]
        %v2597 = vld [vmem:[%s2595 + $0x8] sm:$0xff]
        %v2598 = vld [vmem:[%s2595 + $0x10] sm:$0xff]
        %v2599 = vld [vmem:[%s2595 + $0x18] sm:$0xff]
        %v2600 = vld [vmem:[%s2595 + $0x20] sm:$0xff]
        %v2601 = vld [vmem:[%s2595 + $0x28] sm:$0xff]
        %v2602 = vld [vmem:[%s2595 + $0x30] sm:$0xff]
        %v2603 = vld [vmem:[%s2595 + $0x38] sm:$0xff]
        %v2604 = vld [vmem:[%s2595 + $0x40] sm:$0xff]
        %v2605 = vld [vmem:[%s2595 + $0x48] sm:$0xff]
        %v2606 = vld [vmem:[%s2595 + $0x50] sm:$0xff]
        %v2607 = vld [vmem:[%s2595 + $0x58] sm:$0xff]
        %v2608 = vld [vmem:[%s2595 + $0x60] sm:$0xff]
        %v2609 = vld [vmem:[%s2595 + $0x68] sm:$0xff]
        %v2610 = vld [vmem:[%s2595 + $0x70] sm:$0xff]
        %v2611 = vld [vmem:[%s2595 + $0x78] sm:$0xff]
        %s2612 = scalar_lea.vmem [#allocation7], 16
        %v2613 = vld [vmem:[%s2612] sm:$0xff]
        %v2614 = vld [vmem:[%s2612 + $0x8] sm:$0xff]
        %v2616 = vsel %vm2513, %v2613, 0
        %v2619 = vsel %vm2513, %v2614, 0
        %2621 = vmatprep.subr.mxu0 0.0
        %2622 = vmatpush1.msra.mxu0 0.0
        %2623 = vmatprep.subr.mxu0 0.0
        %2624 = vmatpush1.msra.mxu0 0.0
        %2625 = vmatprep.subr.mxu0 0.0
        %2626 = vmatpush1.msra.mxu0 0.0
        %2627 = vmatprep.subr.mxu0 0.0
        %2628 = vmatpush1.msra.mxu0 0.0
        %2629 = vmatprep.subr.mxu0 0.0
        %2630 = vmatpush1.msra.mxu0 0.0
        %2631 = vmatprep.subr.mxu0 0.0
        %2632 = vmatpush1.msra.mxu0 0.0
        %2633 = vmatprep.subr.mxu0 0.0
        %2634 = vmatpush1.msra.mxu0 0.0
        %2635 = vmatprep.subr.mxu0 0.0
        %2636 = vmatpush1.msra.mxu0 0.0
        %2637 = vmatprep.subr.mxu0 0.0
        %2638 = vmatpush1.msra.mxu0 0.0
        %2639 = vmatprep.subr.mxu0 0.0
        %2640 = vmatpush1.msra.mxu0 %v2510
        %2641 = vmatprep.subr.mxu0 0.0
        %2642 = vmatpush1.msra.mxu0 %v2509
        %2643 = vmatprep.subr.mxu0 0.0
        %2644 = vmatpush1.msra.mxu0 %v2508
        %2645 = vmatprep.subr.mxu0 0.0
        %2646 = vmatpush1.msra.mxu0 %v2507
        %2647 = vmatprep.subr.mxu0 0.0
        %2648 = vmatpush1.msra.mxu0 %v2506
        %2649 = vmatprep.subr.mxu0 0.0
        %2650 = vmatpush1.msra.mxu0 %v2505
        %2651 = vmatprep.subr.mxu0 0.0
        %2652 = vmatpush1.msra.mxu0 %v2504
        %2653 = vmatprep.subr.mxu0 0.0
        %2654 = vmatpush2.msra.mxu0 0.0
        %2655 = vmatprep.subr.mxu0 0.0
        %2656 = vmatpush2.msra.mxu0 0.0
        %2657 = vmatprep.subr.mxu0 0.0
        %2658 = vmatpush2.msra.mxu0 0.0
        %2659 = vmatprep.subr.mxu0 0.0
        %2660 = vmatpush2.msra.mxu0 0.0
        %2661 = vmatprep.subr.mxu0 0.0
        %2662 = vmatpush2.msra.mxu0 0.0
        %2663 = vmatprep.subr.mxu0 0.0
        %2664 = vmatpush2.msra.mxu0 0.0
        %2665 = vmatprep.subr.mxu0 0.0
        %2666 = vmatpush2.msra.mxu0 0.0
        %2667 = vmatprep.subr.mxu0 0.0
        %2668 = vmatpush2.msra.mxu0 0.0
        %2669 = vmatprep.subr.mxu0 0.0
        %2670 = vmatpush2.msra.mxu0 0.0
        %2671 = vmatprep.subr.mxu0 0.0
        %2672 = vmatpush2.msra.mxu0 0.0
        %2673 = vmatprep.subr.mxu0 0.0
        %2674 = vmatpush2.msra.mxu0 0.0
        %2675 = vmatprep.subr.mxu0 0.0
        %2676 = vmatpush2.msra.mxu0 0.0
        %2677 = vmatprep.subr.mxu0 0.0
        %2678 = vmatpush2.msra.mxu0 0.0
        %2679 = vmatprep.subr.mxu0 0.0
        %2680 = vmatpush2.msra.mxu0 0.0
        %2681 = vmatprep.subr.mxu0 0.0
        %2682 = vmatpush2.msra.mxu0 0.0
        %2683 = vmatprep.subr.mxu0 0.0
        %2684 = vmatpush2.msra.mxu0 0.0
        %2685 = vmatprep.mubr.f32.mxu0 0.0
        %2686 = vmatmul.mubr.f32.gmra.mxu0 %v2616
        %v2687 = vpop.f32.mrf.mxu0
        %v2688 = vadd.f32 0.0, %v2687
        %v2689 = vpop.f32.mrf.mxu0
        %2690 = vmatprep.mubr.f32.mxu0 0.0
        %2691 = vmatmul.mubr.f32.gmra.mxu0 %v2619
        %v2692 = vpop.f32.mrf.mxu0
        %v2693 = vadd.f32 0.0, %v2692
        %v2694 = vpop.f32.mrf.mxu0
        %2695 = vdwg.mxu0
        %s2696 = scalar_lea.vmem [#allocation2], 1280
        %v2697 = vld [vmem:[%s2696] sm:$0xff]
        %v2698 = vld [vmem:[%s2696 + $0x8] sm:$0xff]
        %v2699 = vld [vmem:[%s2696 + $0x10] sm:$0xff]
        %v2700 = vld [vmem:[%s2696 + $0x18] sm:$0xff]
        %v2701 = vld [vmem:[%s2696 + $0x20] sm:$0xff]
        %v2702 = vld [vmem:[%s2696 + $0x28] sm:$0xff]
        %v2703 = vld [vmem:[%s2696 + $0x30] sm:$0xff]
        %v2704 = vld [vmem:[%s2696 + $0x38] sm:$0xff]
        %v2705 = vld [vmem:[%s2696 + $0x40] sm:$0xff]
        %v2706 = vld [vmem:[%s2696 + $0x48] sm:$0xff]
        %v2707 = vld [vmem:[%s2696 + $0x50] sm:$0xff]
        %v2708 = vld [vmem:[%s2696 + $0x58] sm:$0xff]
        %v2709 = vld [vmem:[%s2696 + $0x60] sm:$0xff]
        %v2710 = vld [vmem:[%s2696 + $0x68] sm:$0xff]
        %v2711 = vld [vmem:[%s2696 + $0x70] sm:$0xff]
        %v2712 = vld [vmem:[%s2696 + $0x78] sm:$0xff]
        %2713 = vmatprep.subr.mxu0 0.0
        %2714 = vmatpush1.msra.mxu0 %v2712
        %2715 = vmatprep.subr.mxu0 0.0
        %2716 = vmatpush1.msra.mxu0 %v2711
        %2717 = vmatprep.subr.mxu0 0.0
        %2718 = vmatpush1.msra.mxu0 %v2710
        %2719 = vmatprep.subr.mxu0 0.0
        %2720 = vmatpush1.msra.mxu0 %v2709
        %2721 = vmatprep.subr.mxu0 0.0
        %2722 = vmatpush1.msra.mxu0 %v2708
        %2723 = vmatprep.subr.mxu0 0.0
        %2724 = vmatpush1.msra.mxu0 %v2707
        %2725 = vmatprep.subr.mxu0 0.0
        %2726 = vmatpush1.msra.mxu0 %v2706
        %2727 = vmatprep.subr.mxu0 0.0
        %2728 = vmatpush1.msra.mxu0 %v2705
        %2729 = vmatprep.subr.mxu0 0.0
        %2730 = vmatpush1.msra.mxu0 %v2704
        %2731 = vmatprep.subr.mxu0 0.0
        %2732 = vmatpush1.msra.mxu0 %v2703
        %2733 = vmatprep.subr.mxu0 0.0
        %2734 = vmatpush1.msra.mxu0 %v2702
        %2735 = vmatprep.subr.mxu0 0.0
        %2736 = vmatpush1.msra.mxu0 %v2701
        %2737 = vmatprep.subr.mxu0 0.0
        %2738 = vmatpush1.msra.mxu0 %v2700
        %2739 = vmatprep.subr.mxu0 0.0
        %2740 = vmatpush1.msra.mxu0 %v2699
        %2741 = vmatprep.subr.mxu0 0.0
        %2742 = vmatpush1.msra.mxu0 %v2698
        %2743 = vmatprep.subr.mxu0 0.0
        %2744 = vmatpush1.msra.mxu0 %v2697
        %2745 = vmatprep.subr.mxu0 0.0
        %2746 = vmatpush2.msra.mxu0 0.0
        %2747 = vmatprep.subr.mxu0 0.0
        %2748 = vmatpush2.msra.mxu0 0.0
        %2749 = vmatprep.subr.mxu0 0.0
        %2750 = vmatpush2.msra.mxu0 0.0
        %2751 = vmatprep.subr.mxu0 0.0
        %2752 = vmatpush2.msra.mxu0 0.0
        %2753 = vmatprep.subr.mxu0 0.0
        %2754 = vmatpush2.msra.mxu0 0.0
        %2755 = vmatprep.subr.mxu0 0.0
        %2756 = vmatpush2.msra.mxu0 0.0
        %2757 = vmatprep.subr.mxu0 0.0
        %2758 = vmatpush2.msra.mxu0 0.0
        %2759 = vmatprep.subr.mxu0 0.0
        %2760 = vmatpush2.msra.mxu0 0.0
        %2761 = vmatprep.subr.mxu0 0.0
        %2762 = vmatpush2.msra.mxu0 0.0
        %2763 = vmatprep.subr.mxu0 0.0
        %2764 = vmatpush2.msra.mxu0 0.0
        %2765 = vmatprep.subr.mxu0 0.0
        %2766 = vmatpush2.msra.mxu0 0.0
        %2767 = vmatprep.subr.mxu0 0.0
        %2768 = vmatpush2.msra.mxu0 0.0
        %2769 = vmatprep.subr.mxu0 0.0
        %2770 = vmatpush2.msra.mxu0 0.0
        %2771 = vmatprep.subr.mxu0 0.0
        %2772 = vmatpush2.msra.mxu0 0.0
        %2773 = vmatprep.subr.mxu0 0.0
        %2774 = vmatpush2.msra.mxu0 0.0
        %2775 = vmatprep.subr.mxu0 0.0
        %2776 = vmatpush2.msra.mxu0 0.0
        %2777 = vmatprep.mubr.f32.mxu0 0.0
        %2778 = vmatmul.mubr.f32.gmra.mxu0 %v2688
        %v2779 = vpop.f32.mrf.mxu0
        %v2780 = vadd.f32 0.0, %v2779
        %v2781 = vpop.f32.mrf.mxu0
        %2782 = vmatprep.mubr.f32.mxu0 0.0
        %2783 = vmatmul.mubr.f32.gmra.mxu0 %v2693
        %v2784 = vpop.f32.mrf.mxu0
        %v2785 = vadd.f32 0.0, %v2784
        %v2786 = vpop.f32.mrf.mxu0
        %2787 = vdwg.mxu0
        %2788 = vmatprep.subr.mxu0 0.0
        %2789 = vmatpush1.msra.mxu0 %v2611
        %2790 = vmatprep.subr.mxu0 0.0
        %2791 = vmatpush1.msra.mxu0 %v2610
        %2792 = vmatprep.subr.mxu0 0.0
        %2793 = vmatpush1.msra.mxu0 %v2609
        %2794 = vmatprep.subr.mxu0 0.0
        %2795 = vmatpush1.msra.mxu0 %v2608
        %2796 = vmatprep.subr.mxu0 0.0
        %2797 = vmatpush1.msra.mxu0 %v2607
        %2798 = vmatprep.subr.mxu0 0.0
        %2799 = vmatpush1.msra.mxu0 %v2606
        %2800 = vmatprep.subr.mxu0 0.0
        %2801 = vmatpush1.msra.mxu0 %v2605
        %2802 = vmatprep.subr.mxu0 0.0
        %2803 = vmatpush1.msra.mxu0 %v2604
        %2804 = vmatprep.subr.mxu0 0.0
        %2805 = vmatpush1.msra.mxu0 %v2603
        %2806 = vmatprep.subr.mxu0 0.0
        %2807 = vmatpush1.msra.mxu0 %v2602
        %2808 = vmatprep.subr.mxu0 0.0
        %2809 = vmatpush1.msra.mxu0 %v2601
        %2810 = vmatprep.subr.mxu0 0.0
        %2811 = vmatpush1.msra.mxu0 %v2600
        %2812 = vmatprep.subr.mxu0 0.0
        %2813 = vmatpush1.msra.mxu0 %v2599
        %2814 = vmatprep.subr.mxu0 0.0
        %2815 = vmatpush1.msra.mxu0 %v2598
        %2816 = vmatprep.subr.mxu0 0.0
        %2817 = vmatpush1.msra.mxu0 %v2597
        %2818 = vmatprep.subr.mxu0 0.0
        %2819 = vmatpush1.msra.mxu0 %v2596
        %2820 = vmatprep.subr.mxu0 0.0
        %2821 = vmatpush2.msra.mxu0 0.0
        %2822 = vmatprep.subr.mxu0 0.0
        %2823 = vmatpush2.msra.mxu0 0.0
        %2824 = vmatprep.subr.mxu0 0.0
        %2825 = vmatpush2.msra.mxu0 0.0
        %2826 = vmatprep.subr.mxu0 0.0
        %2827 = vmatpush2.msra.mxu0 0.0
        %2828 = vmatprep.subr.mxu0 0.0
        %2829 = vmatpush2.msra.mxu0 0.0
        %2830 = vmatprep.subr.mxu0 0.0
        %2831 = vmatpush2.msra.mxu0 0.0
        %2832 = vmatprep.subr.mxu0 0.0
        %2833 = vmatpush2.msra.mxu0 0.0
        %2834 = vmatprep.subr.mxu0 0.0
        %2835 = vmatpush2.msra.mxu0 0.0
        %2836 = vmatprep.subr.mxu0 0.0
        %2837 = vmatpush2.msra.mxu0 0.0
        %2838 = vmatprep.subr.mxu0 0.0
        %2839 = vmatpush2.msra.mxu0 0.0
        %2840 = vmatprep.subr.mxu0 0.0
        %2841 = vmatpush2.msra.mxu0 0.0
        %2842 = vmatprep.subr.mxu0 0.0
        %2843 = vmatpush2.msra.mxu0 0.0
        %2844 = vmatprep.subr.mxu0 0.0
        %2845 = vmatpush2.msra.mxu0 0.0
        %2846 = vmatprep.subr.mxu0 0.0
        %2847 = vmatpush2.msra.mxu0 0.0
        %2848 = vmatprep.subr.mxu0 0.0
        %2849 = vmatpush2.msra.mxu0 0.0
        %2850 = vmatprep.subr.mxu0 0.0
        %2851 = vmatpush2.msra.mxu0 0.0
        %2852 = vmatprep.mubr.f32.mxu0 0.0
        %2853 = vmatmul.mubr.f32.gmra.mxu0 %v2587
        %v2854 = vpop.f32.mrf.mxu0
        %v2855 = vadd.f32 %v2780, %v2854
        %v2856 = vpop.f32.mrf.mxu0
        %2857 = vmatprep.mubr.f32.mxu0 0.0
        %2858 = vmatmul.mubr.f32.gmra.mxu0 %v2592
        %v2859 = vpop.f32.mrf.mxu0
        %v2860 = vadd.f32 %v2785, %v2859
        %v2861 = vpop.f32.mrf.mxu0
        %2862 = vdwg.mxu0
        %s2863 = scalar_lea.vmem [#allocation7], 32
        %v2864 = vld [vmem:[%s2863] sm:$0xff]
        %v2865 = vld [vmem:[%s2863 + $0x8] sm:$0xff]
        %v2867 = vsel %vm2513, %v2864, 0
        %v2870 = vsel %vm2513, %v2865, 0
        %2872 = vmatprep.subr.mxu0 0.0
        %2873 = vmatpush1.msra.mxu0 0.0
        %2874 = vmatprep.subr.mxu0 0.0
        %2875 = vmatpush1.msra.mxu0 0.0
        %2876 = vmatprep.subr.mxu0 0.0
        %2877 = vmatpush1.msra.mxu0 0.0
        %2878 = vmatprep.subr.mxu0 0.0
        %2879 = vmatpush1.msra.mxu0 0.0
        %2880 = vmatprep.subr.mxu0 0.0
        %2881 = vmatpush1.msra.mxu0 0.0
        %2882 = vmatprep.subr.mxu0 0.0
        %2883 = vmatpush1.msra.mxu0 0.0
        %2884 = vmatprep.subr.mxu0 0.0
        %2885 = vmatpush1.msra.mxu0 0.0
        %2886 = vmatprep.subr.mxu0 0.0
        %2887 = vmatpush1.msra.mxu0 0.0
        %2888 = vmatprep.subr.mxu0 0.0
        %2889 = vmatpush1.msra.mxu0 0.0
        %2890 = vmatprep.subr.mxu0 0.0
        %2891 = vmatpush1.msra.mxu0 %v2510
        %2892 = vmatprep.subr.mxu0 0.0
        %2893 = vmatpush1.msra.mxu0 %v2509
        %2894 = vmatprep.subr.mxu0 0.0
        %2895 = vmatpush1.msra.mxu0 %v2508
        %2896 = vmatprep.subr.mxu0 0.0
        %2897 = vmatpush1.msra.mxu0 %v2507
        %2898 = vmatprep.subr.mxu0 0.0
        %2899 = vmatpush1.msra.mxu0 %v2506
        %2900 = vmatprep.subr.mxu0 0.0
        %2901 = vmatpush1.msra.mxu0 %v2505
        %2902 = vmatprep.subr.mxu0 0.0
        %2903 = vmatpush1.msra.mxu0 %v2504
        %2904 = vmatprep.subr.mxu0 0.0
        %2905 = vmatpush2.msra.mxu0 0.0
        %2906 = vmatprep.subr.mxu0 0.0
        %2907 = vmatpush2.msra.mxu0 0.0
        %2908 = vmatprep.subr.mxu0 0.0
        %2909 = vmatpush2.msra.mxu0 0.0
        %2910 = vmatprep.subr.mxu0 0.0
        %2911 = vmatpush2.msra.mxu0 0.0
        %2912 = vmatprep.subr.mxu0 0.0
        %2913 = vmatpush2.msra.mxu0 0.0
        %2914 = vmatprep.subr.mxu0 0.0
        %2915 = vmatpush2.msra.mxu0 0.0
        %2916 = vmatprep.subr.mxu0 0.0
        %2917 = vmatpush2.msra.mxu0 0.0
        %2918 = vmatprep.subr.mxu0 0.0
        %2919 = vmatpush2.msra.mxu0 0.0
        %2920 = vmatprep.subr.mxu0 0.0
        %2921 = vmatpush2.msra.mxu0 0.0
        %2922 = vmatprep.subr.mxu0 0.0
        %2923 = vmatpush2.msra.mxu0 0.0
        %2924 = vmatprep.subr.mxu0 0.0
        %2925 = vmatpush2.msra.mxu0 0.0
        %2926 = vmatprep.subr.mxu0 0.0
        %2927 = vmatpush2.msra.mxu0 0.0
        %2928 = vmatprep.subr.mxu0 0.0
        %2929 = vmatpush2.msra.mxu0 0.0
        %2930 = vmatprep.subr.mxu0 0.0
        %2931 = vmatpush2.msra.mxu0 0.0
        %2932 = vmatprep.subr.mxu0 0.0
        %2933 = vmatpush2.msra.mxu0 0.0
        %2934 = vmatprep.subr.mxu0 0.0
        %2935 = vmatpush2.msra.mxu0 0.0
        %2936 = vmatprep.mubr.f32.mxu0 0.0
        %2937 = vmatmul.mubr.f32.gmra.mxu0 %v2867
        %v2938 = vpop.f32.mrf.mxu0
        %v2939 = vadd.f32 0.0, %v2938
        %v2940 = vpop.f32.mrf.mxu0
        %2941 = vmatprep.mubr.f32.mxu0 0.0
        %2942 = vmatmul.mubr.f32.gmra.mxu0 %v2870
        %v2943 = vpop.f32.mrf.mxu0
        %v2944 = vadd.f32 0.0, %v2943
        %v2945 = vpop.f32.mrf.mxu0
        %2946 = vdwg.mxu0
        %s2947 = scalar_lea.vmem [#allocation2], 1408
        %v2948 = vld [vmem:[%s2947] sm:$0xff]
        %v2949 = vld [vmem:[%s2947 + $0x8] sm:$0xff]
        %v2950 = vld [vmem:[%s2947 + $0x10] sm:$0xff]
        %v2951 = vld [vmem:[%s2947 + $0x18] sm:$0xff]
        %v2952 = vld [vmem:[%s2947 + $0x20] sm:$0xff]
        %v2953 = vld [vmem:[%s2947 + $0x28] sm:$0xff]
        %v2954 = vld [vmem:[%s2947 + $0x30] sm:$0xff]
        %v2955 = vld [vmem:[%s2947 + $0x38] sm:$0xff]
        %v2956 = vld [vmem:[%s2947 + $0x40] sm:$0xff]
        %v2957 = vld [vmem:[%s2947 + $0x48] sm:$0xff]
        %v2958 = vld [vmem:[%s2947 + $0x50] sm:$0xff]
        %v2959 = vld [vmem:[%s2947 + $0x58] sm:$0xff]
        %v2960 = vld [vmem:[%s2947 + $0x60] sm:$0xff]
        %v2961 = vld [vmem:[%s2947 + $0x68] sm:$0xff]
        %v2962 = vld [vmem:[%s2947 + $0x70] sm:$0xff]
        %v2963 = vld [vmem:[%s2947 + $0x78] sm:$0xff]
        %2964 = vmatprep.subr.mxu0 0.0
        %2965 = vmatpush1.msra.mxu0 %v2963
        %2966 = vmatprep.subr.mxu0 0.0
        %2967 = vmatpush1.msra.mxu0 %v2962
        %2968 = vmatprep.subr.mxu0 0.0
        %2969 = vmatpush1.msra.mxu0 %v2961
        %2970 = vmatprep.subr.mxu0 0.0
        %2971 = vmatpush1.msra.mxu0 %v2960
        %2972 = vmatprep.subr.mxu0 0.0
        %2973 = vmatpush1.msra.mxu0 %v2959
        %2974 = vmatprep.subr.mxu0 0.0
        %2975 = vmatpush1.msra.mxu0 %v2958
        %2976 = vmatprep.subr.mxu0 0.0
        %2977 = vmatpush1.msra.mxu0 %v2957
        %2978 = vmatprep.subr.mxu0 0.0
        %2979 = vmatpush1.msra.mxu0 %v2956
        %2980 = vmatprep.subr.mxu0 0.0
        %2981 = vmatpush1.msra.mxu0 %v2955
        %2982 = vmatprep.subr.mxu0 0.0
        %2983 = vmatpush1.msra.mxu0 %v2954
        %2984 = vmatprep.subr.mxu0 0.0
        %2985 = vmatpush1.msra.mxu0 %v2953
        %2986 = vmatprep.subr.mxu0 0.0
        %2987 = vmatpush1.msra.mxu0 %v2952
        %2988 = vmatprep.subr.mxu0 0.0
        %2989 = vmatpush1.msra.mxu0 %v2951
        %2990 = vmatprep.subr.mxu0 0.0
        %2991 = vmatpush1.msra.mxu0 %v2950
        %2992 = vmatprep.subr.mxu0 0.0
        %2993 = vmatpush1.msra.mxu0 %v2949
        %2994 = vmatprep.subr.mxu0 0.0
        %2995 = vmatpush1.msra.mxu0 %v2948
        %2996 = vmatprep.subr.mxu0 0.0
        %2997 = vmatpush2.msra.mxu0 0.0
        %2998 = vmatprep.subr.mxu0 0.0
        %2999 = vmatpush2.msra.mxu0 0.0
        %3000 = vmatprep.subr.mxu0 0.0
        %3001 = vmatpush2.msra.mxu0 0.0
        %3002 = vmatprep.subr.mxu0 0.0
        %3003 = vmatpush2.msra.mxu0 0.0
        %3004 = vmatprep.subr.mxu0 0.0
        %3005 = vmatpush2.msra.mxu0 0.0
        %3006 = vmatprep.subr.mxu0 0.0
        %3007 = vmatpush2.msra.mxu0 0.0
        %3008 = vmatprep.subr.mxu0 0.0
        %3009 = vmatpush2.msra.mxu0 0.0
        %3010 = vmatprep.subr.mxu0 0.0
        %3011 = vmatpush2.msra.mxu0 0.0
        %3012 = vmatprep.subr.mxu0 0.0
        %3013 = vmatpush2.msra.mxu0 0.0
        %3014 = vmatprep.subr.mxu0 0.0
        %3015 = vmatpush2.msra.mxu0 0.0
        %3016 = vmatprep.subr.mxu0 0.0
        %3017 = vmatpush2.msra.mxu0 0.0
        %3018 = vmatprep.subr.mxu0 0.0
        %3019 = vmatpush2.msra.mxu0 0.0
        %3020 = vmatprep.subr.mxu0 0.0
        %3021 = vmatpush2.msra.mxu0 0.0
        %3022 = vmatprep.subr.mxu0 0.0
        %3023 = vmatpush2.msra.mxu0 0.0
        %3024 = vmatprep.subr.mxu0 0.0
        %3025 = vmatpush2.msra.mxu0 0.0
        %3026 = vmatprep.subr.mxu0 0.0
        %3027 = vmatpush2.msra.mxu0 0.0
        %3028 = vmatprep.mubr.f32.mxu0 0.0
        %3029 = vmatmul.mubr.f32.gmra.mxu0 %v2939
        %v3030 = vpop.f32.mrf.mxu0
        %v3031 = vadd.f32 0.0, %v3030
        %v3032 = vpop.f32.mrf.mxu0
        %3033 = vmatprep.mubr.f32.mxu0 0.0
        %3034 = vmatmul.mubr.f32.gmra.mxu0 %v2944
        %v3035 = vpop.f32.mrf.mxu0
        %v3036 = vadd.f32 0.0, %v3035
        %v3037 = vpop.f32.mrf.mxu0
        %3038 = vdwg.mxu0
        %v3039 = vadd.f32 %v2855, %v3031
        %v3040 = vadd.f32 %v2860, %v3036
        %s3041 = scalar_lea.vmem [#allocation7], 48
        %v3042 = vld [vmem:[%s3041] sm:$0xff]
        %v3043 = vld [vmem:[%s3041 + $0x8] sm:$0xff]
        %v3045 = vsel %vm2513, %v3042, 0
        %v3048 = vsel %vm2513, %v3043, 0
        %3050 = vmatprep.subr.mxu0 0.0
        %3051 = vmatpush1.msra.mxu0 0.0
        %3052 = vmatprep.subr.mxu0 0.0
        %3053 = vmatpush1.msra.mxu0 0.0
        %3054 = vmatprep.subr.mxu0 0.0
        %3055 = vmatpush1.msra.mxu0 0.0
        %3056 = vmatprep.subr.mxu0 0.0
        %3057 = vmatpush1.msra.mxu0 0.0
        %3058 = vmatprep.subr.mxu0 0.0
        %3059 = vmatpush1.msra.mxu0 0.0
        %3060 = vmatprep.subr.mxu0 0.0
        %3061 = vmatpush1.msra.mxu0 0.0
        %3062 = vmatprep.subr.mxu0 0.0
        %3063 = vmatpush1.msra.mxu0 0.0
        %3064 = vmatprep.subr.mxu0 0.0
        %3065 = vmatpush1.msra.mxu0 0.0
        %3066 = vmatprep.subr.mxu0 0.0
        %3067 = vmatpush1.msra.mxu0 0.0
        %3068 = vmatprep.subr.mxu0 0.0
        %3069 = vmatpush1.msra.mxu0 %v2510
        %3070 = vmatprep.subr.mxu0 0.0
        %3071 = vmatpush1.msra.mxu0 %v2509
        %3072 = vmatprep.subr.mxu0 0.0
        %3073 = vmatpush1.msra.mxu0 %v2508
        %3074 = vmatprep.subr.mxu0 0.0
        %3075 = vmatpush1.msra.mxu0 %v2507
        %3076 = vmatprep.subr.mxu0 0.0
        %3077 = vmatpush1.msra.mxu0 %v2506
        %3078 = vmatprep.subr.mxu0 0.0
        %3079 = vmatpush1.msra.mxu0 %v2505
        %3080 = vmatprep.subr.mxu0 0.0
        %3081 = vmatpush1.msra.mxu0 %v2504
        %3082 = vmatprep.subr.mxu0 0.0
        %3083 = vmatpush2.msra.mxu0 0.0
        %3084 = vmatprep.subr.mxu0 0.0
        %3085 = vmatpush2.msra.mxu0 0.0
        %3086 = vmatprep.subr.mxu0 0.0
        %3087 = vmatpush2.msra.mxu0 0.0
        %3088 = vmatprep.subr.mxu0 0.0
        %3089 = vmatpush2.msra.mxu0 0.0
        %3090 = vmatprep.subr.mxu0 0.0
        %3091 = vmatpush2.msra.mxu0 0.0
        %3092 = vmatprep.subr.mxu0 0.0
        %3093 = vmatpush2.msra.mxu0 0.0
        %3094 = vmatprep.subr.mxu0 0.0
        %3095 = vmatpush2.msra.mxu0 0.0
        %3096 = vmatprep.subr.mxu0 0.0
        %3097 = vmatpush2.msra.mxu0 0.0
        %3098 = vmatprep.subr.mxu0 0.0
        %3099 = vmatpush2.msra.mxu0 0.0
        %3100 = vmatprep.subr.mxu0 0.0
        %3101 = vmatpush2.msra.mxu0 0.0
        %3102 = vmatprep.subr.mxu0 0.0
        %3103 = vmatpush2.msra.mxu0 0.0
        %3104 = vmatprep.subr.mxu0 0.0
        %3105 = vmatpush2.msra.mxu0 0.0
        %3106 = vmatprep.subr.mxu0 0.0
        %3107 = vmatpush2.msra.mxu0 0.0
        %3108 = vmatprep.subr.mxu0 0.0
        %3109 = vmatpush2.msra.mxu0 0.0
        %3110 = vmatprep.subr.mxu0 0.0
        %3111 = vmatpush2.msra.mxu0 0.0
        %3112 = vmatprep.subr.mxu0 0.0
        %3113 = vmatpush2.msra.mxu0 0.0
        %3114 = vmatprep.mubr.f32.mxu0 0.0
        %3115 = vmatmul.mubr.f32.gmra.mxu0 %v3045
        %v3116 = vpop.f32.mrf.mxu0
        %v3117 = vadd.f32 0.0, %v3116
        %v3118 = vpop.f32.mrf.mxu0
        %3119 = vmatprep.mubr.f32.mxu0 0.0
        %3120 = vmatmul.mubr.f32.gmra.mxu0 %v3048
        %v3121 = vpop.f32.mrf.mxu0
        %v3122 = vadd.f32 0.0, %v3121
        %v3123 = vpop.f32.mrf.mxu0
        %3124 = vdwg.mxu0
        %s3125 = scalar_lea.vmem [#allocation2], 1536
        %v3126 = vld [vmem:[%s3125] sm:$0xff]
        %v3127 = vld [vmem:[%s3125 + $0x8] sm:$0xff]
        %v3128 = vld [vmem:[%s3125 + $0x10] sm:$0xff]
        %v3129 = vld [vmem:[%s3125 + $0x18] sm:$0xff]
        %v3130 = vld [vmem:[%s3125 + $0x20] sm:$0xff]
        %v3131 = vld [vmem:[%s3125 + $0x28] sm:$0xff]
        %v3132 = vld [vmem:[%s3125 + $0x30] sm:$0xff]
        %v3133 = vld [vmem:[%s3125 + $0x38] sm:$0xff]
        %v3134 = vld [vmem:[%s3125 + $0x40] sm:$0xff]
        %v3135 = vld [vmem:[%s3125 + $0x48] sm:$0xff]
        %v3136 = vld [vmem:[%s3125 + $0x50] sm:$0xff]
        %v3137 = vld [vmem:[%s3125 + $0x58] sm:$0xff]
        %v3138 = vld [vmem:[%s3125 + $0x60] sm:$0xff]
        %v3139 = vld [vmem:[%s3125 + $0x68] sm:$0xff]
        %v3140 = vld [vmem:[%s3125 + $0x70] sm:$0xff]
        %v3141 = vld [vmem:[%s3125 + $0x78] sm:$0xff]
        %3142 = vmatprep.subr.mxu0 0.0
        %3143 = vmatpush1.msra.mxu0 %v3141
        %3144 = vmatprep.subr.mxu0 0.0
        %3145 = vmatpush1.msra.mxu0 %v3140
        %3146 = vmatprep.subr.mxu0 0.0
        %3147 = vmatpush1.msra.mxu0 %v3139
        %3148 = vmatprep.subr.mxu0 0.0
        %3149 = vmatpush1.msra.mxu0 %v3138
        %3150 = vmatprep.subr.mxu0 0.0
        %3151 = vmatpush1.msra.mxu0 %v3137
        %3152 = vmatprep.subr.mxu0 0.0
        %3153 = vmatpush1.msra.mxu0 %v3136
        %3154 = vmatprep.subr.mxu0 0.0
        %3155 = vmatpush1.msra.mxu0 %v3135
        %3156 = vmatprep.subr.mxu0 0.0
        %3157 = vmatpush1.msra.mxu0 %v3134
        %3158 = vmatprep.subr.mxu0 0.0
        %3159 = vmatpush1.msra.mxu0 %v3133
        %3160 = vmatprep.subr.mxu0 0.0
        %3161 = vmatpush1.msra.mxu0 %v3132
        %3162 = vmatprep.subr.mxu0 0.0
        %3163 = vmatpush1.msra.mxu0 %v3131
        %3164 = vmatprep.subr.mxu0 0.0
        %3165 = vmatpush1.msra.mxu0 %v3130
        %3166 = vmatprep.subr.mxu0 0.0
        %3167 = vmatpush1.msra.mxu0 %v3129
        %3168 = vmatprep.subr.mxu0 0.0
        %3169 = vmatpush1.msra.mxu0 %v3128
        %3170 = vmatprep.subr.mxu0 0.0
        %3171 = vmatpush1.msra.mxu0 %v3127
        %3172 = vmatprep.subr.mxu0 0.0
        %3173 = vmatpush1.msra.mxu0 %v3126
        %3174 = vmatprep.subr.mxu0 0.0
        %3175 = vmatpush2.msra.mxu0 0.0
        %3176 = vmatprep.subr.mxu0 0.0
        %3177 = vmatpush2.msra.mxu0 0.0
        %3178 = vmatprep.subr.mxu0 0.0
        %3179 = vmatpush2.msra.mxu0 0.0
        %3180 = vmatprep.subr.mxu0 0.0
        %3181 = vmatpush2.msra.mxu0 0.0
        %3182 = vmatprep.subr.mxu0 0.0
        %3183 = vmatpush2.msra.mxu0 0.0
        %3184 = vmatprep.subr.mxu0 0.0
        %3185 = vmatpush2.msra.mxu0 0.0
        %3186 = vmatprep.subr.mxu0 0.0
        %3187 = vmatpush2.msra.mxu0 0.0
        %3188 = vmatprep.subr.mxu0 0.0
        %3189 = vmatpush2.msra.mxu0 0.0
        %3190 = vmatprep.subr.mxu0 0.0
        %3191 = vmatpush2.msra.mxu0 0.0
        %3192 = vmatprep.subr.mxu0 0.0
        %3193 = vmatpush2.msra.mxu0 0.0
        %3194 = vmatprep.subr.mxu0 0.0
        %3195 = vmatpush2.msra.mxu0 0.0
        %3196 = vmatprep.subr.mxu0 0.0
        %3197 = vmatpush2.msra.mxu0 0.0
        %3198 = vmatprep.subr.mxu0 0.0
        %3199 = vmatpush2.msra.mxu0 0.0
        %3200 = vmatprep.subr.mxu0 0.0
        %3201 = vmatpush2.msra.mxu0 0.0
        %3202 = vmatprep.subr.mxu0 0.0
        %3203 = vmatpush2.msra.mxu0 0.0
        %3204 = vmatprep.subr.mxu0 0.0
        %3205 = vmatpush2.msra.mxu0 0.0
        %3206 = vmatprep.mubr.f32.mxu0 0.0
        %3207 = vmatmul.mubr.f32.gmra.mxu0 %v3117
        %v3208 = vpop.f32.mrf.mxu0
        %v3209 = vadd.f32 0.0, %v3208
        %v3210 = vpop.f32.mrf.mxu0
        %3211 = vmatprep.mubr.f32.mxu0 0.0
        %3212 = vmatmul.mubr.f32.gmra.mxu0 %v3122
        %v3213 = vpop.f32.mrf.mxu0
        %v3214 = vadd.f32 0.0, %v3213
        %v3215 = vpop.f32.mrf.mxu0
        %3216 = vdwg.mxu0
        %v3217 = vadd.f32 %v3039, %v3209
        %v3218 = vadd.f32 %v3040, %v3214
        %s3219 = scalar_lea.vmem [#allocation7], 64
        %v3220 = vld [vmem:[%s3219] sm:$0xff]
        %v3221 = vld [vmem:[%s3219 + $0x8] sm:$0xff]
        %v3223 = vsel %vm2513, %v3220, 0
        %v3226 = vsel %vm2513, %v3221, 0
        %3228 = vmatprep.subr.mxu0 0.0
        %3229 = vmatpush1.msra.mxu0 0.0
        %3230 = vmatprep.subr.mxu0 0.0
        %3231 = vmatpush1.msra.mxu0 0.0
        %3232 = vmatprep.subr.mxu0 0.0
        %3233 = vmatpush1.msra.mxu0 0.0
        %3234 = vmatprep.subr.mxu0 0.0
        %3235 = vmatpush1.msra.mxu0 0.0
        %3236 = vmatprep.subr.mxu0 0.0
        %3237 = vmatpush1.msra.mxu0 0.0
        %3238 = vmatprep.subr.mxu0 0.0
        %3239 = vmatpush1.msra.mxu0 0.0
        %3240 = vmatprep.subr.mxu0 0.0
        %3241 = vmatpush1.msra.mxu0 0.0
        %3242 = vmatprep.subr.mxu0 0.0
        %3243 = vmatpush1.msra.mxu0 0.0
        %3244 = vmatprep.subr.mxu0 0.0
        %3245 = vmatpush1.msra.mxu0 0.0
        %3246 = vmatprep.subr.mxu0 0.0
        %3247 = vmatpush1.msra.mxu0 %v2510
        %3248 = vmatprep.subr.mxu0 0.0
        %3249 = vmatpush1.msra.mxu0 %v2509
        %3250 = vmatprep.subr.mxu0 0.0
        %3251 = vmatpush1.msra.mxu0 %v2508
        %3252 = vmatprep.subr.mxu0 0.0
        %3253 = vmatpush1.msra.mxu0 %v2507
        %3254 = vmatprep.subr.mxu0 0.0
        %3255 = vmatpush1.msra.mxu0 %v2506
        %3256 = vmatprep.subr.mxu0 0.0
        %3257 = vmatpush1.msra.mxu0 %v2505
        %3258 = vmatprep.subr.mxu0 0.0
        %3259 = vmatpush1.msra.mxu0 %v2504
        %3260 = vmatprep.subr.mxu0 0.0
        %3261 = vmatpush2.msra.mxu0 0.0
        %3262 = vmatprep.subr.mxu0 0.0
        %3263 = vmatpush2.msra.mxu0 0.0
        %3264 = vmatprep.subr.mxu0 0.0
        %3265 = vmatpush2.msra.mxu0 0.0
        %3266 = vmatprep.subr.mxu0 0.0
        %3267 = vmatpush2.msra.mxu0 0.0
        %3268 = vmatprep.subr.mxu0 0.0
        %3269 = vmatpush2.msra.mxu0 0.0
        %3270 = vmatprep.subr.mxu0 0.0
        %3271 = vmatpush2.msra.mxu0 0.0
        %3272 = vmatprep.subr.mxu0 0.0
        %3273 = vmatpush2.msra.mxu0 0.0
        %3274 = vmatprep.subr.mxu0 0.0
        %3275 = vmatpush2.msra.mxu0 0.0
        %3276 = vmatprep.subr.mxu0 0.0
        %3277 = vmatpush2.msra.mxu0 0.0
        %3278 = vmatprep.subr.mxu0 0.0
        %3279 = vmatpush2.msra.mxu0 0.0
        %3280 = vmatprep.subr.mxu0 0.0
        %3281 = vmatpush2.msra.mxu0 0.0
        %3282 = vmatprep.subr.mxu0 0.0
        %3283 = vmatpush2.msra.mxu0 0.0
        %3284 = vmatprep.subr.mxu0 0.0
        %3285 = vmatpush2.msra.mxu0 0.0
        %3286 = vmatprep.subr.mxu0 0.0
        %3287 = vmatpush2.msra.mxu0 0.0
        %3288 = vmatprep.subr.mxu0 0.0
        %3289 = vmatpush2.msra.mxu0 0.0
        %3290 = vmatprep.subr.mxu0 0.0
        %3291 = vmatpush2.msra.mxu0 0.0
        %3292 = vmatprep.mubr.f32.mxu0 0.0
        %3293 = vmatmul.mubr.f32.gmra.mxu0 %v3223
        %v3294 = vpop.f32.mrf.mxu0
        %v3295 = vadd.f32 0.0, %v3294
        %v3296 = vpop.f32.mrf.mxu0
        %3297 = vmatprep.mubr.f32.mxu0 0.0
        %3298 = vmatmul.mubr.f32.gmra.mxu0 %v3226
        %v3299 = vpop.f32.mrf.mxu0
        %v3300 = vadd.f32 0.0, %v3299
        %v3301 = vpop.f32.mrf.mxu0
        %3302 = vdwg.mxu0
        %s3303 = scalar_lea.vmem [#allocation2], 1664
        %v3304 = vld [vmem:[%s3303] sm:$0xff]
        %v3305 = vld [vmem:[%s3303 + $0x8] sm:$0xff]
        %v3306 = vld [vmem:[%s3303 + $0x10] sm:$0xff]
        %v3307 = vld [vmem:[%s3303 + $0x18] sm:$0xff]
        %v3308 = vld [vmem:[%s3303 + $0x20] sm:$0xff]
        %v3309 = vld [vmem:[%s3303 + $0x28] sm:$0xff]
        %v3310 = vld [vmem:[%s3303 + $0x30] sm:$0xff]
        %v3311 = vld [vmem:[%s3303 + $0x38] sm:$0xff]
        %v3312 = vld [vmem:[%s3303 + $0x40] sm:$0xff]
        %v3313 = vld [vmem:[%s3303 + $0x48] sm:$0xff]
        %v3314 = vld [vmem:[%s3303 + $0x50] sm:$0xff]
        %v3315 = vld [vmem:[%s3303 + $0x58] sm:$0xff]
        %v3316 = vld [vmem:[%s3303 + $0x60] sm:$0xff]
        %v3317 = vld [vmem:[%s3303 + $0x68] sm:$0xff]
        %v3318 = vld [vmem:[%s3303 + $0x70] sm:$0xff]
        %v3319 = vld [vmem:[%s3303 + $0x78] sm:$0xff]
        %3320 = vmatprep.subr.mxu0 0.0
        %3321 = vmatpush1.msra.mxu0 %v3319
        %3322 = vmatprep.subr.mxu0 0.0
        %3323 = vmatpush1.msra.mxu0 %v3318
        %3324 = vmatprep.subr.mxu0 0.0
        %3325 = vmatpush1.msra.mxu0 %v3317
        %3326 = vmatprep.subr.mxu0 0.0
        %3327 = vmatpush1.msra.mxu0 %v3316
        %3328 = vmatprep.subr.mxu0 0.0
        %3329 = vmatpush1.msra.mxu0 %v3315
        %3330 = vmatprep.subr.mxu0 0.0
        %3331 = vmatpush1.msra.mxu0 %v3314
        %3332 = vmatprep.subr.mxu0 0.0
        %3333 = vmatpush1.msra.mxu0 %v3313
        %3334 = vmatprep.subr.mxu0 0.0
        %3335 = vmatpush1.msra.mxu0 %v3312
        %3336 = vmatprep.subr.mxu0 0.0
        %3337 = vmatpush1.msra.mxu0 %v3311
        %3338 = vmatprep.subr.mxu0 0.0
        %3339 = vmatpush1.msra.mxu0 %v3310
        %3340 = vmatprep.subr.mxu0 0.0
        %3341 = vmatpush1.msra.mxu0 %v3309
        %3342 = vmatprep.subr.mxu0 0.0
        %3343 = vmatpush1.msra.mxu0 %v3308
        %3344 = vmatprep.subr.mxu0 0.0
        %3345 = vmatpush1.msra.mxu0 %v3307
        %3346 = vmatprep.subr.mxu0 0.0
        %3347 = vmatpush1.msra.mxu0 %v3306
        %3348 = vmatprep.subr.mxu0 0.0
        %3349 = vmatpush1.msra.mxu0 %v3305
        %3350 = vmatprep.subr.mxu0 0.0
        %3351 = vmatpush1.msra.mxu0 %v3304
        %3352 = vmatprep.subr.mxu0 0.0
        %3353 = vmatpush2.msra.mxu0 0.0
        %3354 = vmatprep.subr.mxu0 0.0
        %3355 = vmatpush2.msra.mxu0 0.0
        %3356 = vmatprep.subr.mxu0 0.0
        %3357 = vmatpush2.msra.mxu0 0.0
        %3358 = vmatprep.subr.mxu0 0.0
        %3359 = vmatpush2.msra.mxu0 0.0
        %3360 = vmatprep.subr.mxu0 0.0
        %3361 = vmatpush2.msra.mxu0 0.0
        %3362 = vmatprep.subr.mxu0 0.0
        %3363 = vmatpush2.msra.mxu0 0.0
        %3364 = vmatprep.subr.mxu0 0.0
        %3365 = vmatpush2.msra.mxu0 0.0
        %3366 = vmatprep.subr.mxu0 0.0
        %3367 = vmatpush2.msra.mxu0 0.0
        %3368 = vmatprep.subr.mxu0 0.0
        %3369 = vmatpush2.msra.mxu0 0.0
        %3370 = vmatprep.subr.mxu0 0.0
        %3371 = vmatpush2.msra.mxu0 0.0
        %3372 = vmatprep.subr.mxu0 0.0
        %3373 = vmatpush2.msra.mxu0 0.0
        %3374 = vmatprep.subr.mxu0 0.0
        %3375 = vmatpush2.msra.mxu0 0.0
        %3376 = vmatprep.subr.mxu0 0.0
        %3377 = vmatpush2.msra.mxu0 0.0
        %3378 = vmatprep.subr.mxu0 0.0
        %3379 = vmatpush2.msra.mxu0 0.0
        %3380 = vmatprep.subr.mxu0 0.0
        %3381 = vmatpush2.msra.mxu0 0.0
        %3382 = vmatprep.subr.mxu0 0.0
        %3383 = vmatpush2.msra.mxu0 0.0
        %3384 = vmatprep.mubr.f32.mxu0 0.0
        %3385 = vmatmul.mubr.f32.gmra.mxu0 %v3295
        %v3386 = vpop.f32.mrf.mxu0
        %v3387 = vadd.f32 0.0, %v3386
        %v3388 = vpop.f32.mrf.mxu0
        %3389 = vmatprep.mubr.f32.mxu0 0.0
        %3390 = vmatmul.mubr.f32.gmra.mxu0 %v3300
        %v3391 = vpop.f32.mrf.mxu0
        %v3392 = vadd.f32 0.0, %v3391
        %v3393 = vpop.f32.mrf.mxu0
        %3394 = vdwg.mxu0
        %v3395 = vadd.f32 %v3217, %v3387
        %v3396 = vadd.f32 %v3218, %v3392
        %s3397 = scalar_lea.vmem [#allocation7], 80
        %v3398 = vld [vmem:[%s3397] sm:$0xff]
        %v3399 = vld [vmem:[%s3397 + $0x8] sm:$0xff]
        %v3401 = vsel %vm2513, %v3398, 0
        %v3404 = vsel %vm2513, %v3399, 0
        %3406 = vmatprep.subr.mxu0 0.0
        %3407 = vmatpush1.msra.mxu0 0.0
        %3408 = vmatprep.subr.mxu0 0.0
        %3409 = vmatpush1.msra.mxu0 0.0
        %3410 = vmatprep.subr.mxu0 0.0
        %3411 = vmatpush1.msra.mxu0 0.0
        %3412 = vmatprep.subr.mxu0 0.0
        %3413 = vmatpush1.msra.mxu0 0.0
        %3414 = vmatprep.subr.mxu0 0.0
        %3415 = vmatpush1.msra.mxu0 0.0
        %3416 = vmatprep.subr.mxu0 0.0
        %3417 = vmatpush1.msra.mxu0 0.0
        %3418 = vmatprep.subr.mxu0 0.0
        %3419 = vmatpush1.msra.mxu0 0.0
        %3420 = vmatprep.subr.mxu0 0.0
        %3421 = vmatpush1.msra.mxu0 0.0
        %3422 = vmatprep.subr.mxu0 0.0
        %3423 = vmatpush1.msra.mxu0 0.0
        %3424 = vmatprep.subr.mxu0 0.0
        %3425 = vmatpush1.msra.mxu0 %v2510
        %3426 = vmatprep.subr.mxu0 0.0
        %3427 = vmatpush1.msra.mxu0 %v2509
        %3428 = vmatprep.subr.mxu0 0.0
        %3429 = vmatpush1.msra.mxu0 %v2508
        %3430 = vmatprep.subr.mxu0 0.0
        %3431 = vmatpush1.msra.mxu0 %v2507
        %3432 = vmatprep.subr.mxu0 0.0
        %3433 = vmatpush1.msra.mxu0 %v2506
        %3434 = vmatprep.subr.mxu0 0.0
        %3435 = vmatpush1.msra.mxu0 %v2505
        %3436 = vmatprep.subr.mxu0 0.0
        %3437 = vmatpush1.msra.mxu0 %v2504
        %3438 = vmatprep.subr.mxu0 0.0
        %3439 = vmatpush2.msra.mxu0 0.0
        %3440 = vmatprep.subr.mxu0 0.0
        %3441 = vmatpush2.msra.mxu0 0.0
        %3442 = vmatprep.subr.mxu0 0.0
        %3443 = vmatpush2.msra.mxu0 0.0
        %3444 = vmatprep.subr.mxu0 0.0
        %3445 = vmatpush2.msra.mxu0 0.0
        %3446 = vmatprep.subr.mxu0 0.0
        %3447 = vmatpush2.msra.mxu0 0.0
        %3448 = vmatprep.subr.mxu0 0.0
        %3449 = vmatpush2.msra.mxu0 0.0
        %3450 = vmatprep.subr.mxu0 0.0
        %3451 = vmatpush2.msra.mxu0 0.0
        %3452 = vmatprep.subr.mxu0 0.0
        %3453 = vmatpush2.msra.mxu0 0.0
        %3454 = vmatprep.subr.mxu0 0.0
        %3455 = vmatpush2.msra.mxu0 0.0
        %3456 = vmatprep.subr.mxu0 0.0
        %3457 = vmatpush2.msra.mxu0 0.0
        %3458 = vmatprep.subr.mxu0 0.0
        %3459 = vmatpush2.msra.mxu0 0.0
        %3460 = vmatprep.subr.mxu0 0.0
        %3461 = vmatpush2.msra.mxu0 0.0
        %3462 = vmatprep.subr.mxu0 0.0
        %3463 = vmatpush2.msra.mxu0 0.0
        %3464 = vmatprep.subr.mxu0 0.0
        %3465 = vmatpush2.msra.mxu0 0.0
        %3466 = vmatprep.subr.mxu0 0.0
        %3467 = vmatpush2.msra.mxu0 0.0
        %3468 = vmatprep.subr.mxu0 0.0
        %3469 = vmatpush2.msra.mxu0 0.0
        %3470 = vmatprep.mubr.f32.mxu0 0.0
        %3471 = vmatmul.mubr.f32.gmra.mxu0 %v3401
        %v3472 = vpop.f32.mrf.mxu0
        %v3473 = vadd.f32 0.0, %v3472
        %v3474 = vpop.f32.mrf.mxu0
        %3475 = vmatprep.mubr.f32.mxu0 0.0
        %3476 = vmatmul.mubr.f32.gmra.mxu0 %v3404
        %v3477 = vpop.f32.mrf.mxu0
        %v3478 = vadd.f32 0.0, %v3477
        %v3479 = vpop.f32.mrf.mxu0
        %3480 = vdwg.mxu0
        %s3481 = scalar_lea.vmem [#allocation2], 1792
        %v3482 = vld [vmem:[%s3481] sm:$0xff]
        %v3483 = vld [vmem:[%s3481 + $0x8] sm:$0xff]
        %v3484 = vld [vmem:[%s3481 + $0x10] sm:$0xff]
        %v3485 = vld [vmem:[%s3481 + $0x18] sm:$0xff]
        %v3486 = vld [vmem:[%s3481 + $0x20] sm:$0xff]
        %v3487 = vld [vmem:[%s3481 + $0x28] sm:$0xff]
        %v3488 = vld [vmem:[%s3481 + $0x30] sm:$0xff]
        %v3489 = vld [vmem:[%s3481 + $0x38] sm:$0xff]
        %v3490 = vld [vmem:[%s3481 + $0x40] sm:$0xff]
        %v3491 = vld [vmem:[%s3481 + $0x48] sm:$0xff]
        %v3492 = vld [vmem:[%s3481 + $0x50] sm:$0xff]
        %v3493 = vld [vmem:[%s3481 + $0x58] sm:$0xff]
        %v3494 = vld [vmem:[%s3481 + $0x60] sm:$0xff]
        %v3495 = vld [vmem:[%s3481 + $0x68] sm:$0xff]
        %v3496 = vld [vmem:[%s3481 + $0x70] sm:$0xff]
        %v3497 = vld [vmem:[%s3481 + $0x78] sm:$0xff]
        %3498 = vmatprep.subr.mxu0 0.0
        %3499 = vmatpush1.msra.mxu0 %v3497
        %3500 = vmatprep.subr.mxu0 0.0
        %3501 = vmatpush1.msra.mxu0 %v3496
        %3502 = vmatprep.subr.mxu0 0.0
        %3503 = vmatpush1.msra.mxu0 %v3495
        %3504 = vmatprep.subr.mxu0 0.0
        %3505 = vmatpush1.msra.mxu0 %v3494
        %3506 = vmatprep.subr.mxu0 0.0
        %3507 = vmatpush1.msra.mxu0 %v3493
        %3508 = vmatprep.subr.mxu0 0.0
        %3509 = vmatpush1.msra.mxu0 %v3492
        %3510 = vmatprep.subr.mxu0 0.0
        %3511 = vmatpush1.msra.mxu0 %v3491
        %3512 = vmatprep.subr.mxu0 0.0
        %3513 = vmatpush1.msra.mxu0 %v3490
        %3514 = vmatprep.subr.mxu0 0.0
        %3515 = vmatpush1.msra.mxu0 %v3489
        %3516 = vmatprep.subr.mxu0 0.0
        %3517 = vmatpush1.msra.mxu0 %v3488
        %3518 = vmatprep.subr.mxu0 0.0
        %3519 = vmatpush1.msra.mxu0 %v3487
        %3520 = vmatprep.subr.mxu0 0.0
        %3521 = vmatpush1.msra.mxu0 %v3486
        %3522 = vmatprep.subr.mxu0 0.0
        %3523 = vmatpush1.msra.mxu0 %v3485
        %3524 = vmatprep.subr.mxu0 0.0
        %3525 = vmatpush1.msra.mxu0 %v3484
        %3526 = vmatprep.subr.mxu0 0.0
        %3527 = vmatpush1.msra.mxu0 %v3483
        %3528 = vmatprep.subr.mxu0 0.0
        %3529 = vmatpush1.msra.mxu0 %v3482
        %3530 = vmatprep.subr.mxu0 0.0
        %3531 = vmatpush2.msra.mxu0 0.0
        %3532 = vmatprep.subr.mxu0 0.0
        %3533 = vmatpush2.msra.mxu0 0.0
        %3534 = vmatprep.subr.mxu0 0.0
        %3535 = vmatpush2.msra.mxu0 0.0
        %3536 = vmatprep.subr.mxu0 0.0
        %3537 = vmatpush2.msra.mxu0 0.0
        %3538 = vmatprep.subr.mxu0 0.0
        %3539 = vmatpush2.msra.mxu0 0.0
        %3540 = vmatprep.subr.mxu0 0.0
        %3541 = vmatpush2.msra.mxu0 0.0
        %3542 = vmatprep.subr.mxu0 0.0
        %3543 = vmatpush2.msra.mxu0 0.0
        %3544 = vmatprep.subr.mxu0 0.0
        %3545 = vmatpush2.msra.mxu0 0.0
        %3546 = vmatprep.subr.mxu0 0.0
        %3547 = vmatpush2.msra.mxu0 0.0
        %3548 = vmatprep.subr.mxu0 0.0
        %3549 = vmatpush2.msra.mxu0 0.0
        %3550 = vmatprep.subr.mxu0 0.0
        %3551 = vmatpush2.msra.mxu0 0.0
        %3552 = vmatprep.subr.mxu0 0.0
        %3553 = vmatpush2.msra.mxu0 0.0
        %3554 = vmatprep.subr.mxu0 0.0
        %3555 = vmatpush2.msra.mxu0 0.0
        %3556 = vmatprep.subr.mxu0 0.0
        %3557 = vmatpush2.msra.mxu0 0.0
        %3558 = vmatprep.subr.mxu0 0.0
        %3559 = vmatpush2.msra.mxu0 0.0
        %3560 = vmatprep.subr.mxu0 0.0
        %3561 = vmatpush2.msra.mxu0 0.0
        %3562 = vmatprep.mubr.f32.mxu0 0.0
        %3563 = vmatmul.mubr.f32.gmra.mxu0 %v3473
        %v3564 = vpop.f32.mrf.mxu0
        %v3565 = vadd.f32 0.0, %v3564
        %v3566 = vpop.f32.mrf.mxu0
        %3567 = vmatprep.mubr.f32.mxu0 0.0
        %3568 = vmatmul.mubr.f32.gmra.mxu0 %v3478
        %v3569 = vpop.f32.mrf.mxu0
        %v3570 = vadd.f32 0.0, %v3569
        %v3571 = vpop.f32.mrf.mxu0
        %3572 = vdwg.mxu0
        %v3573 = vadd.f32 %v3395, %v3565
        %v3574 = vadd.f32 %v3396, %v3570
        %s3575 = scalar_lea.vmem [#allocation7], 96
        %v3576 = vld [vmem:[%s3575] sm:$0xff]
        %v3577 = vld [vmem:[%s3575 + $0x8] sm:$0xff]
        %v3579 = vsel %vm2513, %v3576, 0
        %v3582 = vsel %vm2513, %v3577, 0
        %3584 = vmatprep.subr.mxu0 0.0
        %3585 = vmatpush1.msra.mxu0 0.0
        %3586 = vmatprep.subr.mxu0 0.0
        %3587 = vmatpush1.msra.mxu0 0.0
        %3588 = vmatprep.subr.mxu0 0.0
        %3589 = vmatpush1.msra.mxu0 0.0
        %3590 = vmatprep.subr.mxu0 0.0
        %3591 = vmatpush1.msra.mxu0 0.0
        %3592 = vmatprep.subr.mxu0 0.0
        %3593 = vmatpush1.msra.mxu0 0.0
        %3594 = vmatprep.subr.mxu0 0.0
        %3595 = vmatpush1.msra.mxu0 0.0
        %3596 = vmatprep.subr.mxu0 0.0
        %3597 = vmatpush1.msra.mxu0 0.0
        %3598 = vmatprep.subr.mxu0 0.0
        %3599 = vmatpush1.msra.mxu0 0.0
        %3600 = vmatprep.subr.mxu0 0.0
        %3601 = vmatpush1.msra.mxu0 0.0
        %3602 = vmatprep.subr.mxu0 0.0
        %3603 = vmatpush1.msra.mxu0 %v2510
        %3604 = vmatprep.subr.mxu0 0.0
        %3605 = vmatpush1.msra.mxu0 %v2509
        %3606 = vmatprep.subr.mxu0 0.0
        %3607 = vmatpush1.msra.mxu0 %v2508
        %3608 = vmatprep.subr.mxu0 0.0
        %3609 = vmatpush1.msra.mxu0 %v2507
        %3610 = vmatprep.subr.mxu0 0.0
        %3611 = vmatpush1.msra.mxu0 %v2506
        %3612 = vmatprep.subr.mxu0 0.0
        %3613 = vmatpush1.msra.mxu0 %v2505
        %3614 = vmatprep.subr.mxu0 0.0
        %3615 = vmatpush1.msra.mxu0 %v2504
        %3616 = vmatprep.subr.mxu0 0.0
        %3617 = vmatpush2.msra.mxu0 0.0
        %3618 = vmatprep.subr.mxu0 0.0
        %3619 = vmatpush2.msra.mxu0 0.0
        %3620 = vmatprep.subr.mxu0 0.0
        %3621 = vmatpush2.msra.mxu0 0.0
        %3622 = vmatprep.subr.mxu0 0.0
        %3623 = vmatpush2.msra.mxu0 0.0
        %3624 = vmatprep.subr.mxu0 0.0
        %3625 = vmatpush2.msra.mxu0 0.0
        %3626 = vmatprep.subr.mxu0 0.0
        %3627 = vmatpush2.msra.mxu0 0.0
        %3628 = vmatprep.subr.mxu0 0.0
        %3629 = vmatpush2.msra.mxu0 0.0
        %3630 = vmatprep.subr.mxu0 0.0
        %3631 = vmatpush2.msra.mxu0 0.0
        %3632 = vmatprep.subr.mxu0 0.0
        %3633 = vmatpush2.msra.mxu0 0.0
        %3634 = vmatprep.subr.mxu0 0.0
        %3635 = vmatpush2.msra.mxu0 0.0
        %3636 = vmatprep.subr.mxu0 0.0
        %3637 = vmatpush2.msra.mxu0 0.0
        %3638 = vmatprep.subr.mxu0 0.0
        %3639 = vmatpush2.msra.mxu0 0.0
        %3640 = vmatprep.subr.mxu0 0.0
        %3641 = vmatpush2.msra.mxu0 0.0
        %3642 = vmatprep.subr.mxu0 0.0
        %3643 = vmatpush2.msra.mxu0 0.0
        %3644 = vmatprep.subr.mxu0 0.0
        %3645 = vmatpush2.msra.mxu0 0.0
        %3646 = vmatprep.subr.mxu0 0.0
        %3647 = vmatpush2.msra.mxu0 0.0
        %3648 = vmatprep.mubr.f32.mxu0 0.0
        %3649 = vmatmul.mubr.f32.gmra.mxu0 %v3579
        %v3650 = vpop.f32.mrf.mxu0
        %v3651 = vadd.f32 0.0, %v3650
        %v3652 = vpop.f32.mrf.mxu0
        %3653 = vmatprep.mubr.f32.mxu0 0.0
        %3654 = vmatmul.mubr.f32.gmra.mxu0 %v3582
        %v3655 = vpop.f32.mrf.mxu0
        %v3656 = vadd.f32 0.0, %v3655
        %v3657 = vpop.f32.mrf.mxu0
        %3658 = vdwg.mxu0
        %s3659 = scalar_lea.vmem [#allocation2], 1920
        %v3660 = vld [vmem:[%s3659] sm:$0xff]
        %v3661 = vld [vmem:[%s3659 + $0x8] sm:$0xff]
        %v3662 = vld [vmem:[%s3659 + $0x10] sm:$0xff]
        %v3663 = vld [vmem:[%s3659 + $0x18] sm:$0xff]
        %v3664 = vld [vmem:[%s3659 + $0x20] sm:$0xff]
        %v3665 = vld [vmem:[%s3659 + $0x28] sm:$0xff]
        %v3666 = vld [vmem:[%s3659 + $0x30] sm:$0xff]
        %v3667 = vld [vmem:[%s3659 + $0x38] sm:$0xff]
        %v3668 = vld [vmem:[%s3659 + $0x40] sm:$0xff]
        %v3669 = vld [vmem:[%s3659 + $0x48] sm:$0xff]
        %v3670 = vld [vmem:[%s3659 + $0x50] sm:$0xff]
        %v3671 = vld [vmem:[%s3659 + $0x58] sm:$0xff]
        %v3672 = vld [vmem:[%s3659 + $0x60] sm:$0xff]
        %v3673 = vld [vmem:[%s3659 + $0x68] sm:$0xff]
        %v3674 = vld [vmem:[%s3659 + $0x70] sm:$0xff]
        %v3675 = vld [vmem:[%s3659 + $0x78] sm:$0xff]
        %3676 = vmatprep.subr.mxu0 0.0
        %3677 = vmatpush1.msra.mxu0 %v3675
        %3678 = vmatprep.subr.mxu0 0.0
        %3679 = vmatpush1.msra.mxu0 %v3674
        %3680 = vmatprep.subr.mxu0 0.0
        %3681 = vmatpush1.msra.mxu0 %v3673
        %3682 = vmatprep.subr.mxu0 0.0
        %3683 = vmatpush1.msra.mxu0 %v3672
        %3684 = vmatprep.subr.mxu0 0.0
        %3685 = vmatpush1.msra.mxu0 %v3671
        %3686 = vmatprep.subr.mxu0 0.0
        %3687 = vmatpush1.msra.mxu0 %v3670
        %3688 = vmatprep.subr.mxu0 0.0
        %3689 = vmatpush1.msra.mxu0 %v3669
        %3690 = vmatprep.subr.mxu0 0.0
        %3691 = vmatpush1.msra.mxu0 %v3668
        %3692 = vmatprep.subr.mxu0 0.0
        %3693 = vmatpush1.msra.mxu0 %v3667
        %3694 = vmatprep.subr.mxu0 0.0
        %3695 = vmatpush1.msra.mxu0 %v3666
        %3696 = vmatprep.subr.mxu0 0.0
        %3697 = vmatpush1.msra.mxu0 %v3665
        %3698 = vmatprep.subr.mxu0 0.0
        %3699 = vmatpush1.msra.mxu0 %v3664
        %3700 = vmatprep.subr.mxu0 0.0
        %3701 = vmatpush1.msra.mxu0 %v3663
        %3702 = vmatprep.subr.mxu0 0.0
        %3703 = vmatpush1.msra.mxu0 %v3662
        %3704 = vmatprep.subr.mxu0 0.0
        %3705 = vmatpush1.msra.mxu0 %v3661
        %3706 = vmatprep.subr.mxu0 0.0
        %3707 = vmatpush1.msra.mxu0 %v3660
        %3708 = vmatprep.subr.mxu0 0.0
        %3709 = vmatpush2.msra.mxu0 0.0
        %3710 = vmatprep.subr.mxu0 0.0
        %3711 = vmatpush2.msra.mxu0 0.0
        %3712 = vmatprep.subr.mxu0 0.0
        %3713 = vmatpush2.msra.mxu0 0.0
        %3714 = vmatprep.subr.mxu0 0.0
        %3715 = vmatpush2.msra.mxu0 0.0
        %3716 = vmatprep.subr.mxu0 0.0
        %3717 = vmatpush2.msra.mxu0 0.0
        %3718 = vmatprep.subr.mxu0 0.0
        %3719 = vmatpush2.msra.mxu0 0.0
        %3720 = vmatprep.subr.mxu0 0.0
        %3721 = vmatpush2.msra.mxu0 0.0
        %3722 = vmatprep.subr.mxu0 0.0
        %3723 = vmatpush2.msra.mxu0 0.0
        %3724 = vmatprep.subr.mxu0 0.0
        %3725 = vmatpush2.msra.mxu0 0.0
        %3726 = vmatprep.subr.mxu0 0.0
        %3727 = vmatpush2.msra.mxu0 0.0
        %3728 = vmatprep.subr.mxu0 0.0
        %3729 = vmatpush2.msra.mxu0 0.0
        %3730 = vmatprep.subr.mxu0 0.0
        %3731 = vmatpush2.msra.mxu0 0.0
        %3732 = vmatprep.subr.mxu0 0.0
        %3733 = vmatpush2.msra.mxu0 0.0
        %3734 = vmatprep.subr.mxu0 0.0
        %3735 = vmatpush2.msra.mxu0 0.0
        %3736 = vmatprep.subr.mxu0 0.0
        %3737 = vmatpush2.msra.mxu0 0.0
        %3738 = vmatprep.subr.mxu0 0.0
        %3739 = vmatpush2.msra.mxu0 0.0
        %3740 = vmatprep.mubr.f32.mxu0 0.0
        %3741 = vmatmul.mubr.f32.gmra.mxu0 %v3651
        %v3742 = vpop.f32.mrf.mxu0
        %v3743 = vadd.f32 0.0, %v3742
        %v3744 = vpop.f32.mrf.mxu0
        %3745 = vmatprep.mubr.f32.mxu0 0.0
        %3746 = vmatmul.mubr.f32.gmra.mxu0 %v3656
        %v3747 = vpop.f32.mrf.mxu0
        %v3748 = vadd.f32 0.0, %v3747
        %v3749 = vpop.f32.mrf.mxu0
        %3750 = vdwg.mxu0
        %v3751 = vadd.f32 %v3573, %v3743
        %v3752 = vadd.f32 %v3574, %v3748
        %s3753 = scalar_lea.vmem [#allocation7], 112
        %v3754 = vld [vmem:[%s3753] sm:$0xff]
        %v3755 = vld [vmem:[%s3753 + $0x8] sm:$0xff]
        %v3757 = vsel %vm2513, %v3754, 0
        %v3760 = vsel %vm2513, %v3755, 0
        %3762 = vmatprep.subr.mxu0 0.0
        %3763 = vmatpush1.msra.mxu0 0.0
        %3764 = vmatprep.subr.mxu0 0.0
        %3765 = vmatpush1.msra.mxu0 0.0
        %3766 = vmatprep.subr.mxu0 0.0
        %3767 = vmatpush1.msra.mxu0 0.0
        %3768 = vmatprep.subr.mxu0 0.0
        %3769 = vmatpush1.msra.mxu0 0.0
        %3770 = vmatprep.subr.mxu0 0.0
        %3771 = vmatpush1.msra.mxu0 0.0
        %3772 = vmatprep.subr.mxu0 0.0
        %3773 = vmatpush1.msra.mxu0 0.0
        %3774 = vmatprep.subr.mxu0 0.0
        %3775 = vmatpush1.msra.mxu0 0.0
        %3776 = vmatprep.subr.mxu0 0.0
        %3777 = vmatpush1.msra.mxu0 0.0
        %3778 = vmatprep.subr.mxu0 0.0
        %3779 = vmatpush1.msra.mxu0 0.0
        %3780 = vmatprep.subr.mxu0 0.0
        %3781 = vmatpush1.msra.mxu0 %v2510
        %3782 = vmatprep.subr.mxu0 0.0
        %3783 = vmatpush1.msra.mxu0 %v2509
        %3784 = vmatprep.subr.mxu0 0.0
        %3785 = vmatpush1.msra.mxu0 %v2508
        %3786 = vmatprep.subr.mxu0 0.0
        %3787 = vmatpush1.msra.mxu0 %v2507
        %3788 = vmatprep.subr.mxu0 0.0
        %3789 = vmatpush1.msra.mxu0 %v2506
        %3790 = vmatprep.subr.mxu0 0.0
        %3791 = vmatpush1.msra.mxu0 %v2505
        %3792 = vmatprep.subr.mxu0 0.0
        %3793 = vmatpush1.msra.mxu0 %v2504
        %3794 = vmatprep.subr.mxu0 0.0
        %3795 = vmatpush2.msra.mxu0 0.0
        %3796 = vmatprep.subr.mxu0 0.0
        %3797 = vmatpush2.msra.mxu0 0.0
        %3798 = vmatprep.subr.mxu0 0.0
        %3799 = vmatpush2.msra.mxu0 0.0
        %3800 = vmatprep.subr.mxu0 0.0
        %3801 = vmatpush2.msra.mxu0 0.0
        %3802 = vmatprep.subr.mxu0 0.0
        %3803 = vmatpush2.msra.mxu0 0.0
        %3804 = vmatprep.subr.mxu0 0.0
        %3805 = vmatpush2.msra.mxu0 0.0
        %3806 = vmatprep.subr.mxu0 0.0
        %3807 = vmatpush2.msra.mxu0 0.0
        %3808 = vmatprep.subr.mxu0 0.0
        %3809 = vmatpush2.msra.mxu0 0.0
        %3810 = vmatprep.subr.mxu0 0.0
        %3811 = vmatpush2.msra.mxu0 0.0
        %3812 = vmatprep.subr.mxu0 0.0
        %3813 = vmatpush2.msra.mxu0 0.0
        %3814 = vmatprep.subr.mxu0 0.0
        %3815 = vmatpush2.msra.mxu0 0.0
        %3816 = vmatprep.subr.mxu0 0.0
        %3817 = vmatpush2.msra.mxu0 0.0
        %3818 = vmatprep.subr.mxu0 0.0
        %3819 = vmatpush2.msra.mxu0 0.0
        %3820 = vmatprep.subr.mxu0 0.0
        %3821 = vmatpush2.msra.mxu0 0.0
        %3822 = vmatprep.subr.mxu0 0.0
        %3823 = vmatpush2.msra.mxu0 0.0
        %3824 = vmatprep.subr.mxu0 0.0
        %3825 = vmatpush2.msra.mxu0 0.0
        %3826 = vmatprep.mubr.f32.mxu0 0.0
        %3827 = vmatmul.mubr.f32.gmra.mxu0 %v3757
        %v3828 = vpop.f32.mrf.mxu0
        %v3829 = vadd.f32 0.0, %v3828
        %v3830 = vpop.f32.mrf.mxu0
        %3831 = vmatprep.mubr.f32.mxu0 0.0
        %3832 = vmatmul.mubr.f32.gmra.mxu0 %v3760
        %v3833 = vpop.f32.mrf.mxu0
        %v3834 = vadd.f32 0.0, %v3833
        %v3835 = vpop.f32.mrf.mxu0
        %3836 = vdwg.mxu0
        %s3837 = scalar_lea.vmem [#allocation2], 2048
        %v3838 = vld [vmem:[%s3837] sm:$0xff]
        %v3839 = vld [vmem:[%s3837 + $0x8] sm:$0xff]
        %v3840 = vld [vmem:[%s3837 + $0x10] sm:$0xff]
        %v3841 = vld [vmem:[%s3837 + $0x18] sm:$0xff]
        %v3842 = vld [vmem:[%s3837 + $0x20] sm:$0xff]
        %v3843 = vld [vmem:[%s3837 + $0x28] sm:$0xff]
        %v3844 = vld [vmem:[%s3837 + $0x30] sm:$0xff]
        %v3845 = vld [vmem:[%s3837 + $0x38] sm:$0xff]
        %v3846 = vld [vmem:[%s3837 + $0x40] sm:$0xff]
        %v3847 = vld [vmem:[%s3837 + $0x48] sm:$0xff]
        %v3848 = vld [vmem:[%s3837 + $0x50] sm:$0xff]
        %v3849 = vld [vmem:[%s3837 + $0x58] sm:$0xff]
        %v3850 = vld [vmem:[%s3837 + $0x60] sm:$0xff]
        %v3851 = vld [vmem:[%s3837 + $0x68] sm:$0xff]
        %v3852 = vld [vmem:[%s3837 + $0x70] sm:$0xff]
        %v3853 = vld [vmem:[%s3837 + $0x78] sm:$0xff]
        %3854 = vmatprep.subr.mxu0 0.0
        %3855 = vmatpush1.msra.mxu0 %v3853
        %3856 = vmatprep.subr.mxu0 0.0
        %3857 = vmatpush1.msra.mxu0 %v3852
        %3858 = vmatprep.subr.mxu0 0.0
        %3859 = vmatpush1.msra.mxu0 %v3851
        %3860 = vmatprep.subr.mxu0 0.0
        %3861 = vmatpush1.msra.mxu0 %v3850
        %3862 = vmatprep.subr.mxu0 0.0
        %3863 = vmatpush1.msra.mxu0 %v3849
        %3864 = vmatprep.subr.mxu0 0.0
        %3865 = vmatpush1.msra.mxu0 %v3848
        %3866 = vmatprep.subr.mxu0 0.0
        %3867 = vmatpush1.msra.mxu0 %v3847
        %3868 = vmatprep.subr.mxu0 0.0
        %3869 = vmatpush1.msra.mxu0 %v3846
        %3870 = vmatprep.subr.mxu0 0.0
        %3871 = vmatpush1.msra.mxu0 %v3845
        %3872 = vmatprep.subr.mxu0 0.0
        %3873 = vmatpush1.msra.mxu0 %v3844
        %3874 = vmatprep.subr.mxu0 0.0
        %3875 = vmatpush1.msra.mxu0 %v3843
        %3876 = vmatprep.subr.mxu0 0.0
        %3877 = vmatpush1.msra.mxu0 %v3842
        %3878 = vmatprep.subr.mxu0 0.0
        %3879 = vmatpush1.msra.mxu0 %v3841
        %3880 = vmatprep.subr.mxu0 0.0
        %3881 = vmatpush1.msra.mxu0 %v3840
        %3882 = vmatprep.subr.mxu0 0.0
        %3883 = vmatpush1.msra.mxu0 %v3839
        %3884 = vmatprep.subr.mxu0 0.0
        %3885 = vmatpush1.msra.mxu0 %v3838
        %3886 = vmatprep.subr.mxu0 0.0
        %3887 = vmatpush2.msra.mxu0 0.0
        %3888 = vmatprep.subr.mxu0 0.0
        %3889 = vmatpush2.msra.mxu0 0.0
        %3890 = vmatprep.subr.mxu0 0.0
        %3891 = vmatpush2.msra.mxu0 0.0
        %3892 = vmatprep.subr.mxu0 0.0
        %3893 = vmatpush2.msra.mxu0 0.0
        %3894 = vmatprep.subr.mxu0 0.0
        %3895 = vmatpush2.msra.mxu0 0.0
        %3896 = vmatprep.subr.mxu0 0.0
        %3897 = vmatpush2.msra.mxu0 0.0
        %3898 = vmatprep.subr.mxu0 0.0
        %3899 = vmatpush2.msra.mxu0 0.0
        %3900 = vmatprep.subr.mxu0 0.0
        %3901 = vmatpush2.msra.mxu0 0.0
        %3902 = vmatprep.subr.mxu0 0.0
        %3903 = vmatpush2.msra.mxu0 0.0
        %3904 = vmatprep.subr.mxu0 0.0
        %3905 = vmatpush2.msra.mxu0 0.0
        %3906 = vmatprep.subr.mxu0 0.0
        %3907 = vmatpush2.msra.mxu0 0.0
        %3908 = vmatprep.subr.mxu0 0.0
        %3909 = vmatpush2.msra.mxu0 0.0
        %3910 = vmatprep.subr.mxu0 0.0
        %3911 = vmatpush2.msra.mxu0 0.0
        %3912 = vmatprep.subr.mxu0 0.0
        %3913 = vmatpush2.msra.mxu0 0.0
        %3914 = vmatprep.subr.mxu0 0.0
        %3915 = vmatpush2.msra.mxu0 0.0
        %3916 = vmatprep.subr.mxu0 0.0
        %3917 = vmatpush2.msra.mxu0 0.0
        %3918 = vmatprep.mubr.f32.mxu0 0.0
        %3919 = vmatmul.mubr.f32.gmra.mxu0 %v3829
        %v3920 = vpop.f32.mrf.mxu0
        %v3921 = vadd.f32 0.0, %v3920
        %v3922 = vpop.f32.mrf.mxu0
        %3923 = vmatprep.mubr.f32.mxu0 0.0
        %3924 = vmatmul.mubr.f32.gmra.mxu0 %v3834
        %v3925 = vpop.f32.mrf.mxu0
        %v3926 = vadd.f32 0.0, %v3925
        %v3927 = vpop.f32.mrf.mxu0
        %3928 = vdwg.mxu0
        %v3929 = vadd.f32 %v3751, %v3921
        %v3930 = vadd.f32 %v3752, %v3926
        %s3931 = scalar_lea.vmem [#allocation7], 128
        %v3932 = vld [vmem:[%s3931] sm:$0xff]
        %v3933 = vld [vmem:[%s3931 + $0x8] sm:$0xff]
        %v3935 = vsel %vm2513, %v3932, 0
        %v3938 = vsel %vm2513, %v3933, 0
        %3940 = vmatprep.subr.mxu0 0.0
        %3941 = vmatpush1.msra.mxu0 0.0
        %3942 = vmatprep.subr.mxu0 0.0
        %3943 = vmatpush1.msra.mxu0 0.0
        %3944 = vmatprep.subr.mxu0 0.0
        %3945 = vmatpush1.msra.mxu0 0.0
        %3946 = vmatprep.subr.mxu0 0.0
        %3947 = vmatpush1.msra.mxu0 0.0
        %3948 = vmatprep.subr.mxu0 0.0
        %3949 = vmatpush1.msra.mxu0 0.0
        %3950 = vmatprep.subr.mxu0 0.0
        %3951 = vmatpush1.msra.mxu0 0.0
        %3952 = vmatprep.subr.mxu0 0.0
        %3953 = vmatpush1.msra.mxu0 0.0
        %3954 = vmatprep.subr.mxu0 0.0
        %3955 = vmatpush1.msra.mxu0 0.0
        %3956 = vmatprep.subr.mxu0 0.0
        %3957 = vmatpush1.msra.mxu0 0.0
        %3958 = vmatprep.subr.mxu0 0.0
        %3959 = vmatpush1.msra.mxu0 %v2510
        %3960 = vmatprep.subr.mxu0 0.0
        %3961 = vmatpush1.msra.mxu0 %v2509
        %3962 = vmatprep.subr.mxu0 0.0
        %3963 = vmatpush1.msra.mxu0 %v2508
        %3964 = vmatprep.subr.mxu0 0.0
        %3965 = vmatpush1.msra.mxu0 %v2507
        %3966 = vmatprep.subr.mxu0 0.0
        %3967 = vmatpush1.msra.mxu0 %v2506
        %3968 = vmatprep.subr.mxu0 0.0
        %3969 = vmatpush1.msra.mxu0 %v2505
        %3970 = vmatprep.subr.mxu0 0.0
        %3971 = vmatpush1.msra.mxu0 %v2504
        %3972 = vmatprep.subr.mxu0 0.0
        %3973 = vmatpush2.msra.mxu0 0.0
        %3974 = vmatprep.subr.mxu0 0.0
        %3975 = vmatpush2.msra.mxu0 0.0
        %3976 = vmatprep.subr.mxu0 0.0
        %3977 = vmatpush2.msra.mxu0 0.0
        %3978 = vmatprep.subr.mxu0 0.0
        %3979 = vmatpush2.msra.mxu0 0.0
        %3980 = vmatprep.subr.mxu0 0.0
        %3981 = vmatpush2.msra.mxu0 0.0
        %3982 = vmatprep.subr.mxu0 0.0
        %3983 = vmatpush2.msra.mxu0 0.0
        %3984 = vmatprep.subr.mxu0 0.0
        %3985 = vmatpush2.msra.mxu0 0.0
        %3986 = vmatprep.subr.mxu0 0.0
        %3987 = vmatpush2.msra.mxu0 0.0
        %3988 = vmatprep.subr.mxu0 0.0
        %3989 = vmatpush2.msra.mxu0 0.0
        %3990 = vmatprep.subr.mxu0 0.0
        %3991 = vmatpush2.msra.mxu0 0.0
        %3992 = vmatprep.subr.mxu0 0.0
        %3993 = vmatpush2.msra.mxu0 0.0
        %3994 = vmatprep.subr.mxu0 0.0
        %3995 = vmatpush2.msra.mxu0 0.0
        %3996 = vmatprep.subr.mxu0 0.0
        %3997 = vmatpush2.msra.mxu0 0.0
        %3998 = vmatprep.subr.mxu0 0.0
        %3999 = vmatpush2.msra.mxu0 0.0
        %4000 = vmatprep.subr.mxu0 0.0
        %4001 = vmatpush2.msra.mxu0 0.0
        %4002 = vmatprep.subr.mxu0 0.0
        %4003 = vmatpush2.msra.mxu0 0.0
        %4004 = vmatprep.mubr.f32.mxu0 0.0
        %4005 = vmatmul.mubr.f32.gmra.mxu0 %v3935
        %v4006 = vpop.f32.mrf.mxu0
        %v4007 = vadd.f32 0.0, %v4006
        %v4008 = vpop.f32.mrf.mxu0
        %4009 = vmatprep.mubr.f32.mxu0 0.0
        %4010 = vmatmul.mubr.f32.gmra.mxu0 %v3938
        %v4011 = vpop.f32.mrf.mxu0
        %v4012 = vadd.f32 0.0, %v4011
        %v4013 = vpop.f32.mrf.mxu0
        %4014 = vdwg.mxu0
        %s4015 = scalar_lea.vmem [#allocation2], 2176
        %v4016 = vld [vmem:[%s4015] sm:$0xff]
        %v4017 = vld [vmem:[%s4015 + $0x8] sm:$0xff]
        %v4018 = vld [vmem:[%s4015 + $0x10] sm:$0xff]
        %v4019 = vld [vmem:[%s4015 + $0x18] sm:$0xff]
        %v4020 = vld [vmem:[%s4015 + $0x20] sm:$0xff]
        %v4021 = vld [vmem:[%s4015 + $0x28] sm:$0xff]
        %v4022 = vld [vmem:[%s4015 + $0x30] sm:$0xff]
        %v4023 = vld [vmem:[%s4015 + $0x38] sm:$0xff]
        %v4024 = vld [vmem:[%s4015 + $0x40] sm:$0xff]
        %v4025 = vld [vmem:[%s4015 + $0x48] sm:$0xff]
        %v4026 = vld [vmem:[%s4015 + $0x50] sm:$0xff]
        %v4027 = vld [vmem:[%s4015 + $0x58] sm:$0xff]
        %v4028 = vld [vmem:[%s4015 + $0x60] sm:$0xff]
        %v4029 = vld [vmem:[%s4015 + $0x68] sm:$0xff]
        %v4030 = vld [vmem:[%s4015 + $0x70] sm:$0xff]
        %v4031 = vld [vmem:[%s4015 + $0x78] sm:$0xff]
        %4032 = vmatprep.subr.mxu0 0.0
        %4033 = vmatpush1.msra.mxu0 %v4031
        %4034 = vmatprep.subr.mxu0 0.0
        %4035 = vmatpush1.msra.mxu0 %v4030
        %4036 = vmatprep.subr.mxu0 0.0
        %4037 = vmatpush1.msra.mxu0 %v4029
        %4038 = vmatprep.subr.mxu0 0.0
        %4039 = vmatpush1.msra.mxu0 %v4028
        %4040 = vmatprep.subr.mxu0 0.0
        %4041 = vmatpush1.msra.mxu0 %v4027
        %4042 = vmatprep.subr.mxu0 0.0
        %4043 = vmatpush1.msra.mxu0 %v4026
        %4044 = vmatprep.subr.mxu0 0.0
        %4045 = vmatpush1.msra.mxu0 %v4025
        %4046 = vmatprep.subr.mxu0 0.0
        %4047 = vmatpush1.msra.mxu0 %v4024
        %4048 = vmatprep.subr.mxu0 0.0
        %4049 = vmatpush1.msra.mxu0 %v4023
        %4050 = vmatprep.subr.mxu0 0.0
        %4051 = vmatpush1.msra.mxu0 %v4022
        %4052 = vmatprep.subr.mxu0 0.0
        %4053 = vmatpush1.msra.mxu0 %v4021
        %4054 = vmatprep.subr.mxu0 0.0
        %4055 = vmatpush1.msra.mxu0 %v4020
        %4056 = vmatprep.subr.mxu0 0.0
        %4057 = vmatpush1.msra.mxu0 %v4019
        %4058 = vmatprep.subr.mxu0 0.0
        %4059 = vmatpush1.msra.mxu0 %v4018
        %4060 = vmatprep.subr.mxu0 0.0
        %4061 = vmatpush1.msra.mxu0 %v4017
        %4062 = vmatprep.subr.mxu0 0.0
        %4063 = vmatpush1.msra.mxu0 %v4016
        %4064 = vmatprep.subr.mxu0 0.0
        %4065 = vmatpush2.msra.mxu0 0.0
        %4066 = vmatprep.subr.mxu0 0.0
        %4067 = vmatpush2.msra.mxu0 0.0
        %4068 = vmatprep.subr.mxu0 0.0
        %4069 = vmatpush2.msra.mxu0 0.0
        %4070 = vmatprep.subr.mxu0 0.0
        %4071 = vmatpush2.msra.mxu0 0.0
        %4072 = vmatprep.subr.mxu0 0.0
        %4073 = vmatpush2.msra.mxu0 0.0
        %4074 = vmatprep.subr.mxu0 0.0
        %4075 = vmatpush2.msra.mxu0 0.0
        %4076 = vmatprep.subr.mxu0 0.0
        %4077 = vmatpush2.msra.mxu0 0.0
        %4078 = vmatprep.subr.mxu0 0.0
        %4079 = vmatpush2.msra.mxu0 0.0
        %4080 = vmatprep.subr.mxu0 0.0
        %4081 = vmatpush2.msra.mxu0 0.0
        %4082 = vmatprep.subr.mxu0 0.0
        %4083 = vmatpush2.msra.mxu0 0.0
        %4084 = vmatprep.subr.mxu0 0.0
        %4085 = vmatpush2.msra.mxu0 0.0
        %4086 = vmatprep.subr.mxu0 0.0
        %4087 = vmatpush2.msra.mxu0 0.0
        %4088 = vmatprep.subr.mxu0 0.0
        %4089 = vmatpush2.msra.mxu0 0.0
        %4090 = vmatprep.subr.mxu0 0.0
        %4091 = vmatpush2.msra.mxu0 0.0
        %4092 = vmatprep.subr.mxu0 0.0
        %4093 = vmatpush2.msra.mxu0 0.0
        %4094 = vmatprep.subr.mxu0 0.0
        %4095 = vmatpush2.msra.mxu0 0.0
        %4096 = vmatprep.mubr.f32.mxu0 0.0
        %4097 = vmatmul.mubr.f32.gmra.mxu0 %v4007
        %v4098 = vpop.f32.mrf.mxu0
        %v4099 = vadd.f32 0.0, %v4098
        %v4100 = vpop.f32.mrf.mxu0
        %4101 = vmatprep.mubr.f32.mxu0 0.0
        %4102 = vmatmul.mubr.f32.gmra.mxu0 %v4012
        %v4103 = vpop.f32.mrf.mxu0
        %v4104 = vadd.f32 0.0, %v4103
        %v4105 = vpop.f32.mrf.mxu0
        %4106 = vdwg.mxu0
        %v4107 = vadd.f32 %v3929, %v4099
        %v4108 = vadd.f32 %v3930, %v4104
        %s4109 = scalar_lea.vmem [#allocation4], 1
        %v4110 = vld [vmem:[%s4109] sm:$0x1]
        %v4112 = vlaneseq
        %v4113 = vshrl.u32 %v4112, 7
        %v4114 = vsub.s32 0, %v4113
        %v4115 = vrot.slane %v4110, %v4114
        %v4117 = vadd.f32 %v4107, %v4115
        %v4118 = vadd.f32 %v4108, %v4115
        %v4119 = vmax.f32 %v4117, 0.0
        %v4120 = vmax.f32 %v4118, 0.0
        %v4121 = vld [vmem:[#allocation9] sm:$0xff]
        %vm4122 = vcmask 130048
        %v4124 = vsel %vm4122, %v4121, 0
        %4126 = vmatprep.subr.mxu0 0.0
        %4127 = vmatpush1.msra.mxu0 0.0
        %4128 = vmatprep.subr.mxu0 0.0
        %4129 = vmatpush1.msra.mxu0 0.0
        %4130 = vmatprep.subr.mxu0 0.0
        %4131 = vmatpush1.msra.mxu0 0.0
        %4132 = vmatprep.subr.mxu0 0.0
        %4133 = vmatpush1.msra.mxu0 0.0
        %4134 = vmatprep.subr.mxu0 0.0
        %4135 = vmatpush1.msra.mxu0 0.0
        %4136 = vmatprep.subr.mxu0 0.0
        %4137 = vmatpush1.msra.mxu0 0.0
        %4138 = vmatprep.subr.mxu0 0.0
        %4139 = vmatpush1.msra.mxu0 0.0
        %4140 = vmatprep.subr.mxu0 0.0
        %4141 = vmatpush1.msra.mxu0 0.0
        %4142 = vmatprep.subr.mxu0 0.0
        %4143 = vmatpush1.msra.mxu0 0.0
        %4144 = vmatprep.subr.mxu0 0.0
        %4145 = vmatpush1.msra.mxu0 0.0
        %4146 = vmatprep.subr.mxu0 0.0
        %4147 = vmatpush1.msra.mxu0 0.0
        %4148 = vmatprep.subr.mxu0 0.0
        %4149 = vmatpush1.msra.mxu0 0.0
        %4150 = vmatprep.subr.mxu0 0.0
        %4151 = vmatpush1.msra.mxu0 0.0
        %4152 = vmatprep.subr.mxu0 0.0
        %4153 = vmatpush1.msra.mxu0 0.0
        %4154 = vmatprep.subr.mxu0 0.0
        %4155 = vmatpush1.msra.mxu0 %v4120
        %4156 = vmatprep.subr.mxu0 0.0
        %4157 = vmatpush1.msra.mxu0 %v4119
        %4158 = vmatprep.subr.mxu0 0.0
        %4159 = vmatpush2.msra.mxu0 0.0
        %4160 = vmatprep.subr.mxu0 0.0
        %4161 = vmatpush2.msra.mxu0 0.0
        %4162 = vmatprep.subr.mxu0 0.0
        %4163 = vmatpush2.msra.mxu0 0.0
        %4164 = vmatprep.subr.mxu0 0.0
        %4165 = vmatpush2.msra.mxu0 0.0
        %4166 = vmatprep.subr.mxu0 0.0
        %4167 = vmatpush2.msra.mxu0 0.0
        %4168 = vmatprep.subr.mxu0 0.0
        %4169 = vmatpush2.msra.mxu0 0.0
        %4170 = vmatprep.subr.mxu0 0.0
        %4171 = vmatpush2.msra.mxu0 0.0
        %4172 = vmatprep.subr.mxu0 0.0
        %4173 = vmatpush2.msra.mxu0 0.0
        %4174 = vmatprep.subr.mxu0 0.0
        %4175 = vmatpush2.msra.mxu0 0.0
        %4176 = vmatprep.subr.mxu0 0.0
        %4177 = vmatpush2.msra.mxu0 0.0
        %4178 = vmatprep.subr.mxu0 0.0
        %4179 = vmatpush2.msra.mxu0 0.0
        %4180 = vmatprep.subr.mxu0 0.0
        %4181 = vmatpush2.msra.mxu0 0.0
        %4182 = vmatprep.subr.mxu0 0.0
        %4183 = vmatpush2.msra.mxu0 0.0
        %4184 = vmatprep.subr.mxu0 0.0
        %4185 = vmatpush2.msra.mxu0 0.0
        %4186 = vmatprep.subr.mxu0 0.0
        %4187 = vmatpush2.msra.mxu0 0.0
        %4188 = vmatprep.subr.mxu0 0.0
        %4189 = vmatpush2.msra.mxu0 0.0
        %4190 = vmatprep.mubr.f32.mxu0 0.0
        %4191 = vmatmul.mubr.f32.gmra.mxu0 %v4124
        %v4192 = vpop.f32.mrf.mxu0
        %v4193 = vadd.f32 0.0, %v4192
        %v4194 = vpop.f32.mrf.mxu0
        %4195 = vdwg.mxu0
        %s4196 = scalar_lea.vmem [#allocation2], 2304
        %v4197 = vld [vmem:[%s4196] sm:$0xff]
        %v4198 = vld [vmem:[%s4196 + $0x8] sm:$0xff]
        %v4199 = vld [vmem:[%s4196 + $0x10] sm:$0xff]
        %v4200 = vld [vmem:[%s4196 + $0x18] sm:$0xff]
        %v4201 = vld [vmem:[%s4196 + $0x20] sm:$0xff]
        %v4202 = vld [vmem:[%s4196 + $0x28] sm:$0xff]
        %v4203 = vld [vmem:[%s4196 + $0x30] sm:$0xff]
        %v4204 = vld [vmem:[%s4196 + $0x38] sm:$0xff]
        %v4205 = vld [vmem:[%s4196 + $0x40] sm:$0xff]
        %v4206 = vld [vmem:[%s4196 + $0x48] sm:$0xff]
        %v4207 = vld [vmem:[%s4196 + $0x50] sm:$0xff]
        %v4208 = vld [vmem:[%s4196 + $0x58] sm:$0xff]
        %v4209 = vld [vmem:[%s4196 + $0x60] sm:$0xff]
        %v4210 = vld [vmem:[%s4196 + $0x68] sm:$0xff]
        %v4211 = vld [vmem:[%s4196 + $0x70] sm:$0xff]
        %v4212 = vld [vmem:[%s4196 + $0x78] sm:$0xff]
        %s4213 = scalar_lea.vmem [#allocation9], 8
        %v4214 = vld [vmem:[%s4213] sm:$0xff]
        %v4216 = vsel %vm4122, %v4214, 0
        %4218 = vmatprep.subr.mxu0 0.0
        %4219 = vmatpush1.msra.mxu0 0.0
        %4220 = vmatprep.subr.mxu0 0.0
        %4221 = vmatpush1.msra.mxu0 0.0
        %4222 = vmatprep.subr.mxu0 0.0
        %4223 = vmatpush1.msra.mxu0 0.0
        %4224 = vmatprep.subr.mxu0 0.0
        %4225 = vmatpush1.msra.mxu0 0.0
        %4226 = vmatprep.subr.mxu0 0.0
        %4227 = vmatpush1.msra.mxu0 0.0
        %4228 = vmatprep.subr.mxu0 0.0
        %4229 = vmatpush1.msra.mxu0 0.0
        %4230 = vmatprep.subr.mxu0 0.0
        %4231 = vmatpush1.msra.mxu0 0.0
        %4232 = vmatprep.subr.mxu0 0.0
        %4233 = vmatpush1.msra.mxu0 0.0
        %4234 = vmatprep.subr.mxu0 0.0
        %4235 = vmatpush1.msra.mxu0 0.0
        %4236 = vmatprep.subr.mxu0 0.0
        %4237 = vmatpush1.msra.mxu0 0.0
        %4238 = vmatprep.subr.mxu0 0.0
        %4239 = vmatpush1.msra.mxu0 0.0
        %4240 = vmatprep.subr.mxu0 0.0
        %4241 = vmatpush1.msra.mxu0 0.0
        %4242 = vmatprep.subr.mxu0 0.0
        %4243 = vmatpush1.msra.mxu0 0.0
        %4244 = vmatprep.subr.mxu0 0.0
        %4245 = vmatpush1.msra.mxu0 0.0
        %4246 = vmatprep.subr.mxu0 0.0
        %4247 = vmatpush1.msra.mxu0 %v4120
        %4248 = vmatprep.subr.mxu0 0.0
        %4249 = vmatpush1.msra.mxu0 %v4119
        %4250 = vmatprep.subr.mxu0 0.0
        %4251 = vmatpush2.msra.mxu0 0.0
        %4252 = vmatprep.subr.mxu0 0.0
        %4253 = vmatpush2.msra.mxu0 0.0
        %4254 = vmatprep.subr.mxu0 0.0
        %4255 = vmatpush2.msra.mxu0 0.0
        %4256 = vmatprep.subr.mxu0 0.0
        %4257 = vmatpush2.msra.mxu0 0.0
        %4258 = vmatprep.subr.mxu0 0.0
        %4259 = vmatpush2.msra.mxu0 0.0
        %4260 = vmatprep.subr.mxu0 0.0
        %4261 = vmatpush2.msra.mxu0 0.0
        %4262 = vmatprep.subr.mxu0 0.0
        %4263 = vmatpush2.msra.mxu0 0.0
        %4264 = vmatprep.subr.mxu0 0.0
        %4265 = vmatpush2.msra.mxu0 0.0
        %4266 = vmatprep.subr.mxu0 0.0
        %4267 = vmatpush2.msra.mxu0 0.0
        %4268 = vmatprep.subr.mxu0 0.0
        %4269 = vmatpush2.msra.mxu0 0.0
        %4270 = vmatprep.subr.mxu0 0.0
        %4271 = vmatpush2.msra.mxu0 0.0
        %4272 = vmatprep.subr.mxu0 0.0
        %4273 = vmatpush2.msra.mxu0 0.0
        %4274 = vmatprep.subr.mxu0 0.0
        %4275 = vmatpush2.msra.mxu0 0.0
        %4276 = vmatprep.subr.mxu0 0.0
        %4277 = vmatpush2.msra.mxu0 0.0
        %4278 = vmatprep.subr.mxu0 0.0
        %4279 = vmatpush2.msra.mxu0 0.0
        %4280 = vmatprep.subr.mxu0 0.0
        %4281 = vmatpush2.msra.mxu0 0.0
        %4282 = vmatprep.mubr.f32.mxu0 0.0
        %4283 = vmatmul.mubr.f32.gmra.mxu0 %v4216
        %v4284 = vpop.f32.mrf.mxu0
        %v4285 = vadd.f32 0.0, %v4284
        %v4286 = vpop.f32.mrf.mxu0
        %4287 = vdwg.mxu0
        %s4288 = scalar_lea.vmem [#allocation2], 2432
        %v4289 = vld [vmem:[%s4288] sm:$0xff]
        %v4290 = vld [vmem:[%s4288 + $0x8] sm:$0xff]
        %v4291 = vld [vmem:[%s4288 + $0x10] sm:$0xff]
        %v4292 = vld [vmem:[%s4288 + $0x18] sm:$0xff]
        %v4293 = vld [vmem:[%s4288 + $0x20] sm:$0xff]
        %v4294 = vld [vmem:[%s4288 + $0x28] sm:$0xff]
        %v4295 = vld [vmem:[%s4288 + $0x30] sm:$0xff]
        %v4296 = vld [vmem:[%s4288 + $0x38] sm:$0xff]
        %v4297 = vld [vmem:[%s4288 + $0x40] sm:$0xff]
        %v4298 = vld [vmem:[%s4288 + $0x48] sm:$0xff]
        %v4299 = vld [vmem:[%s4288 + $0x50] sm:$0xff]
        %v4300 = vld [vmem:[%s4288 + $0x58] sm:$0xff]
        %v4301 = vld [vmem:[%s4288 + $0x60] sm:$0xff]
        %v4302 = vld [vmem:[%s4288 + $0x68] sm:$0xff]
        %v4303 = vld [vmem:[%s4288 + $0x70] sm:$0xff]
        %v4304 = vld [vmem:[%s4288 + $0x78] sm:$0xff]
        %4305 = vmatprep.subr.mxu0 0.0
        %4306 = vmatpush1.msra.mxu0 %v4304
        %4307 = vmatprep.subr.mxu0 0.0
        %4308 = vmatpush1.msra.mxu0 %v4303
        %4309 = vmatprep.subr.mxu0 0.0
        %4310 = vmatpush1.msra.mxu0 %v4302
        %4311 = vmatprep.subr.mxu0 0.0
        %4312 = vmatpush1.msra.mxu0 %v4301
        %4313 = vmatprep.subr.mxu0 0.0
        %4314 = vmatpush1.msra.mxu0 %v4300
        %4315 = vmatprep.subr.mxu0 0.0
        %4316 = vmatpush1.msra.mxu0 %v4299
        %4317 = vmatprep.subr.mxu0 0.0
        %4318 = vmatpush1.msra.mxu0 %v4298
        %4319 = vmatprep.subr.mxu0 0.0
        %4320 = vmatpush1.msra.mxu0 %v4297
        %4321 = vmatprep.subr.mxu0 0.0
        %4322 = vmatpush1.msra.mxu0 %v4296
        %4323 = vmatprep.subr.mxu0 0.0
        %4324 = vmatpush1.msra.mxu0 %v4295
        %4325 = vmatprep.subr.mxu0 0.0
        %4326 = vmatpush1.msra.mxu0 %v4294
        %4327 = vmatprep.subr.mxu0 0.0
        %4328 = vmatpush1.msra.mxu0 %v4293
        %4329 = vmatprep.subr.mxu0 0.0
        %4330 = vmatpush1.msra.mxu0 %v4292
        %4331 = vmatprep.subr.mxu0 0.0
        %4332 = vmatpush1.msra.mxu0 %v4291
        %4333 = vmatprep.subr.mxu0 0.0
        %4334 = vmatpush1.msra.mxu0 %v4290
        %4335 = vmatprep.subr.mxu0 0.0
        %4336 = vmatpush1.msra.mxu0 %v4289
        %4337 = vmatprep.subr.mxu0 0.0
        %4338 = vmatpush2.msra.mxu0 0.0
        %4339 = vmatprep.subr.mxu0 0.0
        %4340 = vmatpush2.msra.mxu0 0.0
        %4341 = vmatprep.subr.mxu0 0.0
        %4342 = vmatpush2.msra.mxu0 0.0
        %4343 = vmatprep.subr.mxu0 0.0
        %4344 = vmatpush2.msra.mxu0 0.0
        %4345 = vmatprep.subr.mxu0 0.0
        %4346 = vmatpush2.msra.mxu0 0.0
        %4347 = vmatprep.subr.mxu0 0.0
        %4348 = vmatpush2.msra.mxu0 0.0
        %4349 = vmatprep.subr.mxu0 0.0
        %4350 = vmatpush2.msra.mxu0 0.0
        %4351 = vmatprep.subr.mxu0 0.0
        %4352 = vmatpush2.msra.mxu0 0.0
        %4353 = vmatprep.subr.mxu0 0.0
        %4354 = vmatpush2.msra.mxu0 0.0
        %4355 = vmatprep.subr.mxu0 0.0
        %4356 = vmatpush2.msra.mxu0 0.0
        %4357 = vmatprep.subr.mxu0 0.0
        %4358 = vmatpush2.msra.mxu0 0.0
        %4359 = vmatprep.subr.mxu0 0.0
        %4360 = vmatpush2.msra.mxu0 0.0
        %4361 = vmatprep.subr.mxu0 0.0
        %4362 = vmatpush2.msra.mxu0 0.0
        %4363 = vmatprep.subr.mxu0 0.0
        %4364 = vmatpush2.msra.mxu0 0.0
        %4365 = vmatprep.subr.mxu0 0.0
        %4366 = vmatpush2.msra.mxu0 0.0
        %4367 = vmatprep.subr.mxu0 0.0
        %4368 = vmatpush2.msra.mxu0 0.0
        %4369 = vmatprep.mubr.f32.mxu0 0.0
        %4370 = vmatmul.mubr.f32.gmra.mxu0 %v4285
        %v4371 = vpop.f32.mrf.mxu0
        %v4372 = vadd.f32 0.0, %v4371
        %v4373 = vpop.f32.mrf.mxu0
        %4374 = vdwg.mxu0
        %4375 = vmatprep.subr.mxu0 0.0
        %4376 = vmatpush1.msra.mxu0 %v4212
        %4377 = vmatprep.subr.mxu0 0.0
        %4378 = vmatpush1.msra.mxu0 %v4211
        %4379 = vmatprep.subr.mxu0 0.0
        %4380 = vmatpush1.msra.mxu0 %v4210
        %4381 = vmatprep.subr.mxu0 0.0
        %4382 = vmatpush1.msra.mxu0 %v4209
        %4383 = vmatprep.subr.mxu0 0.0
        %4384 = vmatpush1.msra.mxu0 %v4208
        %4385 = vmatprep.subr.mxu0 0.0
        %4386 = vmatpush1.msra.mxu0 %v4207
        %4387 = vmatprep.subr.mxu0 0.0
        %4388 = vmatpush1.msra.mxu0 %v4206
        %4389 = vmatprep.subr.mxu0 0.0
        %4390 = vmatpush1.msra.mxu0 %v4205
        %4391 = vmatprep.subr.mxu0 0.0
        %4392 = vmatpush1.msra.mxu0 %v4204
        %4393 = vmatprep.subr.mxu0 0.0
        %4394 = vmatpush1.msra.mxu0 %v4203
        %4395 = vmatprep.subr.mxu0 0.0
        %4396 = vmatpush1.msra.mxu0 %v4202
        %4397 = vmatprep.subr.mxu0 0.0
        %4398 = vmatpush1.msra.mxu0 %v4201
        %4399 = vmatprep.subr.mxu0 0.0
        %4400 = vmatpush1.msra.mxu0 %v4200
        %4401 = vmatprep.subr.mxu0 0.0
        %4402 = vmatpush1.msra.mxu0 %v4199
        %4403 = vmatprep.subr.mxu0 0.0
        %4404 = vmatpush1.msra.mxu0 %v4198
        %4405 = vmatprep.subr.mxu0 0.0
        %4406 = vmatpush1.msra.mxu0 %v4197
        %4407 = vmatprep.subr.mxu0 0.0
        %4408 = vmatpush2.msra.mxu0 0.0
        %4409 = vmatprep.subr.mxu0 0.0
        %4410 = vmatpush2.msra.mxu0 0.0
        %4411 = vmatprep.subr.mxu0 0.0
        %4412 = vmatpush2.msra.mxu0 0.0
        %4413 = vmatprep.subr.mxu0 0.0
        %4414 = vmatpush2.msra.mxu0 0.0
        %4415 = vmatprep.subr.mxu0 0.0
        %4416 = vmatpush2.msra.mxu0 0.0
        %4417 = vmatprep.subr.mxu0 0.0
        %4418 = vmatpush2.msra.mxu0 0.0
        %4419 = vmatprep.subr.mxu0 0.0
        %4420 = vmatpush2.msra.mxu0 0.0
        %4421 = vmatprep.subr.mxu0 0.0
        %4422 = vmatpush2.msra.mxu0 0.0
        %4423 = vmatprep.subr.mxu0 0.0
        %4424 = vmatpush2.msra.mxu0 0.0
        %4425 = vmatprep.subr.mxu0 0.0
        %4426 = vmatpush2.msra.mxu0 0.0
        %4427 = vmatprep.subr.mxu0 0.0
        %4428 = vmatpush2.msra.mxu0 0.0
        %4429 = vmatprep.subr.mxu0 0.0
        %4430 = vmatpush2.msra.mxu0 0.0
        %4431 = vmatprep.subr.mxu0 0.0
        %4432 = vmatpush2.msra.mxu0 0.0
        %4433 = vmatprep.subr.mxu0 0.0
        %4434 = vmatpush2.msra.mxu0 0.0
        %4435 = vmatprep.subr.mxu0 0.0
        %4436 = vmatpush2.msra.mxu0 0.0
        %4437 = vmatprep.subr.mxu0 0.0
        %4438 = vmatpush2.msra.mxu0 0.0
        %4439 = vmatprep.mubr.f32.mxu0 0.0
        %4440 = vmatmul.mubr.f32.gmra.mxu0 %v4193
        %v4441 = vpop.f32.mrf.mxu0
        %v4442 = vadd.f32 %v4372, %v4441
        %v4443 = vpop.f32.mrf.mxu0
        %4444 = vdwg.mxu0
        %s4445 = scalar_lea.vmem [#allocation9], 16
        %v4446 = vld [vmem:[%s4445] sm:$0xff]
        %v4448 = vsel %vm4122, %v4446, 0
        %4450 = vmatprep.subr.mxu0 0.0
        %4451 = vmatpush1.msra.mxu0 0.0
        %4452 = vmatprep.subr.mxu0 0.0
        %4453 = vmatpush1.msra.mxu0 0.0
        %4454 = vmatprep.subr.mxu0 0.0
        %4455 = vmatpush1.msra.mxu0 0.0
        %4456 = vmatprep.subr.mxu0 0.0
        %4457 = vmatpush1.msra.mxu0 0.0
        %4458 = vmatprep.subr.mxu0 0.0
        %4459 = vmatpush1.msra.mxu0 0.0
        %4460 = vmatprep.subr.mxu0 0.0
        %4461 = vmatpush1.msra.mxu0 0.0
        %4462 = vmatprep.subr.mxu0 0.0
        %4463 = vmatpush1.msra.mxu0 0.0
        %4464 = vmatprep.subr.mxu0 0.0
        %4465 = vmatpush1.msra.mxu0 0.0
        %4466 = vmatprep.subr.mxu0 0.0
        %4467 = vmatpush1.msra.mxu0 0.0
        %4468 = vmatprep.subr.mxu0 0.0
        %4469 = vmatpush1.msra.mxu0 0.0
        %4470 = vmatprep.subr.mxu0 0.0
        %4471 = vmatpush1.msra.mxu0 0.0
        %4472 = vmatprep.subr.mxu0 0.0
        %4473 = vmatpush1.msra.mxu0 0.0
        %4474 = vmatprep.subr.mxu0 0.0
        %4475 = vmatpush1.msra.mxu0 0.0
        %4476 = vmatprep.subr.mxu0 0.0
        %4477 = vmatpush1.msra.mxu0 0.0
        %4478 = vmatprep.subr.mxu0 0.0
        %4479 = vmatpush1.msra.mxu0 %v4120
        %4480 = vmatprep.subr.mxu0 0.0
        %4481 = vmatpush1.msra.mxu0 %v4119
        %4482 = vmatprep.subr.mxu0 0.0
        %4483 = vmatpush2.msra.mxu0 0.0
        %4484 = vmatprep.subr.mxu0 0.0
        %4485 = vmatpush2.msra.mxu0 0.0
        %4486 = vmatprep.subr.mxu0 0.0
        %4487 = vmatpush2.msra.mxu0 0.0
        %4488 = vmatprep.subr.mxu0 0.0
        %4489 = vmatpush2.msra.mxu0 0.0
        %4490 = vmatprep.subr.mxu0 0.0
        %4491 = vmatpush2.msra.mxu0 0.0
        %4492 = vmatprep.subr.mxu0 0.0
        %4493 = vmatpush2.msra.mxu0 0.0
        %4494 = vmatprep.subr.mxu0 0.0
        %4495 = vmatpush2.msra.mxu0 0.0
        %4496 = vmatprep.subr.mxu0 0.0
        %4497 = vmatpush2.msra.mxu0 0.0
        %4498 = vmatprep.subr.mxu0 0.0
        %4499 = vmatpush2.msra.mxu0 0.0
        %4500 = vmatprep.subr.mxu0 0.0
        %4501 = vmatpush2.msra.mxu0 0.0
        %4502 = vmatprep.subr.mxu0 0.0
        %4503 = vmatpush2.msra.mxu0 0.0
        %4504 = vmatprep.subr.mxu0 0.0
        %4505 = vmatpush2.msra.mxu0 0.0
        %4506 = vmatprep.subr.mxu0 0.0
        %4507 = vmatpush2.msra.mxu0 0.0
        %4508 = vmatprep.subr.mxu0 0.0
        %4509 = vmatpush2.msra.mxu0 0.0
        %4510 = vmatprep.subr.mxu0 0.0
        %4511 = vmatpush2.msra.mxu0 0.0
        %4512 = vmatprep.subr.mxu0 0.0
        %4513 = vmatpush2.msra.mxu0 0.0
        %4514 = vmatprep.mubr.f32.mxu0 0.0
        %4515 = vmatmul.mubr.f32.gmra.mxu0 %v4448
        %v4516 = vpop.f32.mrf.mxu0
        %v4517 = vadd.f32 0.0, %v4516
        %v4518 = vpop.f32.mrf.mxu0
        %4519 = vdwg.mxu0
        %s4520 = scalar_lea.vmem [#allocation2], 2560
        %v4521 = vld [vmem:[%s4520] sm:$0xff]
        %v4522 = vld [vmem:[%s4520 + $0x8] sm:$0xff]
        %v4523 = vld [vmem:[%s4520 + $0x10] sm:$0xff]
        %v4524 = vld [vmem:[%s4520 + $0x18] sm:$0xff]
        %v4525 = vld [vmem:[%s4520 + $0x20] sm:$0xff]
        %v4526 = vld [vmem:[%s4520 + $0x28] sm:$0xff]
        %v4527 = vld [vmem:[%s4520 + $0x30] sm:$0xff]
        %v4528 = vld [vmem:[%s4520 + $0x38] sm:$0xff]
        %v4529 = vld [vmem:[%s4520 + $0x40] sm:$0xff]
        %v4530 = vld [vmem:[%s4520 + $0x48] sm:$0xff]
        %v4531 = vld [vmem:[%s4520 + $0x50] sm:$0xff]
        %v4532 = vld [vmem:[%s4520 + $0x58] sm:$0xff]
        %v4533 = vld [vmem:[%s4520 + $0x60] sm:$0xff]
        %v4534 = vld [vmem:[%s4520 + $0x68] sm:$0xff]
        %v4535 = vld [vmem:[%s4520 + $0x70] sm:$0xff]
        %v4536 = vld [vmem:[%s4520 + $0x78] sm:$0xff]
        %4537 = vmatprep.subr.mxu0 0.0
        %4538 = vmatpush1.msra.mxu0 %v4536
        %4539 = vmatprep.subr.mxu0 0.0
        %4540 = vmatpush1.msra.mxu0 %v4535
        %4541 = vmatprep.subr.mxu0 0.0
        %4542 = vmatpush1.msra.mxu0 %v4534
        %4543 = vmatprep.subr.mxu0 0.0
        %4544 = vmatpush1.msra.mxu0 %v4533
        %4545 = vmatprep.subr.mxu0 0.0
        %4546 = vmatpush1.msra.mxu0 %v4532
        %4547 = vmatprep.subr.mxu0 0.0
        %4548 = vmatpush1.msra.mxu0 %v4531
        %4549 = vmatprep.subr.mxu0 0.0
        %4550 = vmatpush1.msra.mxu0 %v4530
        %4551 = vmatprep.subr.mxu0 0.0
        %4552 = vmatpush1.msra.mxu0 %v4529
        %4553 = vmatprep.subr.mxu0 0.0
        %4554 = vmatpush1.msra.mxu0 %v4528
        %4555 = vmatprep.subr.mxu0 0.0
        %4556 = vmatpush1.msra.mxu0 %v4527
        %4557 = vmatprep.subr.mxu0 0.0
        %4558 = vmatpush1.msra.mxu0 %v4526
        %4559 = vmatprep.subr.mxu0 0.0
        %4560 = vmatpush1.msra.mxu0 %v4525
        %4561 = vmatprep.subr.mxu0 0.0
        %4562 = vmatpush1.msra.mxu0 %v4524
        %4563 = vmatprep.subr.mxu0 0.0
        %4564 = vmatpush1.msra.mxu0 %v4523
        %4565 = vmatprep.subr.mxu0 0.0
        %4566 = vmatpush1.msra.mxu0 %v4522
        %4567 = vmatprep.subr.mxu0 0.0
        %4568 = vmatpush1.msra.mxu0 %v4521
        %4569 = vmatprep.subr.mxu0 0.0
        %4570 = vmatpush2.msra.mxu0 0.0
        %4571 = vmatprep.subr.mxu0 0.0
        %4572 = vmatpush2.msra.mxu0 0.0
        %4573 = vmatprep.subr.mxu0 0.0
        %4574 = vmatpush2.msra.mxu0 0.0
        %4575 = vmatprep.subr.mxu0 0.0
        %4576 = vmatpush2.msra.mxu0 0.0
        %4577 = vmatprep.subr.mxu0 0.0
        %4578 = vmatpush2.msra.mxu0 0.0
        %4579 = vmatprep.subr.mxu0 0.0
        %4580 = vmatpush2.msra.mxu0 0.0
        %4581 = vmatprep.subr.mxu0 0.0
        %4582 = vmatpush2.msra.mxu0 0.0
        %4583 = vmatprep.subr.mxu0 0.0
        %4584 = vmatpush2.msra.mxu0 0.0
        %4585 = vmatprep.subr.mxu0 0.0
        %4586 = vmatpush2.msra.mxu0 0.0
        %4587 = vmatprep.subr.mxu0 0.0
        %4588 = vmatpush2.msra.mxu0 0.0
        %4589 = vmatprep.subr.mxu0 0.0
        %4590 = vmatpush2.msra.mxu0 0.0
        %4591 = vmatprep.subr.mxu0 0.0
        %4592 = vmatpush2.msra.mxu0 0.0
        %4593 = vmatprep.subr.mxu0 0.0
        %4594 = vmatpush2.msra.mxu0 0.0
        %4595 = vmatprep.subr.mxu0 0.0
        %4596 = vmatpush2.msra.mxu0 0.0
        %4597 = vmatprep.subr.mxu0 0.0
        %4598 = vmatpush2.msra.mxu0 0.0
        %4599 = vmatprep.subr.mxu0 0.0
        %4600 = vmatpush2.msra.mxu0 0.0
        %4601 = vmatprep.mubr.f32.mxu0 0.0
        %4602 = vmatmul.mubr.f32.gmra.mxu0 %v4517
        %v4603 = vpop.f32.mrf.mxu0
        %v4604 = vadd.f32 0.0, %v4603
        %v4605 = vpop.f32.mrf.mxu0
        %4606 = vdwg.mxu0
        %v4607 = vadd.f32 %v4442, %v4604
        %s4608 = scalar_lea.vmem [#allocation9], 24
        %v4609 = vld [vmem:[%s4608] sm:$0xff]
        %v4611 = vsel %vm4122, %v4609, 0
        %4613 = vmatprep.subr.mxu0 0.0
        %4614 = vmatpush1.msra.mxu0 0.0
        %4615 = vmatprep.subr.mxu0 0.0
        %4616 = vmatpush1.msra.mxu0 0.0
        %4617 = vmatprep.subr.mxu0 0.0
        %4618 = vmatpush1.msra.mxu0 0.0
        %4619 = vmatprep.subr.mxu0 0.0
        %4620 = vmatpush1.msra.mxu0 0.0
        %4621 = vmatprep.subr.mxu0 0.0
        %4622 = vmatpush1.msra.mxu0 0.0
        %4623 = vmatprep.subr.mxu0 0.0
        %4624 = vmatpush1.msra.mxu0 0.0
        %4625 = vmatprep.subr.mxu0 0.0
        %4626 = vmatpush1.msra.mxu0 0.0
        %4627 = vmatprep.subr.mxu0 0.0
        %4628 = vmatpush1.msra.mxu0 0.0
        %4629 = vmatprep.subr.mxu0 0.0
        %4630 = vmatpush1.msra.mxu0 0.0
        %4631 = vmatprep.subr.mxu0 0.0
        %4632 = vmatpush1.msra.mxu0 0.0
        %4633 = vmatprep.subr.mxu0 0.0
        %4634 = vmatpush1.msra.mxu0 0.0
        %4635 = vmatprep.subr.mxu0 0.0
        %4636 = vmatpush1.msra.mxu0 0.0
        %4637 = vmatprep.subr.mxu0 0.0
        %4638 = vmatpush1.msra.mxu0 0.0
        %4639 = vmatprep.subr.mxu0 0.0
        %4640 = vmatpush1.msra.mxu0 0.0
        %4641 = vmatprep.subr.mxu0 0.0
        %4642 = vmatpush1.msra.mxu0 %v4120
        %4643 = vmatprep.subr.mxu0 0.0
        %4644 = vmatpush1.msra.mxu0 %v4119
        %4645 = vmatprep.subr.mxu0 0.0
        %4646 = vmatpush2.msra.mxu0 0.0
        %4647 = vmatprep.subr.mxu0 0.0
        %4648 = vmatpush2.msra.mxu0 0.0
        %4649 = vmatprep.subr.mxu0 0.0
        %4650 = vmatpush2.msra.mxu0 0.0
        %4651 = vmatprep.subr.mxu0 0.0
        %4652 = vmatpush2.msra.mxu0 0.0
        %4653 = vmatprep.subr.mxu0 0.0
        %4654 = vmatpush2.msra.mxu0 0.0
        %4655 = vmatprep.subr.mxu0 0.0
        %4656 = vmatpush2.msra.mxu0 0.0
        %4657 = vmatprep.subr.mxu0 0.0
        %4658 = vmatpush2.msra.mxu0 0.0
        %4659 = vmatprep.subr.mxu0 0.0
        %4660 = vmatpush2.msra.mxu0 0.0
        %4661 = vmatprep.subr.mxu0 0.0
        %4662 = vmatpush2.msra.mxu0 0.0
        %4663 = vmatprep.subr.mxu0 0.0
        %4664 = vmatpush2.msra.mxu0 0.0
        %4665 = vmatprep.subr.mxu0 0.0
        %4666 = vmatpush2.msra.mxu0 0.0
        %4667 = vmatprep.subr.mxu0 0.0
        %4668 = vmatpush2.msra.mxu0 0.0
        %4669 = vmatprep.subr.mxu0 0.0
        %4670 = vmatpush2.msra.mxu0 0.0
        %4671 = vmatprep.subr.mxu0 0.0
        %4672 = vmatpush2.msra.mxu0 0.0
        %4673 = vmatprep.subr.mxu0 0.0
        %4674 = vmatpush2.msra.mxu0 0.0
        %4675 = vmatprep.subr.mxu0 0.0
        %4676 = vmatpush2.msra.mxu0 0.0
        %4677 = vmatprep.mubr.f32.mxu0 0.0
        %4678 = vmatmul.mubr.f32.gmra.mxu0 %v4611
        %v4679 = vpop.f32.mrf.mxu0
        %v4680 = vadd.f32 0.0, %v4679
        %v4681 = vpop.f32.mrf.mxu0
        %4682 = vdwg.mxu0
        %s4683 = scalar_lea.vmem [#allocation2], 2688
        %v4684 = vld [vmem:[%s4683] sm:$0xff]
        %v4685 = vld [vmem:[%s4683 + $0x8] sm:$0xff]
        %v4686 = vld [vmem:[%s4683 + $0x10] sm:$0xff]
        %v4687 = vld [vmem:[%s4683 + $0x18] sm:$0xff]
        %v4688 = vld [vmem:[%s4683 + $0x20] sm:$0xff]
        %v4689 = vld [vmem:[%s4683 + $0x28] sm:$0xff]
        %v4690 = vld [vmem:[%s4683 + $0x30] sm:$0xff]
        %v4691 = vld [vmem:[%s4683 + $0x38] sm:$0xff]
        %v4692 = vld [vmem:[%s4683 + $0x40] sm:$0xff]
        %v4693 = vld [vmem:[%s4683 + $0x48] sm:$0xff]
        %v4694 = vld [vmem:[%s4683 + $0x50] sm:$0xff]
        %v4695 = vld [vmem:[%s4683 + $0x58] sm:$0xff]
        %v4696 = vld [vmem:[%s4683 + $0x60] sm:$0xff]
        %v4697 = vld [vmem:[%s4683 + $0x68] sm:$0xff]
        %v4698 = vld [vmem:[%s4683 + $0x70] sm:$0xff]
        %v4699 = vld [vmem:[%s4683 + $0x78] sm:$0xff]
        %4700 = vmatprep.subr.mxu0 0.0
        %4701 = vmatpush1.msra.mxu0 %v4699
        %4702 = vmatprep.subr.mxu0 0.0
        %4703 = vmatpush1.msra.mxu0 %v4698
        %4704 = vmatprep.subr.mxu0 0.0
        %4705 = vmatpush1.msra.mxu0 %v4697
        %4706 = vmatprep.subr.mxu0 0.0
        %4707 = vmatpush1.msra.mxu0 %v4696
        %4708 = vmatprep.subr.mxu0 0.0
        %4709 = vmatpush1.msra.mxu0 %v4695
        %4710 = vmatprep.subr.mxu0 0.0
        %4711 = vmatpush1.msra.mxu0 %v4694
        %4712 = vmatprep.subr.mxu0 0.0
        %4713 = vmatpush1.msra.mxu0 %v4693
        %4714 = vmatprep.subr.mxu0 0.0
        %4715 = vmatpush1.msra.mxu0 %v4692
        %4716 = vmatprep.subr.mxu0 0.0
        %4717 = vmatpush1.msra.mxu0 %v4691
        %4718 = vmatprep.subr.mxu0 0.0
        %4719 = vmatpush1.msra.mxu0 %v4690
        %4720 = vmatprep.subr.mxu0 0.0
        %4721 = vmatpush1.msra.mxu0 %v4689
        %4722 = vmatprep.subr.mxu0 0.0
        %4723 = vmatpush1.msra.mxu0 %v4688
        %4724 = vmatprep.subr.mxu0 0.0
        %4725 = vmatpush1.msra.mxu0 %v4687
        %4726 = vmatprep.subr.mxu0 0.0
        %4727 = vmatpush1.msra.mxu0 %v4686
        %4728 = vmatprep.subr.mxu0 0.0
        %4729 = vmatpush1.msra.mxu0 %v4685
        %4730 = vmatprep.subr.mxu0 0.0
        %4731 = vmatpush1.msra.mxu0 %v4684
        %4732 = vmatprep.subr.mxu0 0.0
        %4733 = vmatpush2.msra.mxu0 0.0
        %4734 = vmatprep.subr.mxu0 0.0
        %4735 = vmatpush2.msra.mxu0 0.0
        %4736 = vmatprep.subr.mxu0 0.0
        %4737 = vmatpush2.msra.mxu0 0.0
        %4738 = vmatprep.subr.mxu0 0.0
        %4739 = vmatpush2.msra.mxu0 0.0
        %4740 = vmatprep.subr.mxu0 0.0
        %4741 = vmatpush2.msra.mxu0 0.0
        %4742 = vmatprep.subr.mxu0 0.0
        %4743 = vmatpush2.msra.mxu0 0.0
        %4744 = vmatprep.subr.mxu0 0.0
        %4745 = vmatpush2.msra.mxu0 0.0
        %4746 = vmatprep.subr.mxu0 0.0
        %4747 = vmatpush2.msra.mxu0 0.0
        %4748 = vmatprep.subr.mxu0 0.0
        %4749 = vmatpush2.msra.mxu0 0.0
        %4750 = vmatprep.subr.mxu0 0.0
        %4751 = vmatpush2.msra.mxu0 0.0
        %4752 = vmatprep.subr.mxu0 0.0
        %4753 = vmatpush2.msra.mxu0 0.0
        %4754 = vmatprep.subr.mxu0 0.0
        %4755 = vmatpush2.msra.mxu0 0.0
        %4756 = vmatprep.subr.mxu0 0.0
        %4757 = vmatpush2.msra.mxu0 0.0
        %4758 = vmatprep.subr.mxu0 0.0
        %4759 = vmatpush2.msra.mxu0 0.0
        %4760 = vmatprep.subr.mxu0 0.0
        %4761 = vmatpush2.msra.mxu0 0.0
        %4762 = vmatprep.subr.mxu0 0.0
        %4763 = vmatpush2.msra.mxu0 0.0
        %4764 = vmatprep.mubr.f32.mxu0 0.0
        %4765 = vmatmul.mubr.f32.gmra.mxu0 %v4680
        %v4766 = vpop.f32.mrf.mxu0
        %v4767 = vadd.f32 0.0, %v4766
        %v4768 = vpop.f32.mrf.mxu0
        %4769 = vdwg.mxu0
        %v4770 = vadd.f32 %v4607, %v4767
        %s4771 = scalar_lea.vmem [#allocation9], 32
        %v4772 = vld [vmem:[%s4771] sm:$0xff]
        %v4774 = vsel %vm4122, %v4772, 0
        %4776 = vmatprep.subr.mxu0 0.0
        %4777 = vmatpush1.msra.mxu0 0.0
        %4778 = vmatprep.subr.mxu0 0.0
        %4779 = vmatpush1.msra.mxu0 0.0
        %4780 = vmatprep.subr.mxu0 0.0
        %4781 = vmatpush1.msra.mxu0 0.0
        %4782 = vmatprep.subr.mxu0 0.0
        %4783 = vmatpush1.msra.mxu0 0.0
        %4784 = vmatprep.subr.mxu0 0.0
        %4785 = vmatpush1.msra.mxu0 0.0
        %4786 = vmatprep.subr.mxu0 0.0
        %4787 = vmatpush1.msra.mxu0 0.0
        %4788 = vmatprep.subr.mxu0 0.0
        %4789 = vmatpush1.msra.mxu0 0.0
        %4790 = vmatprep.subr.mxu0 0.0
        %4791 = vmatpush1.msra.mxu0 0.0
        %4792 = vmatprep.subr.mxu0 0.0
        %4793 = vmatpush1.msra.mxu0 0.0
        %4794 = vmatprep.subr.mxu0 0.0
        %4795 = vmatpush1.msra.mxu0 0.0
        %4796 = vmatprep.subr.mxu0 0.0
        %4797 = vmatpush1.msra.mxu0 0.0
        %4798 = vmatprep.subr.mxu0 0.0
        %4799 = vmatpush1.msra.mxu0 0.0
        %4800 = vmatprep.subr.mxu0 0.0
        %4801 = vmatpush1.msra.mxu0 0.0
        %4802 = vmatprep.subr.mxu0 0.0
        %4803 = vmatpush1.msra.mxu0 0.0
        %4804 = vmatprep.subr.mxu0 0.0
        %4805 = vmatpush1.msra.mxu0 %v4120
        %4806 = vmatprep.subr.mxu0 0.0
        %4807 = vmatpush1.msra.mxu0 %v4119
        %4808 = vmatprep.subr.mxu0 0.0
        %4809 = vmatpush2.msra.mxu0 0.0
        %4810 = vmatprep.subr.mxu0 0.0
        %4811 = vmatpush2.msra.mxu0 0.0
        %4812 = vmatprep.subr.mxu0 0.0
        %4813 = vmatpush2.msra.mxu0 0.0
        %4814 = vmatprep.subr.mxu0 0.0
        %4815 = vmatpush2.msra.mxu0 0.0
        %4816 = vmatprep.subr.mxu0 0.0
        %4817 = vmatpush2.msra.mxu0 0.0
        %4818 = vmatprep.subr.mxu0 0.0
        %4819 = vmatpush2.msra.mxu0 0.0
        %4820 = vmatprep.subr.mxu0 0.0
        %4821 = vmatpush2.msra.mxu0 0.0
        %4822 = vmatprep.subr.mxu0 0.0
        %4823 = vmatpush2.msra.mxu0 0.0
        %4824 = vmatprep.subr.mxu0 0.0
        %4825 = vmatpush2.msra.mxu0 0.0
        %4826 = vmatprep.subr.mxu0 0.0
        %4827 = vmatpush2.msra.mxu0 0.0
        %4828 = vmatprep.subr.mxu0 0.0
        %4829 = vmatpush2.msra.mxu0 0.0
        %4830 = vmatprep.subr.mxu0 0.0
        %4831 = vmatpush2.msra.mxu0 0.0
        %4832 = vmatprep.subr.mxu0 0.0
        %4833 = vmatpush2.msra.mxu0 0.0
        %4834 = vmatprep.subr.mxu0 0.0
        %4835 = vmatpush2.msra.mxu0 0.0
        %4836 = vmatprep.subr.mxu0 0.0
        %4837 = vmatpush2.msra.mxu0 0.0
        %4838 = vmatprep.subr.mxu0 0.0
        %4839 = vmatpush2.msra.mxu0 0.0
        %4840 = vmatprep.mubr.f32.mxu0 0.0
        %4841 = vmatmul.mubr.f32.gmra.mxu0 %v4774
        %v4842 = vpop.f32.mrf.mxu0
        %v4843 = vadd.f32 0.0, %v4842
        %v4844 = vpop.f32.mrf.mxu0
        %4845 = vdwg.mxu0
        %s4846 = scalar_lea.vmem [#allocation2], 2816
        %v4847 = vld [vmem:[%s4846] sm:$0xff]
        %v4848 = vld [vmem:[%s4846 + $0x8] sm:$0xff]
        %v4849 = vld [vmem:[%s4846 + $0x10] sm:$0xff]
        %v4850 = vld [vmem:[%s4846 + $0x18] sm:$0xff]
        %v4851 = vld [vmem:[%s4846 + $0x20] sm:$0xff]
        %v4852 = vld [vmem:[%s4846 + $0x28] sm:$0xff]
        %v4853 = vld [vmem:[%s4846 + $0x30] sm:$0xff]
        %v4854 = vld [vmem:[%s4846 + $0x38] sm:$0xff]
        %v4855 = vld [vmem:[%s4846 + $0x40] sm:$0xff]
        %v4856 = vld [vmem:[%s4846 + $0x48] sm:$0xff]
        %v4857 = vld [vmem:[%s4846 + $0x50] sm:$0xff]
        %v4858 = vld [vmem:[%s4846 + $0x58] sm:$0xff]
        %v4859 = vld [vmem:[%s4846 + $0x60] sm:$0xff]
        %v4860 = vld [vmem:[%s4846 + $0x68] sm:$0xff]
        %v4861 = vld [vmem:[%s4846 + $0x70] sm:$0xff]
        %v4862 = vld [vmem:[%s4846 + $0x78] sm:$0xff]
        %4863 = vmatprep.subr.mxu0 0.0
        %4864 = vmatpush1.msra.mxu0 %v4862
        %4865 = vmatprep.subr.mxu0 0.0
        %4866 = vmatpush1.msra.mxu0 %v4861
        %4867 = vmatprep.subr.mxu0 0.0
        %4868 = vmatpush1.msra.mxu0 %v4860
        %4869 = vmatprep.subr.mxu0 0.0
        %4870 = vmatpush1.msra.mxu0 %v4859
        %4871 = vmatprep.subr.mxu0 0.0
        %4872 = vmatpush1.msra.mxu0 %v4858
        %4873 = vmatprep.subr.mxu0 0.0
        %4874 = vmatpush1.msra.mxu0 %v4857
        %4875 = vmatprep.subr.mxu0 0.0
        %4876 = vmatpush1.msra.mxu0 %v4856
        %4877 = vmatprep.subr.mxu0 0.0
        %4878 = vmatpush1.msra.mxu0 %v4855
        %4879 = vmatprep.subr.mxu0 0.0
        %4880 = vmatpush1.msra.mxu0 %v4854
        %4881 = vmatprep.subr.mxu0 0.0
        %4882 = vmatpush1.msra.mxu0 %v4853
        %4883 = vmatprep.subr.mxu0 0.0
        %4884 = vmatpush1.msra.mxu0 %v4852
        %4885 = vmatprep.subr.mxu0 0.0
        %4886 = vmatpush1.msra.mxu0 %v4851
        %4887 = vmatprep.subr.mxu0 0.0
        %4888 = vmatpush1.msra.mxu0 %v4850
        %4889 = vmatprep.subr.mxu0 0.0
        %4890 = vmatpush1.msra.mxu0 %v4849
        %4891 = vmatprep.subr.mxu0 0.0
        %4892 = vmatpush1.msra.mxu0 %v4848
        %4893 = vmatprep.subr.mxu0 0.0
        %4894 = vmatpush1.msra.mxu0 %v4847
        %4895 = vmatprep.subr.mxu0 0.0
        %4896 = vmatpush2.msra.mxu0 0.0
        %4897 = vmatprep.subr.mxu0 0.0
        %4898 = vmatpush2.msra.mxu0 0.0
        %4899 = vmatprep.subr.mxu0 0.0
        %4900 = vmatpush2.msra.mxu0 0.0
        %4901 = vmatprep.subr.mxu0 0.0
        %4902 = vmatpush2.msra.mxu0 0.0
        %4903 = vmatprep.subr.mxu0 0.0
        %4904 = vmatpush2.msra.mxu0 0.0
        %4905 = vmatprep.subr.mxu0 0.0
        %4906 = vmatpush2.msra.mxu0 0.0
        %4907 = vmatprep.subr.mxu0 0.0
        %4908 = vmatpush2.msra.mxu0 0.0
        %4909 = vmatprep.subr.mxu0 0.0
        %4910 = vmatpush2.msra.mxu0 0.0
        %4911 = vmatprep.subr.mxu0 0.0
        %4912 = vmatpush2.msra.mxu0 0.0
        %4913 = vmatprep.subr.mxu0 0.0
        %4914 = vmatpush2.msra.mxu0 0.0
        %4915 = vmatprep.subr.mxu0 0.0
        %4916 = vmatpush2.msra.mxu0 0.0
        %4917 = vmatprep.subr.mxu0 0.0
        %4918 = vmatpush2.msra.mxu0 0.0
        %4919 = vmatprep.subr.mxu0 0.0
        %4920 = vmatpush2.msra.mxu0 0.0
        %4921 = vmatprep.subr.mxu0 0.0
        %4922 = vmatpush2.msra.mxu0 0.0
        %4923 = vmatprep.subr.mxu0 0.0
        %4924 = vmatpush2.msra.mxu0 0.0
        %4925 = vmatprep.subr.mxu0 0.0
        %4926 = vmatpush2.msra.mxu0 0.0
        %4927 = vmatprep.mubr.f32.mxu0 0.0
        %4928 = vmatmul.mubr.f32.gmra.mxu0 %v4843
        %v4929 = vpop.f32.mrf.mxu0
        %v4930 = vadd.f32 0.0, %v4929
        %v4931 = vpop.f32.mrf.mxu0
        %4932 = vdwg.mxu0
        %v4933 = vadd.f32 %v4770, %v4930
        %s4934 = scalar_lea.vmem [#allocation9], 40
        %v4935 = vld [vmem:[%s4934] sm:$0xff]
        %v4937 = vsel %vm4122, %v4935, 0
        %4939 = vmatprep.subr.mxu0 0.0
        %4940 = vmatpush1.msra.mxu0 0.0
        %4941 = vmatprep.subr.mxu0 0.0
        %4942 = vmatpush1.msra.mxu0 0.0
        %4943 = vmatprep.subr.mxu0 0.0
        %4944 = vmatpush1.msra.mxu0 0.0
        %4945 = vmatprep.subr.mxu0 0.0
        %4946 = vmatpush1.msra.mxu0 0.0
        %4947 = vmatprep.subr.mxu0 0.0
        %4948 = vmatpush1.msra.mxu0 0.0
        %4949 = vmatprep.subr.mxu0 0.0
        %4950 = vmatpush1.msra.mxu0 0.0
        %4951 = vmatprep.subr.mxu0 0.0
        %4952 = vmatpush1.msra.mxu0 0.0
        %4953 = vmatprep.subr.mxu0 0.0
        %4954 = vmatpush1.msra.mxu0 0.0
        %4955 = vmatprep.subr.mxu0 0.0
        %4956 = vmatpush1.msra.mxu0 0.0
        %4957 = vmatprep.subr.mxu0 0.0
        %4958 = vmatpush1.msra.mxu0 0.0
        %4959 = vmatprep.subr.mxu0 0.0
        %4960 = vmatpush1.msra.mxu0 0.0
        %4961 = vmatprep.subr.mxu0 0.0
        %4962 = vmatpush1.msra.mxu0 0.0
        %4963 = vmatprep.subr.mxu0 0.0
        %4964 = vmatpush1.msra.mxu0 0.0
        %4965 = vmatprep.subr.mxu0 0.0
        %4966 = vmatpush1.msra.mxu0 0.0
        %4967 = vmatprep.subr.mxu0 0.0
        %4968 = vmatpush1.msra.mxu0 %v4120
        %4969 = vmatprep.subr.mxu0 0.0
        %4970 = vmatpush1.msra.mxu0 %v4119
        %4971 = vmatprep.subr.mxu0 0.0
        %4972 = vmatpush2.msra.mxu0 0.0
        %4973 = vmatprep.subr.mxu0 0.0
        %4974 = vmatpush2.msra.mxu0 0.0
        %4975 = vmatprep.subr.mxu0 0.0
        %4976 = vmatpush2.msra.mxu0 0.0
        %4977 = vmatprep.subr.mxu0 0.0
        %4978 = vmatpush2.msra.mxu0 0.0
        %4979 = vmatprep.subr.mxu0 0.0
        %4980 = vmatpush2.msra.mxu0 0.0
        %4981 = vmatprep.subr.mxu0 0.0
        %4982 = vmatpush2.msra.mxu0 0.0
        %4983 = vmatprep.subr.mxu0 0.0
        %4984 = vmatpush2.msra.mxu0 0.0
        %4985 = vmatprep.subr.mxu0 0.0
        %4986 = vmatpush2.msra.mxu0 0.0
        %4987 = vmatprep.subr.mxu0 0.0
        %4988 = vmatpush2.msra.mxu0 0.0
        %4989 = vmatprep.subr.mxu0 0.0
        %4990 = vmatpush2.msra.mxu0 0.0
        %4991 = vmatprep.subr.mxu0 0.0
        %4992 = vmatpush2.msra.mxu0 0.0
        %4993 = vmatprep.subr.mxu0 0.0
        %4994 = vmatpush2.msra.mxu0 0.0
        %4995 = vmatprep.subr.mxu0 0.0
        %4996 = vmatpush2.msra.mxu0 0.0
        %4997 = vmatprep.subr.mxu0 0.0
        %4998 = vmatpush2.msra.mxu0 0.0
        %4999 = vmatprep.subr.mxu0 0.0
        %5000 = vmatpush2.msra.mxu0 0.0
        %5001 = vmatprep.subr.mxu0 0.0
        %5002 = vmatpush2.msra.mxu0 0.0
        %5003 = vmatprep.mubr.f32.mxu0 0.0
        %5004 = vmatmul.mubr.f32.gmra.mxu0 %v4937
        %v5005 = vpop.f32.mrf.mxu0
        %v5006 = vadd.f32 0.0, %v5005
        %v5007 = vpop.f32.mrf.mxu0
        %5008 = vdwg.mxu0
        %s5009 = scalar_lea.vmem [#allocation2], 2944
        %v5010 = vld [vmem:[%s5009] sm:$0xff]
        %v5011 = vld [vmem:[%s5009 + $0x8] sm:$0xff]
        %v5012 = vld [vmem:[%s5009 + $0x10] sm:$0xff]
        %v5013 = vld [vmem:[%s5009 + $0x18] sm:$0xff]
        %v5014 = vld [vmem:[%s5009 + $0x20] sm:$0xff]
        %v5015 = vld [vmem:[%s5009 + $0x28] sm:$0xff]
        %v5016 = vld [vmem:[%s5009 + $0x30] sm:$0xff]
        %v5017 = vld [vmem:[%s5009 + $0x38] sm:$0xff]
        %v5018 = vld [vmem:[%s5009 + $0x40] sm:$0xff]
        %v5019 = vld [vmem:[%s5009 + $0x48] sm:$0xff]
        %v5020 = vld [vmem:[%s5009 + $0x50] sm:$0xff]
        %v5021 = vld [vmem:[%s5009 + $0x58] sm:$0xff]
        %v5022 = vld [vmem:[%s5009 + $0x60] sm:$0xff]
        %v5023 = vld [vmem:[%s5009 + $0x68] sm:$0xff]
        %v5024 = vld [vmem:[%s5009 + $0x70] sm:$0xff]
        %v5025 = vld [vmem:[%s5009 + $0x78] sm:$0xff]
        %5026 = vmatprep.subr.mxu0 0.0
        %5027 = vmatpush1.msra.mxu0 %v5025
        %5028 = vmatprep.subr.mxu0 0.0
        %5029 = vmatpush1.msra.mxu0 %v5024
        %5030 = vmatprep.subr.mxu0 0.0
        %5031 = vmatpush1.msra.mxu0 %v5023
        %5032 = vmatprep.subr.mxu0 0.0
        %5033 = vmatpush1.msra.mxu0 %v5022
        %5034 = vmatprep.subr.mxu0 0.0
        %5035 = vmatpush1.msra.mxu0 %v5021
        %5036 = vmatprep.subr.mxu0 0.0
        %5037 = vmatpush1.msra.mxu0 %v5020
        %5038 = vmatprep.subr.mxu0 0.0
        %5039 = vmatpush1.msra.mxu0 %v5019
        %5040 = vmatprep.subr.mxu0 0.0
        %5041 = vmatpush1.msra.mxu0 %v5018
        %5042 = vmatprep.subr.mxu0 0.0
        %5043 = vmatpush1.msra.mxu0 %v5017
        %5044 = vmatprep.subr.mxu0 0.0
        %5045 = vmatpush1.msra.mxu0 %v5016
        %5046 = vmatprep.subr.mxu0 0.0
        %5047 = vmatpush1.msra.mxu0 %v5015
        %5048 = vmatprep.subr.mxu0 0.0
        %5049 = vmatpush1.msra.mxu0 %v5014
        %5050 = vmatprep.subr.mxu0 0.0
        %5051 = vmatpush1.msra.mxu0 %v5013
        %5052 = vmatprep.subr.mxu0 0.0
        %5053 = vmatpush1.msra.mxu0 %v5012
        %5054 = vmatprep.subr.mxu0 0.0
        %5055 = vmatpush1.msra.mxu0 %v5011
        %5056 = vmatprep.subr.mxu0 0.0
        %5057 = vmatpush1.msra.mxu0 %v5010
        %5058 = vmatprep.subr.mxu0 0.0
        %5059 = vmatpush2.msra.mxu0 0.0
        %5060 = vmatprep.subr.mxu0 0.0
        %5061 = vmatpush2.msra.mxu0 0.0
        %5062 = vmatprep.subr.mxu0 0.0
        %5063 = vmatpush2.msra.mxu0 0.0
        %5064 = vmatprep.subr.mxu0 0.0
        %5065 = vmatpush2.msra.mxu0 0.0
        %5066 = vmatprep.subr.mxu0 0.0
        %5067 = vmatpush2.msra.mxu0 0.0
        %5068 = vmatprep.subr.mxu0 0.0
        %5069 = vmatpush2.msra.mxu0 0.0
        %5070 = vmatprep.subr.mxu0 0.0
        %5071 = vmatpush2.msra.mxu0 0.0
        %5072 = vmatprep.subr.mxu0 0.0
        %5073 = vmatpush2.msra.mxu0 0.0
        %5074 = vmatprep.subr.mxu0 0.0
        %5075 = vmatpush2.msra.mxu0 0.0
        %5076 = vmatprep.subr.mxu0 0.0
        %5077 = vmatpush2.msra.mxu0 0.0
        %5078 = vmatprep.subr.mxu0 0.0
        %5079 = vmatpush2.msra.mxu0 0.0
        %5080 = vmatprep.subr.mxu0 0.0
        %5081 = vmatpush2.msra.mxu0 0.0
        %5082 = vmatprep.subr.mxu0 0.0
        %5083 = vmatpush2.msra.mxu0 0.0
        %5084 = vmatprep.subr.mxu0 0.0
        %5085 = vmatpush2.msra.mxu0 0.0
        %5086 = vmatprep.subr.mxu0 0.0
        %5087 = vmatpush2.msra.mxu0 0.0
        %5088 = vmatprep.subr.mxu0 0.0
        %5089 = vmatpush2.msra.mxu0 0.0
        %5090 = vmatprep.mubr.f32.mxu0 0.0
        %5091 = vmatmul.mubr.f32.gmra.mxu0 %v5006
        %v5092 = vpop.f32.mrf.mxu0
        %v5093 = vadd.f32 0.0, %v5092
        %v5094 = vpop.f32.mrf.mxu0
        %5095 = vdwg.mxu0
        %v5096 = vadd.f32 %v4933, %v5093
        %s5097 = scalar_lea.vmem [#allocation9], 48
        %v5098 = vld [vmem:[%s5097] sm:$0xff]
        %v5100 = vsel %vm4122, %v5098, 0
        %5102 = vmatprep.subr.mxu0 0.0
        %5103 = vmatpush1.msra.mxu0 0.0
        %5104 = vmatprep.subr.mxu0 0.0
        %5105 = vmatpush1.msra.mxu0 0.0
        %5106 = vmatprep.subr.mxu0 0.0
        %5107 = vmatpush1.msra.mxu0 0.0
        %5108 = vmatprep.subr.mxu0 0.0
        %5109 = vmatpush1.msra.mxu0 0.0
        %5110 = vmatprep.subr.mxu0 0.0
        %5111 = vmatpush1.msra.mxu0 0.0
        %5112 = vmatprep.subr.mxu0 0.0
        %5113 = vmatpush1.msra.mxu0 0.0
        %5114 = vmatprep.subr.mxu0 0.0
        %5115 = vmatpush1.msra.mxu0 0.0
        %5116 = vmatprep.subr.mxu0 0.0
        %5117 = vmatpush1.msra.mxu0 0.0
        %5118 = vmatprep.subr.mxu0 0.0
        %5119 = vmatpush1.msra.mxu0 0.0
        %5120 = vmatprep.subr.mxu0 0.0
        %5121 = vmatpush1.msra.mxu0 0.0
        %5122 = vmatprep.subr.mxu0 0.0
        %5123 = vmatpush1.msra.mxu0 0.0
        %5124 = vmatprep.subr.mxu0 0.0
        %5125 = vmatpush1.msra.mxu0 0.0
        %5126 = vmatprep.subr.mxu0 0.0
        %5127 = vmatpush1.msra.mxu0 0.0
        %5128 = vmatprep.subr.mxu0 0.0
        %5129 = vmatpush1.msra.mxu0 0.0
        %5130 = vmatprep.subr.mxu0 0.0
        %5131 = vmatpush1.msra.mxu0 %v4120
        %5132 = vmatprep.subr.mxu0 0.0
        %5133 = vmatpush1.msra.mxu0 %v4119
        %5134 = vmatprep.subr.mxu0 0.0
        %5135 = vmatpush2.msra.mxu0 0.0
        %5136 = vmatprep.subr.mxu0 0.0
        %5137 = vmatpush2.msra.mxu0 0.0
        %5138 = vmatprep.subr.mxu0 0.0
        %5139 = vmatpush2.msra.mxu0 0.0
        %5140 = vmatprep.subr.mxu0 0.0
        %5141 = vmatpush2.msra.mxu0 0.0
        %5142 = vmatprep.subr.mxu0 0.0
        %5143 = vmatpush2.msra.mxu0 0.0
        %5144 = vmatprep.subr.mxu0 0.0
        %5145 = vmatpush2.msra.mxu0 0.0
        %5146 = vmatprep.subr.mxu0 0.0
        %5147 = vmatpush2.msra.mxu0 0.0
        %5148 = vmatprep.subr.mxu0 0.0
        %5149 = vmatpush2.msra.mxu0 0.0
        %5150 = vmatprep.subr.mxu0 0.0
        %5151 = vmatpush2.msra.mxu0 0.0
        %5152 = vmatprep.subr.mxu0 0.0
        %5153 = vmatpush2.msra.mxu0 0.0
        %5154 = vmatprep.subr.mxu0 0.0
        %5155 = vmatpush2.msra.mxu0 0.0
        %5156 = vmatprep.subr.mxu0 0.0
        %5157 = vmatpush2.msra.mxu0 0.0
        %5158 = vmatprep.subr.mxu0 0.0
        %5159 = vmatpush2.msra.mxu0 0.0
        %5160 = vmatprep.subr.mxu0 0.0
        %5161 = vmatpush2.msra.mxu0 0.0
        %5162 = vmatprep.subr.mxu0 0.0
        %5163 = vmatpush2.msra.mxu0 0.0
        %5164 = vmatprep.subr.mxu0 0.0
        %5165 = vmatpush2.msra.mxu0 0.0
        %5166 = vmatprep.mubr.f32.mxu0 0.0
        %5167 = vmatmul.mubr.f32.gmra.mxu0 %v5100
        %v5168 = vpop.f32.mrf.mxu0
        %v5169 = vadd.f32 0.0, %v5168
        %v5170 = vpop.f32.mrf.mxu0
        %5171 = vdwg.mxu0
        %s5172 = scalar_lea.vmem [#allocation2], 3072
        %v5173 = vld [vmem:[%s5172] sm:$0xff]
        %v5174 = vld [vmem:[%s5172 + $0x8] sm:$0xff]
        %v5175 = vld [vmem:[%s5172 + $0x10] sm:$0xff]
        %v5176 = vld [vmem:[%s5172 + $0x18] sm:$0xff]
        %v5177 = vld [vmem:[%s5172 + $0x20] sm:$0xff]
        %v5178 = vld [vmem:[%s5172 + $0x28] sm:$0xff]
        %v5179 = vld [vmem:[%s5172 + $0x30] sm:$0xff]
        %v5180 = vld [vmem:[%s5172 + $0x38] sm:$0xff]
        %v5181 = vld [vmem:[%s5172 + $0x40] sm:$0xff]
        %v5182 = vld [vmem:[%s5172 + $0x48] sm:$0xff]
        %v5183 = vld [vmem:[%s5172 + $0x50] sm:$0xff]
        %v5184 = vld [vmem:[%s5172 + $0x58] sm:$0xff]
        %v5185 = vld [vmem:[%s5172 + $0x60] sm:$0xff]
        %v5186 = vld [vmem:[%s5172 + $0x68] sm:$0xff]
        %v5187 = vld [vmem:[%s5172 + $0x70] sm:$0xff]
        %v5188 = vld [vmem:[%s5172 + $0x78] sm:$0xff]
        %5189 = vmatprep.subr.mxu0 0.0
        %5190 = vmatpush1.msra.mxu0 %v5188
        %5191 = vmatprep.subr.mxu0 0.0
        %5192 = vmatpush1.msra.mxu0 %v5187
        %5193 = vmatprep.subr.mxu0 0.0
        %5194 = vmatpush1.msra.mxu0 %v5186
        %5195 = vmatprep.subr.mxu0 0.0
        %5196 = vmatpush1.msra.mxu0 %v5185
        %5197 = vmatprep.subr.mxu0 0.0
        %5198 = vmatpush1.msra.mxu0 %v5184
        %5199 = vmatprep.subr.mxu0 0.0
        %5200 = vmatpush1.msra.mxu0 %v5183
        %5201 = vmatprep.subr.mxu0 0.0
        %5202 = vmatpush1.msra.mxu0 %v5182
        %5203 = vmatprep.subr.mxu0 0.0
        %5204 = vmatpush1.msra.mxu0 %v5181
        %5205 = vmatprep.subr.mxu0 0.0
        %5206 = vmatpush1.msra.mxu0 %v5180
        %5207 = vmatprep.subr.mxu0 0.0
        %5208 = vmatpush1.msra.mxu0 %v5179
        %5209 = vmatprep.subr.mxu0 0.0
        %5210 = vmatpush1.msra.mxu0 %v5178
        %5211 = vmatprep.subr.mxu0 0.0
        %5212 = vmatpush1.msra.mxu0 %v5177
        %5213 = vmatprep.subr.mxu0 0.0
        %5214 = vmatpush1.msra.mxu0 %v5176
        %5215 = vmatprep.subr.mxu0 0.0
        %5216 = vmatpush1.msra.mxu0 %v5175
        %5217 = vmatprep.subr.mxu0 0.0
        %5218 = vmatpush1.msra.mxu0 %v5174
        %5219 = vmatprep.subr.mxu0 0.0
        %5220 = vmatpush1.msra.mxu0 %v5173
        %5221 = vmatprep.subr.mxu0 0.0
        %5222 = vmatpush2.msra.mxu0 0.0
        %5223 = vmatprep.subr.mxu0 0.0
        %5224 = vmatpush2.msra.mxu0 0.0
        %5225 = vmatprep.subr.mxu0 0.0
        %5226 = vmatpush2.msra.mxu0 0.0
        %5227 = vmatprep.subr.mxu0 0.0
        %5228 = vmatpush2.msra.mxu0 0.0
        %5229 = vmatprep.subr.mxu0 0.0
        %5230 = vmatpush2.msra.mxu0 0.0
        %5231 = vmatprep.subr.mxu0 0.0
        %5232 = vmatpush2.msra.mxu0 0.0
        %5233 = vmatprep.subr.mxu0 0.0
        %5234 = vmatpush2.msra.mxu0 0.0
        %5235 = vmatprep.subr.mxu0 0.0
        %5236 = vmatpush2.msra.mxu0 0.0
        %5237 = vmatprep.subr.mxu0 0.0
        %5238 = vmatpush2.msra.mxu0 0.0
        %5239 = vmatprep.subr.mxu0 0.0
        %5240 = vmatpush2.msra.mxu0 0.0
        %5241 = vmatprep.subr.mxu0 0.0
        %5242 = vmatpush2.msra.mxu0 0.0
        %5243 = vmatprep.subr.mxu0 0.0
        %5244 = vmatpush2.msra.mxu0 0.0
        %5245 = vmatprep.subr.mxu0 0.0
        %5246 = vmatpush2.msra.mxu0 0.0
        %5247 = vmatprep.subr.mxu0 0.0
        %5248 = vmatpush2.msra.mxu0 0.0
        %5249 = vmatprep.subr.mxu0 0.0
        %5250 = vmatpush2.msra.mxu0 0.0
        %5251 = vmatprep.subr.mxu0 0.0
        %5252 = vmatpush2.msra.mxu0 0.0
        %5253 = vmatprep.mubr.f32.mxu0 0.0
        %5254 = vmatmul.mubr.f32.gmra.mxu0 %v5169
        %v5255 = vpop.f32.mrf.mxu0
        %v5256 = vadd.f32 0.0, %v5255
        %v5257 = vpop.f32.mrf.mxu0
        %5258 = vdwg.mxu0
        %v5259 = vadd.f32 %v5096, %v5256
        %s5260 = scalar_lea.vmem [#allocation9], 56
        %v5261 = vld [vmem:[%s5260] sm:$0xff]
        %v5263 = vsel %vm4122, %v5261, 0
        %5265 = vmatprep.subr.mxu0 0.0
        %5266 = vmatpush1.msra.mxu0 0.0
        %5267 = vmatprep.subr.mxu0 0.0
        %5268 = vmatpush1.msra.mxu0 0.0
        %5269 = vmatprep.subr.mxu0 0.0
        %5270 = vmatpush1.msra.mxu0 0.0
        %5271 = vmatprep.subr.mxu0 0.0
        %5272 = vmatpush1.msra.mxu0 0.0
        %5273 = vmatprep.subr.mxu0 0.0
        %5274 = vmatpush1.msra.mxu0 0.0
        %5275 = vmatprep.subr.mxu0 0.0
        %5276 = vmatpush1.msra.mxu0 0.0
        %5277 = vmatprep.subr.mxu0 0.0
        %5278 = vmatpush1.msra.mxu0 0.0
        %5279 = vmatprep.subr.mxu0 0.0
        %5280 = vmatpush1.msra.mxu0 0.0
        %5281 = vmatprep.subr.mxu0 0.0
        %5282 = vmatpush1.msra.mxu0 0.0
        %5283 = vmatprep.subr.mxu0 0.0
        %5284 = vmatpush1.msra.mxu0 0.0
        %5285 = vmatprep.subr.mxu0 0.0
        %5286 = vmatpush1.msra.mxu0 0.0
        %5287 = vmatprep.subr.mxu0 0.0
        %5288 = vmatpush1.msra.mxu0 0.0
        %5289 = vmatprep.subr.mxu0 0.0
        %5290 = vmatpush1.msra.mxu0 0.0
        %5291 = vmatprep.subr.mxu0 0.0
        %5292 = vmatpush1.msra.mxu0 0.0
        %5293 = vmatprep.subr.mxu0 0.0
        %5294 = vmatpush1.msra.mxu0 %v4120
        %5295 = vmatprep.subr.mxu0 0.0
        %5296 = vmatpush1.msra.mxu0 %v4119
        %5297 = vmatprep.subr.mxu0 0.0
        %5298 = vmatpush2.msra.mxu0 0.0
        %5299 = vmatprep.subr.mxu0 0.0
        %5300 = vmatpush2.msra.mxu0 0.0
        %5301 = vmatprep.subr.mxu0 0.0
        %5302 = vmatpush2.msra.mxu0 0.0
        %5303 = vmatprep.subr.mxu0 0.0
        %5304 = vmatpush2.msra.mxu0 0.0
        %5305 = vmatprep.subr.mxu0 0.0
        %5306 = vmatpush2.msra.mxu0 0.0
        %5307 = vmatprep.subr.mxu0 0.0
        %5308 = vmatpush2.msra.mxu0 0.0
        %5309 = vmatprep.subr.mxu0 0.0
        %5310 = vmatpush2.msra.mxu0 0.0
        %5311 = vmatprep.subr.mxu0 0.0
        %5312 = vmatpush2.msra.mxu0 0.0
        %5313 = vmatprep.subr.mxu0 0.0
        %5314 = vmatpush2.msra.mxu0 0.0
        %5315 = vmatprep.subr.mxu0 0.0
        %5316 = vmatpush2.msra.mxu0 0.0
        %5317 = vmatprep.subr.mxu0 0.0
        %5318 = vmatpush2.msra.mxu0 0.0
        %5319 = vmatprep.subr.mxu0 0.0
        %5320 = vmatpush2.msra.mxu0 0.0
        %5321 = vmatprep.subr.mxu0 0.0
        %5322 = vmatpush2.msra.mxu0 0.0
        %5323 = vmatprep.subr.mxu0 0.0
        %5324 = vmatpush2.msra.mxu0 0.0
        %5325 = vmatprep.subr.mxu0 0.0
        %5326 = vmatpush2.msra.mxu0 0.0
        %5327 = vmatprep.subr.mxu0 0.0
        %5328 = vmatpush2.msra.mxu0 0.0
        %5329 = vmatprep.mubr.f32.mxu0 0.0
        %5330 = vmatmul.mubr.f32.gmra.mxu0 %v5263
        %v5331 = vpop.f32.mrf.mxu0
        %v5332 = vadd.f32 0.0, %v5331
        %v5333 = vpop.f32.mrf.mxu0
        %5334 = vdwg.mxu0
        %s5335 = scalar_lea.vmem [#allocation2], 3200
        %v5336 = vld [vmem:[%s5335] sm:$0xff]
        %v5337 = vld [vmem:[%s5335 + $0x8] sm:$0xff]
        %v5338 = vld [vmem:[%s5335 + $0x10] sm:$0xff]
        %v5339 = vld [vmem:[%s5335 + $0x18] sm:$0xff]
        %v5340 = vld [vmem:[%s5335 + $0x20] sm:$0xff]
        %v5341 = vld [vmem:[%s5335 + $0x28] sm:$0xff]
        %v5342 = vld [vmem:[%s5335 + $0x30] sm:$0xff]
        %v5343 = vld [vmem:[%s5335 + $0x38] sm:$0xff]
        %v5344 = vld [vmem:[%s5335 + $0x40] sm:$0xff]
        %v5345 = vld [vmem:[%s5335 + $0x48] sm:$0xff]
        %v5346 = vld [vmem:[%s5335 + $0x50] sm:$0xff]
        %v5347 = vld [vmem:[%s5335 + $0x58] sm:$0xff]
        %v5348 = vld [vmem:[%s5335 + $0x60] sm:$0xff]
        %v5349 = vld [vmem:[%s5335 + $0x68] sm:$0xff]
        %v5350 = vld [vmem:[%s5335 + $0x70] sm:$0xff]
        %v5351 = vld [vmem:[%s5335 + $0x78] sm:$0xff]
        %5352 = vmatprep.subr.mxu0 0.0
        %5353 = vmatpush1.msra.mxu0 %v5351
        %5354 = vmatprep.subr.mxu0 0.0
        %5355 = vmatpush1.msra.mxu0 %v5350
        %5356 = vmatprep.subr.mxu0 0.0
        %5357 = vmatpush1.msra.mxu0 %v5349
        %5358 = vmatprep.subr.mxu0 0.0
        %5359 = vmatpush1.msra.mxu0 %v5348
        %5360 = vmatprep.subr.mxu0 0.0
        %5361 = vmatpush1.msra.mxu0 %v5347
        %5362 = vmatprep.subr.mxu0 0.0
        %5363 = vmatpush1.msra.mxu0 %v5346
        %5364 = vmatprep.subr.mxu0 0.0
        %5365 = vmatpush1.msra.mxu0 %v5345
        %5366 = vmatprep.subr.mxu0 0.0
        %5367 = vmatpush1.msra.mxu0 %v5344
        %5368 = vmatprep.subr.mxu0 0.0
        %5369 = vmatpush1.msra.mxu0 %v5343
        %5370 = vmatprep.subr.mxu0 0.0
        %5371 = vmatpush1.msra.mxu0 %v5342
        %5372 = vmatprep.subr.mxu0 0.0
        %5373 = vmatpush1.msra.mxu0 %v5341
        %5374 = vmatprep.subr.mxu0 0.0
        %5375 = vmatpush1.msra.mxu0 %v5340
        %5376 = vmatprep.subr.mxu0 0.0
        %5377 = vmatpush1.msra.mxu0 %v5339
        %5378 = vmatprep.subr.mxu0 0.0
        %5379 = vmatpush1.msra.mxu0 %v5338
        %5380 = vmatprep.subr.mxu0 0.0
        %5381 = vmatpush1.msra.mxu0 %v5337
        %5382 = vmatprep.subr.mxu0 0.0
        %5383 = vmatpush1.msra.mxu0 %v5336
        %5384 = vmatprep.subr.mxu0 0.0
        %5385 = vmatpush2.msra.mxu0 0.0
        %5386 = vmatprep.subr.mxu0 0.0
        %5387 = vmatpush2.msra.mxu0 0.0
        %5388 = vmatprep.subr.mxu0 0.0
        %5389 = vmatpush2.msra.mxu0 0.0
        %5390 = vmatprep.subr.mxu0 0.0
        %5391 = vmatpush2.msra.mxu0 0.0
        %5392 = vmatprep.subr.mxu0 0.0
        %5393 = vmatpush2.msra.mxu0 0.0
        %5394 = vmatprep.subr.mxu0 0.0
        %5395 = vmatpush2.msra.mxu0 0.0
        %5396 = vmatprep.subr.mxu0 0.0
        %5397 = vmatpush2.msra.mxu0 0.0
        %5398 = vmatprep.subr.mxu0 0.0
        %5399 = vmatpush2.msra.mxu0 0.0
        %5400 = vmatprep.subr.mxu0 0.0
        %5401 = vmatpush2.msra.mxu0 0.0
        %5402 = vmatprep.subr.mxu0 0.0
        %5403 = vmatpush2.msra.mxu0 0.0
        %5404 = vmatprep.subr.mxu0 0.0
        %5405 = vmatpush2.msra.mxu0 0.0
        %5406 = vmatprep.subr.mxu0 0.0
        %5407 = vmatpush2.msra.mxu0 0.0
        %5408 = vmatprep.subr.mxu0 0.0
        %5409 = vmatpush2.msra.mxu0 0.0
        %5410 = vmatprep.subr.mxu0 0.0
        %5411 = vmatpush2.msra.mxu0 0.0
        %5412 = vmatprep.subr.mxu0 0.0
        %5413 = vmatpush2.msra.mxu0 0.0
        %5414 = vmatprep.subr.mxu0 0.0
        %5415 = vmatpush2.msra.mxu0 0.0
        %5416 = vmatprep.mubr.f32.mxu0 0.0
        %5417 = vmatmul.mubr.f32.gmra.mxu0 %v5332
        %v5418 = vpop.f32.mrf.mxu0
        %v5419 = vadd.f32 0.0, %v5418
        %v5420 = vpop.f32.mrf.mxu0
        %5421 = vdwg.mxu0
        %v5422 = vadd.f32 %v5259, %v5419
        %s5423 = scalar_lea.vmem [#allocation9], 64
        %v5424 = vld [vmem:[%s5423] sm:$0xff]
        %v5426 = vsel %vm4122, %v5424, 0
        %5428 = vmatprep.subr.mxu0 0.0
        %5429 = vmatpush1.msra.mxu0 0.0
        %5430 = vmatprep.subr.mxu0 0.0
        %5431 = vmatpush1.msra.mxu0 0.0
        %5432 = vmatprep.subr.mxu0 0.0
        %5433 = vmatpush1.msra.mxu0 0.0
        %5434 = vmatprep.subr.mxu0 0.0
        %5435 = vmatpush1.msra.mxu0 0.0
        %5436 = vmatprep.subr.mxu0 0.0
        %5437 = vmatpush1.msra.mxu0 0.0
        %5438 = vmatprep.subr.mxu0 0.0
        %5439 = vmatpush1.msra.mxu0 0.0
        %5440 = vmatprep.subr.mxu0 0.0
        %5441 = vmatpush1.msra.mxu0 0.0
        %5442 = vmatprep.subr.mxu0 0.0
        %5443 = vmatpush1.msra.mxu0 0.0
        %5444 = vmatprep.subr.mxu0 0.0
        %5445 = vmatpush1.msra.mxu0 0.0
        %5446 = vmatprep.subr.mxu0 0.0
        %5447 = vmatpush1.msra.mxu0 0.0
        %5448 = vmatprep.subr.mxu0 0.0
        %5449 = vmatpush1.msra.mxu0 0.0
        %5450 = vmatprep.subr.mxu0 0.0
        %5451 = vmatpush1.msra.mxu0 0.0
        %5452 = vmatprep.subr.mxu0 0.0
        %5453 = vmatpush1.msra.mxu0 0.0
        %5454 = vmatprep.subr.mxu0 0.0
        %5455 = vmatpush1.msra.mxu0 0.0
        %5456 = vmatprep.subr.mxu0 0.0
        %5457 = vmatpush1.msra.mxu0 %v4120
        %5458 = vmatprep.subr.mxu0 0.0
        %5459 = vmatpush1.msra.mxu0 %v4119
        %5460 = vmatprep.subr.mxu0 0.0
        %5461 = vmatpush2.msra.mxu0 0.0
        %5462 = vmatprep.subr.mxu0 0.0
        %5463 = vmatpush2.msra.mxu0 0.0
        %5464 = vmatprep.subr.mxu0 0.0
        %5465 = vmatpush2.msra.mxu0 0.0
        %5466 = vmatprep.subr.mxu0 0.0
        %5467 = vmatpush2.msra.mxu0 0.0
        %5468 = vmatprep.subr.mxu0 0.0
        %5469 = vmatpush2.msra.mxu0 0.0
        %5470 = vmatprep.subr.mxu0 0.0
        %5471 = vmatpush2.msra.mxu0 0.0
        %5472 = vmatprep.subr.mxu0 0.0
        %5473 = vmatpush2.msra.mxu0 0.0
        %5474 = vmatprep.subr.mxu0 0.0
        %5475 = vmatpush2.msra.mxu0 0.0
        %5476 = vmatprep.subr.mxu0 0.0
        %5477 = vmatpush2.msra.mxu0 0.0
        %5478 = vmatprep.subr.mxu0 0.0
        %5479 = vmatpush2.msra.mxu0 0.0
        %5480 = vmatprep.subr.mxu0 0.0
        %5481 = vmatpush2.msra.mxu0 0.0
        %5482 = vmatprep.subr.mxu0 0.0
        %5483 = vmatpush2.msra.mxu0 0.0
        %5484 = vmatprep.subr.mxu0 0.0
        %5485 = vmatpush2.msra.mxu0 0.0
        %5486 = vmatprep.subr.mxu0 0.0
        %5487 = vmatpush2.msra.mxu0 0.0
        %5488 = vmatprep.subr.mxu0 0.0
        %5489 = vmatpush2.msra.mxu0 0.0
        %5490 = vmatprep.subr.mxu0 0.0
        %5491 = vmatpush2.msra.mxu0 0.0
        %5492 = vmatprep.mubr.f32.mxu0 0.0
        %5493 = vmatmul.mubr.f32.gmra.mxu0 %v5426
        %v5494 = vpop.f32.mrf.mxu0
        %v5495 = vadd.f32 0.0, %v5494
        %v5496 = vpop.f32.mrf.mxu0
        %5497 = vdwg.mxu0
        %s5498 = scalar_lea.vmem [#allocation2], 3328
        %v5499 = vld [vmem:[%s5498] sm:$0xff]
        %v5500 = vld [vmem:[%s5498 + $0x8] sm:$0xff]
        %v5501 = vld [vmem:[%s5498 + $0x10] sm:$0xff]
        %v5502 = vld [vmem:[%s5498 + $0x18] sm:$0xff]
        %v5503 = vld [vmem:[%s5498 + $0x20] sm:$0xff]
        %v5504 = vld [vmem:[%s5498 + $0x28] sm:$0xff]
        %v5505 = vld [vmem:[%s5498 + $0x30] sm:$0xff]
        %v5506 = vld [vmem:[%s5498 + $0x38] sm:$0xff]
        %v5507 = vld [vmem:[%s5498 + $0x40] sm:$0xff]
        %v5508 = vld [vmem:[%s5498 + $0x48] sm:$0xff]
        %v5509 = vld [vmem:[%s5498 + $0x50] sm:$0xff]
        %v5510 = vld [vmem:[%s5498 + $0x58] sm:$0xff]
        %v5511 = vld [vmem:[%s5498 + $0x60] sm:$0xff]
        %v5512 = vld [vmem:[%s5498 + $0x68] sm:$0xff]
        %v5513 = vld [vmem:[%s5498 + $0x70] sm:$0xff]
        %v5514 = vld [vmem:[%s5498 + $0x78] sm:$0xff]
        %5515 = vmatprep.subr.mxu0 0.0
        %5516 = vmatpush1.msra.mxu0 %v5514
        %5517 = vmatprep.subr.mxu0 0.0
        %5518 = vmatpush1.msra.mxu0 %v5513
        %5519 = vmatprep.subr.mxu0 0.0
        %5520 = vmatpush1.msra.mxu0 %v5512
        %5521 = vmatprep.subr.mxu0 0.0
        %5522 = vmatpush1.msra.mxu0 %v5511
        %5523 = vmatprep.subr.mxu0 0.0
        %5524 = vmatpush1.msra.mxu0 %v5510
        %5525 = vmatprep.subr.mxu0 0.0
        %5526 = vmatpush1.msra.mxu0 %v5509
        %5527 = vmatprep.subr.mxu0 0.0
        %5528 = vmatpush1.msra.mxu0 %v5508
        %5529 = vmatprep.subr.mxu0 0.0
        %5530 = vmatpush1.msra.mxu0 %v5507
        %5531 = vmatprep.subr.mxu0 0.0
        %5532 = vmatpush1.msra.mxu0 %v5506
        %5533 = vmatprep.subr.mxu0 0.0
        %5534 = vmatpush1.msra.mxu0 %v5505
        %5535 = vmatprep.subr.mxu0 0.0
        %5536 = vmatpush1.msra.mxu0 %v5504
        %5537 = vmatprep.subr.mxu0 0.0
        %5538 = vmatpush1.msra.mxu0 %v5503
        %5539 = vmatprep.subr.mxu0 0.0
        %5540 = vmatpush1.msra.mxu0 %v5502
        %5541 = vmatprep.subr.mxu0 0.0
        %5542 = vmatpush1.msra.mxu0 %v5501
        %5543 = vmatprep.subr.mxu0 0.0
        %5544 = vmatpush1.msra.mxu0 %v5500
        %5545 = vmatprep.subr.mxu0 0.0
        %5546 = vmatpush1.msra.mxu0 %v5499
        %5547 = vmatprep.subr.mxu0 0.0
        %5548 = vmatpush2.msra.mxu0 0.0
        %5549 = vmatprep.subr.mxu0 0.0
        %5550 = vmatpush2.msra.mxu0 0.0
        %5551 = vmatprep.subr.mxu0 0.0
        %5552 = vmatpush2.msra.mxu0 0.0
        %5553 = vmatprep.subr.mxu0 0.0
        %5554 = vmatpush2.msra.mxu0 0.0
        %5555 = vmatprep.subr.mxu0 0.0
        %5556 = vmatpush2.msra.mxu0 0.0
        %5557 = vmatprep.subr.mxu0 0.0
        %5558 = vmatpush2.msra.mxu0 0.0
        %5559 = vmatprep.subr.mxu0 0.0
        %5560 = vmatpush2.msra.mxu0 0.0
        %5561 = vmatprep.subr.mxu0 0.0
        %5562 = vmatpush2.msra.mxu0 0.0
        %5563 = vmatprep.subr.mxu0 0.0
        %5564 = vmatpush2.msra.mxu0 0.0
        %5565 = vmatprep.subr.mxu0 0.0
        %5566 = vmatpush2.msra.mxu0 0.0
        %5567 = vmatprep.subr.mxu0 0.0
        %5568 = vmatpush2.msra.mxu0 0.0
        %5569 = vmatprep.subr.mxu0 0.0
        %5570 = vmatpush2.msra.mxu0 0.0
        %5571 = vmatprep.subr.mxu0 0.0
        %5572 = vmatpush2.msra.mxu0 0.0
        %5573 = vmatprep.subr.mxu0 0.0
        %5574 = vmatpush2.msra.mxu0 0.0
        %5575 = vmatprep.subr.mxu0 0.0
        %5576 = vmatpush2.msra.mxu0 0.0
        %5577 = vmatprep.subr.mxu0 0.0
        %5578 = vmatpush2.msra.mxu0 0.0
        %5579 = vmatprep.mubr.f32.mxu0 0.0
        %5580 = vmatmul.mubr.f32.gmra.mxu0 %v5495
        %v5581 = vpop.f32.mrf.mxu0
        %v5582 = vadd.f32 0.0, %v5581
        %v5583 = vpop.f32.mrf.mxu0
        %5584 = vdwg.mxu0
        %v5585 = vadd.f32 %v5422, %v5582
        %s5586 = scalar_lea.vmem [#allocation4], 2
        %v5587 = vld [vmem:[%s5586] sm:$0x1]
        %v5589 = vlaneseq
        %v5590 = vshrl.u32 %v5589, 7
        %v5591 = vsub.s32 0, %v5590
        %v5592 = vrot.slane %v5587, %v5591
        %v5594 = vadd.f32 %v5585, %v5592
        %v5595 = vlaneseq
        %v5596 = vshrl.u32 %v5595, 7
        %vm5597 = vcmp.lt.s32.totalorder %v5596, 1
        %v5598 = vsel %vm5597, 1, 0
        %vm5599 = vcmp.eq.s32.totalorder %v5598, 1
        %v5600 = vsel %vm5599, %v5594, -inf
        %v5601 = vrot.slane %v5600, 4
        %v5602 = vmax.f32 %v5600, %v5601
        %v5603 = vrot.slane %v5602, 2
        %v5604 = vmax.f32 %v5602, %v5603
        %v5605 = vrot.slane %v5604, 1
        %v5606 = vmax.f32 %v5604, %v5605
        %5607 = vst [vmem:[%s322] sm:$0xff] %v5606
        %p5608 = scmp.lt.s32.totalorder %s20, 1
        %s5609 = scalar_select %p5608, %s20, 1
        %s5610 = smul.addr %s5609, 8
        %s5611 = scalar_lea.vmem %s6, %s5610
        // Predicated region
        $region65: #{encoder_net_forward.1} parent=43 // pred_check
          %p5612 = pneg %p169
        $region66: #{encoder_net_forward.1} parent=43 // pred_check_branch
          %5614 = sbr.rel (%p5612) target = $region68
        $region67: #{encoder_net_forward.1} parent=43 // pred_region
          _
        $region68: #{encoder_net_forward.1} parent=43 // pred_fallthru
          _
      $region44: #{encoder_net_forward.1} parent=5 // pred_fallthru
        _
      %p5615 = scmp.le.s32.totalorder 2, %s15
      // Predicated region
      $region69: #{encoder_net_forward.1} parent=5 // pred_check
        %p5616 = pneg %p5615
      $region70: #{encoder_net_forward.1} parent=5 // pred_check_branch
        %5618 = sbr.rel (%p5616) target = $region72
      $region71: #{encoder_net_forward.1} parent=5 // pred_region
        %s5619 = ssub.s32 %s15, 2
        // Predicated region
        $region73: #{encoder_net_forward.1} parent=71 // pred_check
          %p5620 = pneg %p175
        $region74: #{encoder_net_forward.1} parent=71 // pred_check_branch
          %5622 = sbr.rel (%p5620) target = $region76
        $region75: #{encoder_net_forward.1} parent=71 // pred_region
          %p5623 = scmp.lt.s32.totalorder %s21, 1
          %s5624 = scalar_select %p5623, %s21, 1
          %s5625 = smul.addr %s5624, 8
          %s5626 = scalar_lea.vmem %s6, %s5625
        $region76: #{encoder_net_forward.1} parent=71 // pred_fallthru
          _
      $region72: #{encoder_net_forward.1} parent=5 // pred_fallthru
        _
    $region6: #{encoder_net_forward.1} parent=1 // loop_footer
      %s19 = sadd.s32 1, %s15
    $region7: #{encoder_net_forward.1} parent=1 // loop_footer_branch
      %14 = sbr.rel target = $region3
    $region8: #{encoder_net_forward.1} parent=1 // loop_exit
      _
    %5627 = vsyncpa [#allocation3], 1
    %s5628 = scalar_lea.sflag [#allocation3], 1
    %5629 = vsyncpa %s5628, 1
    %5630 = vsyncpa [#allocation5], 1
    %5631 = vsyncpa [#allocation8], 1

</llo_original>
